<compile_context>
chip_gen: v7x
topology: tpu7x:2x2x1
jax: 0.10.0
libtpu: 0.0.40
codegen_flags: <defaults>
</compile_context>

<pallas_src>
import jax
import jax.numpy as jnp
from jax.experimental import pallas as pl
from jax.experimental.pallas import tpu as pltpu

_EPS = 1e-5


# ---------------------------------------------------------------------------
# Shared math (pure jnp): used both inside the Pallas kernel and by the exact
# JAX reference, so correctness checks validate the Pallas plumbing tightly.
# ---------------------------------------------------------------------------
def _affine(h, w, s, t, relu, cd):
    """(Conv1d(k=1)|Linear) + folded eval-mode BN [+ ReLU].  MXU in `cd`, f32 acc."""
    y = jnp.dot(h.astype(cd), w.astype(cd), preferred_element_type=jnp.float32)
    y = y * s + t
    return jnp.maximum(y, 0.0) if relu else y


def _forward_tile(xf, Bt, N, P, eye_flat, cd):
    """Fused PointNetfeat forward for one tile.

    xf: (Bt*N, 5) f32, points-major (channels on lanes).
    Returns gfeat (Bt, 1024) f32 and trans_flat (Bt, 25) f32.
    """
    C = xf.shape[-1]

    # ---- STN5d point MLP + max over points ----
    h = _affine(xf, *P["stn1"], True, cd)
    h = _affine(h, *P["stn2"], True, cd)
    h = _affine(h, *P["stn3"], True, cd)                          # (Bt*N, 1024)
    f = jnp.concatenate(
        [jnp.max(h[b * N:(b + 1) * N, :], axis=0, keepdims=True) for b in range(Bt)],
        axis=0)                                                   # (Bt, 1024)

    # ---- STN5d FC head -> flattened 5x5 transform (+ identity) ----
    g = _affine(f, *P["fc1"], True, cd)
    g = _affine(g, *P["fc2"], True, cd)
    fw3, fb3 = P["fc3"]
    trans_flat = (jnp.dot(g.astype(cd), fw3.astype(cd),
                          preferred_element_type=jnp.float32) + fb3 + eye_flat)  # (Bt, 25)

    # ---- apply input transform:  xt[b,n,d] = sum_c x[b,n,c] * trans[b,c,d] ----
    # Built from contiguous lane slices of trans_flat; C=5 -> 5 cheap VPU mul-adds.
    xt_rows = []
    for b in range(Bt):
        xb = xf[b * N:(b + 1) * N, :]                             # (N, 5)
        tb = trans_flat[b:b + 1, :]                               # (1, 25)
        xt_b = xb[:, 0:1] * tb[:, 0:C]
        for c in range(1, C):
            xt_b = xt_b + xb[:, c:c + 1] * tb[:, C * c:C * (c + 1)]
        xt_rows.append(xt_b)
    xt = jnp.concatenate(xt_rows, axis=0)                         # (Bt*N, 5)

    # ---- main point MLP (bn only after conv3, no ReLU) + max over points ----
    h = _affine(xt, *P["m1"], True, cd)
    h = _affine(h, *P["m2"], True, cd)
    h = _affine(h, *P["m3"], False, cd)                           # (Bt*N, 1024)
    gfeat = jnp.concatenate(
        [jnp.max(h[b * N:(b + 1) * N, :], axis=0, keepdims=True) for b in range(Bt)],
        axis=0)                                                   # (Bt, 1024)
    return gfeat, trans_flat


# ---------------------------------------------------------------------------
# Pallas kernel (fused, one grid step per batch tile)
# ---------------------------------------------------------------------------
def _make_kernel(Bt, N, compute_dtype):
    def kernel(xf_ref, *refs):
        *w_refs, gfeat_ref, trans_ref = refs
        vals = [r[...] for r in w_refs]
        (sw1, ss1, st1, sw2, ss2, st2, sw3, ss3, st3,
         fw1, fs1, ft1, fw2, fs2, ft2, fw3, fb3, eye_flat,
         mw1, ms1, mt1, mw2, ms2, mt2, mw3, ms3, mt3) = vals
        P = dict(stn1=(sw1, ss1, st1), stn2=(sw2, ss2, st2), stn3=(sw3, ss3, st3),
                 fc1=(fw1, fs1, ft1), fc2=(fw2, fs2, ft2), fc3=(fw3, fb3),
                 m1=(mw1, ms1, mt1), m2=(mw2, ms2, mt2), m3=(mw3, ms3, mt3))
        gfeat, trans_flat = _forward_tile(xf_ref[...], Bt, N, P, eye_flat, compute_dtype)
        gfeat_ref[...] = gfeat
        trans_ref[...] = trans_flat
    return kernel


# ---------------------------------------------------------------------------
# Parameter construction (deterministic, synthetic) and preparation
# ---------------------------------------------------------------------------
def _fold_conv_bn(key, cin, cout):
    """Conv1d(k=1)/Linear + BatchNorm1d (eval) folded into (W^T, scale, shift)."""
    k = jax.random.split(key, 6)
    w = jax.random.normal(k[0], (cin, cout), jnp.float32) * 0.1
    b = jax.random.normal(k[1], (cout,), jnp.float32) * 0.1
    gamma = jax.random.uniform(k[2], (cout,), jnp.float32, minval=0.5, maxval=1.5)
    beta = jax.random.normal(k[3], (cout,), jnp.float32) * 0.1
    mean = jax.random.normal(k[4], (cout,), jnp.float32) * 0.1
    var = jax.random.uniform(k[5], (cout,), jnp.float32, minval=0.5, maxval=1.5)
    s = gamma / jnp.sqrt(var + _EPS)
    scale = s.reshape(1, cout)
    shift = ((b - mean) * s + beta).reshape(1, cout)
    return (w, scale, shift)


def make_params(seed=0):
    ks = jax.random.split(jax.random.PRNGKey(seed), 10)
    P = {}
    P["stn1"] = _fold_conv_bn(ks[0], 5, 64)
    P["stn2"] = _fold_conv_bn(ks[1], 64, 128)
    P["stn3"] = _fold_conv_bn(ks[2], 128, 1024)
    P["fc1"] = _fold_conv_bn(ks[3], 1024, 512)
    P["fc2"] = _fold_conv_bn(ks[4], 512, 256)
    P["fc3w"] = jax.random.normal(ks[5], (256, 25), jnp.float32) * 0.1
    P["fc3b"] = (jax.random.normal(ks[6], (25,), jnp.float32) * 0.1).reshape(1, 25)
    P["m1"] = _fold_conv_bn(ks[7], 5, 64)
    P["m2"] = _fold_conv_bn(ks[8], 64, 128)
    P["m3"] = _fold_conv_bn(ks[9], 128, 1024)
    return P


def prepare_params(P, compute_dtype):
    """Cast matmul weights to the MXU compute dtype; folded-BN scale/shift stay f32."""
    def cast_w(p):
        w, s, t = p
        return (w.astype(compute_dtype), s, t)
    Q = {k: cast_w(P[k]) for k in
         ("stn1", "stn2", "stn3", "fc1", "fc2", "m1", "m2", "m3")}
    Q["fc3"] = (P["fc3w"].astype(compute_dtype), P["fc3b"])
    return Q


# ---------------------------------------------------------------------------
# Wrapper
# ---------------------------------------------------------------------------
def _pick_batch_tile(B, N):
    # Bt must divide B and keep the (Bt*N, 1024) f32 activation tile modest
    # (<= ~8 MiB).  Prefer layout-safe choices for the (Bt, 1024)/(Bt, 25)
    # output blocks: Bt a multiple of 8 or Bt == B.  (At tiny B this gives a
    # single grid step; acceptable since the workload is then tiny anyway.)
    row_budget = 2048
    divisors = [d for d in range(1, B + 1) if B % d == 0]
    safe = [d for d in divisors if d % 8 == 0 or d == B]
    for cands in (safe, divisors):
        fitting = [d for d in cands if d * N <= row_budget]
        if fitting:
            return max(fitting)
    return 1


def pointnetfeat_pallas(x_b5n, P, *, compute_dtype=jnp.bfloat16, batch_tile=None):
    B, C, N = x_b5n.shape
    assert C == 5
    # PyTorch NCW (B,5,N) -> points-major (B*N, 5): channels on lanes.
    xf = jnp.transpose(x_b5n, (0, 2, 1)).astype(jnp.float32).reshape(B * N, C)

    Bt = batch_tile if batch_tile is not None else _pick_batch_tile(B, N)
    assert B % Bt == 0
    grid = (B // Bt,)

    Q = prepare_params(P, compute_dtype)
    eye_flat = jnp.eye(C, dtype=jnp.float32).reshape(1, C * C)
    weights = [*Q["stn1"], *Q["stn2"], *Q["stn3"],
               *Q["fc1"], *Q["fc2"], *Q["fc3"], eye_flat,
               *Q["m1"], *Q["m2"], *Q["m3"]]

    def wspec(a):
        nd = a.ndim
        return pl.BlockSpec(a.shape, lambda b, _n=nd: (0,) * _n)

    gfeat, trans_flat = pl.pallas_call(
        _make_kernel(Bt, N, compute_dtype),
        out_shape=(jax.ShapeDtypeStruct((B, 1024), jnp.float32),
                   jax.ShapeDtypeStruct((B, C * C), jnp.float32)),
        grid=grid,
        in_specs=[pl.BlockSpec((Bt * N, C), lambda b: (b, 0))]
        + [wspec(a) for a in weights],
        out_specs=(pl.BlockSpec((Bt, 1024), lambda b: (b, 0)),
                   pl.BlockSpec((Bt, C * C), lambda b: (b, 0))),
        compiler_params=pltpu.CompilerParams(
            dimension_semantics=("parallel",),
            # explicit budget: safe on v7x (64 MiB physical) and a raise over
            # the 16/32 MiB default scoped limit on v5e/v6e.
            vmem_limit_bytes=48 * 1024 * 1024),
    )(xf, *weights)

    trans = trans_flat.reshape(B, C, C)
    return gfeat, trans, None   # trans_feat is None (feature_transform=False)


# ---------------------------------------------------------------------------
# References for validation
# ---------------------------------------------------------------------------
def pointnetfeat_ref_exact(x_b5n, P, compute_dtype=jnp.bfloat16):
    """Same math as the kernel (shared _forward_tile), plain JAX, no Pallas."""
    B, C, N = x_b5n.shape
    xf = jnp.transpose(x_b5n, (0, 2, 1)).astype(jnp.float32).reshape(B * N, C)
    Q = prepare_params(P, compute_dtype)
    eye_flat = jnp.eye(C, dtype=jnp.float32).reshape(1, C * C)
    gfeat, trans_flat = _forward_tile(xf, B, N, Q, eye_flat, compute_dtype)
    return gfeat, trans_flat.reshape(B, C, C), None


def pointnetfeat_ref_f32(x_b5n, P):
    """Independent full-f32 formulation (unfused, explicit bmm)."""
    x = jnp.transpose(x_b5n, (0, 2, 1)).astype(jnp.float32)        # (B, N, 5)

    def layer(h, p, relu=True):
        w, s, t = p
        h = jnp.einsum("bnc,cd->bnd", h, w) * s + t
        return jnp.maximum(h, 0.0) if relu else h

    def fc(h, p, relu=True):
        w, s, t = p
        h = h @ w * s + t
        return jnp.maximum(h, 0.0) if relu else h

    h = layer(x, P["stn1"]); h = layer(h, P["stn2"]); h = layer(h, P["stn3"])
    f = jnp.max(h, axis=1)
    g = fc(f, P["fc1"]); g = fc(g, P["fc2"])
    trans = (g @ P["fc3w"] + P["fc3b"]
             + jnp.eye(5, dtype=jnp.float32).reshape(1, 25)).reshape(-1, 5, 5)
    xt = jnp.einsum("bnc,bcd->bnd", x, trans)
    h = layer(xt, P["m1"]); h = layer(h, P["m2"]); h = layer(h, P["m3"], relu=False)
    gfeat = jnp.max(h, axis=1)
    return gfeat, trans, None


# ---------------------------------------------------------------------------
if __name__ == "__main__":
    B, C, N = 2, 5, 64
    x = jax.random.normal(jax.random.PRNGKey(0), (B, C, N), jnp.float32)  # PyTorch NCW
    P = make_params(seed=0)

    gfeat, trans, trans_feat = pointnetfeat_pallas(x, P)
    gfeat = jax.block_until_ready(gfeat)
    trans = jax.block_until_ready(trans)

    assert gfeat.shape == (B, 1024) and trans.shape == (B, 5, 5) and trans_feat is None

    # 1) Exact-math reference (same bf16-matmul path, no Pallas): tight check of
    #    the Pallas plumbing (BlockSpecs, grid, DMA, fused dataflow).
    g_e, t_e, _ = pointnetfeat_ref_exact(x, P)
    assert jnp.allclose(gfeat, g_e, atol=1e-3, rtol=1e-3), "gfeat mismatch vs exact reference"
    assert jnp.allclose(trans, t_e, atol=1e-3, rtol=1e-3), "trans mismatch vs exact reference"

    # 2) Sanity vs an independent full-f32 reference (bf16 quantization noise expected).
    g_f, t_f, _ = pointnetfeat_ref_f32(x, P)

    def nerr(a, b):
        return float(jnp.max(jnp.abs(a - b)) / (jnp.max(jnp.abs(b)) + 1e-6))

    assert nerr(gfeat, g_f) < 8e-2, "gfeat deviates too much from f32 reference"
    assert nerr(trans, t_f) < 8e-2, "trans deviates too much from f32 reference"

    print("KERNEL_OK")
</pallas_src>

<mosaic_0001>
module attributes {stable_mosaic.version = 11 : i64} {
  func.func @kernel(%arg0: i32, %arg1: memref<128x5xf32, #tpu.memory_space<vmem>>, %arg2: memref<5x64xbf16, #tpu.memory_space<vmem>>, %arg3: memref<1x64xf32, #tpu.memory_space<vmem>>, %arg4: memref<1x64xf32, #tpu.memory_space<vmem>>, %arg5: memref<64x128xbf16, #tpu.memory_space<vmem>>, %arg6: memref<1x128xf32, #tpu.memory_space<vmem>>, %arg7: memref<1x128xf32, #tpu.memory_space<vmem>>, %arg8: memref<128x1024xbf16, #tpu.memory_space<vmem>>, %arg9: memref<1x1024xf32, #tpu.memory_space<vmem>>, %arg10: memref<1x1024xf32, #tpu.memory_space<vmem>>, %arg11: memref<1024x512xbf16, #tpu.memory_space<vmem>>, %arg12: memref<1x512xf32, #tpu.memory_space<vmem>>, %arg13: memref<1x512xf32, #tpu.memory_space<vmem>>, %arg14: memref<512x256xbf16, #tpu.memory_space<vmem>>, %arg15: memref<1x256xf32, #tpu.memory_space<vmem>>, %arg16: memref<1x256xf32, #tpu.memory_space<vmem>>, %arg17: memref<256x25xbf16, #tpu.memory_space<vmem>>, %arg18: memref<1x25xf32, #tpu.memory_space<vmem>>, %arg19: memref<1x25xf32, #tpu.memory_space<vmem>>, %arg20: memref<5x64xbf16, #tpu.memory_space<vmem>>, %arg21: memref<1x64xf32, #tpu.memory_space<vmem>>, %arg22: memref<1x64xf32, #tpu.memory_space<vmem>>, %arg23: memref<64x128xbf16, #tpu.memory_space<vmem>>, %arg24: memref<1x128xf32, #tpu.memory_space<vmem>>, %arg25: memref<1x128xf32, #tpu.memory_space<vmem>>, %arg26: memref<128x1024xbf16, #tpu.memory_space<vmem>>, %arg27: memref<1x1024xf32, #tpu.memory_space<vmem>>, %arg28: memref<1x1024xf32, #tpu.memory_space<vmem>>, %arg29: memref<2x1024xf32, #tpu.memory_space<vmem>>, %arg30: memref<2x25xf32, #tpu.memory_space<vmem>>) attributes {dimension_semantics = [#tpu.dimension_semantics<parallel>], iteration_bounds = array<i64: 1>, scalar_prefetch = 0 : i64, scratch_operands = 0 : i64, tpu.core_type = #tpu.core_type<tc>, window_params = [{transform_indices = @transform_0, window_bounds = array<i64: 128, 5>}, {pipeline_mode = #tpu.pipeline_mode<synchronous>, transform_indices = @transform_1, window_bounds = array<i64: 5, 64>}, {pipeline_mode = #tpu.pipeline_mode<synchronous>, transform_indices = @transform_2, window_bounds = array<i64: 1, 64>}, {pipeline_mode = #tpu.pipeline_mode<synchronous>, transform_indices = @transform_3, window_bounds = array<i64: 1, 64>}, {pipeline_mode = #tpu.pipeline_mode<synchronous>, transform_indices = @transform_4, window_bounds = array<i64: 64, 128>}, {pipeline_mode = #tpu.pipeline_mode<synchronous>, transform_indices = @transform_5, window_bounds = array<i64: 1, 128>}, {pipeline_mode = #tpu.pipeline_mode<synchronous>, transform_indices = @transform_6, window_bounds = array<i64: 1, 128>}, {pipeline_mode = #tpu.pipeline_mode<synchronous>, transform_indices = @transform_7, window_bounds = array<i64: 128, 1024>}, {pipeline_mode = #tpu.pipeline_mode<synchronous>, transform_indices = @transform_8, window_bounds = array<i64: 1, 1024>}, {pipeline_mode = #tpu.pipeline_mode<synchronous>, transform_indices = @transform_9, window_bounds = array<i64: 1, 1024>}, {pipeline_mode = #tpu.pipeline_mode<synchronous>, transform_indices = @transform_10, window_bounds = array<i64: 1024, 512>}, {pipeline_mode = #tpu.pipeline_mode<synchronous>, transform_indices = @transform_11, window_bounds = array<i64: 1, 512>}, {pipeline_mode = #tpu.pipeline_mode<synchronous>, transform_indices = @transform_12, window_bounds = array<i64: 1, 512>}, {pipeline_mode = #tpu.pipeline_mode<synchronous>, transform_indices = @transform_13, window_bounds = array<i64: 512, 256>}, {pipeline_mode = #tpu.pipeline_mode<synchronous>, transform_indices = @transform_14, window_bounds = array<i64: 1, 256>}, {pipeline_mode = #tpu.pipeline_mode<synchronous>, transform_indices = @transform_15, window_bounds = array<i64: 1, 256>}, {pipeline_mode = #tpu.pipeline_mode<synchronous>, transform_indices = @transform_16, window_bounds = array<i64: 256, 25>}, {pipeline_mode = #tpu.pipeline_mode<synchronous>, transform_indices = @transform_17, window_bounds = array<i64: 1, 25>}, {pipeline_mode = #tpu.pipeline_mode<synchronous>, transform_indices = @transform_18, window_bounds = array<i64: 1, 25>}, {pipeline_mode = #tpu.pipeline_mode<synchronous>, transform_indices = @transform_19, window_bounds = array<i64: 5, 64>}, {pipeline_mode = #tpu.pipeline_mode<synchronous>, transform_indices = @transform_20, window_bounds = array<i64: 1, 64>}, {pipeline_mode = #tpu.pipeline_mode<synchronous>, transform_indices = @transform_21, window_bounds = array<i64: 1, 64>}, {pipeline_mode = #tpu.pipeline_mode<synchronous>, transform_indices = @transform_22, window_bounds = array<i64: 64, 128>}, {pipeline_mode = #tpu.pipeline_mode<synchronous>, transform_indices = @transform_23, window_bounds = array<i64: 1, 128>}, {pipeline_mode = #tpu.pipeline_mode<synchronous>, transform_indices = @transform_24, window_bounds = array<i64: 1, 128>}, {pipeline_mode = #tpu.pipeline_mode<synchronous>, transform_indices = @transform_25, window_bounds = array<i64: 128, 1024>}, {pipeline_mode = #tpu.pipeline_mode<synchronous>, transform_indices = @transform_26, window_bounds = array<i64: 1, 1024>}, {pipeline_mode = #tpu.pipeline_mode<synchronous>, transform_indices = @transform_27, window_bounds = array<i64: 1, 1024>}, {transform_indices = @transform_28, window_bounds = array<i64: 2, 1024>}, {transform_indices = @transform_29, window_bounds = array<i64: 2, 25>}]} {
    %c0 = arith.constant 0 : index
    %c0_0 = arith.constant 0 : index
    %0 = vector.load %arg2[%c0, %c0_0] : memref<5x64xbf16, #tpu.memory_space<vmem>>, vector<5x64xbf16>
    %c0_1 = arith.constant 0 : index
    %c0_2 = arith.constant 0 : index
    %1 = vector.load %arg3[%c0_1, %c0_2] : memref<1x64xf32, #tpu.memory_space<vmem>>, vector<1x64xf32>
    %c0_3 = arith.constant 0 : index
    %c0_4 = arith.constant 0 : index
    %2 = vector.load %arg4[%c0_3, %c0_4] : memref<1x64xf32, #tpu.memory_space<vmem>>, vector<1x64xf32>
    %c0_5 = arith.constant 0 : index
    %c0_6 = arith.constant 0 : index
    %3 = vector.load %arg5[%c0_5, %c0_6] : memref<64x128xbf16, #tpu.memory_space<vmem>>, vector<64x128xbf16>
    %c0_7 = arith.constant 0 : index
    %c0_8 = arith.constant 0 : index
    %4 = vector.load %arg6[%c0_7, %c0_8] : memref<1x128xf32, #tpu.memory_space<vmem>>, vector<1x128xf32>
    %c0_9 = arith.constant 0 : index
    %c0_10 = arith.constant 0 : index
    %5 = vector.load %arg7[%c0_9, %c0_10] : memref<1x128xf32, #tpu.memory_space<vmem>>, vector<1x128xf32>
    %c0_11 = arith.constant 0 : index
    %c0_12 = arith.constant 0 : index
    %6 = vector.load %arg8[%c0_11, %c0_12] : memref<128x1024xbf16, #tpu.memory_space<vmem>>, vector<128x1024xbf16>
    %c0_13 = arith.constant 0 : index
    %c0_14 = arith.constant 0 : index
    %7 = vector.load %arg9[%c0_13, %c0_14] : memref<1x1024xf32, #tpu.memory_space<vmem>>, vector<1x1024xf32>
    %c0_15 = arith.constant 0 : index
    %c0_16 = arith.constant 0 : index
    %8 = vector.load %arg10[%c0_15, %c0_16] : memref<1x1024xf32, #tpu.memory_space<vmem>>, vector<1x1024xf32>
    %c0_17 = arith.constant 0 : index
    %c0_18 = arith.constant 0 : index
    %9 = vector.load %arg11[%c0_17, %c0_18] : memref<1024x512xbf16, #tpu.memory_space<vmem>>, vector<1024x512xbf16>
    %c0_19 = arith.constant 0 : index
    %c0_20 = arith.constant 0 : index
    %10 = vector.load %arg12[%c0_19, %c0_20] : memref<1x512xf32, #tpu.memory_space<vmem>>, vector<1x512xf32>
    %c0_21 = arith.constant 0 : index
    %c0_22 = arith.constant 0 : index
    %11 = vector.load %arg13[%c0_21, %c0_22] : memref<1x512xf32, #tpu.memory_space<vmem>>, vector<1x512xf32>
    %c0_23 = arith.constant 0 : index
    %c0_24 = arith.constant 0 : index
    %12 = vector.load %arg14[%c0_23, %c0_24] : memref<512x256xbf16, #tpu.memory_space<vmem>>, vector<512x256xbf16>
    %c0_25 = arith.constant 0 : index
    %c0_26 = arith.constant 0 : index
    %13 = vector.load %arg15[%c0_25, %c0_26] : memref<1x256xf32, #tpu.memory_space<vmem>>, vector<1x256xf32>
    %c0_27 = arith.constant 0 : index
    %c0_28 = arith.constant 0 : index
    %14 = vector.load %arg16[%c0_27, %c0_28] : memref<1x256xf32, #tpu.memory_space<vmem>>, vector<1x256xf32>
    %c0_29 = arith.constant 0 : index
    %c0_30 = arith.constant 0 : index
    %15 = vector.load %arg17[%c0_29, %c0_30] : memref<256x25xbf16, #tpu.memory_space<vmem>>, vector<256x25xbf16>
    %c0_31 = arith.constant 0 : index
    %c0_32 = arith.constant 0 : index
    %16 = vector.load %arg18[%c0_31, %c0_32] : memref<1x25xf32, #tpu.memory_space<vmem>>, vector<1x25xf32>
    %c0_33 = arith.constant 0 : index
    %c0_34 = arith.constant 0 : index
    %17 = vector.load %arg19[%c0_33, %c0_34] : memref<1x25xf32, #tpu.memory_space<vmem>>, vector<1x25xf32>
    %c0_35 = arith.constant 0 : index
    %c0_36 = arith.constant 0 : index
    %18 = vector.load %arg20[%c0_35, %c0_36] : memref<5x64xbf16, #tpu.memory_space<vmem>>, vector<5x64xbf16>
    %c0_37 = arith.constant 0 : index
    %c0_38 = arith.constant 0 : index
    %19 = vector.load %arg21[%c0_37, %c0_38] : memref<1x64xf32, #tpu.memory_space<vmem>>, vector<1x64xf32>
    %c0_39 = arith.constant 0 : index
    %c0_40 = arith.constant 0 : index
    %20 = vector.load %arg22[%c0_39, %c0_40] : memref<1x64xf32, #tpu.memory_space<vmem>>, vector<1x64xf32>
    %c0_41 = arith.constant 0 : index
    %c0_42 = arith.constant 0 : index
    %21 = vector.load %arg23[%c0_41, %c0_42] : memref<64x128xbf16, #tpu.memory_space<vmem>>, vector<64x128xbf16>
    %c0_43 = arith.constant 0 : index
    %c0_44 = arith.constant 0 : index
    %22 = vector.load %arg24[%c0_43, %c0_44] : memref<1x128xf32, #tpu.memory_space<vmem>>, vector<1x128xf32>
    %c0_45 = arith.constant 0 : index
    %c0_46 = arith.constant 0 : index
    %23 = vector.load %arg25[%c0_45, %c0_46] : memref<1x128xf32, #tpu.memory_space<vmem>>, vector<1x128xf32>
    %c0_47 = arith.constant 0 : index
    %c0_48 = arith.constant 0 : index
    %24 = vector.load %arg26[%c0_47, %c0_48] : memref<128x1024xbf16, #tpu.memory_space<vmem>>, vector<128x1024xbf16>
    %c0_49 = arith.constant 0 : index
    %c0_50 = arith.constant 0 : index
    %25 = vector.load %arg27[%c0_49, %c0_50] : memref<1x1024xf32, #tpu.memory_space<vmem>>, vector<1x1024xf32>
    %c0_51 = arith.constant 0 : index
    %c0_52 = arith.constant 0 : index
    %26 = vector.load %arg28[%c0_51, %c0_52] : memref<1x1024xf32, #tpu.memory_space<vmem>>, vector<1x1024xf32>
    %c0_53 = arith.constant 0 : index
    %c0_54 = arith.constant 0 : index
    %27 = vector.load %arg1[%c0_53, %c0_54] : memref<128x5xf32, #tpu.memory_space<vmem>>, vector<128x5xf32>
    %28 = arith.truncf %27 : vector<128x5xf32> to vector<128x5xbf16>
    %cst = arith.constant dense<0.000000e+00> : vector<128x64xf32>
    %29 = tpu.matmul %28, %0, %cst {dimension_numbers = #tpu.dot_dimension_numbers<[1], [0], [0], [1], [0, 0, 1, 1], [], []>} : vector<128x5xbf16>, vector<5x64xbf16>, vector<128x64xf32> -> vector<128x64xf32>
    %30 = vector.broadcast %1 : vector<1x64xf32> to vector<128x64xf32>
    %31 = arith.mulf %29, %30 : vector<128x64xf32>
    %32 = vector.broadcast %2 : vector<1x64xf32> to vector<128x64xf32>
    %33 = arith.addf %31, %32 : vector<128x64xf32>
    %cst_55 = arith.constant 0.000000e+00 : f32
    %34 = vector.broadcast %cst_55 : f32 to vector<128x64xf32>
    %35 = arith.maximumf %33, %34 : vector<128x64xf32>
    %36 = arith.truncf %35 : vector<128x64xf32> to vector<128x64xbf16>
    %cst_56 = arith.constant dense<0.000000e+00> : vector<128x128xf32>
    %37 = tpu.matmul %36, %3, %cst_56 {dimension_numbers = #tpu.dot_dimension_numbers<[1], [0], [0], [1], [0, 0, 1, 1], [], []>} : vector<128x64xbf16>, vector<64x128xbf16>, vector<128x128xf32> -> vector<128x128xf32>
    %38 = vector.broadcast %4 : vector<1x128xf32> to vector<128x128xf32>
    %39 = arith.mulf %37, %38 : vector<128x128xf32>
    %40 = vector.broadcast %5 : vector<1x128xf32> to vector<128x128xf32>
    %41 = arith.addf %39, %40 : vector<128x128xf32>
    %cst_57 = arith.constant 0.000000e+00 : f32
    %42 = vector.broadcast %cst_57 : f32 to vector<128x128xf32>
    %43 = arith.maximumf %41, %42 : vector<128x128xf32>
    %44 = arith.truncf %43 : vector<128x128xf32> to vector<128x128xbf16>
    %cst_58 = arith.constant dense<0.000000e+00> : vector<128x1024xf32>
    %45 = tpu.matmul %44, %6, %cst_58 {dimension_numbers = #tpu.dot_dimension_numbers<[1], [0], [0], [1], [0, 0, 1, 1], [], []>} : vector<128x128xbf16>, vector<128x1024xbf16>, vector<128x1024xf32> -> vector<128x1024xf32>
    %46 = vector.broadcast %7 : vector<1x1024xf32> to vector<128x1024xf32>
    %47 = arith.mulf %45, %46 : vector<128x1024xf32>
    %48 = vector.broadcast %8 : vector<1x1024xf32> to vector<128x1024xf32>
    %49 = arith.addf %47, %48 : vector<128x1024xf32>
    %cst_59 = arith.constant 0.000000e+00 : f32
    %50 = vector.broadcast %cst_59 : f32 to vector<128x1024xf32>
    %51 = arith.maximumf %49, %50 : vector<128x1024xf32>
    %52 = vector.extract_strided_slice %51 {offsets = [0, 0], sizes = [64, 1024], strides = [1, 1]} : vector<128x1024xf32> to vector<64x1024xf32>
    %cst_60 = arith.constant dense<0xFF800000> : vector<1024xf32>
    %53 = vector.multi_reduction <maximumf>, %52, %cst_60 [0] : vector<64x1024xf32> to vector<1024xf32>
    %54 = vector.shape_cast %53 : vector<1024xf32> to vector<1x1024xf32>
    %55 = vector.extract_strided_slice %51 {offsets = [64, 0], sizes = [64, 1024], strides = [1, 1]} : vector<128x1024xf32> to vector<64x1024xf32>
    %cst_61 = arith.constant dense<0xFF800000> : vector<1024xf32>
    %56 = vector.multi_reduction <maximumf>, %55, %cst_61 [0] : vector<64x1024xf32> to vector<1024xf32>
    %57 = vector.shape_cast %56 : vector<1024xf32> to vector<1x1024xf32>
    %58 = tpu.concatenate %54, %57 in 0 : vector<1x1024xf32>, vector<1x1024xf32> -> vector<2x1024xf32>
    %59 = arith.truncf %58 : vector<2x1024xf32> to vector<2x1024xbf16>
    %cst_62 = arith.constant dense<0.000000e+00> : vector<2x512xf32>
    %60 = tpu.matmul %59, %9, %cst_62 {dimension_numbers = #tpu.dot_dimension_numbers<[1], [0], [0], [1], [0, 0, 1, 1], [], []>} : vector<2x1024xbf16>, vector<1024x512xbf16>, vector<2x512xf32> -> vector<2x512xf32>
    %61 = vector.broadcast %10 : vector<1x512xf32> to vector<2x512xf32>
    %62 = arith.mulf %60, %61 : vector<2x512xf32>
    %63 = vector.broadcast %11 : vector<1x512xf32> to vector<2x512xf32>
    %64 = arith.addf %62, %63 : vector<2x512xf32>
    %cst_63 = arith.constant 0.000000e+00 : f32
    %65 = vector.broadcast %cst_63 : f32 to vector<2x512xf32>
    %66 = arith.maximumf %64, %65 : vector<2x512xf32>
    %67 = arith.truncf %66 : vector<2x512xf32> to vector<2x512xbf16>
    %cst_64 = arith.constant dense<0.000000e+00> : vector<2x256xf32>
    %68 = tpu.matmul %67, %12, %cst_64 {dimension_numbers = #tpu.dot_dimension_numbers<[1], [0], [0], [1], [0, 0, 1, 1], [], []>} : vector<2x512xbf16>, vector<512x256xbf16>, vector<2x256xf32> -> vector<2x256xf32>
    %69 = vector.broadcast %13 : vector<1x256xf32> to vector<2x256xf32>
    %70 = arith.mulf %68, %69 : vector<2x256xf32>
    %71 = vector.broadcast %14 : vector<1x256xf32> to vector<2x256xf32>
    %72 = arith.addf %70, %71 : vector<2x256xf32>
    %cst_65 = arith.constant 0.000000e+00 : f32
    %73 = vector.broadcast %cst_65 : f32 to vector<2x256xf32>
    %74 = arith.maximumf %72, %73 : vector<2x256xf32>
    %75 = arith.truncf %74 : vector<2x256xf32> to vector<2x256xbf16>
    %cst_66 = arith.constant dense<0.000000e+00> : vector<2x25xf32>
    %76 = tpu.matmul %75, %15, %cst_66 {dimension_numbers = #tpu.dot_dimension_numbers<[1], [0], [0], [1], [0, 0, 1, 1], [], []>} : vector<2x256xbf16>, vector<256x25xbf16>, vector<2x25xf32> -> vector<2x25xf32>
    %77 = vector.broadcast %16 : vector<1x25xf32> to vector<2x25xf32>
    %78 = arith.addf %76, %77 : vector<2x25xf32>
    %79 = vector.broadcast %17 : vector<1x25xf32> to vector<2x25xf32>
    %80 = arith.addf %78, %79 : vector<2x25xf32>
    %81 = vector.extract_strided_slice %27 {offsets = [0, 0], sizes = [64, 5], strides = [1, 1]} : vector<128x5xf32> to vector<64x5xf32>
    %82 = vector.extract_strided_slice %80 {offsets = [0, 0], sizes = [1, 25], strides = [1, 1]} : vector<2x25xf32> to vector<1x25xf32>
    %83 = vector.extract_strided_slice %81 {offsets = [0, 0], sizes = [64, 1], strides = [1, 1]} : vector<64x5xf32> to vector<64x1xf32>
    %84 = vector.extract_strided_slice %82 {offsets = [0, 0], sizes = [1, 5], strides = [1, 1]} : vector<1x25xf32> to vector<1x5xf32>
    %85 = vector.broadcast %83 : vector<64x1xf32> to vector<64x5xf32>
    %86 = vector.broadcast %84 : vector<1x5xf32> to vector<64x5xf32>
    %87 = arith.mulf %85, %86 : vector<64x5xf32>
    %88 = vector.extract_strided_slice %81 {offsets = [0, 1], sizes = [64, 1], strides = [1, 1]} : vector<64x5xf32> to vector<64x1xf32>
    %89 = vector.extract_strided_slice %82 {offsets = [0, 5], sizes = [1, 5], strides = [1, 1]} : vector<1x25xf32> to vector<1x5xf32>
    %90 = vector.broadcast %88 : vector<64x1xf32> to vector<64x5xf32>
    %91 = vector.broadcast %89 : vector<1x5xf32> to vector<64x5xf32>
    %92 = arith.mulf %90, %91 : vector<64x5xf32>
    %93 = arith.addf %87, %92 : vector<64x5xf32>
    %94 = vector.extract_strided_slice %81 {offsets = [0, 2], sizes = [64, 1], strides = [1, 1]} : vector<64x5xf32> to vector<64x1xf32>
    %95 = vector.extract_strided_slice %82 {offsets = [0, 10], sizes = [1, 5], strides = [1, 1]} : vector<1x25xf32> to vector<1x5xf32>
    %96 = vector.broadcast %94 : vector<64x1xf32> to vector<64x5xf32>
    %97 = vector.broadcast %95 : vector<1x5xf32> to vector<64x5xf32>
    %98 = arith.mulf %96, %97 : vector<64x5xf32>
    %99 = arith.addf %93, %98 : vector<64x5xf32>
    %100 = vector.extract_strided_slice %81 {offsets = [0, 3], sizes = [64, 1], strides = [1, 1]} : vector<64x5xf32> to vector<64x1xf32>
    %101 = vector.extract_strided_slice %82 {offsets = [0, 15], sizes = [1, 5], strides = [1, 1]} : vector<1x25xf32> to vector<1x5xf32>
    %102 = vector.broadcast %100 : vector<64x1xf32> to vector<64x5xf32>
    %103 = vector.broadcast %101 : vector<1x5xf32> to vector<64x5xf32>
    %104 = arith.mulf %102, %103 : vector<64x5xf32>
    %105 = arith.addf %99, %104 : vector<64x5xf32>
    %106 = vector.extract_strided_slice %81 {offsets = [0, 4], sizes = [64, 1], strides = [1, 1]} : vector<64x5xf32> to vector<64x1xf32>
    %107 = vector.extract_strided_slice %82 {offsets = [0, 20], sizes = [1, 5], strides = [1, 1]} : vector<1x25xf32> to vector<1x5xf32>
    %108 = vector.broadcast %106 : vector<64x1xf32> to vector<64x5xf32>
    %109 = vector.broadcast %107 : vector<1x5xf32> to vector<64x5xf32>
    %110 = arith.mulf %108, %109 : vector<64x5xf32>
    %111 = arith.addf %105, %110 : vector<64x5xf32>
    %112 = vector.extract_strided_slice %27 {offsets = [64, 0], sizes = [64, 5], strides = [1, 1]} : vector<128x5xf32> to vector<64x5xf32>
    %113 = vector.extract_strided_slice %80 {offsets = [1, 0], sizes = [1, 25], strides = [1, 1]} : vector<2x25xf32> to vector<1x25xf32>
    %114 = vector.extract_strided_slice %112 {offsets = [0, 0], sizes = [64, 1], strides = [1, 1]} : vector<64x5xf32> to vector<64x1xf32>
    %115 = vector.extract_strided_slice %113 {offsets = [0, 0], sizes = [1, 5], strides = [1, 1]} : vector<1x25xf32> to vector<1x5xf32>
    %116 = vector.broadcast %114 : vector<64x1xf32> to vector<64x5xf32>
    %117 = vector.broadcast %115 : vector<1x5xf32> to vector<64x5xf32>
    %118 = arith.mulf %116, %117 : vector<64x5xf32>
    %119 = vector.extract_strided_slice %112 {offsets = [0, 1], sizes = [64, 1], strides = [1, 1]} : vector<64x5xf32> to vector<64x1xf32>
    %120 = vector.extract_strided_slice %113 {offsets = [0, 5], sizes = [1, 5], strides = [1, 1]} : vector<1x25xf32> to vector<1x5xf32>
    %121 = vector.broadcast %119 : vector<64x1xf32> to vector<64x5xf32>
    %122 = vector.broadcast %120 : vector<1x5xf32> to vector<64x5xf32>
    %123 = arith.mulf %121, %122 : vector<64x5xf32>
    %124 = arith.addf %118, %123 : vector<64x5xf32>
    %125 = vector.extract_strided_slice %112 {offsets = [0, 2], sizes = [64, 1], strides = [1, 1]} : vector<64x5xf32> to vector<64x1xf32>
    %126 = vector.extract_strided_slice %113 {offsets = [0, 10], sizes = [1, 5], strides = [1, 1]} : vector<1x25xf32> to vector<1x5xf32>
    %127 = vector.broadcast %125 : vector<64x1xf32> to vector<64x5xf32>
    %128 = vector.broadcast %126 : vector<1x5xf32> to vector<64x5xf32>
    %129 = arith.mulf %127, %128 : vector<64x5xf32>
    %130 = arith.addf %124, %129 : vector<64x5xf32>
    %131 = vector.extract_strided_slice %112 {offsets = [0, 3], sizes = [64, 1], strides = [1, 1]} : vector<64x5xf32> to vector<64x1xf32>
    %132 = vector.extract_strided_slice %113 {offsets = [0, 15], sizes = [1, 5], strides = [1, 1]} : vector<1x25xf32> to vector<1x5xf32>
    %133 = vector.broadcast %131 : vector<64x1xf32> to vector<64x5xf32>
    %134 = vector.broadcast %132 : vector<1x5xf32> to vector<64x5xf32>
    %135 = arith.mulf %133, %134 : vector<64x5xf32>
    %136 = arith.addf %130, %135 : vector<64x5xf32>
    %137 = vector.extract_strided_slice %112 {offsets = [0, 4], sizes = [64, 1], strides = [1, 1]} : vector<64x5xf32> to vector<64x1xf32>
    %138 = vector.extract_strided_slice %113 {offsets = [0, 20], sizes = [1, 5], strides = [1, 1]} : vector<1x25xf32> to vector<1x5xf32>
    %139 = vector.broadcast %137 : vector<64x1xf32> to vector<64x5xf32>
    %140 = vector.broadcast %138 : vector<1x5xf32> to vector<64x5xf32>
    %141 = arith.mulf %139, %140 : vector<64x5xf32>
    %142 = arith.addf %136, %141 : vector<64x5xf32>
    %143 = tpu.concatenate %111, %142 in 0 : vector<64x5xf32>, vector<64x5xf32> -> vector<128x5xf32>
    %144 = arith.truncf %143 : vector<128x5xf32> to vector<128x5xbf16>
    %cst_67 = arith.constant dense<0.000000e+00> : vector<128x64xf32>
    %145 = tpu.matmul %144, %18, %cst_67 {dimension_numbers = #tpu.dot_dimension_numbers<[1], [0], [0], [1], [0, 0, 1, 1], [], []>} : vector<128x5xbf16>, vector<5x64xbf16>, vector<128x64xf32> -> vector<128x64xf32>
    %146 = vector.broadcast %19 : vector<1x64xf32> to vector<128x64xf32>
    %147 = arith.mulf %145, %146 : vector<128x64xf32>
    %148 = vector.broadcast %20 : vector<1x64xf32> to vector<128x64xf32>
    %149 = arith.addf %147, %148 : vector<128x64xf32>
    %cst_68 = arith.constant 0.000000e+00 : f32
    %150 = vector.broadcast %cst_68 : f32 to vector<128x64xf32>
    %151 = arith.maximumf %149, %150 : vector<128x64xf32>
    %152 = arith.truncf %151 : vector<128x64xf32> to vector<128x64xbf16>
    %cst_69 = arith.constant dense<0.000000e+00> : vector<128x128xf32>
    %153 = tpu.matmul %152, %21, %cst_69 {dimension_numbers = #tpu.dot_dimension_numbers<[1], [0], [0], [1], [0, 0, 1, 1], [], []>} : vector<128x64xbf16>, vector<64x128xbf16>, vector<128x128xf32> -> vector<128x128xf32>
    %154 = vector.broadcast %22 : vector<1x128xf32> to vector<128x128xf32>
    %155 = arith.mulf %153, %154 : vector<128x128xf32>
    %156 = vector.broadcast %23 : vector<1x128xf32> to vector<128x128xf32>
    %157 = arith.addf %155, %156 : vector<128x128xf32>
    %cst_70 = arith.constant 0.000000e+00 : f32
    %158 = vector.broadcast %cst_70 : f32 to vector<128x128xf32>
    %159 = arith.maximumf %157, %158 : vector<128x128xf32>
    %160 = arith.truncf %159 : vector<128x128xf32> to vector<128x128xbf16>
    %cst_71 = arith.constant dense<0.000000e+00> : vector<128x1024xf32>
    %161 = tpu.matmul %160, %24, %cst_71 {dimension_numbers = #tpu.dot_dimension_numbers<[1], [0], [0], [1], [0, 0, 1, 1], [], []>} : vector<128x128xbf16>, vector<128x1024xbf16>, vector<128x1024xf32> -> vector<128x1024xf32>
    %162 = vector.broadcast %25 : vector<1x1024xf32> to vector<128x1024xf32>
    %163 = arith.mulf %161, %162 : vector<128x1024xf32>
    %164 = vector.broadcast %26 : vector<1x1024xf32> to vector<128x1024xf32>
    %165 = arith.addf %163, %164 : vector<128x1024xf32>
    %166 = vector.extract_strided_slice %165 {offsets = [0, 0], sizes = [64, 1024], strides = [1, 1]} : vector<128x1024xf32> to vector<64x1024xf32>
    %cst_72 = arith.constant dense<0xFF800000> : vector<1024xf32>
    %167 = vector.multi_reduction <maximumf>, %166, %cst_72 [0] : vector<64x1024xf32> to vector<1024xf32>
    %168 = vector.shape_cast %167 : vector<1024xf32> to vector<1x1024xf32>
    %169 = vector.extract_strided_slice %165 {offsets = [64, 0], sizes = [64, 1024], strides = [1, 1]} : vector<128x1024xf32> to vector<64x1024xf32>
    %cst_73 = arith.constant dense<0xFF800000> : vector<1024xf32>
    %170 = vector.multi_reduction <maximumf>, %169, %cst_73 [0] : vector<64x1024xf32> to vector<1024xf32>
    %171 = vector.shape_cast %170 : vector<1024xf32> to vector<1x1024xf32>
    %172 = tpu.concatenate %168, %171 in 0 : vector<1x1024xf32>, vector<1x1024xf32> -> vector<2x1024xf32>
    %c0_74 = arith.constant 0 : index
    %c0_75 = arith.constant 0 : index
    %173 = vector.load %arg29[%c0_74, %c0_75] : memref<2x1024xf32, #tpu.memory_space<vmem>>, vector<2x1024xf32>
    tpu.vector_store %arg29[%c0_74, %c0_75], %172 {strides = array<i32>} : memref<2x1024xf32, #tpu.memory_space<vmem>>, vector<2x1024xf32>,
    %c0_76 = arith.constant 0 : index
    %c0_77 = arith.constant 0 : index
    %174 = vector.load %arg30[%c0_76, %c0_77] : memref<2x25xf32, #tpu.memory_space<vmem>>, vector<2x25xf32>
    tpu.vector_store %arg30[%c0_76, %c0_77], %80 {strides = array<i32>} : memref<2x25xf32, #tpu.memory_space<vmem>>, vector<2x25xf32>,
    return
  }
  func.func @transform_0(%arg0: i32) -> (i32, i32) {
    %c0_i32 = arith.constant 0 : i32
    %c0_i32_0 = arith.constant 0 : i32
    return %arg0, %c0_i32 : i32, i32
  }
  func.func @transform_1(%arg0: i32) -> (i32, i32) {
    %c0_i32 = arith.constant 0 : i32
    %c0_i32_0 = arith.constant 0 : i32
    %c0_i32_1 = arith.constant 0 : i32
    return %c0_i32, %c0_i32_0 : i32, i32
  }
  func.func @transform_2(%arg0: i32) -> (i32, i32) {
    %c0_i32 = arith.constant 0 : i32
    %c0_i32_0 = arith.constant 0 : i32
    %c0_i32_1 = arith.constant 0 : i32
    return %c0_i32, %c0_i32_0 : i32, i32
  }
  func.func @transform_3(%arg0: i32) -> (i32, i32) {
    %c0_i32 = arith.constant 0 : i32
    %c0_i32_0 = arith.constant 0 : i32
    %c0_i32_1 = arith.constant 0 : i32
    return %c0_i32, %c0_i32_0 : i32, i32
  }
  func.func @transform_4(%arg0: i32) -> (i32, i32) {
    %c0_i32 = arith.constant 0 : i32
    %c0_i32_0 = arith.constant 0 : i32
    %c0_i32_1 = arith.constant 0 : i32
    return %c0_i32, %c0_i32_0 : i32, i32
  }
  func.func @transform_5(%arg0: i32) -> (i32, i32) {
    %c0_i32 = arith.constant 0 : i32
    %c0_i32_0 = arith.constant 0 : i32
    %c0_i32_1 = arith.constant 0 : i32
    return %c0_i32, %c0_i32_0 : i32, i32
  }
  func.func @transform_6(%arg0: i32) -> (i32, i32) {
    %c0_i32 = arith.constant 0 : i32
    %c0_i32_0 = arith.constant 0 : i32
    %c0_i32_1 = arith.constant 0 : i32
    return %c0_i32, %c0_i32_0 : i32, i32
  }
  func.func @transform_7(%arg0: i32) -> (i32, i32) {
    %c0_i32 = arith.constant 0 : i32
    %c0_i32_0 = arith.constant 0 : i32
    %c0_i32_1 = arith.constant 0 : i32
    return %c0_i32, %c0_i32_0 : i32, i32
  }
  func.func @transform_8(%arg0: i32) -> (i32, i32) {
    %c0_i32 = arith.constant 0 : i32
    %c0_i32_0 = arith.constant 0 : i32
    %c0_i32_1 = arith.constant 0 : i32
    return %c0_i32, %c0_i32_0 : i32, i32
  }
  func.func @transform_9(%arg0: i32) -> (i32, i32) {
    %c0_i32 = arith.constant 0 : i32
    %c0_i32_0 = arith.constant 0 : i32
    %c0_i32_1 = arith.constant 0 : i32
    return %c0_i32, %c0_i32_0 : i32, i32
  }
  func.func @transform_10(%arg0: i32) -> (i32, i32) {
    %c0_i32 = arith.constant 0 : i32
    %c0_i32_0 = arith.constant 0 : i32
    %c0_i32_1 = arith.constant 0 : i32
    return %c0_i32, %c0_i32_0 : i32, i32
  }
  func.func @transform_11(%arg0: i32) -> (i32, i32) {
    %c0_i32 = arith.constant 0 : i32
    %c0_i32_0 = arith.constant 0 : i32
    %c0_i32_1 = arith.constant 0 : i32
    return %c0_i32, %c0_i32_0 : i32, i32
  }
  func.func @transform_12(%arg0: i32) -> (i32, i32) {
    %c0_i32 = arith.constant 0 : i32
    %c0_i32_0 = arith.constant 0 : i32
    %c0_i32_1 = arith.constant 0 : i32
    return %c0_i32, %c0_i32_0 : i32, i32
  }
  func.func @transform_13(%arg0: i32) -> (i32, i32) {
    %c0_i32 = arith.constant 0 : i32
    %c0_i32_0 = arith.constant 0 : i32
    %c0_i32_1 = arith.constant 0 : i32
    return %c0_i32, %c0_i32_0 : i32, i32
  }
  func.func @transform_14(%arg0: i32) -> (i32, i32) {
    %c0_i32 = arith.constant 0 : i32
    %c0_i32_0 = arith.constant 0 : i32
    %c0_i32_1 = arith.constant 0 : i32
    return %c0_i32, %c0_i32_0 : i32, i32
  }
  func.func @transform_15(%arg0: i32) -> (i32, i32) {
    %c0_i32 = arith.constant 0 : i32
    %c0_i32_0 = arith.constant 0 : i32
    %c0_i32_1 = arith.constant 0 : i32
    return %c0_i32, %c0_i32_0 : i32, i32
  }
  func.func @transform_16(%arg0: i32) -> (i32, i32) {
    %c0_i32 = arith.constant 0 : i32
    %c0_i32_0 = arith.constant 0 : i32
    %c0_i32_1 = arith.constant 0 : i32
    return %c0_i32, %c0_i32_0 : i32, i32
  }
  func.func @transform_17(%arg0: i32) -> (i32, i32) {
    %c0_i32 = arith.constant 0 : i32
    %c0_i32_0 = arith.constant 0 : i32
    %c0_i32_1 = arith.constant 0 : i32
    return %c0_i32, %c0_i32_0 : i32, i32
  }
  func.func @transform_18(%arg0: i32) -> (i32, i32) {
    %c0_i32 = arith.constant 0 : i32
    %c0_i32_0 = arith.constant 0 : i32
    %c0_i32_1 = arith.constant 0 : i32
    return %c0_i32, %c0_i32_0 : i32, i32
  }
  func.func @transform_19(%arg0: i32) -> (i32, i32) {
    %c0_i32 = arith.constant 0 : i32
    %c0_i32_0 = arith.constant 0 : i32
    %c0_i32_1 = arith.constant 0 : i32
    return %c0_i32, %c0_i32_0 : i32, i32
  }
  func.func @transform_20(%arg0: i32) -> (i32, i32) {
    %c0_i32 = arith.constant 0 : i32
    %c0_i32_0 = arith.constant 0 : i32
    %c0_i32_1 = arith.constant 0 : i32
    return %c0_i32, %c0_i32_0 : i32, i32
  }
  func.func @transform_21(%arg0: i32) -> (i32, i32) {
    %c0_i32 = arith.constant 0 : i32
    %c0_i32_0 = arith.constant 0 : i32
    %c0_i32_1 = arith.constant 0 : i32
    return %c0_i32, %c0_i32_0 : i32, i32
  }
  func.func @transform_22(%arg0: i32) -> (i32, i32) {
    %c0_i32 = arith.constant 0 : i32
    %c0_i32_0 = arith.constant 0 : i32
    %c0_i32_1 = arith.constant 0 : i32
    return %c0_i32, %c0_i32_0 : i32, i32
  }
  func.func @transform_23(%arg0: i32) -> (i32, i32) {
    %c0_i32 = arith.constant 0 : i32
    %c0_i32_0 = arith.constant 0 : i32
    %c0_i32_1 = arith.constant 0 : i32
    return %c0_i32, %c0_i32_0 : i32, i32
  }
  func.func @transform_24(%arg0: i32) -> (i32, i32) {
    %c0_i32 = arith.constant 0 : i32
    %c0_i32_0 = arith.constant 0 : i32
    %c0_i32_1 = arith.constant 0 : i32
    return %c0_i32, %c0_i32_0 : i32, i32
  }
  func.func @transform_25(%arg0: i32) -> (i32, i32) {
    %c0_i32 = arith.constant 0 : i32
    %c0_i32_0 = arith.constant 0 : i32
    %c0_i32_1 = arith.constant 0 : i32
    return %c0_i32, %c0_i32_0 : i32, i32
  }
  func.func @transform_26(%arg0: i32) -> (i32, i32) {
    %c0_i32 = arith.constant 0 : i32
    %c0_i32_0 = arith.constant 0 : i32
    %c0_i32_1 = arith.constant 0 : i32
    return %c0_i32, %c0_i32_0 : i32, i32
  }
  func.func @transform_27(%arg0: i32) -> (i32, i32) {
    %c0_i32 = arith.constant 0 : i32
    %c0_i32_0 = arith.constant 0 : i32
    %c0_i32_1 = arith.constant 0 : i32
    return %c0_i32, %c0_i32_0 : i32, i32
  }
  func.func @transform_28(%arg0: i32) -> (i32, i32) {
    %c0_i32 = arith.constant 0 : i32
    %c0_i32_0 = arith.constant 0 : i32
    return %arg0, %c0_i32 : i32, i32
  }
  func.func @transform_29(%arg0: i32) -> (i32, i32) {
    %c0_i32 = arith.constant 0 : i32
    %c0_i32_0 = arith.constant 0 : i32
    return %arg0, %c0_i32 : i32, i32
  }
}

</mosaic_0001>

<llo_original>
// kernel: tpu_custom_call.1
$region0: #{tpu_custom_call.1}
  #allocation0 [shape = 'u32[]', space=smem, size = 0x4, offset = 0x4, fixed_abs, tag = 'smem constant byte address 0x4 - core index']
  #allocation1 [shape = 'u32[144,128]{1,0:T(1,128)}', space=vmem, size = 0x12000, scoped, tag = 'internal scratch']
  %s0 = inlined_call_operand.smem [shape: u32[30], index: -1, kind: input, shape index: {}]
  %s1 = sld [smem:[%s0]]
  %s2 = scalar_lea.smem %s0, 1
  %s3 = sld [smem:[%s2]]
  %s4 = scalar_lea.smem %s0, 2
  %s5 = sld [smem:[%s4]]
  %s6 = scalar_lea.smem %s0, 3
  %s7 = sld [smem:[%s6]]
  %s8 = scalar_lea.smem %s0, 4
  %s9 = sld [smem:[%s8]]
  %s10 = scalar_lea.smem %s0, 5
  %s11 = sld [smem:[%s10]]
  %s12 = scalar_lea.smem %s0, 6
  %s13 = sld [smem:[%s12]]
  %s14 = scalar_lea.smem %s0, 7
  %s15 = sld [smem:[%s14]]
  %s16 = scalar_lea.smem %s0, 8
  %s17 = sld [smem:[%s16]]
  %s18 = scalar_lea.smem %s0, 9
  %s19 = sld [smem:[%s18]]
  %s20 = scalar_lea.smem %s0, 10
  %s21 = sld [smem:[%s20]]
  %s22 = scalar_lea.smem %s0, 11
  %s23 = sld [smem:[%s22]]
  %s24 = scalar_lea.smem %s0, 12
  %s25 = sld [smem:[%s24]]
  %s26 = scalar_lea.smem %s0, 13
  %s27 = sld [smem:[%s26]]
  %s28 = scalar_lea.smem %s0, 14
  %s29 = sld [smem:[%s28]]
  %s30 = scalar_lea.smem %s0, 15
  %s31 = sld [smem:[%s30]]
  %s32 = scalar_lea.smem %s0, 16
  %s33 = sld [smem:[%s32]]
  %s34 = scalar_lea.smem %s0, 17
  %s35 = sld [smem:[%s34]]
  %s36 = scalar_lea.smem %s0, 18
  %s37 = sld [smem:[%s36]]
  %s38 = scalar_lea.smem %s0, 19
  %s39 = sld [smem:[%s38]]
  %s40 = scalar_lea.smem %s0, 20
  %s41 = sld [smem:[%s40]]
  %s42 = scalar_lea.smem %s0, 21
  %s43 = sld [smem:[%s42]]
  %s44 = scalar_lea.smem %s0, 22
  %s45 = sld [smem:[%s44]]
  %s46 = scalar_lea.smem %s0, 23
  %s47 = sld [smem:[%s46]]
  %s48 = scalar_lea.smem %s0, 24
  %s49 = sld [smem:[%s48]]
  %s50 = scalar_lea.smem %s0, 25
  %s51 = sld [smem:[%s50]]
  %s52 = scalar_lea.smem %s0, 26
  %s53 = sld [smem:[%s52]]
  %s54 = scalar_lea.smem %s0, 27
  %s55 = sld [smem:[%s54]]
  %s56 = scalar_lea.smem %s0, 28
  %s57 = sld [smem:[%s56]]
  %s58 = scalar_lea.smem %s0, 29
  %s59 = sld [smem:[%s58]]
  %60 = xla_tuple %s57, %s59
  %s61 = sld [smem:[#allocation0]]
  $region146: #{tpu_custom_call.1} parent=0
    _
  %s63 = ssub.s32 1, %s61
  %s64 = scalar_select 0, %s63, %s61
  $region1: #{tpu_custom_call.1} parent=0
    #allocation2 [shape = 'u8[262144]{0}', space=vmem, size = 0x40000, scoped, tag = 'input window, operand 7, single buffered']
    #allocation3 [shape = 's32[1]{0}', space=sflag, size = 0x4, scoped, tag = 'scoped memory for tpu_custom_call.1']
    #allocation4 [shape = 's32[1]{0}', space=sflag, size = 0x4, scoped, tag = 'scoped memory for tpu_custom_call.1']
    #allocation5 [shape = 'u8[1048576]{0}', space=vmem, size = 0x100000, scoped, tag = 'input window, operand 10, single buffered']
    #allocation6 [shape = 's32[1]{0}', space=sflag, size = 0x4, scoped, tag = 'scoped memory for tpu_custom_call.1']
    #allocation7 [shape = 'u8[262144]{0}', space=vmem, size = 0x40000, scoped, tag = 'input window, operand 13, single buffered']
    #allocation8 [shape = 'u8[262144]{0}', space=vmem, size = 0x40000, scoped, tag = 'input window, operand 25, single buffered']
    #allocation9 [shape = 's32[1]{0}', space=sflag, size = 0x4, scoped, tag = 'scoped memory for tpu_custom_call.1']
    #allocation10 [shape = 'u8[8192]{0}', space=vmem, size = 0x2000, scoped, tag = 'output window, operand 0, single buffered']
    #allocation11 [shape = 'u8[1024]{0}', space=vmem, size = 0x400, scoped, tag = 'output window, operand 1, single buffered']
    #allocation12 [shape = 's32[1]{0}', space=sflag, size = 0x4, scoped, tag = 'scoped memory for tpu_custom_call.1']
    %65 = vsyncpa [#allocation3], 0
    %66 = vsyncpa [#allocation6], 0
    %67 = vsyncpa [#allocation9], 0
    %68 = vsyncpa [#allocation4], 0
    %69 = vsyncpa [#allocation12], 0
    // Predicated region
    $region2: #{tpu_custom_call.1} parent=1 // pred_check
      _
    $region3: #{tpu_custom_call.1} parent=1 // pred_check_branch
      %71 = sbr.rel (0) target = $region5
    $region4: #{tpu_custom_call.1} parent=1 // pred_region
      _
    $region5: #{tpu_custom_call.1} parent=1 // pred_fallthru
      _
    // Predicated region
    $region6: #{tpu_custom_call.1} parent=1 // pred_check
      _
    $region7: #{tpu_custom_call.1} parent=1 // pred_check_branch
      %73 = sbr.rel (0) target = $region9
    $region8: #{tpu_custom_call.1} parent=1 // pred_region
      _
    $region9: #{tpu_custom_call.1} parent=1 // pred_fallthru
      _
    // Predicated region
    $region10: #{tpu_custom_call.1} parent=1 // pred_check
      _
    $region11: #{tpu_custom_call.1} parent=1 // pred_check_branch
      %75 = sbr.rel (0) target = $region13
    $region12: #{tpu_custom_call.1} parent=1 // pred_region
      _
    $region13: #{tpu_custom_call.1} parent=1 // pred_fallthru
      _
    // Predicated region
    $region14: #{tpu_custom_call.1} parent=1 // pred_check
      _
    $region15: #{tpu_custom_call.1} parent=1 // pred_check_branch
      %77 = sbr.rel (0) target = $region17
    $region16: #{tpu_custom_call.1} parent=1 // pred_region
      _
    $region17: #{tpu_custom_call.1} parent=1 // pred_fallthru
      _
    // Predicated region
    $region18: #{tpu_custom_call.1} parent=1 // pred_check
      _
    $region19: #{tpu_custom_call.1} parent=1 // pred_check_branch
      %79 = sbr.rel (0) target = $region21
    $region20: #{tpu_custom_call.1} parent=1 // pred_region
      _
    $region21: #{tpu_custom_call.1} parent=1 // pred_fallthru
      _
    // Predicated region
    $region22: #{tpu_custom_call.1} parent=1 // pred_check
      _
    $region23: #{tpu_custom_call.1} parent=1 // pred_check_branch
      %81 = sbr.rel (0) target = $region25
    $region24: #{tpu_custom_call.1} parent=1 // pred_region
      _
    $region25: #{tpu_custom_call.1} parent=1 // pred_fallthru
      _
    // Predicated region
    $region26: #{tpu_custom_call.1} parent=1 // pred_check
      _
    $region27: #{tpu_custom_call.1} parent=1 // pred_check_branch
      %83 = sbr.rel (0) target = $region29
    $region28: #{tpu_custom_call.1} parent=1 // pred_region
      _
    $region29: #{tpu_custom_call.1} parent=1 // pred_fallthru
      _
    // Predicated region
    $region30: #{tpu_custom_call.1} parent=1 // pred_check
      _
    $region31: #{tpu_custom_call.1} parent=1 // pred_check_branch
      %85 = sbr.rel (0) target = $region33
    $region32: #{tpu_custom_call.1} parent=1 // pred_region
      %s87 = ssub.s32 8192, 8192
      %88 = vsyncadd [#allocation3], %s87
      %s89 = sshll.u32 [#allocation2], 4
      %s90 = int_to_ptr.vmem [resolvable:$true] %s89
      %95 = dma.hbm_to_vmem [thread:$0]  %s15, 8192, %s90, [#allocation3], 512, 512, 32
    $region33: #{tpu_custom_call.1} parent=1 // pred_fallthru
      _
    // Predicated region
    $region34: #{tpu_custom_call.1} parent=1 // pred_check
      _
    $region35: #{tpu_custom_call.1} parent=1 // pred_check_branch
      %97 = sbr.rel (0) target = $region37
    $region36: #{tpu_custom_call.1} parent=1 // pred_region
      _
    $region37: #{tpu_custom_call.1} parent=1 // pred_fallthru
      _
    // Predicated region
    $region38: #{tpu_custom_call.1} parent=1 // pred_check
      _
    $region39: #{tpu_custom_call.1} parent=1 // pred_check_branch
      %99 = sbr.rel (0) target = $region41
    $region40: #{tpu_custom_call.1} parent=1 // pred_region
      _
    $region41: #{tpu_custom_call.1} parent=1 // pred_fallthru
      _
    // Predicated region
    $region42: #{tpu_custom_call.1} parent=1 // pred_check
      _
    $region43: #{tpu_custom_call.1} parent=1 // pred_check_branch
      %101 = sbr.rel (0) target = $region45
    $region44: #{tpu_custom_call.1} parent=1 // pred_region
      %s103 = ssub.s32 32768, 32768
      %104 = vsyncadd [#allocation6], %s103
      %s105 = sshll.u32 [#allocation5], 4
      %s106 = int_to_ptr.vmem [resolvable:$true] %s105
      %111 = dma.hbm_to_vmem [thread:$0]  %s21, 32768, %s106, [#allocation6], 256, 256, 16
    $region45: #{tpu_custom_call.1} parent=1 // pred_fallthru
      _
    // Predicated region
    $region46: #{tpu_custom_call.1} parent=1 // pred_check
      _
    $region47: #{tpu_custom_call.1} parent=1 // pred_check_branch
      %113 = sbr.rel (0) target = $region49
    $region48: #{tpu_custom_call.1} parent=1 // pred_region
      _
    $region49: #{tpu_custom_call.1} parent=1 // pred_fallthru
      _
    // Predicated region
    $region50: #{tpu_custom_call.1} parent=1 // pred_check
      _
    $region51: #{tpu_custom_call.1} parent=1 // pred_check_branch
      %115 = sbr.rel (0) target = $region53
    $region52: #{tpu_custom_call.1} parent=1 // pred_region
      _
    $region53: #{tpu_custom_call.1} parent=1 // pred_fallthru
      _
    // Predicated region
    $region54: #{tpu_custom_call.1} parent=1 // pred_check
      _
    $region55: #{tpu_custom_call.1} parent=1 // pred_check_branch
      %117 = sbr.rel (0) target = $region57
    $region56: #{tpu_custom_call.1} parent=1 // pred_region
      %s119 = ssub.s32 8192, 8192
      %120 = vsyncadd [#allocation6], %s119
      %s121 = sshll.u32 [#allocation7], 4
      %s122 = int_to_ptr.vmem [resolvable:$true] %s121
      %127 = dma.hbm_to_vmem [thread:$0]  %s27, 8192, %s122, [#allocation6], 128, 128, 8
    $region57: #{tpu_custom_call.1} parent=1 // pred_fallthru
      _
    // Predicated region
    $region58: #{tpu_custom_call.1} parent=1 // pred_check
      _
    $region59: #{tpu_custom_call.1} parent=1 // pred_check_branch
      %129 = sbr.rel (0) target = $region61
    $region60: #{tpu_custom_call.1} parent=1 // pred_region
      _
    $region61: #{tpu_custom_call.1} parent=1 // pred_fallthru
      _
    // Predicated region
    $region62: #{tpu_custom_call.1} parent=1 // pred_check
      _
    $region63: #{tpu_custom_call.1} parent=1 // pred_check_branch
      %131 = sbr.rel (0) target = $region65
    $region64: #{tpu_custom_call.1} parent=1 // pred_region
      _
    $region65: #{tpu_custom_call.1} parent=1 // pred_fallthru
      _
    // Predicated region
    $region66: #{tpu_custom_call.1} parent=1 // pred_check
      _
    $region67: #{tpu_custom_call.1} parent=1 // pred_check_branch
      %133 = sbr.rel (0) target = $region69
    $region68: #{tpu_custom_call.1} parent=1 // pred_region
      _
    $region69: #{tpu_custom_call.1} parent=1 // pred_fallthru
      _
    // Predicated region
    $region70: #{tpu_custom_call.1} parent=1 // pred_check
      _
    $region71: #{tpu_custom_call.1} parent=1 // pred_check_branch
      %135 = sbr.rel (0) target = $region73
    $region72: #{tpu_custom_call.1} parent=1 // pred_region
      _
    $region73: #{tpu_custom_call.1} parent=1 // pred_fallthru
      _
    // Predicated region
    $region74: #{tpu_custom_call.1} parent=1 // pred_check
      _
    $region75: #{tpu_custom_call.1} parent=1 // pred_check_branch
      %137 = sbr.rel (0) target = $region77
    $region76: #{tpu_custom_call.1} parent=1 // pred_region
      _
    $region77: #{tpu_custom_call.1} parent=1 // pred_fallthru
      _
    // Predicated region
    $region78: #{tpu_custom_call.1} parent=1 // pred_check
      _
    $region79: #{tpu_custom_call.1} parent=1 // pred_check_branch
      %139 = sbr.rel (0) target = $region81
    $region80: #{tpu_custom_call.1} parent=1 // pred_region
      _
    $region81: #{tpu_custom_call.1} parent=1 // pred_fallthru
      _
    // Predicated region
    $region82: #{tpu_custom_call.1} parent=1 // pred_check
      _
    $region83: #{tpu_custom_call.1} parent=1 // pred_check_branch
      %141 = sbr.rel (0) target = $region85
    $region84: #{tpu_custom_call.1} parent=1 // pred_region
      _
    $region85: #{tpu_custom_call.1} parent=1 // pred_fallthru
      _
    // Predicated region
    $region86: #{tpu_custom_call.1} parent=1 // pred_check
      _
    $region87: #{tpu_custom_call.1} parent=1 // pred_check_branch
      %143 = sbr.rel (0) target = $region89
    $region88: #{tpu_custom_call.1} parent=1 // pred_region
      _
    $region89: #{tpu_custom_call.1} parent=1 // pred_fallthru
      _
    // Predicated region
    $region90: #{tpu_custom_call.1} parent=1 // pred_check
      _
    $region91: #{tpu_custom_call.1} parent=1 // pred_check_branch
      %145 = sbr.rel (0) target = $region93
    $region92: #{tpu_custom_call.1} parent=1 // pred_region
      _
    $region93: #{tpu_custom_call.1} parent=1 // pred_fallthru
      _
    // Predicated region
    $region94: #{tpu_custom_call.1} parent=1 // pred_check
      _
    $region95: #{tpu_custom_call.1} parent=1 // pred_check_branch
      %147 = sbr.rel (0) target = $region97
    $region96: #{tpu_custom_call.1} parent=1 // pred_region
      _
    $region97: #{tpu_custom_call.1} parent=1 // pred_fallthru
      _
    // Predicated region
    $region98: #{tpu_custom_call.1} parent=1 // pred_check
      _
    $region99: #{tpu_custom_call.1} parent=1 // pred_check_branch
      %149 = sbr.rel (0) target = $region101
    $region100: #{tpu_custom_call.1} parent=1 // pred_region
      _
    $region101: #{tpu_custom_call.1} parent=1 // pred_fallthru
      _
    // Predicated region
    $region102: #{tpu_custom_call.1} parent=1 // pred_check
      _
    $region103: #{tpu_custom_call.1} parent=1 // pred_check_branch
      %151 = sbr.rel (0) target = $region105
    $region104: #{tpu_custom_call.1} parent=1 // pred_region
      %s153 = ssub.s32 8192, 8192
      %154 = vsyncadd [#allocation9], %s153
      %s155 = sshll.u32 [#allocation8], 4
      %s156 = int_to_ptr.vmem [resolvable:$true] %s155
      %161 = dma.hbm_to_vmem [thread:$0]  %s51, 8192, %s156, [#allocation9], 512, 512, 32
    $region105: #{tpu_custom_call.1} parent=1 // pred_fallthru
      _
    // Predicated region
    $region106: #{tpu_custom_call.1} parent=1 // pred_check
      _
    $region107: #{tpu_custom_call.1} parent=1 // pred_check_branch
      %163 = sbr.rel (0) target = $region109
    $region108: #{tpu_custom_call.1} parent=1 // pred_region
      _
    $region109: #{tpu_custom_call.1} parent=1 // pred_fallthru
      _
    // Predicated region
    $region110: #{tpu_custom_call.1} parent=1 // pred_check
      _
    $region111: #{tpu_custom_call.1} parent=1 // pred_check_branch
      %165 = sbr.rel (0) target = $region113
    $region112: #{tpu_custom_call.1} parent=1 // pred_region
      _
    $region113: #{tpu_custom_call.1} parent=1 // pred_fallthru
      _
    // Predicated region
    $region114: #{tpu_custom_call.1} parent=1 // pred_check
      _
    $region115: #{tpu_custom_call.1} parent=1 // pred_check_branch
      %167 = sbr.rel (0) target = $region117
    $region116: #{tpu_custom_call.1} parent=1 // pred_region
      %168 = dma.done [#allocation3], 8192
    $region117: #{tpu_custom_call.1} parent=1 // pred_fallthru
      _
    // Predicated region
    $region118: #{tpu_custom_call.1} parent=1 // pred_check
      _
    $region119: #{tpu_custom_call.1} parent=1 // pred_check_branch
      %170 = sbr.rel (0) target = $region121
    $region120: #{tpu_custom_call.1} parent=1 // pred_region
      %171 = dma.done [#allocation6], 32768
    $region121: #{tpu_custom_call.1} parent=1 // pred_fallthru
      _
    // Predicated region
    $region122: #{tpu_custom_call.1} parent=1 // pred_check
      _
    $region123: #{tpu_custom_call.1} parent=1 // pred_check_branch
      %173 = sbr.rel (0) target = $region125
    $region124: #{tpu_custom_call.1} parent=1 // pred_region
      %174 = dma.done [#allocation6], 8192
    $region125: #{tpu_custom_call.1} parent=1 // pred_fallthru
      _
    // Predicated region
    $region126: #{tpu_custom_call.1} parent=1 // pred_check
      _
    $region127: #{tpu_custom_call.1} parent=1 // pred_check_branch
      %176 = sbr.rel (0) target = $region129
    $region128: #{tpu_custom_call.1} parent=1 // pred_region
      %177 = dma.done [#allocation9], 8192
    $region129: #{tpu_custom_call.1} parent=1 // pred_fallthru
      _
    %v179 = vld [vmem:[%s3] sm:$0x7]
    %v180 = vld [vmem:[%s5] sm:$0x1]
    %v181 = vld [vmem:[%s7] sm:$0x1]
    %v182 = vld [vmem:[%s9] sm:$0xf]
    %v183 = vld [vmem:[%s9 + $0x4] sm:$0xf]
    %v184 = vld [vmem:[%s9 + $0x8] sm:$0xf]
    %v185 = vld [vmem:[%s9 + $0xc] sm:$0xf]
    %v186 = vld [vmem:[%s9 + $0x10] sm:$0xf]
    %v187 = vld [vmem:[%s9 + $0x14] sm:$0xf]
    %v188 = vld [vmem:[%s9 + $0x18] sm:$0xf]
    %v189 = vld [vmem:[%s9 + $0x1c] sm:$0xf]
    %v190 = vld [vmem:[%s11] sm:$0x1]
    %v191 = vld [vmem:[%s13] sm:$0x1]
    %v192 = vld [vmem:[#allocation2] sm:$0xff]
    %v193 = vld [vmem:[#allocation2 + $0x8] sm:$0xff]
    %v194 = vld [vmem:[#allocation2 + $0x10] sm:$0xff]
    %v195 = vld [vmem:[#allocation2 + $0x18] sm:$0xff]
    %v196 = vld [vmem:[#allocation2 + $0x20] sm:$0xff]
    %v197 = vld [vmem:[#allocation2 + $0x28] sm:$0xff]
    %v198 = vld [vmem:[#allocation2 + $0x30] sm:$0xff]
    %v199 = vld [vmem:[#allocation2 + $0x38] sm:$0xff]
    %v200 = vld [vmem:[#allocation2 + $0x40] sm:$0xff]
    %v201 = vld [vmem:[#allocation2 + $0x48] sm:$0xff]
    %v202 = vld [vmem:[#allocation2 + $0x50] sm:$0xff]
    %v203 = vld [vmem:[#allocation2 + $0x58] sm:$0xff]
    %v204 = vld [vmem:[#allocation2 + $0x60] sm:$0xff]
    %v205 = vld [vmem:[#allocation2 + $0x68] sm:$0xff]
    %v206 = vld [vmem:[#allocation2 + $0x70] sm:$0xff]
    %v207 = vld [vmem:[#allocation2 + $0x78] sm:$0xff]
    %v208 = vld [vmem:[#allocation2 + $0x80] sm:$0xff]
    %v209 = vld [vmem:[#allocation2 + $0x88] sm:$0xff]
    %v210 = vld [vmem:[#allocation2 + $0x90] sm:$0xff]
    %v211 = vld [vmem:[#allocation2 + $0x98] sm:$0xff]
    %v212 = vld [vmem:[#allocation2 + $0xa0] sm:$0xff]
    %v213 = vld [vmem:[#allocation2 + $0xa8] sm:$0xff]
    %v214 = vld [vmem:[#allocation2 + $0xb0] sm:$0xff]
    %v215 = vld [vmem:[#allocation2 + $0xb8] sm:$0xff]
    %v216 = vld [vmem:[#allocation2 + $0xc0] sm:$0xff]
    %v217 = vld [vmem:[#allocation2 + $0xc8] sm:$0xff]
    %v218 = vld [vmem:[#allocation2 + $0xd0] sm:$0xff]
    %v219 = vld [vmem:[#allocation2 + $0xd8] sm:$0xff]
    %v220 = vld [vmem:[#allocation2 + $0xe0] sm:$0xff]
    %v221 = vld [vmem:[#allocation2 + $0xe8] sm:$0xff]
    %v222 = vld [vmem:[#allocation2 + $0xf0] sm:$0xff]
    %v223 = vld [vmem:[#allocation2 + $0xf8] sm:$0xff]
    %v224 = vld [vmem:[#allocation2 + $0x100] sm:$0xff]
    %v225 = vld [vmem:[#allocation2 + $0x108] sm:$0xff]
    %v226 = vld [vmem:[#allocation2 + $0x110] sm:$0xff]
    %v227 = vld [vmem:[#allocation2 + $0x118] sm:$0xff]
    %v228 = vld [vmem:[#allocation2 + $0x120] sm:$0xff]
    %v229 = vld [vmem:[#allocation2 + $0x128] sm:$0xff]
    %v230 = vld [vmem:[#allocation2 + $0x130] sm:$0xff]
    %v231 = vld [vmem:[#allocation2 + $0x138] sm:$0xff]
    %v232 = vld [vmem:[#allocation2 + $0x140] sm:$0xff]
    %v233 = vld [vmem:[#allocation2 + $0x148] sm:$0xff]
    %v234 = vld [vmem:[#allocation2 + $0x150] sm:$0xff]
    %v235 = vld [vmem:[#allocation2 + $0x158] sm:$0xff]
    %v236 = vld [vmem:[#allocation2 + $0x160] sm:$0xff]
    %v237 = vld [vmem:[#allocation2 + $0x168] sm:$0xff]
    %v238 = vld [vmem:[#allocation2 + $0x170] sm:$0xff]
    %v239 = vld [vmem:[#allocation2 + $0x178] sm:$0xff]
    %v240 = vld [vmem:[#allocation2 + $0x180] sm:$0xff]
    %v241 = vld [vmem:[#allocation2 + $0x188] sm:$0xff]
    %v242 = vld [vmem:[#allocation2 + $0x190] sm:$0xff]
    %v243 = vld [vmem:[#allocation2 + $0x198] sm:$0xff]
    %v244 = vld [vmem:[#allocation2 + $0x1a0] sm:$0xff]
    %v245 = vld [vmem:[#allocation2 + $0x1a8] sm:$0xff]
    %v246 = vld [vmem:[#allocation2 + $0x1b0] sm:$0xff]
    %v247 = vld [vmem:[#allocation2 + $0x1b8] sm:$0xff]
    %v248 = vld [vmem:[#allocation2 + $0x1c0] sm:$0xff]
    %v249 = vld [vmem:[#allocation2 + $0x1c8] sm:$0xff]
    %v250 = vld [vmem:[#allocation2 + $0x1d0] sm:$0xff]
    %v251 = vld [vmem:[#allocation2 + $0x1d8] sm:$0xff]
    %v252 = vld [vmem:[#allocation2 + $0x1e0] sm:$0xff]
    %v253 = vld [vmem:[#allocation2 + $0x1e8] sm:$0xff]
    %v254 = vld [vmem:[#allocation2 + $0x1f0] sm:$0xff]
    %v255 = vld [vmem:[#allocation2 + $0x1f8] sm:$0xff]
    %v256 = vld [vmem:[%s17] sm:$0xff]
    %v257 = vld [vmem:[%s19] sm:$0xff]
    %v258 = vld [vmem:[#allocation5] sm:$0xff]
    %v259 = vld [vmem:[#allocation5 + $0x8] sm:$0xff]
    %v260 = vld [vmem:[#allocation5 + $0x10] sm:$0xff]
    %v261 = vld [vmem:[#allocation5 + $0x18] sm:$0xff]
    %v262 = vld [vmem:[#allocation5 + $0x20] sm:$0xff]
    %v263 = vld [vmem:[#allocation5 + $0x28] sm:$0xff]
    %v264 = vld [vmem:[#allocation5 + $0x30] sm:$0xff]
    %v265 = vld [vmem:[#allocation5 + $0x38] sm:$0xff]
    %v266 = vld [vmem:[#allocation5 + $0x40] sm:$0xff]
    %v267 = vld [vmem:[#allocation5 + $0x48] sm:$0xff]
    %v268 = vld [vmem:[#allocation5 + $0x50] sm:$0xff]
    %v269 = vld [vmem:[#allocation5 + $0x58] sm:$0xff]
    %v270 = vld [vmem:[#allocation5 + $0x60] sm:$0xff]
    %v271 = vld [vmem:[#allocation5 + $0x68] sm:$0xff]
    %v272 = vld [vmem:[#allocation5 + $0x70] sm:$0xff]
    %v273 = vld [vmem:[#allocation5 + $0x78] sm:$0xff]
    %v274 = vld [vmem:[#allocation5 + $0x80] sm:$0xff]
    %v275 = vld [vmem:[#allocation5 + $0x88] sm:$0xff]
    %v276 = vld [vmem:[#allocation5 + $0x90] sm:$0xff]
    %v277 = vld [vmem:[#allocation5 + $0x98] sm:$0xff]
    %v278 = vld [vmem:[#allocation5 + $0xa0] sm:$0xff]
    %v279 = vld [vmem:[#allocation5 + $0xa8] sm:$0xff]
    %v280 = vld [vmem:[#allocation5 + $0xb0] sm:$0xff]
    %v281 = vld [vmem:[#allocation5 + $0xb8] sm:$0xff]
    %v282 = vld [vmem:[#allocation5 + $0xc0] sm:$0xff]
    %v283 = vld [vmem:[#allocation5 + $0xc8] sm:$0xff]
    %v284 = vld [vmem:[#allocation5 + $0xd0] sm:$0xff]
    %v285 = vld [vmem:[#allocation5 + $0xd8] sm:$0xff]
    %v286 = vld [vmem:[#allocation5 + $0xe0] sm:$0xff]
    %v287 = vld [vmem:[#allocation5 + $0xe8] sm:$0xff]
    %v288 = vld [vmem:[#allocation5 + $0xf0] sm:$0xff]
    %v289 = vld [vmem:[#allocation5 + $0xf8] sm:$0xff]
    %v290 = vld [vmem:[#allocation5 + $0x100] sm:$0xff]
    %v291 = vld [vmem:[#allocation5 + $0x108] sm:$0xff]
    %v292 = vld [vmem:[#allocation5 + $0x110] sm:$0xff]
    %v293 = vld [vmem:[#allocation5 + $0x118] sm:$0xff]
    %v294 = vld [vmem:[#allocation5 + $0x120] sm:$0xff]
    %v295 = vld [vmem:[#allocation5 + $0x128] sm:$0xff]
    %v296 = vld [vmem:[#allocation5 + $0x130] sm:$0xff]
    %v297 = vld [vmem:[#allocation5 + $0x138] sm:$0xff]
    %v298 = vld [vmem:[#allocation5 + $0x140] sm:$0xff]
    %v299 = vld [vmem:[#allocation5 + $0x148] sm:$0xff]
    %v300 = vld [vmem:[#allocation5 + $0x150] sm:$0xff]
    %v301 = vld [vmem:[#allocation5 + $0x158] sm:$0xff]
    %v302 = vld [vmem:[#allocation5 + $0x160] sm:$0xff]
    %v303 = vld [vmem:[#allocation5 + $0x168] sm:$0xff]
    %v304 = vld [vmem:[#allocation5 + $0x170] sm:$0xff]
    %v305 = vld [vmem:[#allocation5 + $0x178] sm:$0xff]
    %v306 = vld [vmem:[#allocation5 + $0x180] sm:$0xff]
    %v307 = vld [vmem:[#allocation5 + $0x188] sm:$0xff]
    %v308 = vld [vmem:[#allocation5 + $0x190] sm:$0xff]
    %v309 = vld [vmem:[#allocation5 + $0x198] sm:$0xff]
    %v310 = vld [vmem:[#allocation5 + $0x1a0] sm:$0xff]
    %v311 = vld [vmem:[#allocation5 + $0x1a8] sm:$0xff]
    %v312 = vld [vmem:[#allocation5 + $0x1b0] sm:$0xff]
    %v313 = vld [vmem:[#allocation5 + $0x1b8] sm:$0xff]
    %v314 = vld [vmem:[#allocation5 + $0x1c0] sm:$0xff]
    %v315 = vld [vmem:[#allocation5 + $0x1c8] sm:$0xff]
    %v316 = vld [vmem:[#allocation5 + $0x1d0] sm:$0xff]
    %v317 = vld [vmem:[#allocation5 + $0x1d8] sm:$0xff]
    %v318 = vld [vmem:[#allocation5 + $0x1e0] sm:$0xff]
    %v319 = vld [vmem:[#allocation5 + $0x1e8] sm:$0xff]
    %v320 = vld [vmem:[#allocation5 + $0x1f0] sm:$0xff]
    %v321 = vld [vmem:[#allocation5 + $0x1f8] sm:$0xff]
    %v322 = vld [vmem:[#allocation5 + $0x200] sm:$0xff]
    %v323 = vld [vmem:[#allocation5 + $0x208] sm:$0xff]
    %v324 = vld [vmem:[#allocation5 + $0x210] sm:$0xff]
    %v325 = vld [vmem:[#allocation5 + $0x218] sm:$0xff]
    %v326 = vld [vmem:[#allocation5 + $0x220] sm:$0xff]
    %v327 = vld [vmem:[#allocation5 + $0x228] sm:$0xff]
    %v328 = vld [vmem:[#allocation5 + $0x230] sm:$0xff]
    %v329 = vld [vmem:[#allocation5 + $0x238] sm:$0xff]
    %v330 = vld [vmem:[#allocation5 + $0x240] sm:$0xff]
    %v331 = vld [vmem:[#allocation5 + $0x248] sm:$0xff]
    %v332 = vld [vmem:[#allocation5 + $0x250] sm:$0xff]
    %v333 = vld [vmem:[#allocation5 + $0x258] sm:$0xff]
    %v334 = vld [vmem:[#allocation5 + $0x260] sm:$0xff]
    %v335 = vld [vmem:[#allocation5 + $0x268] sm:$0xff]
    %v336 = vld [vmem:[#allocation5 + $0x270] sm:$0xff]
    %v337 = vld [vmem:[#allocation5 + $0x278] sm:$0xff]
    %v338 = vld [vmem:[#allocation5 + $0x280] sm:$0xff]
    %v339 = vld [vmem:[#allocation5 + $0x288] sm:$0xff]
    %v340 = vld [vmem:[#allocation5 + $0x290] sm:$0xff]
    %v341 = vld [vmem:[#allocation5 + $0x298] sm:$0xff]
    %v342 = vld [vmem:[#allocation5 + $0x2a0] sm:$0xff]
    %v343 = vld [vmem:[#allocation5 + $0x2a8] sm:$0xff]
    %v344 = vld [vmem:[#allocation5 + $0x2b0] sm:$0xff]
    %v345 = vld [vmem:[#allocation5 + $0x2b8] sm:$0xff]
    %v346 = vld [vmem:[#allocation5 + $0x2c0] sm:$0xff]
    %v347 = vld [vmem:[#allocation5 + $0x2c8] sm:$0xff]
    %v348 = vld [vmem:[#allocation5 + $0x2d0] sm:$0xff]
    %v349 = vld [vmem:[#allocation5 + $0x2d8] sm:$0xff]
    %v350 = vld [vmem:[#allocation5 + $0x2e0] sm:$0xff]
    %v351 = vld [vmem:[#allocation5 + $0x2e8] sm:$0xff]
    %v352 = vld [vmem:[#allocation5 + $0x2f0] sm:$0xff]
    %v353 = vld [vmem:[#allocation5 + $0x2f8] sm:$0xff]
    %v354 = vld [vmem:[#allocation5 + $0x300] sm:$0xff]
    %v355 = vld [vmem:[#allocation5 + $0x308] sm:$0xff]
    %v356 = vld [vmem:[#allocation5 + $0x310] sm:$0xff]
    %v357 = vld [vmem:[#allocation5 + $0x318] sm:$0xff]
    %v358 = vld [vmem:[#allocation5 + $0x320] sm:$0xff]
    %v359 = vld [vmem:[#allocation5 + $0x328] sm:$0xff]
    %v360 = vld [vmem:[#allocation5 + $0x330] sm:$0xff]
    %v361 = vld [vmem:[#allocation5 + $0x338] sm:$0xff]
    %v362 = vld [vmem:[#allocation5 + $0x340] sm:$0xff]
    %v363 = vld [vmem:[#allocation5 + $0x348] sm:$0xff]
    %v364 = vld [vmem:[#allocation5 + $0x350] sm:$0xff]
    %v365 = vld [vmem:[#allocation5 + $0x358] sm:$0xff]
    %v366 = vld [vmem:[#allocation5 + $0x360] sm:$0xff]
    %v367 = vld [vmem:[#allocation5 + $0x368] sm:$0xff]
    %v368 = vld [vmem:[#allocation5 + $0x370] sm:$0xff]
    %v369 = vld [vmem:[#allocation5 + $0x378] sm:$0xff]
    %v370 = vld [vmem:[#allocation5 + $0x380] sm:$0xff]
    %v371 = vld [vmem:[#allocation5 + $0x388] sm:$0xff]
    %v372 = vld [vmem:[#allocation5 + $0x390] sm:$0xff]
    %v373 = vld [vmem:[#allocation5 + $0x398] sm:$0xff]
    %v374 = vld [vmem:[#allocation5 + $0x3a0] sm:$0xff]
    %v375 = vld [vmem:[#allocation5 + $0x3a8] sm:$0xff]
    %v376 = vld [vmem:[#allocation5 + $0x3b0] sm:$0xff]
    %v377 = vld [vmem:[#allocation5 + $0x3b8] sm:$0xff]
    %v378 = vld [vmem:[#allocation5 + $0x3c0] sm:$0xff]
    %v379 = vld [vmem:[#allocation5 + $0x3c8] sm:$0xff]
    %v380 = vld [vmem:[#allocation5 + $0x3d0] sm:$0xff]
    %v381 = vld [vmem:[#allocation5 + $0x3d8] sm:$0xff]
    %v382 = vld [vmem:[#allocation5 + $0x3e0] sm:$0xff]
    %v383 = vld [vmem:[#allocation5 + $0x3e8] sm:$0xff]
    %v384 = vld [vmem:[#allocation5 + $0x3f0] sm:$0xff]
    %v385 = vld [vmem:[#allocation5 + $0x3f8] sm:$0xff]
    %v386 = vld [vmem:[#allocation5 + $0x400] sm:$0xff]
    %v387 = vld [vmem:[#allocation5 + $0x408] sm:$0xff]
    %v388 = vld [vmem:[#allocation5 + $0x410] sm:$0xff]
    %v389 = vld [vmem:[#allocation5 + $0x418] sm:$0xff]
    %v390 = vld [vmem:[#allocation5 + $0x420] sm:$0xff]
    %v391 = vld [vmem:[#allocation5 + $0x428] sm:$0xff]
    %v392 = vld [vmem:[#allocation5 + $0x430] sm:$0xff]
    %v393 = vld [vmem:[#allocation5 + $0x438] sm:$0xff]
    %v394 = vld [vmem:[#allocation5 + $0x440] sm:$0xff]
    %v395 = vld [vmem:[#allocation5 + $0x448] sm:$0xff]
    %v396 = vld [vmem:[#allocation5 + $0x450] sm:$0xff]
    %v397 = vld [vmem:[#allocation5 + $0x458] sm:$0xff]
    %v398 = vld [vmem:[#allocation5 + $0x460] sm:$0xff]
    %v399 = vld [vmem:[#allocation5 + $0x468] sm:$0xff]
    %v400 = vld [vmem:[#allocation5 + $0x470] sm:$0xff]
    %v401 = vld [vmem:[#allocation5 + $0x478] sm:$0xff]
    %v402 = vld [vmem:[#allocation5 + $0x480] sm:$0xff]
    %v403 = vld [vmem:[#allocation5 + $0x488] sm:$0xff]
    %v404 = vld [vmem:[#allocation5 + $0x490] sm:$0xff]
    %v405 = vld [vmem:[#allocation5 + $0x498] sm:$0xff]
    %v406 = vld [vmem:[#allocation5 + $0x4a0] sm:$0xff]
    %v407 = vld [vmem:[#allocation5 + $0x4a8] sm:$0xff]
    %v408 = vld [vmem:[#allocation5 + $0x4b0] sm:$0xff]
    %v409 = vld [vmem:[#allocation5 + $0x4b8] sm:$0xff]
    %v410 = vld [vmem:[#allocation5 + $0x4c0] sm:$0xff]
    %v411 = vld [vmem:[#allocation5 + $0x4c8] sm:$0xff]
    %v412 = vld [vmem:[#allocation5 + $0x4d0] sm:$0xff]
    %v413 = vld [vmem:[#allocation5 + $0x4d8] sm:$0xff]
    %v414 = vld [vmem:[#allocation5 + $0x4e0] sm:$0xff]
    %v415 = vld [vmem:[#allocation5 + $0x4e8] sm:$0xff]
    %v416 = vld [vmem:[#allocation5 + $0x4f0] sm:$0xff]
    %v417 = vld [vmem:[#allocation5 + $0x4f8] sm:$0xff]
    %v418 = vld [vmem:[#allocation5 + $0x500] sm:$0xff]
    %v419 = vld [vmem:[#allocation5 + $0x508] sm:$0xff]
    %v420 = vld [vmem:[#allocation5 + $0x510] sm:$0xff]
    %v421 = vld [vmem:[#allocation5 + $0x518] sm:$0xff]
    %v422 = vld [vmem:[#allocation5 + $0x520] sm:$0xff]
    %v423 = vld [vmem:[#allocation5 + $0x528] sm:$0xff]
    %v424 = vld [vmem:[#allocation5 + $0x530] sm:$0xff]
    %v425 = vld [vmem:[#allocation5 + $0x538] sm:$0xff]
    %v426 = vld [vmem:[#allocation5 + $0x540] sm:$0xff]
    %v427 = vld [vmem:[#allocation5 + $0x548] sm:$0xff]
    %v428 = vld [vmem:[#allocation5 + $0x550] sm:$0xff]
    %v429 = vld [vmem:[#allocation5 + $0x558] sm:$0xff]
    %v430 = vld [vmem:[#allocation5 + $0x560] sm:$0xff]
    %v431 = vld [vmem:[#allocation5 + $0x568] sm:$0xff]
    %v432 = vld [vmem:[#allocation5 + $0x570] sm:$0xff]
    %v433 = vld [vmem:[#allocation5 + $0x578] sm:$0xff]
    %v434 = vld [vmem:[#allocation5 + $0x580] sm:$0xff]
    %v435 = vld [vmem:[#allocation5 + $0x588] sm:$0xff]
    %v436 = vld [vmem:[#allocation5 + $0x590] sm:$0xff]
    %v437 = vld [vmem:[#allocation5 + $0x598] sm:$0xff]
    %v438 = vld [vmem:[#allocation5 + $0x5a0] sm:$0xff]
    %v439 = vld [vmem:[#allocation5 + $0x5a8] sm:$0xff]
    %v440 = vld [vmem:[#allocation5 + $0x5b0] sm:$0xff]
    %v441 = vld [vmem:[#allocation5 + $0x5b8] sm:$0xff]
    %v442 = vld [vmem:[#allocation5 + $0x5c0] sm:$0xff]
    %v443 = vld [vmem:[#allocation5 + $0x5c8] sm:$0xff]
    %v444 = vld [vmem:[#allocation5 + $0x5d0] sm:$0xff]
    %v445 = vld [vmem:[#allocation5 + $0x5d8] sm:$0xff]
    %v446 = vld [vmem:[#allocation5 + $0x5e0] sm:$0xff]
    %v447 = vld [vmem:[#allocation5 + $0x5e8] sm:$0xff]
    %v448 = vld [vmem:[#allocation5 + $0x5f0] sm:$0xff]
    %v449 = vld [vmem:[#allocation5 + $0x5f8] sm:$0xff]
    %v450 = vld [vmem:[#allocation5 + $0x600] sm:$0xff]
    %v451 = vld [vmem:[#allocation5 + $0x608] sm:$0xff]
    %v452 = vld [vmem:[#allocation5 + $0x610] sm:$0xff]
    %v453 = vld [vmem:[#allocation5 + $0x618] sm:$0xff]
    %v454 = vld [vmem:[#allocation5 + $0x620] sm:$0xff]
    %v455 = vld [vmem:[#allocation5 + $0x628] sm:$0xff]
    %v456 = vld [vmem:[#allocation5 + $0x630] sm:$0xff]
    %v457 = vld [vmem:[#allocation5 + $0x638] sm:$0xff]
    %v458 = vld [vmem:[#allocation5 + $0x640] sm:$0xff]
    %v459 = vld [vmem:[#allocation5 + $0x648] sm:$0xff]
    %v460 = vld [vmem:[#allocation5 + $0x650] sm:$0xff]
    %v461 = vld [vmem:[#allocation5 + $0x658] sm:$0xff]
    %v462 = vld [vmem:[#allocation5 + $0x660] sm:$0xff]
    %v463 = vld [vmem:[#allocation5 + $0x668] sm:$0xff]
    %v464 = vld [vmem:[#allocation5 + $0x670] sm:$0xff]
    %v465 = vld [vmem:[#allocation5 + $0x678] sm:$0xff]
    %v466 = vld [vmem:[#allocation5 + $0x680] sm:$0xff]
    %v467 = vld [vmem:[#allocation5 + $0x688] sm:$0xff]
    %v468 = vld [vmem:[#allocation5 + $0x690] sm:$0xff]
    %v469 = vld [vmem:[#allocation5 + $0x698] sm:$0xff]
    %v470 = vld [vmem:[#allocation5 + $0x6a0] sm:$0xff]
    %v471 = vld [vmem:[#allocation5 + $0x6a8] sm:$0xff]
    %v472 = vld [vmem:[#allocation5 + $0x6b0] sm:$0xff]
    %v473 = vld [vmem:[#allocation5 + $0x6b8] sm:$0xff]
    %v474 = vld [vmem:[#allocation5 + $0x6c0] sm:$0xff]
    %v475 = vld [vmem:[#allocation5 + $0x6c8] sm:$0xff]
    %v476 = vld [vmem:[#allocation5 + $0x6d0] sm:$0xff]
    %v477 = vld [vmem:[#allocation5 + $0x6d8] sm:$0xff]
    %v478 = vld [vmem:[#allocation5 + $0x6e0] sm:$0xff]
    %v479 = vld [vmem:[#allocation5 + $0x6e8] sm:$0xff]
    %v480 = vld [vmem:[#allocation5 + $0x6f0] sm:$0xff]
    %v481 = vld [vmem:[#allocation5 + $0x6f8] sm:$0xff]
    %v482 = vld [vmem:[#allocation5 + $0x700] sm:$0xff]
    %v483 = vld [vmem:[#allocation5 + $0x708] sm:$0xff]
    %v484 = vld [vmem:[#allocation5 + $0x710] sm:$0xff]
    %v485 = vld [vmem:[#allocation5 + $0x718] sm:$0xff]
    %v486 = vld [vmem:[#allocation5 + $0x720] sm:$0xff]
    %v487 = vld [vmem:[#allocation5 + $0x728] sm:$0xff]
    %v488 = vld [vmem:[#allocation5 + $0x730] sm:$0xff]
    %v489 = vld [vmem:[#allocation5 + $0x738] sm:$0xff]
    %v490 = vld [vmem:[#allocation5 + $0x740] sm:$0xff]
    %v491 = vld [vmem:[#allocation5 + $0x748] sm:$0xff]
    %v492 = vld [vmem:[#allocation5 + $0x750] sm:$0xff]
    %v493 = vld [vmem:[#allocation5 + $0x758] sm:$0xff]
    %v494 = vld [vmem:[#allocation5 + $0x760] sm:$0xff]
    %v495 = vld [vmem:[#allocation5 + $0x768] sm:$0xff]
    %v496 = vld [vmem:[#allocation5 + $0x770] sm:$0xff]
    %v497 = vld [vmem:[#allocation5 + $0x778] sm:$0xff]
    %v498 = vld [vmem:[#allocation5 + $0x780] sm:$0xff]
    %v499 = vld [vmem:[#allocation5 + $0x788] sm:$0xff]
    %v500 = vld [vmem:[#allocation5 + $0x790] sm:$0xff]
    %v501 = vld [vmem:[#allocation5 + $0x798] sm:$0xff]
    %v502 = vld [vmem:[#allocation5 + $0x7a0] sm:$0xff]
    %v503 = vld [vmem:[#allocation5 + $0x7a8] sm:$0xff]
    %v504 = vld [vmem:[#allocation5 + $0x7b0] sm:$0xff]
    %v505 = vld [vmem:[#allocation5 + $0x7b8] sm:$0xff]
    %v506 = vld [vmem:[#allocation5 + $0x7c0] sm:$0xff]
    %v507 = vld [vmem:[#allocation5 + $0x7c8] sm:$0xff]
    %v508 = vld [vmem:[#allocation5 + $0x7d0] sm:$0xff]
    %v509 = vld [vmem:[#allocation5 + $0x7d8] sm:$0xff]
    %v510 = vld [vmem:[#allocation5 + $0x7e0] sm:$0xff]
    %v511 = vld [vmem:[#allocation5 + $0x7e8] sm:$0xff]
    %v512 = vld [vmem:[#allocation5 + $0x7f0] sm:$0xff]
    %v513 = vld [vmem:[#allocation5 + $0x7f8] sm:$0xff]
    %v514 = vld [vmem:[%s23] sm:$0xf]
    %v515 = vld [vmem:[%s25] sm:$0xf]
    %v516 = vld [vmem:[#allocation7] sm:$0xff]
    %v517 = vld [vmem:[#allocation7 + $0x8] sm:$0xff]
    %v518 = vld [vmem:[#allocation7 + $0x10] sm:$0xff]
    %v519 = vld [vmem:[#allocation7 + $0x18] sm:$0xff]
    %v520 = vld [vmem:[#allocation7 + $0x20] sm:$0xff]
    %v521 = vld [vmem:[#allocation7 + $0x28] sm:$0xff]
    %v522 = vld [vmem:[#allocation7 + $0x30] sm:$0xff]
    %v523 = vld [vmem:[#allocation7 + $0x38] sm:$0xff]
    %v524 = vld [vmem:[#allocation7 + $0x40] sm:$0xff]
    %v525 = vld [vmem:[#allocation7 + $0x48] sm:$0xff]
    %v526 = vld [vmem:[#allocation7 + $0x50] sm:$0xff]
    %v527 = vld [vmem:[#allocation7 + $0x58] sm:$0xff]
    %v528 = vld [vmem:[#allocation7 + $0x60] sm:$0xff]
    %v529 = vld [vmem:[#allocation7 + $0x68] sm:$0xff]
    %v530 = vld [vmem:[#allocation7 + $0x70] sm:$0xff]
    %v531 = vld [vmem:[#allocation7 + $0x78] sm:$0xff]
    %v532 = vld [vmem:[#allocation7 + $0x80] sm:$0xff]
    %v533 = vld [vmem:[#allocation7 + $0x88] sm:$0xff]
    %v534 = vld [vmem:[#allocation7 + $0x90] sm:$0xff]
    %v535 = vld [vmem:[#allocation7 + $0x98] sm:$0xff]
    %v536 = vld [vmem:[#allocation7 + $0xa0] sm:$0xff]
    %v537 = vld [vmem:[#allocation7 + $0xa8] sm:$0xff]
    %v538 = vld [vmem:[#allocation7 + $0xb0] sm:$0xff]
    %v539 = vld [vmem:[#allocation7 + $0xb8] sm:$0xff]
    %v540 = vld [vmem:[#allocation7 + $0xc0] sm:$0xff]
    %v541 = vld [vmem:[#allocation7 + $0xc8] sm:$0xff]
    %v542 = vld [vmem:[#allocation7 + $0xd0] sm:$0xff]
    %v543 = vld [vmem:[#allocation7 + $0xd8] sm:$0xff]
    %v544 = vld [vmem:[#allocation7 + $0xe0] sm:$0xff]
    %v545 = vld [vmem:[#allocation7 + $0xe8] sm:$0xff]
    %v546 = vld [vmem:[#allocation7 + $0xf0] sm:$0xff]
    %v547 = vld [vmem:[#allocation7 + $0xf8] sm:$0xff]
    %v548 = vld [vmem:[#allocation7 + $0x100] sm:$0xff]
    %v549 = vld [vmem:[#allocation7 + $0x108] sm:$0xff]
    %v550 = vld [vmem:[#allocation7 + $0x110] sm:$0xff]
    %v551 = vld [vmem:[#allocation7 + $0x118] sm:$0xff]
    %v552 = vld [vmem:[#allocation7 + $0x120] sm:$0xff]
    %v553 = vld [vmem:[#allocation7 + $0x128] sm:$0xff]
    %v554 = vld [vmem:[#allocation7 + $0x130] sm:$0xff]
    %v555 = vld [vmem:[#allocation7 + $0x138] sm:$0xff]
    %v556 = vld [vmem:[#allocation7 + $0x140] sm:$0xff]
    %v557 = vld [vmem:[#allocation7 + $0x148] sm:$0xff]
    %v558 = vld [vmem:[#allocation7 + $0x150] sm:$0xff]
    %v559 = vld [vmem:[#allocation7 + $0x158] sm:$0xff]
    %v560 = vld [vmem:[#allocation7 + $0x160] sm:$0xff]
    %v561 = vld [vmem:[#allocation7 + $0x168] sm:$0xff]
    %v562 = vld [vmem:[#allocation7 + $0x170] sm:$0xff]
    %v563 = vld [vmem:[#allocation7 + $0x178] sm:$0xff]
    %v564 = vld [vmem:[#allocation7 + $0x180] sm:$0xff]
    %v565 = vld [vmem:[#allocation7 + $0x188] sm:$0xff]
    %v566 = vld [vmem:[#allocation7 + $0x190] sm:$0xff]
    %v567 = vld [vmem:[#allocation7 + $0x198] sm:$0xff]
    %v568 = vld [vmem:[#allocation7 + $0x1a0] sm:$0xff]
    %v569 = vld [vmem:[#allocation7 + $0x1a8] sm:$0xff]
    %v570 = vld [vmem:[#allocation7 + $0x1b0] sm:$0xff]
    %v571 = vld [vmem:[#allocation7 + $0x1b8] sm:$0xff]
    %v572 = vld [vmem:[#allocation7 + $0x1c0] sm:$0xff]
    %v573 = vld [vmem:[#allocation7 + $0x1c8] sm:$0xff]
    %v574 = vld [vmem:[#allocation7 + $0x1d0] sm:$0xff]
    %v575 = vld [vmem:[#allocation7 + $0x1d8] sm:$0xff]
    %v576 = vld [vmem:[#allocation7 + $0x1e0] sm:$0xff]
    %v577 = vld [vmem:[#allocation7 + $0x1e8] sm:$0xff]
    %v578 = vld [vmem:[#allocation7 + $0x1f0] sm:$0xff]
    %v579 = vld [vmem:[#allocation7 + $0x1f8] sm:$0xff]
    %v580 = vld [vmem:[%s29] sm:$0x3]
    %v581 = vld [vmem:[%s31] sm:$0x3]
    %v582 = vld [vmem:[%s33] sm:$0xf]
    %v583 = vld [vmem:[%s33 + $0x4] sm:$0xf]
    %v584 = vld [vmem:[%s33 + $0x8] sm:$0xf]
    %v585 = vld [vmem:[%s33 + $0xc] sm:$0xf]
    %v586 = vld [vmem:[%s33 + $0x10] sm:$0xf]
    %v587 = vld [vmem:[%s33 + $0x14] sm:$0xf]
    %v588 = vld [vmem:[%s33 + $0x18] sm:$0xf]
    %v589 = vld [vmem:[%s33 + $0x1c] sm:$0xf]
    %v590 = vld [vmem:[%s33 + $0x20] sm:$0xf]
    %v591 = vld [vmem:[%s33 + $0x24] sm:$0xf]
    %v592 = vld [vmem:[%s33 + $0x28] sm:$0xf]
    %v593 = vld [vmem:[%s33 + $0x2c] sm:$0xf]
    %v594 = vld [vmem:[%s33 + $0x30] sm:$0xf]
    %v595 = vld [vmem:[%s33 + $0x34] sm:$0xf]
    %v596 = vld [vmem:[%s33 + $0x38] sm:$0xf]
    %v597 = vld [vmem:[%s33 + $0x3c] sm:$0xf]
    %v598 = vld [vmem:[%s33 + $0x40] sm:$0xf]
    %v599 = vld [vmem:[%s33 + $0x44] sm:$0xf]
    %v600 = vld [vmem:[%s33 + $0x48] sm:$0xf]
    %v601 = vld [vmem:[%s33 + $0x4c] sm:$0xf]
    %v602 = vld [vmem:[%s33 + $0x50] sm:$0xf]
    %v603 = vld [vmem:[%s33 + $0x54] sm:$0xf]
    %v604 = vld [vmem:[%s33 + $0x58] sm:$0xf]
    %v605 = vld [vmem:[%s33 + $0x5c] sm:$0xf]
    %v606 = vld [vmem:[%s33 + $0x60] sm:$0xf]
    %v607 = vld [vmem:[%s33 + $0x64] sm:$0xf]
    %v608 = vld [vmem:[%s33 + $0x68] sm:$0xf]
    %v609 = vld [vmem:[%s33 + $0x6c] sm:$0xf]
    %v610 = vld [vmem:[%s33 + $0x70] sm:$0xf]
    %v611 = vld [vmem:[%s33 + $0x74] sm:$0xf]
    %v612 = vld [vmem:[%s33 + $0x78] sm:$0xf]
    %v613 = vld [vmem:[%s33 + $0x7c] sm:$0xf]
    %v614 = vld [vmem:[%s35] sm:$0x1]
    %v615 = vld [vmem:[%s37] sm:$0x1]
    %v616 = vld [vmem:[%s39] sm:$0x7]
    %v617 = vld [vmem:[%s41] sm:$0x1]
    %v618 = vld [vmem:[%s43] sm:$0x1]
    %v619 = vld [vmem:[%s45] sm:$0xf]
    %v620 = vld [vmem:[%s45 + $0x4] sm:$0xf]
    %v621 = vld [vmem:[%s45 + $0x8] sm:$0xf]
    %v622 = vld [vmem:[%s45 + $0xc] sm:$0xf]
    %v623 = vld [vmem:[%s45 + $0x10] sm:$0xf]
    %v624 = vld [vmem:[%s45 + $0x14] sm:$0xf]
    %v625 = vld [vmem:[%s45 + $0x18] sm:$0xf]
    %v626 = vld [vmem:[%s45 + $0x1c] sm:$0xf]
    %v627 = vld [vmem:[%s47] sm:$0x1]
    %v628 = vld [vmem:[%s49] sm:$0x1]
    %v629 = vld [vmem:[#allocation8] sm:$0xff]
    %v630 = vld [vmem:[#allocation8 + $0x8] sm:$0xff]
    %v631 = vld [vmem:[#allocation8 + $0x10] sm:$0xff]
    %v632 = vld [vmem:[#allocation8 + $0x18] sm:$0xff]
    %v633 = vld [vmem:[#allocation8 + $0x20] sm:$0xff]
    %v634 = vld [vmem:[#allocation8 + $0x28] sm:$0xff]
    %v635 = vld [vmem:[#allocation8 + $0x30] sm:$0xff]
    %v636 = vld [vmem:[#allocation8 + $0x38] sm:$0xff]
    %v637 = vld [vmem:[#allocation8 + $0x40] sm:$0xff]
    %v638 = vld [vmem:[#allocation8 + $0x48] sm:$0xff]
    %v639 = vld [vmem:[#allocation8 + $0x50] sm:$0xff]
    %v640 = vld [vmem:[#allocation8 + $0x58] sm:$0xff]
    %v641 = vld [vmem:[#allocation8 + $0x60] sm:$0xff]
    %v642 = vld [vmem:[#allocation8 + $0x68] sm:$0xff]
    %v643 = vld [vmem:[#allocation8 + $0x70] sm:$0xff]
    %v644 = vld [vmem:[#allocation8 + $0x78] sm:$0xff]
    %v645 = vld [vmem:[#allocation8 + $0x80] sm:$0xff]
    %v646 = vld [vmem:[#allocation8 + $0x88] sm:$0xff]
    %v647 = vld [vmem:[#allocation8 + $0x90] sm:$0xff]
    %v648 = vld [vmem:[#allocation8 + $0x98] sm:$0xff]
    %v649 = vld [vmem:[#allocation8 + $0xa0] sm:$0xff]
    %v650 = vld [vmem:[#allocation8 + $0xa8] sm:$0xff]
    %v651 = vld [vmem:[#allocation8 + $0xb0] sm:$0xff]
    %v652 = vld [vmem:[#allocation8 + $0xb8] sm:$0xff]
    %v653 = vld [vmem:[#allocation8 + $0xc0] sm:$0xff]
    %v654 = vld [vmem:[#allocation8 + $0xc8] sm:$0xff]
    %v655 = vld [vmem:[#allocation8 + $0xd0] sm:$0xff]
    %v656 = vld [vmem:[#allocation8 + $0xd8] sm:$0xff]
    %v657 = vld [vmem:[#allocation8 + $0xe0] sm:$0xff]
    %v658 = vld [vmem:[#allocation8 + $0xe8] sm:$0xff]
    %v659 = vld [vmem:[#allocation8 + $0xf0] sm:$0xff]
    %v660 = vld [vmem:[#allocation8 + $0xf8] sm:$0xff]
    %v661 = vld [vmem:[#allocation8 + $0x100] sm:$0xff]
    %v662 = vld [vmem:[#allocation8 + $0x108] sm:$0xff]
    %v663 = vld [vmem:[#allocation8 + $0x110] sm:$0xff]
    %v664 = vld [vmem:[#allocation8 + $0x118] sm:$0xff]
    %v665 = vld [vmem:[#allocation8 + $0x120] sm:$0xff]
    %v666 = vld [vmem:[#allocation8 + $0x128] sm:$0xff]
    %v667 = vld [vmem:[#allocation8 + $0x130] sm:$0xff]
    %v668 = vld [vmem:[#allocation8 + $0x138] sm:$0xff]
    %v669 = vld [vmem:[#allocation8 + $0x140] sm:$0xff]
    %v670 = vld [vmem:[#allocation8 + $0x148] sm:$0xff]
    %v671 = vld [vmem:[#allocation8 + $0x150] sm:$0xff]
    %v672 = vld [vmem:[#allocation8 + $0x158] sm:$0xff]
    %v673 = vld [vmem:[#allocation8 + $0x160] sm:$0xff]
    %v674 = vld [vmem:[#allocation8 + $0x168] sm:$0xff]
    %v675 = vld [vmem:[#allocation8 + $0x170] sm:$0xff]
    %v676 = vld [vmem:[#allocation8 + $0x178] sm:$0xff]
    %v677 = vld [vmem:[#allocation8 + $0x180] sm:$0xff]
    %v678 = vld [vmem:[#allocation8 + $0x188] sm:$0xff]
    %v679 = vld [vmem:[#allocation8 + $0x190] sm:$0xff]
    %v680 = vld [vmem:[#allocation8 + $0x198] sm:$0xff]
    %v681 = vld [vmem:[#allocation8 + $0x1a0] sm:$0xff]
    %v682 = vld [vmem:[#allocation8 + $0x1a8] sm:$0xff]
    %v683 = vld [vmem:[#allocation8 + $0x1b0] sm:$0xff]
    %v684 = vld [vmem:[#allocation8 + $0x1b8] sm:$0xff]
    %v685 = vld [vmem:[#allocation8 + $0x1c0] sm:$0xff]
    %v686 = vld [vmem:[#allocation8 + $0x1c8] sm:$0xff]
    %v687 = vld [vmem:[#allocation8 + $0x1d0] sm:$0xff]
    %v688 = vld [vmem:[#allocation8 + $0x1d8] sm:$0xff]
    %v689 = vld [vmem:[#allocation8 + $0x1e0] sm:$0xff]
    %v690 = vld [vmem:[#allocation8 + $0x1e8] sm:$0xff]
    %v691 = vld [vmem:[#allocation8 + $0x1f0] sm:$0xff]
    %v692 = vld [vmem:[#allocation8 + $0x1f8] sm:$0xff]
    %v693 = vld [vmem:[%s53] sm:$0xff]
    %v694 = vld [vmem:[%s55] sm:$0xff]
    %v695 = vld [vmem:[%s1] sm:$0xff]
    %v696 = vld [vmem:[%s1 + $0x8] sm:$0xff]
    %v697 = vld [vmem:[%s1 + $0x10] sm:$0xff]
    %v698 = vld [vmem:[%s1 + $0x18] sm:$0xff]
    %v699 = vld [vmem:[%s1 + $0x20] sm:$0xff]
    %v700 = vld [vmem:[%s1 + $0x28] sm:$0xff]
    %v701 = vld [vmem:[%s1 + $0x30] sm:$0xff]
    %v702 = vld [vmem:[%s1 + $0x38] sm:$0xff]
    %v703 = vld [vmem:[%s1 + $0x40] sm:$0xff]
    %v704 = vld [vmem:[%s1 + $0x48] sm:$0xff]
    %v705 = vld [vmem:[%s1 + $0x50] sm:$0xff]
    %v706 = vld [vmem:[%s1 + $0x58] sm:$0xff]
    %v707 = vld [vmem:[%s1 + $0x60] sm:$0xff]
    %v708 = vld [vmem:[%s1 + $0x68] sm:$0xff]
    %v709 = vld [vmem:[%s1 + $0x70] sm:$0xff]
    %v710 = vld [vmem:[%s1 + $0x78] sm:$0xff]
    %v711 = vpack.c.bf16 %v696, %v695
    %v712 = vpack.c.bf16 %v698, %v697
    %v713 = vpack.c.bf16 %v700, %v699
    %v714 = vpack.c.bf16 %v702, %v701
    %v715 = vpack.c.bf16 %v704, %v703
    %v716 = vpack.c.bf16 %v706, %v705
    %v717 = vpack.c.bf16 %v708, %v707
    %v718 = vpack.c.bf16 %v710, %v709
    %vm719 = vcmask 39936
    %v721 = vsel %vm719, %v711, 0
    %v724 = vsel %vm719, %v712, 0
    %v727 = vsel %vm719, %v713, 0
    %v730 = vsel %vm719, %v714, 0
    %v733 = vsel %vm719, %v715, 0
    %v736 = vsel %vm719, %v716, 0
    %v739 = vsel %vm719, %v717, 0
    %v742 = vsel %vm719, %v718, 0
    %vm744 = vcmask 1041408
    %vm745 = vcmask 1042432
    %v746 = vsel %vm744, 4294967295, 65535
    %v747 = vsel %vm745, %v746, 0
    %v749 = vand.u32 %v179, %v747
    %751 = vmatprep.subr.bf16.mxu0 0
    %752 = vmatpush1.bf16.msra.mxu0 %v749
    %753 = vmatprep.subr.bf16.mxu0 0
    %754 = vmatpush1.bf16.msra.mxu0 0
    %755 = vmatprep.subr.bf16.mxu0 0
    %756 = vmatpush1.bf16.msra.mxu0 0
    %757 = vmatprep.subr.bf16.mxu0 0
    %758 = vmatpush1.bf16.msra.mxu0 0
    %759 = vmatprep.subr.bf16.mxu0 0
    %760 = vmatpush1.bf16.msra.mxu0 0
    %761 = vmatprep.subr.bf16.mxu0 0
    %762 = vmatpush1.bf16.msra.mxu0 0
    %763 = vmatprep.subr.bf16.mxu0 0
    %764 = vmatpush1.bf16.msra.mxu0 0
    %765 = vmatprep.subr.bf16.mxu0 0
    %766 = vmatpush1.bf16.msra.mxu0 0
    %767 = vmatprep.subr.bf16.mxu0 0
    %768 = vmatpush1.bf16.msra.mxu0 0
    %769 = vmatprep.subr.bf16.mxu0 0
    %770 = vmatpush1.bf16.msra.mxu0 0
    %771 = vmatprep.subr.bf16.mxu0 0
    %772 = vmatpush1.bf16.msra.mxu0 0
    %773 = vmatprep.subr.bf16.mxu0 0
    %774 = vmatpush1.bf16.msra.mxu0 0
    %775 = vmatprep.subr.bf16.mxu0 0
    %776 = vmatpush1.bf16.msra.mxu0 0
    %777 = vmatprep.subr.bf16.mxu0 0
    %778 = vmatpush1.bf16.msra.mxu0 0
    %779 = vmatprep.subr.bf16.mxu0 0
    %780 = vmatpush1.bf16.msra.mxu0 0
    %781 = vmatprep.subr.bf16.mxu0 0
    %782 = vmatpush1.bf16.msra.mxu0 0
    %783 = vmatprep.mubr.bf16.mxu0 0
    %784 = vmatmul.mubr.bf16.gmra.mrb[0].mxu0 %v721
    %v785 = vpop.f32.mrb[0].mxu0
    %v786 = vadd.f32 0.0, %v785
    %v787 = vpop.f32.mrb[0].mxu0
    %v788 = vpop.f32.mrb[0].mxu0
    %v789 = vadd.f32 0.0, %v788
    %v790 = vpop.f32.mrb[0].mxu0
    %791 = vmatprep.mubr.bf16.mxu0 0
    %792 = vmatmul.mubr.bf16.gmra.mrb[0].mxu0 %v724
    %v793 = vpop.f32.mrb[0].mxu0
    %v794 = vadd.f32 0.0, %v793
    %v795 = vpop.f32.mrb[0].mxu0
    %v796 = vpop.f32.mrb[0].mxu0
    %v797 = vadd.f32 0.0, %v796
    %v798 = vpop.f32.mrb[0].mxu0
    %799 = vmatprep.mubr.bf16.mxu0 0
    %800 = vmatmul.mubr.bf16.gmra.mrb[0].mxu0 %v727
    %v801 = vpop.f32.mrb[0].mxu0
    %v802 = vadd.f32 0.0, %v801
    %v803 = vpop.f32.mrb[0].mxu0
    %v804 = vpop.f32.mrb[0].mxu0
    %v805 = vadd.f32 0.0, %v804
    %v806 = vpop.f32.mrb[0].mxu0
    %807 = vmatprep.mubr.bf16.mxu0 0
    %808 = vmatmul.mubr.bf16.gmra.mrb[0].mxu0 %v730
    %v809 = vpop.f32.mrb[0].mxu0
    %v810 = vadd.f32 0.0, %v809
    %v811 = vpop.f32.mrb[0].mxu0
    %v812 = vpop.f32.mrb[0].mxu0
    %v813 = vadd.f32 0.0, %v812
    %v814 = vpop.f32.mrb[0].mxu0
    %815 = vmatprep.mubr.bf16.mxu0 0
    %816 = vmatmul.mubr.bf16.gmra.mrb[0].mxu0 %v733
    %v817 = vpop.f32.mrb[0].mxu0
    %v818 = vadd.f32 0.0, %v817
    %v819 = vpop.f32.mrb[0].mxu0
    %v820 = vpop.f32.mrb[0].mxu0
    %v821 = vadd.f32 0.0, %v820
    %v822 = vpop.f32.mrb[0].mxu0
    %823 = vmatprep.mubr.bf16.mxu0 0
    %824 = vmatmul.mubr.bf16.gmra.mrb[0].mxu0 %v736
    %v825 = vpop.f32.mrb[0].mxu0
    %v826 = vadd.f32 0.0, %v825
    %v827 = vpop.f32.mrb[0].mxu0
    %v828 = vpop.f32.mrb[0].mxu0
    %v829 = vadd.f32 0.0, %v828
    %v830 = vpop.f32.mrb[0].mxu0
    %831 = vmatprep.mubr.bf16.mxu0 0
    %832 = vmatmul.mubr.bf16.gmra.mrb[0].mxu0 %v739
    %v833 = vpop.f32.mrb[0].mxu0
    %v834 = vadd.f32 0.0, %v833
    %v835 = vpop.f32.mrb[0].mxu0
    %v836 = vpop.f32.mrb[0].mxu0
    %v837 = vadd.f32 0.0, %v836
    %v838 = vpop.f32.mrb[0].mxu0
    %839 = vmatprep.mubr.bf16.mxu0 0
    %840 = vmatmul.mubr.bf16.gmra.mrb[0].mxu0 %v742
    %v841 = vpop.f32.mrb[0].mxu0
    %v842 = vadd.f32 0.0, %v841
    %v843 = vpop.f32.mrb[0].mxu0
    %v844 = vpop.f32.mrb[0].mxu0
    %v845 = vadd.f32 0.0, %v844
    %v846 = vpop.f32.mrb[0].mxu0
    %847 = vdwg.mxu0
    %v849 = vlaneseq
    %v850 = vshrl.u32 %v849, 7
    %v851 = vsub.s32 0, %v850
    %v852 = vrot.slane %v180, %v851
    %v854 = vmul.f32 %v786, %v852
    %v855 = vmul.f32 %v789, %v852
    %v856 = vmul.f32 %v794, %v852
    %v857 = vmul.f32 %v797, %v852
    %v858 = vmul.f32 %v802, %v852
    %v859 = vmul.f32 %v805, %v852
    %v860 = vmul.f32 %v810, %v852
    %v861 = vmul.f32 %v813, %v852
    %v862 = vmul.f32 %v818, %v852
    %v863 = vmul.f32 %v821, %v852
    %v864 = vmul.f32 %v826, %v852
    %v865 = vmul.f32 %v829, %v852
    %v866 = vmul.f32 %v834, %v852
    %v867 = vmul.f32 %v837, %v852
    %v868 = vmul.f32 %v842, %v852
    %v869 = vmul.f32 %v845, %v852
    %v871 = vlaneseq
    %v872 = vshrl.u32 %v871, 7
    %v873 = vsub.s32 0, %v872
    %v874 = vrot.slane %v181, %v873
    %v876 = vadd.f32 %v854, %v874
    %v877 = vadd.f32 %v855, %v874
    %v878 = vadd.f32 %v856, %v874
    %v879 = vadd.f32 %v857, %v874
    %v880 = vadd.f32 %v858, %v874
    %v881 = vadd.f32 %v859, %v874
    %v882 = vadd.f32 %v860, %v874
    %v883 = vadd.f32 %v861, %v874
    %v884 = vadd.f32 %v862, %v874
    %v885 = vadd.f32 %v863, %v874
    %v886 = vadd.f32 %v864, %v874
    %v887 = vadd.f32 %v865, %v874
    %v888 = vadd.f32 %v866, %v874
    %v889 = vadd.f32 %v867, %v874
    %v890 = vadd.f32 %v868, %v874
    %v891 = vadd.f32 %v869, %v874
    %v892 = vmax.f32 %v876, 0.0
    %v893 = vmax.f32 %v877, 0.0
    %v894 = vmax.f32 %v878, 0.0
    %v895 = vmax.f32 %v879, 0.0
    %v896 = vmax.f32 %v880, 0.0
    %v897 = vmax.f32 %v881, 0.0
    %v898 = vmax.f32 %v882, 0.0
    %v899 = vmax.f32 %v883, 0.0
    %v900 = vmax.f32 %v884, 0.0
    %v901 = vmax.f32 %v885, 0.0
    %v902 = vmax.f32 %v886, 0.0
    %v903 = vmax.f32 %v887, 0.0
    %v904 = vmax.f32 %v888, 0.0
    %v905 = vmax.f32 %v889, 0.0
    %v906 = vmax.f32 %v890, 0.0
    %v907 = vmax.f32 %v891, 0.0
    %v908 = vpack.c.bf16 %v893, %v892
    %v909 = vpack.c.bf16 %v895, %v894
    %v910 = vpack.c.bf16 %v897, %v896
    %v911 = vpack.c.bf16 %v899, %v898
    %v912 = vpack.c.bf16 %v901, %v900
    %v913 = vpack.c.bf16 %v903, %v902
    %v914 = vpack.c.bf16 %v905, %v904
    %v915 = vpack.c.bf16 %v907, %v906
    %v924 = vunpack.c.l.b16 %v182
    %v925 = vunpack.c.l.b16 %v183
    %v926 = vunpack.c.l.b16 %v184
    %v927 = vunpack.c.l.b16 %v185
    %v928 = vunpack.c.l.b16 %v186
    %v929 = vunpack.c.l.b16 %v187
    %v930 = vunpack.c.l.b16 %v188
    %v931 = vunpack.c.l.b16 %v189
    %v932 = vpack.c.b16 %v925, %v924
    %v933 = vpack.c.b16 %v927, %v926
    %v934 = vpack.c.b16 %v929, %v928
    %v935 = vpack.c.b16 %v931, %v930
    %vm940 = vcmask 523264
    %v942 = vsel %vm940, %v908, 0
    %v945 = vsel %vm940, %v909, 0
    %v948 = vsel %vm940, %v910, 0
    %v951 = vsel %vm940, %v911, 0
    %v954 = vsel %vm940, %v912, 0
    %v957 = vsel %vm940, %v913, 0
    %v960 = vsel %vm940, %v914, 0
    %v963 = vsel %vm940, %v915, 0
    %965 = vmatprep.subr.bf16.mxu0 0
    %966 = vmatpush1.bf16.msra.mxu0 %v932
    %967 = vmatprep.subr.bf16.mxu0 0
    %968 = vmatpush1.bf16.msra.mxu0 %v933
    %969 = vmatprep.subr.bf16.mxu0 0
    %970 = vmatpush1.bf16.msra.mxu0 %v934
    %971 = vmatprep.subr.bf16.mxu0 0
    %972 = vmatpush1.bf16.msra.mxu0 %v935
    %973 = vmatprep.subr.bf16.mxu0 0
    %974 = vmatpush1.bf16.msra.mxu0 0
    %975 = vmatprep.subr.bf16.mxu0 0
    %976 = vmatpush1.bf16.msra.mxu0 0
    %977 = vmatprep.subr.bf16.mxu0 0
    %978 = vmatpush1.bf16.msra.mxu0 0
    %979 = vmatprep.subr.bf16.mxu0 0
    %980 = vmatpush1.bf16.msra.mxu0 0
    %981 = vmatprep.subr.bf16.mxu0 0
    %982 = vmatpush1.bf16.msra.mxu0 0
    %983 = vmatprep.subr.bf16.mxu0 0
    %984 = vmatpush1.bf16.msra.mxu0 0
    %985 = vmatprep.subr.bf16.mxu0 0
    %986 = vmatpush1.bf16.msra.mxu0 0
    %987 = vmatprep.subr.bf16.mxu0 0
    %988 = vmatpush1.bf16.msra.mxu0 0
    %989 = vmatprep.subr.bf16.mxu0 0
    %990 = vmatpush1.bf16.msra.mxu0 0
    %991 = vmatprep.subr.bf16.mxu0 0
    %992 = vmatpush1.bf16.msra.mxu0 0
    %993 = vmatprep.subr.bf16.mxu0 0
    %994 = vmatpush1.bf16.msra.mxu0 0
    %995 = vmatprep.subr.bf16.mxu0 0
    %996 = vmatpush1.bf16.msra.mxu0 0
    %997 = vmatprep.mubr.bf16.mxu0 0
    %998 = vmatmul.mubr.bf16.gmra.mrb[0].mxu0 %v942
    %v999 = vpop.f32.mrb[0].mxu0
    %v1000 = vadd.f32 0.0, %v999
    %v1001 = vpop.f32.mrb[0].mxu0
    %v1002 = vpop.f32.mrb[0].mxu0
    %v1003 = vadd.f32 0.0, %v1002
    %v1004 = vpop.f32.mrb[0].mxu0
    %1005 = vmatprep.mubr.bf16.mxu0 0
    %1006 = vmatmul.mubr.bf16.gmra.mrb[0].mxu0 %v945
    %v1007 = vpop.f32.mrb[0].mxu0
    %v1008 = vadd.f32 0.0, %v1007
    %v1009 = vpop.f32.mrb[0].mxu0
    %v1010 = vpop.f32.mrb[0].mxu0
    %v1011 = vadd.f32 0.0, %v1010
    %v1012 = vpop.f32.mrb[0].mxu0
    %1013 = vmatprep.mubr.bf16.mxu0 0
    %1014 = vmatmul.mubr.bf16.gmra.mrb[0].mxu0 %v948
    %v1015 = vpop.f32.mrb[0].mxu0
    %v1016 = vadd.f32 0.0, %v1015
    %v1017 = vpop.f32.mrb[0].mxu0
    %v1018 = vpop.f32.mrb[0].mxu0
    %v1019 = vadd.f32 0.0, %v1018
    %v1020 = vpop.f32.mrb[0].mxu0
    %1021 = vmatprep.mubr.bf16.mxu0 0
    %1022 = vmatmul.mubr.bf16.gmra.mrb[0].mxu0 %v951
    %v1023 = vpop.f32.mrb[0].mxu0
    %v1024 = vadd.f32 0.0, %v1023
    %v1025 = vpop.f32.mrb[0].mxu0
    %v1026 = vpop.f32.mrb[0].mxu0
    %v1027 = vadd.f32 0.0, %v1026
    %v1028 = vpop.f32.mrb[0].mxu0
    %1029 = vmatprep.mubr.bf16.mxu0 0
    %1030 = vmatmul.mubr.bf16.gmra.mrb[0].mxu0 %v954
    %v1031 = vpop.f32.mrb[0].mxu0
    %v1032 = vadd.f32 0.0, %v1031
    %v1033 = vpop.f32.mrb[0].mxu0
    %v1034 = vpop.f32.mrb[0].mxu0
    %v1035 = vadd.f32 0.0, %v1034
    %v1036 = vpop.f32.mrb[0].mxu0
    %1037 = vmatprep.mubr.bf16.mxu0 0
    %1038 = vmatmul.mubr.bf16.gmra.mrb[0].mxu0 %v957
    %v1039 = vpop.f32.mrb[0].mxu0
    %v1040 = vadd.f32 0.0, %v1039
    %v1041 = vpop.f32.mrb[0].mxu0
    %v1042 = vpop.f32.mrb[0].mxu0
    %v1043 = vadd.f32 0.0, %v1042
    %v1044 = vpop.f32.mrb[0].mxu0
    %1045 = vmatprep.mubr.bf16.mxu0 0
    %1046 = vmatmul.mubr.bf16.gmra.mrb[0].mxu0 %v960
    %v1047 = vpop.f32.mrb[0].mxu0
    %v1048 = vadd.f32 0.0, %v1047
    %v1049 = vpop.f32.mrb[0].mxu0
    %v1050 = vpop.f32.mrb[0].mxu0
    %v1051 = vadd.f32 0.0, %v1050
    %v1052 = vpop.f32.mrb[0].mxu0
    %1053 = vmatprep.mubr.bf16.mxu0 0
    %1054 = vmatmul.mubr.bf16.gmra.mrb[0].mxu0 %v963
    %v1055 = vpop.f32.mrb[0].mxu0
    %v1056 = vadd.f32 0.0, %v1055
    %v1057 = vpop.f32.mrb[0].mxu0
    %v1058 = vpop.f32.mrb[0].mxu0
    %v1059 = vadd.f32 0.0, %v1058
    %v1060 = vpop.f32.mrb[0].mxu0
    %1061 = vdwg.mxu0
    %v1063 = vlaneseq
    %v1064 = vshrl.u32 %v1063, 7
    %v1065 = vsub.s32 0, %v1064
    %v1066 = vrot.slane %v190, %v1065
    %v1068 = vmul.f32 %v1000, %v1066
    %v1069 = vmul.f32 %v1003, %v1066
    %v1070 = vmul.f32 %v1008, %v1066
    %v1071 = vmul.f32 %v1011, %v1066
    %v1072 = vmul.f32 %v1016, %v1066
    %v1073 = vmul.f32 %v1019, %v1066
    %v1074 = vmul.f32 %v1024, %v1066
    %v1075 = vmul.f32 %v1027, %v1066
    %v1076 = vmul.f32 %v1032, %v1066
    %v1077 = vmul.f32 %v1035, %v1066
    %v1078 = vmul.f32 %v1040, %v1066
    %v1079 = vmul.f32 %v1043, %v1066
    %v1080 = vmul.f32 %v1048, %v1066
    %v1081 = vmul.f32 %v1051, %v1066
    %v1082 = vmul.f32 %v1056, %v1066
    %v1083 = vmul.f32 %v1059, %v1066
    %v1085 = vlaneseq
    %v1086 = vshrl.u32 %v1085, 7
    %v1087 = vsub.s32 0, %v1086
    %v1088 = vrot.slane %v191, %v1087
    %v1090 = vadd.f32 %v1068, %v1088
    %v1091 = vadd.f32 %v1069, %v1088
    %v1092 = vadd.f32 %v1070, %v1088
    %v1093 = vadd.f32 %v1071, %v1088
    %v1094 = vadd.f32 %v1072, %v1088
    %v1095 = vadd.f32 %v1073, %v1088
    %v1096 = vadd.f32 %v1074, %v1088
    %v1097 = vadd.f32 %v1075, %v1088
    %v1098 = vadd.f32 %v1076, %v1088
    %v1099 = vadd.f32 %v1077, %v1088
    %v1100 = vadd.f32 %v1078, %v1088
    %v1101 = vadd.f32 %v1079, %v1088
    %v1102 = vadd.f32 %v1080, %v1088
    %v1103 = vadd.f32 %v1081, %v1088
    %v1104 = vadd.f32 %v1082, %v1088
    %v1105 = vadd.f32 %v1083, %v1088
    %v1106 = vmax.f32 %v1090, 0.0
    %v1107 = vmax.f32 %v1091, 0.0
    %v1108 = vmax.f32 %v1092, 0.0
    %v1109 = vmax.f32 %v1093, 0.0
    %v1110 = vmax.f32 %v1094, 0.0
    %v1111 = vmax.f32 %v1095, 0.0
    %v1112 = vmax.f32 %v1096, 0.0
    %v1113 = vmax.f32 %v1097, 0.0
    %v1114 = vmax.f32 %v1098, 0.0
    %v1115 = vmax.f32 %v1099, 0.0
    %v1116 = vmax.f32 %v1100, 0.0
    %v1117 = vmax.f32 %v1101, 0.0
    %v1118 = vmax.f32 %v1102, 0.0
    %v1119 = vmax.f32 %v1103, 0.0
    %v1120 = vmax.f32 %v1104, 0.0
    %v1121 = vmax.f32 %v1105, 0.0
    %v1122 = vpack.c.bf16 %v1107, %v1106
    %v1123 = vpack.c.bf16 %v1109, %v1108
    %v1124 = vpack.c.bf16 %v1111, %v1110
    %v1125 = vpack.c.bf16 %v1113, %v1112
    %v1126 = vpack.c.bf16 %v1115, %v1114
    %v1127 = vpack.c.bf16 %v1117, %v1116
    %v1128 = vpack.c.bf16 %v1119, %v1118
    %v1129 = vpack.c.bf16 %v1121, %v1120
    %v1194 = vunpack.c.l.b16 %v192
    %v1195 = vunpack.c.h.b16 %v192
    %v1196 = vunpack.c.l.b16 %v193
    %v1197 = vunpack.c.h.b16 %v193
    %v1198 = vunpack.c.l.b16 %v194
    %v1199 = vunpack.c.h.b16 %v194
    %v1200 = vunpack.c.l.b16 %v195
    %v1201 = vunpack.c.h.b16 %v195
    %v1202 = vunpack.c.l.b16 %v196
    %v1203 = vunpack.c.h.b16 %v196
    %v1204 = vunpack.c.l.b16 %v197
    %v1205 = vunpack.c.h.b16 %v197
    %v1206 = vunpack.c.l.b16 %v198
    %v1207 = vunpack.c.h.b16 %v198
    %v1208 = vunpack.c.l.b16 %v199
    %v1209 = vunpack.c.h.b16 %v199
    %v1210 = vunpack.c.l.b16 %v200
    %v1211 = vunpack.c.h.b16 %v200
    %v1212 = vunpack.c.l.b16 %v201
    %v1213 = vunpack.c.h.b16 %v201
    %v1214 = vunpack.c.l.b16 %v202
    %v1215 = vunpack.c.h.b16 %v202
    %v1216 = vunpack.c.l.b16 %v203
    %v1217 = vunpack.c.h.b16 %v203
    %v1218 = vunpack.c.l.b16 %v204
    %v1219 = vunpack.c.h.b16 %v204
    %v1220 = vunpack.c.l.b16 %v205
    %v1221 = vunpack.c.h.b16 %v205
    %v1222 = vunpack.c.l.b16 %v206
    %v1223 = vunpack.c.h.b16 %v206
    %v1224 = vunpack.c.l.b16 %v207
    %v1225 = vunpack.c.h.b16 %v207
    %v1226 = vunpack.c.l.b16 %v208
    %v1227 = vunpack.c.h.b16 %v208
    %v1228 = vunpack.c.l.b16 %v209
    %v1229 = vunpack.c.h.b16 %v209
    %v1230 = vunpack.c.l.b16 %v210
    %v1231 = vunpack.c.h.b16 %v210
    %v1232 = vunpack.c.l.b16 %v211
    %v1233 = vunpack.c.h.b16 %v211
    %v1234 = vunpack.c.l.b16 %v212
    %v1235 = vunpack.c.h.b16 %v212
    %v1236 = vunpack.c.l.b16 %v213
    %v1237 = vunpack.c.h.b16 %v213
    %v1238 = vunpack.c.l.b16 %v214
    %v1239 = vunpack.c.h.b16 %v214
    %v1240 = vunpack.c.l.b16 %v215
    %v1241 = vunpack.c.h.b16 %v215
    %v1242 = vunpack.c.l.b16 %v216
    %v1243 = vunpack.c.h.b16 %v216
    %v1244 = vunpack.c.l.b16 %v217
    %v1245 = vunpack.c.h.b16 %v217
    %v1246 = vunpack.c.l.b16 %v218
    %v1247 = vunpack.c.h.b16 %v218
    %v1248 = vunpack.c.l.b16 %v219
    %v1249 = vunpack.c.h.b16 %v219
    %v1250 = vunpack.c.l.b16 %v220
    %v1251 = vunpack.c.h.b16 %v220
    %v1252 = vunpack.c.l.b16 %v221
    %v1253 = vunpack.c.h.b16 %v221
    %v1254 = vunpack.c.l.b16 %v222
    %v1255 = vunpack.c.h.b16 %v222
    %v1256 = vunpack.c.l.b16 %v223
    %v1257 = vunpack.c.h.b16 %v223
    %v1258 = vunpack.c.l.b16 %v224
    %v1259 = vunpack.c.h.b16 %v224
    %v1260 = vunpack.c.l.b16 %v225
    %v1261 = vunpack.c.h.b16 %v225
    %v1262 = vunpack.c.l.b16 %v226
    %v1263 = vunpack.c.h.b16 %v226
    %v1264 = vunpack.c.l.b16 %v227
    %v1265 = vunpack.c.h.b16 %v227
    %v1266 = vunpack.c.l.b16 %v228
    %v1267 = vunpack.c.h.b16 %v228
    %v1268 = vunpack.c.l.b16 %v229
    %v1269 = vunpack.c.h.b16 %v229
    %v1270 = vunpack.c.l.b16 %v230
    %v1271 = vunpack.c.h.b16 %v230
    %v1272 = vunpack.c.l.b16 %v231
    %v1273 = vunpack.c.h.b16 %v231
    %v1274 = vunpack.c.l.b16 %v232
    %v1275 = vunpack.c.h.b16 %v232
    %v1276 = vunpack.c.l.b16 %v233
    %v1277 = vunpack.c.h.b16 %v233
    %v1278 = vunpack.c.l.b16 %v234
    %v1279 = vunpack.c.h.b16 %v234
    %v1280 = vunpack.c.l.b16 %v235
    %v1281 = vunpack.c.h.b16 %v235
    %v1282 = vunpack.c.l.b16 %v236
    %v1283 = vunpack.c.h.b16 %v236
    %v1284 = vunpack.c.l.b16 %v237
    %v1285 = vunpack.c.h.b16 %v237
    %v1286 = vunpack.c.l.b16 %v238
    %v1287 = vunpack.c.h.b16 %v238
    %v1288 = vunpack.c.l.b16 %v239
    %v1289 = vunpack.c.h.b16 %v239
    %v1290 = vunpack.c.l.b16 %v240
    %v1291 = vunpack.c.h.b16 %v240
    %v1292 = vunpack.c.l.b16 %v241
    %v1293 = vunpack.c.h.b16 %v241
    %v1294 = vunpack.c.l.b16 %v242
    %v1295 = vunpack.c.h.b16 %v242
    %v1296 = vunpack.c.l.b16 %v243
    %v1297 = vunpack.c.h.b16 %v243
    %v1298 = vunpack.c.l.b16 %v244
    %v1299 = vunpack.c.h.b16 %v244
    %v1300 = vunpack.c.l.b16 %v245
    %v1301 = vunpack.c.h.b16 %v245
    %v1302 = vunpack.c.l.b16 %v246
    %v1303 = vunpack.c.h.b16 %v246
    %v1304 = vunpack.c.l.b16 %v247
    %v1305 = vunpack.c.h.b16 %v247
    %v1306 = vunpack.c.l.b16 %v248
    %v1307 = vunpack.c.h.b16 %v248
    %v1308 = vunpack.c.l.b16 %v249
    %v1309 = vunpack.c.h.b16 %v249
    %v1310 = vunpack.c.l.b16 %v250
    %v1311 = vunpack.c.h.b16 %v250
    %v1312 = vunpack.c.l.b16 %v251
    %v1313 = vunpack.c.h.b16 %v251
    %v1314 = vunpack.c.l.b16 %v252
    %v1315 = vunpack.c.h.b16 %v252
    %v1316 = vunpack.c.l.b16 %v253
    %v1317 = vunpack.c.h.b16 %v253
    %v1318 = vunpack.c.l.b16 %v254
    %v1319 = vunpack.c.h.b16 %v254
    %v1320 = vunpack.c.l.b16 %v255
    %v1321 = vunpack.c.h.b16 %v255
    %v1322 = vpack.c.b16 %v1202, %v1194
    %v1323 = vpack.c.b16 %v1203, %v1195
    %v1324 = vpack.c.b16 %v1204, %v1196
    %v1325 = vpack.c.b16 %v1205, %v1197
    %v1326 = vpack.c.b16 %v1206, %v1198
    %v1327 = vpack.c.b16 %v1207, %v1199
    %v1328 = vpack.c.b16 %v1208, %v1200
    %v1329 = vpack.c.b16 %v1209, %v1201
    %v1330 = vpack.c.b16 %v1218, %v1210
    %v1331 = vpack.c.b16 %v1219, %v1211
    %v1332 = vpack.c.b16 %v1220, %v1212
    %v1333 = vpack.c.b16 %v1221, %v1213
    %v1334 = vpack.c.b16 %v1222, %v1214
    %v1335 = vpack.c.b16 %v1223, %v1215
    %v1336 = vpack.c.b16 %v1224, %v1216
    %v1337 = vpack.c.b16 %v1225, %v1217
    %v1338 = vpack.c.b16 %v1234, %v1226
    %v1339 = vpack.c.b16 %v1235, %v1227
    %v1340 = vpack.c.b16 %v1236, %v1228
    %v1341 = vpack.c.b16 %v1237, %v1229
    %v1342 = vpack.c.b16 %v1238, %v1230
    %v1343 = vpack.c.b16 %v1239, %v1231
    %v1344 = vpack.c.b16 %v1240, %v1232
    %v1345 = vpack.c.b16 %v1241, %v1233
    %v1346 = vpack.c.b16 %v1250, %v1242
    %v1347 = vpack.c.b16 %v1251, %v1243
    %v1348 = vpack.c.b16 %v1252, %v1244
    %v1349 = vpack.c.b16 %v1253, %v1245
    %v1350 = vpack.c.b16 %v1254, %v1246
    %v1351 = vpack.c.b16 %v1255, %v1247
    %v1352 = vpack.c.b16 %v1256, %v1248
    %v1353 = vpack.c.b16 %v1257, %v1249
    %v1354 = vpack.c.b16 %v1266, %v1258
    %v1355 = vpack.c.b16 %v1267, %v1259
    %v1356 = vpack.c.b16 %v1268, %v1260
    %v1357 = vpack.c.b16 %v1269, %v1261
    %v1358 = vpack.c.b16 %v1270, %v1262
    %v1359 = vpack.c.b16 %v1271, %v1263
    %v1360 = vpack.c.b16 %v1272, %v1264
    %v1361 = vpack.c.b16 %v1273, %v1265
    %v1362 = vpack.c.b16 %v1282, %v1274
    %v1363 = vpack.c.b16 %v1283, %v1275
    %v1364 = vpack.c.b16 %v1284, %v1276
    %v1365 = vpack.c.b16 %v1285, %v1277
    %v1366 = vpack.c.b16 %v1286, %v1278
    %v1367 = vpack.c.b16 %v1287, %v1279
    %v1368 = vpack.c.b16 %v1288, %v1280
    %v1369 = vpack.c.b16 %v1289, %v1281
    %v1370 = vpack.c.b16 %v1298, %v1290
    %v1371 = vpack.c.b16 %v1299, %v1291
    %v1372 = vpack.c.b16 %v1300, %v1292
    %v1373 = vpack.c.b16 %v1301, %v1293
    %v1374 = vpack.c.b16 %v1302, %v1294
    %v1375 = vpack.c.b16 %v1303, %v1295
    %v1376 = vpack.c.b16 %v1304, %v1296
    %v1377 = vpack.c.b16 %v1305, %v1297
    %v1378 = vpack.c.b16 %v1314, %v1306
    %v1379 = vpack.c.b16 %v1315, %v1307
    %v1380 = vpack.c.b16 %v1316, %v1308
    %v1381 = vpack.c.b16 %v1317, %v1309
    %v1382 = vpack.c.b16 %v1318, %v1310
    %v1383 = vpack.c.b16 %v1319, %v1311
    %v1384 = vpack.c.b16 %v1320, %v1312
    %v1385 = vpack.c.b16 %v1321, %v1313
    %1450 = vmatprep.subr.bf16.mxu0 %v1323
    %1451 = vmatpush1.bf16.msra.mxu0 %v1322
    %1452 = vmatprep.subr.bf16.mxu0 %v1331
    %1453 = vmatpush1.bf16.msra.mxu0 %v1330
    %1454 = vmatprep.subr.bf16.mxu0 %v1339
    %1455 = vmatpush1.bf16.msra.mxu0 %v1338
    %1456 = vmatprep.subr.bf16.mxu0 %v1347
    %1457 = vmatpush1.bf16.msra.mxu0 %v1346
    %1458 = vmatprep.subr.bf16.mxu0 %v1355
    %1459 = vmatpush1.bf16.msra.mxu0 %v1354
    %1460 = vmatprep.subr.bf16.mxu0 %v1363
    %1461 = vmatpush1.bf16.msra.mxu0 %v1362
    %1462 = vmatprep.subr.bf16.mxu0 %v1371
    %1463 = vmatpush1.bf16.msra.mxu0 %v1370
    %1464 = vmatprep.subr.bf16.mxu0 %v1379
    %1465 = vmatpush1.bf16.msra.mxu0 %v1378
    %1466 = vmatprep.subr.bf16.mxu0 0
    %1467 = vmatpush1.bf16.msra.mxu0 0
    %1468 = vmatprep.subr.bf16.mxu0 0
    %1469 = vmatpush1.bf16.msra.mxu0 0
    %1470 = vmatprep.subr.bf16.mxu0 0
    %1471 = vmatpush1.bf16.msra.mxu0 0
    %1472 = vmatprep.subr.bf16.mxu0 0
    %1473 = vmatpush1.bf16.msra.mxu0 0
    %1474 = vmatprep.subr.bf16.mxu0 0
    %1475 = vmatpush1.bf16.msra.mxu0 0
    %1476 = vmatprep.subr.bf16.mxu0 0
    %1477 = vmatpush1.bf16.msra.mxu0 0
    %1478 = vmatprep.subr.bf16.mxu0 0
    %1479 = vmatpush1.bf16.msra.mxu0 0
    %1480 = vmatprep.subr.bf16.mxu0 0
    %1481 = vmatpush1.bf16.msra.mxu0 0
    %1482 = vmatprep.mubr.bf16.mxu0 0
    %1483 = vmatmul.mubr.bf16.gmra.mrb[0].mxu0 %v1122
    %v1484 = vpop.f32.mrb[0].mxu0
    %v1485 = vadd.f32 0.0, %v1484
    %v1486 = vpop.f32.mrb[0].mxu0
    %v1487 = vadd.f32 0.0, %v1486
    %v1488 = vpop.f32.mrb[0].mxu0
    %v1489 = vadd.f32 0.0, %v1488
    %v1490 = vpop.f32.mrb[0].mxu0
    %v1491 = vadd.f32 0.0, %v1490
    %1492 = vmatprep.mubr.bf16.mxu0 0
    %1493 = vmatmul.mubr.bf16.gmra.mrb[0].mxu0 %v1123
    %v1494 = vpop.f32.mrb[0].mxu0
    %v1495 = vadd.f32 0.0, %v1494
    %v1496 = vpop.f32.mrb[0].mxu0
    %v1497 = vadd.f32 0.0, %v1496
    %v1498 = vpop.f32.mrb[0].mxu0
    %v1499 = vadd.f32 0.0, %v1498
    %v1500 = vpop.f32.mrb[0].mxu0
    %v1501 = vadd.f32 0.0, %v1500
    %1502 = vmatprep.mubr.bf16.mxu0 0
    %1503 = vmatmul.mubr.bf16.gmra.mrb[0].mxu0 %v1124
    %v1504 = vpop.f32.mrb[0].mxu0
    %v1505 = vadd.f32 0.0, %v1504
    %v1506 = vpop.f32.mrb[0].mxu0
    %v1507 = vadd.f32 0.0, %v1506
    %v1508 = vpop.f32.mrb[0].mxu0
    %v1509 = vadd.f32 0.0, %v1508
    %v1510 = vpop.f32.mrb[0].mxu0
    %v1511 = vadd.f32 0.0, %v1510
    %1512 = vmatprep.mubr.bf16.mxu0 0
    %1513 = vmatmul.mubr.bf16.gmra.mrb[0].mxu0 %v1125
    %v1514 = vpop.f32.mrb[0].mxu0
    %v1515 = vadd.f32 0.0, %v1514
    %v1516 = vpop.f32.mrb[0].mxu0
    %v1517 = vadd.f32 0.0, %v1516
    %v1518 = vpop.f32.mrb[0].mxu0
    %v1519 = vadd.f32 0.0, %v1518
    %v1520 = vpop.f32.mrb[0].mxu0
    %v1521 = vadd.f32 0.0, %v1520
    %1522 = vmatprep.mubr.bf16.mxu0 0
    %1523 = vmatmul.mubr.bf16.gmra.mrb[0].mxu0 %v1126
    %v1524 = vpop.f32.mrb[0].mxu0
    %v1525 = vadd.f32 0.0, %v1524
    %v1526 = vpop.f32.mrb[0].mxu0
    %v1527 = vadd.f32 0.0, %v1526
    %v1528 = vpop.f32.mrb[0].mxu0
    %v1529 = vadd.f32 0.0, %v1528
    %v1530 = vpop.f32.mrb[0].mxu0
    %v1531 = vadd.f32 0.0, %v1530
    %1532 = vmatprep.mubr.bf16.mxu0 0
    %1533 = vmatmul.mubr.bf16.gmra.mrb[0].mxu0 %v1127
    %v1534 = vpop.f32.mrb[0].mxu0
    %v1535 = vadd.f32 0.0, %v1534
    %v1536 = vpop.f32.mrb[0].mxu0
    %v1537 = vadd.f32 0.0, %v1536
    %v1538 = vpop.f32.mrb[0].mxu0
    %v1539 = vadd.f32 0.0, %v1538
    %v1540 = vpop.f32.mrb[0].mxu0
    %v1541 = vadd.f32 0.0, %v1540
    %1542 = vmatprep.mubr.bf16.mxu0 0
    %1543 = vmatmul.mubr.bf16.gmra.mrb[0].mxu0 %v1128
    %v1544 = vpop.f32.mrb[0].mxu0
    %v1545 = vadd.f32 0.0, %v1544
    %v1546 = vpop.f32.mrb[0].mxu0
    %v1547 = vadd.f32 0.0, %v1546
    %v1548 = vpop.f32.mrb[0].mxu0
    %v1549 = vadd.f32 0.0, %v1548
    %v1550 = vpop.f32.mrb[0].mxu0
    %v1551 = vadd.f32 0.0, %v1550
    %1552 = vmatprep.mubr.bf16.mxu0 0
    %1553 = vmatmul.mubr.bf16.gmra.mrb[0].mxu0 %v1129
    %v1554 = vpop.f32.mrb[0].mxu0
    %v1555 = vadd.f32 0.0, %v1554
    %v1556 = vpop.f32.mrb[0].mxu0
    %v1557 = vadd.f32 0.0, %v1556
    %v1558 = vpop.f32.mrb[0].mxu0
    %v1559 = vadd.f32 0.0, %v1558
    %v1560 = vpop.f32.mrb[0].mxu0
    %v1561 = vadd.f32 0.0, %v1560
    %1562 = vdwg.mxu0
    %1563 = vmatprep.subr.bf16.mxu0 %v1325
    %1564 = vmatpush1.bf16.msra.mxu0 %v1324
    %1565 = vmatprep.subr.bf16.mxu0 %v1333
    %1566 = vmatpush1.bf16.msra.mxu0 %v1332
    %1567 = vmatprep.subr.bf16.mxu0 %v1341
    %1568 = vmatpush1.bf16.msra.mxu0 %v1340
    %1569 = vmatprep.subr.bf16.mxu0 %v1349
    %1570 = vmatpush1.bf16.msra.mxu0 %v1348
    %1571 = vmatprep.subr.bf16.mxu0 %v1357
    %1572 = vmatpush1.bf16.msra.mxu0 %v1356
    %1573 = vmatprep.subr.bf16.mxu0 %v1365
    %1574 = vmatpush1.bf16.msra.mxu0 %v1364
    %1575 = vmatprep.subr.bf16.mxu0 %v1373
    %1576 = vmatpush1.bf16.msra.mxu0 %v1372
    %1577 = vmatprep.subr.bf16.mxu0 %v1381
    %1578 = vmatpush1.bf16.msra.mxu0 %v1380
    %1579 = vmatprep.subr.bf16.mxu0 0
    %1580 = vmatpush1.bf16.msra.mxu0 0
    %1581 = vmatprep.subr.bf16.mxu0 0
    %1582 = vmatpush1.bf16.msra.mxu0 0
    %1583 = vmatprep.subr.bf16.mxu0 0
    %1584 = vmatpush1.bf16.msra.mxu0 0
    %1585 = vmatprep.subr.bf16.mxu0 0
    %1586 = vmatpush1.bf16.msra.mxu0 0
    %1587 = vmatprep.subr.bf16.mxu0 0
    %1588 = vmatpush1.bf16.msra.mxu0 0
    %1589 = vmatprep.subr.bf16.mxu0 0
    %1590 = vmatpush1.bf16.msra.mxu0 0
    %1591 = vmatprep.subr.bf16.mxu0 0
    %1592 = vmatpush1.bf16.msra.mxu0 0
    %1593 = vmatprep.subr.bf16.mxu0 0
    %1594 = vmatpush1.bf16.msra.mxu0 0
    %1595 = vmatprep.mubr.bf16.mxu0 0
    %1596 = vmatmul.mubr.bf16.gmra.mrb[0].mxu0 %v1122
    %v1597 = vpop.f32.mrb[0].mxu0
    %v1598 = vadd.f32 0.0, %v1597
    %v1599 = vpop.f32.mrb[0].mxu0
    %v1600 = vadd.f32 0.0, %v1599
    %v1601 = vpop.f32.mrb[0].mxu0
    %v1602 = vadd.f32 0.0, %v1601
    %v1603 = vpop.f32.mrb[0].mxu0
    %v1604 = vadd.f32 0.0, %v1603
    %1605 = vmatprep.mubr.bf16.mxu0 0
    %1606 = vmatmul.mubr.bf16.gmra.mrb[0].mxu0 %v1123
    %v1607 = vpop.f32.mrb[0].mxu0
    %v1608 = vadd.f32 0.0, %v1607
    %v1609 = vpop.f32.mrb[0].mxu0
    %v1610 = vadd.f32 0.0, %v1609
    %v1611 = vpop.f32.mrb[0].mxu0
    %v1612 = vadd.f32 0.0, %v1611
    %v1613 = vpop.f32.mrb[0].mxu0
    %v1614 = vadd.f32 0.0, %v1613
    %1615 = vmatprep.mubr.bf16.mxu0 0
    %1616 = vmatmul.mubr.bf16.gmra.mrb[0].mxu0 %v1124
    %v1617 = vpop.f32.mrb[0].mxu0
    %v1618 = vadd.f32 0.0, %v1617
    %v1619 = vpop.f32.mrb[0].mxu0
    %v1620 = vadd.f32 0.0, %v1619
    %v1621 = vpop.f32.mrb[0].mxu0
    %v1622 = vadd.f32 0.0, %v1621
    %v1623 = vpop.f32.mrb[0].mxu0
    %v1624 = vadd.f32 0.0, %v1623
    %1625 = vmatprep.mubr.bf16.mxu0 0
    %1626 = vmatmul.mubr.bf16.gmra.mrb[0].mxu0 %v1125
    %v1627 = vpop.f32.mrb[0].mxu0
    %v1628 = vadd.f32 0.0, %v1627
    %v1629 = vpop.f32.mrb[0].mxu0
    %v1630 = vadd.f32 0.0, %v1629
    %v1631 = vpop.f32.mrb[0].mxu0
    %v1632 = vadd.f32 0.0, %v1631
    %v1633 = vpop.f32.mrb[0].mxu0
    %v1634 = vadd.f32 0.0, %v1633
    %1635 = vmatprep.mubr.bf16.mxu0 0
    %1636 = vmatmul.mubr.bf16.gmra.mrb[0].mxu0 %v1126
    %v1637 = vpop.f32.mrb[0].mxu0
    %v1638 = vadd.f32 0.0, %v1637
    %v1639 = vpop.f32.mrb[0].mxu0
    %v1640 = vadd.f32 0.0, %v1639
    %v1641 = vpop.f32.mrb[0].mxu0
    %v1642 = vadd.f32 0.0, %v1641
    %v1643 = vpop.f32.mrb[0].mxu0
    %v1644 = vadd.f32 0.0, %v1643
    %1645 = vmatprep.mubr.bf16.mxu0 0
    %1646 = vmatmul.mubr.bf16.gmra.mrb[0].mxu0 %v1127
    %v1647 = vpop.f32.mrb[0].mxu0
    %v1648 = vadd.f32 0.0, %v1647
    %v1649 = vpop.f32.mrb[0].mxu0
    %v1650 = vadd.f32 0.0, %v1649
    %v1651 = vpop.f32.mrb[0].mxu0
    %v1652 = vadd.f32 0.0, %v1651
    %v1653 = vpop.f32.mrb[0].mxu0
    %v1654 = vadd.f32 0.0, %v1653
    %1655 = vmatprep.mubr.bf16.mxu0 0
    %1656 = vmatmul.mubr.bf16.gmra.mrb[0].mxu0 %v1128
    %v1657 = vpop.f32.mrb[0].mxu0
    %v1658 = vadd.f32 0.0, %v1657
    %v1659 = vpop.f32.mrb[0].mxu0
    %v1660 = vadd.f32 0.0, %v1659
    %v1661 = vpop.f32.mrb[0].mxu0
    %v1662 = vadd.f32 0.0, %v1661
    %v1663 = vpop.f32.mrb[0].mxu0
    %v1664 = vadd.f32 0.0, %v1663
    %1665 = vmatprep.mubr.bf16.mxu0 0
    %1666 = vmatmul.mubr.bf16.gmra.mrb[0].mxu0 %v1129
    %v1667 = vpop.f32.mrb[0].mxu0
    %v1668 = vadd.f32 0.0, %v1667
    %v1669 = vpop.f32.mrb[0].mxu0
    %v1670 = vadd.f32 0.0, %v1669
    %v1671 = vpop.f32.mrb[0].mxu0
    %v1672 = vadd.f32 0.0, %v1671
    %v1673 = vpop.f32.mrb[0].mxu0
    %v1674 = vadd.f32 0.0, %v1673
    %1675 = vdwg.mxu0
    %1676 = vmatprep.subr.bf16.mxu0 %v1327
    %1677 = vmatpush1.bf16.msra.mxu0 %v1326
    %1678 = vmatprep.subr.bf16.mxu0 %v1335
    %1679 = vmatpush1.bf16.msra.mxu0 %v1334
    %1680 = vmatprep.subr.bf16.mxu0 %v1343
    %1681 = vmatpush1.bf16.msra.mxu0 %v1342
    %1682 = vmatprep.subr.bf16.mxu0 %v1351
    %1683 = vmatpush1.bf16.msra.mxu0 %v1350
    %1684 = vmatprep.subr.bf16.mxu0 %v1359
    %1685 = vmatpush1.bf16.msra.mxu0 %v1358
    %1686 = vmatprep.subr.bf16.mxu0 %v1367
    %1687 = vmatpush1.bf16.msra.mxu0 %v1366
    %1688 = vmatprep.subr.bf16.mxu0 %v1375
    %1689 = vmatpush1.bf16.msra.mxu0 %v1374
    %1690 = vmatprep.subr.bf16.mxu0 %v1383
    %1691 = vmatpush1.bf16.msra.mxu0 %v1382
    %1692 = vmatprep.subr.bf16.mxu0 0
    %1693 = vmatpush1.bf16.msra.mxu0 0
    %1694 = vmatprep.subr.bf16.mxu0 0
    %1695 = vmatpush1.bf16.msra.mxu0 0
    %1696 = vmatprep.subr.bf16.mxu0 0
    %1697 = vmatpush1.bf16.msra.mxu0 0
    %1698 = vmatprep.subr.bf16.mxu0 0
    %1699 = vmatpush1.bf16.msra.mxu0 0
    %1700 = vmatprep.subr.bf16.mxu0 0
    %1701 = vmatpush1.bf16.msra.mxu0 0
    %1702 = vmatprep.subr.bf16.mxu0 0
    %1703 = vmatpush1.bf16.msra.mxu0 0
    %1704 = vmatprep.subr.bf16.mxu0 0
    %1705 = vmatpush1.bf16.msra.mxu0 0
    %1706 = vmatprep.subr.bf16.mxu0 0
    %1707 = vmatpush1.bf16.msra.mxu0 0
    %1708 = vmatprep.mubr.bf16.mxu0 0
    %1709 = vmatmul.mubr.bf16.gmra.mrb[0].mxu0 %v1122
    %v1710 = vpop.f32.mrb[0].mxu0
    %v1711 = vadd.f32 0.0, %v1710
    %v1712 = vpop.f32.mrb[0].mxu0
    %v1713 = vadd.f32 0.0, %v1712
    %v1714 = vpop.f32.mrb[0].mxu0
    %v1715 = vadd.f32 0.0, %v1714
    %v1716 = vpop.f32.mrb[0].mxu0
    %v1717 = vadd.f32 0.0, %v1716
    %1718 = vmatprep.mubr.bf16.mxu0 0
    %1719 = vmatmul.mubr.bf16.gmra.mrb[0].mxu0 %v1123
    %v1720 = vpop.f32.mrb[0].mxu0
    %v1721 = vadd.f32 0.0, %v1720
    %v1722 = vpop.f32.mrb[0].mxu0
    %v1723 = vadd.f32 0.0, %v1722
    %v1724 = vpop.f32.mrb[0].mxu0
    %v1725 = vadd.f32 0.0, %v1724
    %v1726 = vpop.f32.mrb[0].mxu0
    %v1727 = vadd.f32 0.0, %v1726
    %1728 = vmatprep.mubr.bf16.mxu0 0
    %1729 = vmatmul.mubr.bf16.gmra.mrb[0].mxu0 %v1124
    %v1730 = vpop.f32.mrb[0].mxu0
    %v1731 = vadd.f32 0.0, %v1730
    %v1732 = vpop.f32.mrb[0].mxu0
    %v1733 = vadd.f32 0.0, %v1732
    %v1734 = vpop.f32.mrb[0].mxu0
    %v1735 = vadd.f32 0.0, %v1734
    %v1736 = vpop.f32.mrb[0].mxu0
    %v1737 = vadd.f32 0.0, %v1736
    %1738 = vmatprep.mubr.bf16.mxu0 0
    %1739 = vmatmul.mubr.bf16.gmra.mrb[0].mxu0 %v1125
    %v1740 = vpop.f32.mrb[0].mxu0
    %v1741 = vadd.f32 0.0, %v1740
    %v1742 = vpop.f32.mrb[0].mxu0
    %v1743 = vadd.f32 0.0, %v1742
    %v1744 = vpop.f32.mrb[0].mxu0
    %v1745 = vadd.f32 0.0, %v1744
    %v1746 = vpop.f32.mrb[0].mxu0
    %v1747 = vadd.f32 0.0, %v1746
    %1748 = vmatprep.mubr.bf16.mxu0 0
    %1749 = vmatmul.mubr.bf16.gmra.mrb[0].mxu0 %v1126
    %v1750 = vpop.f32.mrb[0].mxu0
    %v1751 = vadd.f32 0.0, %v1750
    %v1752 = vpop.f32.mrb[0].mxu0
    %v1753 = vadd.f32 0.0, %v1752
    %v1754 = vpop.f32.mrb[0].mxu0
    %v1755 = vadd.f32 0.0, %v1754
    %v1756 = vpop.f32.mrb[0].mxu0
    %v1757 = vadd.f32 0.0, %v1756
    %1758 = vmatprep.mubr.bf16.mxu0 0
    %1759 = vmatmul.mubr.bf16.gmra.mrb[0].mxu0 %v1127
    %v1760 = vpop.f32.mrb[0].mxu0
    %v1761 = vadd.f32 0.0, %v1760
    %v1762 = vpop.f32.mrb[0].mxu0
    %v1763 = vadd.f32 0.0, %v1762
    %v1764 = vpop.f32.mrb[0].mxu0
    %v1765 = vadd.f32 0.0, %v1764
    %v1766 = vpop.f32.mrb[0].mxu0
    %v1767 = vadd.f32 0.0, %v1766
    %1768 = vmatprep.mubr.bf16.mxu0 0
    %1769 = vmatmul.mubr.bf16.gmra.mrb[0].mxu0 %v1128
    %v1770 = vpop.f32.mrb[0].mxu0
    %v1771 = vadd.f32 0.0, %v1770
    %v1772 = vpop.f32.mrb[0].mxu0
    %v1773 = vadd.f32 0.0, %v1772
    %v1774 = vpop.f32.mrb[0].mxu0
    %v1775 = vadd.f32 0.0, %v1774
    %v1776 = vpop.f32.mrb[0].mxu0
    %v1777 = vadd.f32 0.0, %v1776
    %1778 = vmatprep.mubr.bf16.mxu0 0
    %1779 = vmatmul.mubr.bf16.gmra.mrb[0].mxu0 %v1129
    %v1780 = vpop.f32.mrb[0].mxu0
    %v1781 = vadd.f32 0.0, %v1780
    %v1782 = vpop.f32.mrb[0].mxu0
    %v1783 = vadd.f32 0.0, %v1782
    %v1784 = vpop.f32.mrb[0].mxu0
    %v1785 = vadd.f32 0.0, %v1784
    %v1786 = vpop.f32.mrb[0].mxu0
    %v1787 = vadd.f32 0.0, %v1786
    %1788 = vdwg.mxu0
    %1789 = vmatprep.subr.bf16.mxu0 %v1329
    %1790 = vmatpush1.bf16.msra.mxu0 %v1328
    %1791 = vmatprep.subr.bf16.mxu0 %v1337
    %1792 = vmatpush1.bf16.msra.mxu0 %v1336
    %1793 = vmatprep.subr.bf16.mxu0 %v1345
    %1794 = vmatpush1.bf16.msra.mxu0 %v1344
    %1795 = vmatprep.subr.bf16.mxu0 %v1353
    %1796 = vmatpush1.bf16.msra.mxu0 %v1352
    %1797 = vmatprep.subr.bf16.mxu0 %v1361
    %1798 = vmatpush1.bf16.msra.mxu0 %v1360
    %1799 = vmatprep.subr.bf16.mxu0 %v1369
    %1800 = vmatpush1.bf16.msra.mxu0 %v1368
    %1801 = vmatprep.subr.bf16.mxu0 %v1377
    %1802 = vmatpush1.bf16.msra.mxu0 %v1376
    %1803 = vmatprep.subr.bf16.mxu0 %v1385
    %1804 = vmatpush1.bf16.msra.mxu0 %v1384
    %1805 = vmatprep.subr.bf16.mxu0 0
    %1806 = vmatpush1.bf16.msra.mxu0 0
    %1807 = vmatprep.subr.bf16.mxu0 0
    %1808 = vmatpush1.bf16.msra.mxu0 0
    %1809 = vmatprep.subr.bf16.mxu0 0
    %1810 = vmatpush1.bf16.msra.mxu0 0
    %1811 = vmatprep.subr.bf16.mxu0 0
    %1812 = vmatpush1.bf16.msra.mxu0 0
    %1813 = vmatprep.subr.bf16.mxu0 0
    %1814 = vmatpush1.bf16.msra.mxu0 0
    %1815 = vmatprep.subr.bf16.mxu0 0
    %1816 = vmatpush1.bf16.msra.mxu0 0
    %1817 = vmatprep.subr.bf16.mxu0 0
    %1818 = vmatpush1.bf16.msra.mxu0 0
    %1819 = vmatprep.subr.bf16.mxu0 0
    %1820 = vmatpush1.bf16.msra.mxu0 0
    %1821 = vmatprep.mubr.bf16.mxu0 0
    %1822 = vmatmul.mubr.bf16.gmra.mrb[0].mxu0 %v1122
    %v1823 = vpop.f32.mrb[0].mxu0
    %v1824 = vadd.f32 0.0, %v1823
    %v1825 = vpop.f32.mrb[0].mxu0
    %v1826 = vadd.f32 0.0, %v1825
    %v1827 = vpop.f32.mrb[0].mxu0
    %v1828 = vadd.f32 0.0, %v1827
    %v1829 = vpop.f32.mrb[0].mxu0
    %v1830 = vadd.f32 0.0, %v1829
    %1831 = vmatprep.mubr.bf16.mxu0 0
    %1832 = vmatmul.mubr.bf16.gmra.mrb[0].mxu0 %v1123
    %v1833 = vpop.f32.mrb[0].mxu0
    %v1834 = vadd.f32 0.0, %v1833
    %v1835 = vpop.f32.mrb[0].mxu0
    %v1836 = vadd.f32 0.0, %v1835
    %v1837 = vpop.f32.mrb[0].mxu0
    %v1838 = vadd.f32 0.0, %v1837
    %v1839 = vpop.f32.mrb[0].mxu0
    %v1840 = vadd.f32 0.0, %v1839
    %1841 = vmatprep.mubr.bf16.mxu0 0
    %1842 = vmatmul.mubr.bf16.gmra.mrb[0].mxu0 %v1124
    %v1843 = vpop.f32.mrb[0].mxu0
    %v1844 = vadd.f32 0.0, %v1843
    %v1845 = vpop.f32.mrb[0].mxu0
    %v1846 = vadd.f32 0.0, %v1845
    %v1847 = vpop.f32.mrb[0].mxu0
    %v1848 = vadd.f32 0.0, %v1847
    %v1849 = vpop.f32.mrb[0].mxu0
    %v1850 = vadd.f32 0.0, %v1849
    %1851 = vmatprep.mubr.bf16.mxu0 0
    %1852 = vmatmul.mubr.bf16.gmra.mrb[0].mxu0 %v1125
    %v1853 = vpop.f32.mrb[0].mxu0
    %v1854 = vadd.f32 0.0, %v1853
    %v1855 = vpop.f32.mrb[0].mxu0
    %v1856 = vadd.f32 0.0, %v1855
    %v1857 = vpop.f32.mrb[0].mxu0
    %v1858 = vadd.f32 0.0, %v1857
    %v1859 = vpop.f32.mrb[0].mxu0
    %v1860 = vadd.f32 0.0, %v1859
    %1861 = vmatprep.mubr.bf16.mxu0 0
    %1862 = vmatmul.mubr.bf16.gmra.mrb[0].mxu0 %v1126
    %v1863 = vpop.f32.mrb[0].mxu0
    %v1864 = vadd.f32 0.0, %v1863
    %v1865 = vpop.f32.mrb[0].mxu0
    %v1866 = vadd.f32 0.0, %v1865
    %v1867 = vpop.f32.mrb[0].mxu0
    %v1868 = vadd.f32 0.0, %v1867
    %v1869 = vpop.f32.mrb[0].mxu0
    %v1870 = vadd.f32 0.0, %v1869
    %1871 = vmatprep.mubr.bf16.mxu0 0
    %1872 = vmatmul.mubr.bf16.gmra.mrb[0].mxu0 %v1127
    %v1873 = vpop.f32.mrb[0].mxu0
    %v1874 = vadd.f32 0.0, %v1873
    %v1875 = vpop.f32.mrb[0].mxu0
    %v1876 = vadd.f32 0.0, %v1875
    %v1877 = vpop.f32.mrb[0].mxu0
    %v1878 = vadd.f32 0.0, %v1877
    %v1879 = vpop.f32.mrb[0].mxu0
    %v1880 = vadd.f32 0.0, %v1879
    %1881 = vmatprep.mubr.bf16.mxu0 0
    %1882 = vmatmul.mubr.bf16.gmra.mrb[0].mxu0 %v1128
    %v1883 = vpop.f32.mrb[0].mxu0
    %v1884 = vadd.f32 0.0, %v1883
    %v1885 = vpop.f32.mrb[0].mxu0
    %v1886 = vadd.f32 0.0, %v1885
    %v1887 = vpop.f32.mrb[0].mxu0
    %v1888 = vadd.f32 0.0, %v1887
    %v1889 = vpop.f32.mrb[0].mxu0
    %v1890 = vadd.f32 0.0, %v1889
    %1891 = vmatprep.mubr.bf16.mxu0 0
    %1892 = vmatmul.mubr.bf16.gmra.mrb[0].mxu0 %v1129
    %v1893 = vpop.f32.mrb[0].mxu0
    %v1894 = vadd.f32 0.0, %v1893
    %v1895 = vpop.f32.mrb[0].mxu0
    %v1896 = vadd.f32 0.0, %v1895
    %v1897 = vpop.f32.mrb[0].mxu0
    %v1898 = vadd.f32 0.0, %v1897
    %v1899 = vpop.f32.mrb[0].mxu0
    %v1900 = vadd.f32 0.0, %v1899
    %1901 = vdwg.mxu0
    %v1903 = vlaneseq
    %v1904 = vshrl.u32 %v1903, 7
    %v1905 = vsub.s32 0, %v1904
    %v1906 = vrot.slane %v256, %v1905
    %v1907 = vlaneseq
    %v1908 = vshrl.u32 %v1907, 7
    %v1909 = vsub.s32 1, %v1908
    %v1910 = vrot.slane %v256, %v1909
    %v1911 = vlaneseq
    %v1912 = vshrl.u32 %v1911, 7
    %v1913 = vsub.s32 2, %v1912
    %v1914 = vrot.slane %v256, %v1913
    %v1915 = vlaneseq
    %v1916 = vshrl.u32 %v1915, 7
    %v1917 = vsub.s32 3, %v1916
    %v1918 = vrot.slane %v256, %v1917
    %v1919 = vlaneseq
    %v1920 = vshrl.u32 %v1919, 7
    %v1921 = vsub.s32 4, %v1920
    %v1922 = vrot.slane %v256, %v1921
    %v1923 = vlaneseq
    %v1924 = vshrl.u32 %v1923, 7
    %v1925 = vsub.s32 5, %v1924
    %v1926 = vrot.slane %v256, %v1925
    %v1927 = vlaneseq
    %v1928 = vshrl.u32 %v1927, 7
    %v1929 = vsub.s32 6, %v1928
    %v1930 = vrot.slane %v256, %v1929
    %v1931 = vlaneseq
    %v1932 = vshrl.u32 %v1931, 7
    %v1933 = vsub.s32 7, %v1932
    %v1934 = vrot.slane %v256, %v1933
    %v1943 = vmul.f32 %v1485, %v1906
    %v1944 = vmul.f32 %v1487, %v1910
    %v1945 = vmul.f32 %v1598, %v1914
    %v1946 = vmul.f32 %v1600, %v1918
    %v1947 = vmul.f32 %v1711, %v1922
    %v1948 = vmul.f32 %v1713, %v1926
    %v1949 = vmul.f32 %v1824, %v1930
    %v1950 = vmul.f32 %v1826, %v1934
    %v1951 = vmul.f32 %v1489, %v1906
    %v1952 = vmul.f32 %v1491, %v1910
    %v1953 = vmul.f32 %v1602, %v1914
    %v1954 = vmul.f32 %v1604, %v1918
    %v1955 = vmul.f32 %v1715, %v1922
    %v1956 = vmul.f32 %v1717, %v1926
    %v1957 = vmul.f32 %v1828, %v1930
    %v1958 = vmul.f32 %v1830, %v1934
    %v1959 = vmul.f32 %v1495, %v1906
    %v1960 = vmul.f32 %v1497, %v1910
    %v1961 = vmul.f32 %v1608, %v1914
    %v1962 = vmul.f32 %v1610, %v1918
    %v1963 = vmul.f32 %v1721, %v1922
    %v1964 = vmul.f32 %v1723, %v1926
    %v1965 = vmul.f32 %v1834, %v1930
    %v1966 = vmul.f32 %v1836, %v1934
    %v1967 = vmul.f32 %v1499, %v1906
    %v1968 = vmul.f32 %v1501, %v1910
    %v1969 = vmul.f32 %v1612, %v1914
    %v1970 = vmul.f32 %v1614, %v1918
    %v1971 = vmul.f32 %v1725, %v1922
    %v1972 = vmul.f32 %v1727, %v1926
    %v1973 = vmul.f32 %v1838, %v1930
    %v1974 = vmul.f32 %v1840, %v1934
    %v1975 = vmul.f32 %v1505, %v1906
    %v1976 = vmul.f32 %v1507, %v1910
    %v1977 = vmul.f32 %v1618, %v1914
    %v1978 = vmul.f32 %v1620, %v1918
    %v1979 = vmul.f32 %v1731, %v1922
    %v1980 = vmul.f32 %v1733, %v1926
    %v1981 = vmul.f32 %v1844, %v1930
    %v1982 = vmul.f32 %v1846, %v1934
    %v1983 = vmul.f32 %v1509, %v1906
    %v1984 = vmul.f32 %v1511, %v1910
    %v1985 = vmul.f32 %v1622, %v1914
    %v1986 = vmul.f32 %v1624, %v1918
    %v1987 = vmul.f32 %v1735, %v1922
    %v1988 = vmul.f32 %v1737, %v1926
    %v1989 = vmul.f32 %v1848, %v1930
    %v1990 = vmul.f32 %v1850, %v1934
    %v1991 = vmul.f32 %v1515, %v1906
    %v1992 = vmul.f32 %v1517, %v1910
    %v1993 = vmul.f32 %v1628, %v1914
    %v1994 = vmul.f32 %v1630, %v1918
    %v1995 = vmul.f32 %v1741, %v1922
    %v1996 = vmul.f32 %v1743, %v1926
    %v1997 = vmul.f32 %v1854, %v1930
    %v1998 = vmul.f32 %v1856, %v1934
    %v1999 = vmul.f32 %v1519, %v1906
    %v2000 = vmul.f32 %v1521, %v1910
    %v2001 = vmul.f32 %v1632, %v1914
    %v2002 = vmul.f32 %v1634, %v1918
    %v2003 = vmul.f32 %v1745, %v1922
    %v2004 = vmul.f32 %v1747, %v1926
    %v2005 = vmul.f32 %v1858, %v1930
    %v2006 = vmul.f32 %v1860, %v1934
    %v2007 = vmul.f32 %v1525, %v1906
    %v2008 = vmul.f32 %v1527, %v1910
    %v2009 = vmul.f32 %v1638, %v1914
    %v2010 = vmul.f32 %v1640, %v1918
    %v2011 = vmul.f32 %v1751, %v1922
    %v2012 = vmul.f32 %v1753, %v1926
    %v2013 = vmul.f32 %v1864, %v1930
    %v2014 = vmul.f32 %v1866, %v1934
    %v2015 = vmul.f32 %v1529, %v1906
    %v2016 = vmul.f32 %v1531, %v1910
    %v2017 = vmul.f32 %v1642, %v1914
    %v2018 = vmul.f32 %v1644, %v1918
    %v2019 = vmul.f32 %v1755, %v1922
    %v2020 = vmul.f32 %v1757, %v1926
    %v2021 = vmul.f32 %v1868, %v1930
    %v2022 = vmul.f32 %v1870, %v1934
    %v2023 = vmul.f32 %v1535, %v1906
    %v2024 = vmul.f32 %v1537, %v1910
    %v2025 = vmul.f32 %v1648, %v1914
    %v2026 = vmul.f32 %v1650, %v1918
    %v2027 = vmul.f32 %v1761, %v1922
    %v2028 = vmul.f32 %v1763, %v1926
    %v2029 = vmul.f32 %v1874, %v1930
    %v2030 = vmul.f32 %v1876, %v1934
    %v2031 = vmul.f32 %v1539, %v1906
    %v2032 = vmul.f32 %v1541, %v1910
    %v2033 = vmul.f32 %v1652, %v1914
    %v2034 = vmul.f32 %v1654, %v1918
    %v2035 = vmul.f32 %v1765, %v1922
    %v2036 = vmul.f32 %v1767, %v1926
    %v2037 = vmul.f32 %v1878, %v1930
    %v2038 = vmul.f32 %v1880, %v1934
    %v2039 = vmul.f32 %v1545, %v1906
    %v2040 = vmul.f32 %v1547, %v1910
    %v2041 = vmul.f32 %v1658, %v1914
    %v2042 = vmul.f32 %v1660, %v1918
    %v2043 = vmul.f32 %v1771, %v1922
    %v2044 = vmul.f32 %v1773, %v1926
    %v2045 = vmul.f32 %v1884, %v1930
    %v2046 = vmul.f32 %v1886, %v1934
    %v2047 = vmul.f32 %v1549, %v1906
    %v2048 = vmul.f32 %v1551, %v1910
    %v2049 = vmul.f32 %v1662, %v1914
    %v2050 = vmul.f32 %v1664, %v1918
    %v2051 = vmul.f32 %v1775, %v1922
    %v2052 = vmul.f32 %v1777, %v1926
    %v2053 = vmul.f32 %v1888, %v1930
    %v2054 = vmul.f32 %v1890, %v1934
    %v2055 = vmul.f32 %v1555, %v1906
    %v2056 = vmul.f32 %v1557, %v1910
    %v2057 = vmul.f32 %v1668, %v1914
    %v2058 = vmul.f32 %v1670, %v1918
    %v2059 = vmul.f32 %v1781, %v1922
    %v2060 = vmul.f32 %v1783, %v1926
    %v2061 = vmul.f32 %v1894, %v1930
    %v2062 = vmul.f32 %v1896, %v1934
    %v2063 = vmul.f32 %v1559, %v1906
    %v2064 = vmul.f32 %v1561, %v1910
    %v2065 = vmul.f32 %v1672, %v1914
    %v2066 = vmul.f32 %v1674, %v1918
    %v2067 = vmul.f32 %v1785, %v1922
    %v2068 = vmul.f32 %v1787, %v1926
    %v2069 = vmul.f32 %v1898, %v1930
    %v2070 = vmul.f32 %v1900, %v1934
    %v2072 = vlaneseq
    %v2073 = vshrl.u32 %v2072, 7
    %v2074 = vsub.s32 0, %v2073
    %v2075 = vrot.slane %v257, %v2074
    %v2076 = vlaneseq
    %v2077 = vshrl.u32 %v2076, 7
    %v2078 = vsub.s32 1, %v2077
    %v2079 = vrot.slane %v257, %v2078
    %v2080 = vlaneseq
    %v2081 = vshrl.u32 %v2080, 7
    %v2082 = vsub.s32 2, %v2081
    %v2083 = vrot.slane %v257, %v2082
    %v2084 = vlaneseq
    %v2085 = vshrl.u32 %v2084, 7
    %v2086 = vsub.s32 3, %v2085
    %v2087 = vrot.slane %v257, %v2086
    %v2088 = vlaneseq
    %v2089 = vshrl.u32 %v2088, 7
    %v2090 = vsub.s32 4, %v2089
    %v2091 = vrot.slane %v257, %v2090
    %v2092 = vlaneseq
    %v2093 = vshrl.u32 %v2092, 7
    %v2094 = vsub.s32 5, %v2093
    %v2095 = vrot.slane %v257, %v2094
    %v2096 = vlaneseq
    %v2097 = vshrl.u32 %v2096, 7
    %v2098 = vsub.s32 6, %v2097
    %v2099 = vrot.slane %v257, %v2098
    %v2100 = vlaneseq
    %v2101 = vshrl.u32 %v2100, 7
    %v2102 = vsub.s32 7, %v2101
    %v2103 = vrot.slane %v257, %v2102
    %v2112 = vadd.f32 %v1943, %v2075
    %v2113 = vadd.f32 %v1944, %v2079
    %v2114 = vadd.f32 %v1945, %v2083
    %v2115 = vadd.f32 %v1946, %v2087
    %v2116 = vadd.f32 %v1947, %v2091
    %v2117 = vadd.f32 %v1948, %v2095
    %v2118 = vadd.f32 %v1949, %v2099
    %v2119 = vadd.f32 %v1950, %v2103
    %v2120 = vadd.f32 %v1951, %v2075
    %v2121 = vadd.f32 %v1952, %v2079
    %v2122 = vadd.f32 %v1953, %v2083
    %v2123 = vadd.f32 %v1954, %v2087
    %v2124 = vadd.f32 %v1955, %v2091
    %v2125 = vadd.f32 %v1956, %v2095
    %v2126 = vadd.f32 %v1957, %v2099
    %v2127 = vadd.f32 %v1958, %v2103
    %v2128 = vadd.f32 %v1959, %v2075
    %v2129 = vadd.f32 %v1960, %v2079
    %v2130 = vadd.f32 %v1961, %v2083
    %v2131 = vadd.f32 %v1962, %v2087
    %v2132 = vadd.f32 %v1963, %v2091
    %v2133 = vadd.f32 %v1964, %v2095
    %v2134 = vadd.f32 %v1965, %v2099
    %v2135 = vadd.f32 %v1966, %v2103
    %v2136 = vadd.f32 %v1967, %v2075
    %v2137 = vadd.f32 %v1968, %v2079
    %v2138 = vadd.f32 %v1969, %v2083
    %v2139 = vadd.f32 %v1970, %v2087
    %v2140 = vadd.f32 %v1971, %v2091
    %v2141 = vadd.f32 %v1972, %v2095
    %v2142 = vadd.f32 %v1973, %v2099
    %v2143 = vadd.f32 %v1974, %v2103
    %v2144 = vadd.f32 %v1975, %v2075
    %v2145 = vadd.f32 %v1976, %v2079
    %v2146 = vadd.f32 %v1977, %v2083
    %v2147 = vadd.f32 %v1978, %v2087
    %v2148 = vadd.f32 %v1979, %v2091
    %v2149 = vadd.f32 %v1980, %v2095
    %v2150 = vadd.f32 %v1981, %v2099
    %v2151 = vadd.f32 %v1982, %v2103
    %v2152 = vadd.f32 %v1983, %v2075
    %v2153 = vadd.f32 %v1984, %v2079
    %v2154 = vadd.f32 %v1985, %v2083
    %v2155 = vadd.f32 %v1986, %v2087
    %v2156 = vadd.f32 %v1987, %v2091
    %v2157 = vadd.f32 %v1988, %v2095
    %v2158 = vadd.f32 %v1989, %v2099
    %v2159 = vadd.f32 %v1990, %v2103
    %v2160 = vadd.f32 %v1991, %v2075
    %v2161 = vadd.f32 %v1992, %v2079
    %v2162 = vadd.f32 %v1993, %v2083
    %v2163 = vadd.f32 %v1994, %v2087
    %v2164 = vadd.f32 %v1995, %v2091
    %v2165 = vadd.f32 %v1996, %v2095
    %v2166 = vadd.f32 %v1997, %v2099
    %v2167 = vadd.f32 %v1998, %v2103
    %v2168 = vadd.f32 %v1999, %v2075
    %v2169 = vadd.f32 %v2000, %v2079
    %v2170 = vadd.f32 %v2001, %v2083
    %v2171 = vadd.f32 %v2002, %v2087
    %v2172 = vadd.f32 %v2003, %v2091
    %v2173 = vadd.f32 %v2004, %v2095
    %v2174 = vadd.f32 %v2005, %v2099
    %v2175 = vadd.f32 %v2006, %v2103
    %v2176 = vadd.f32 %v2007, %v2075
    %v2177 = vadd.f32 %v2008, %v2079
    %v2178 = vadd.f32 %v2009, %v2083
    %v2179 = vadd.f32 %v2010, %v2087
    %v2180 = vadd.f32 %v2011, %v2091
    %v2181 = vadd.f32 %v2012, %v2095
    %v2182 = vadd.f32 %v2013, %v2099
    %v2183 = vadd.f32 %v2014, %v2103
    %v2184 = vadd.f32 %v2015, %v2075
    %v2185 = vadd.f32 %v2016, %v2079
    %v2186 = vadd.f32 %v2017, %v2083
    %v2187 = vadd.f32 %v2018, %v2087
    %v2188 = vadd.f32 %v2019, %v2091
    %v2189 = vadd.f32 %v2020, %v2095
    %v2190 = vadd.f32 %v2021, %v2099
    %v2191 = vadd.f32 %v2022, %v2103
    %v2192 = vadd.f32 %v2023, %v2075
    %v2193 = vadd.f32 %v2024, %v2079
    %v2194 = vadd.f32 %v2025, %v2083
    %v2195 = vadd.f32 %v2026, %v2087
    %v2196 = vadd.f32 %v2027, %v2091
    %v2197 = vadd.f32 %v2028, %v2095
    %v2198 = vadd.f32 %v2029, %v2099
    %v2199 = vadd.f32 %v2030, %v2103
    %v2200 = vadd.f32 %v2031, %v2075
    %v2201 = vadd.f32 %v2032, %v2079
    %v2202 = vadd.f32 %v2033, %v2083
    %v2203 = vadd.f32 %v2034, %v2087
    %v2204 = vadd.f32 %v2035, %v2091
    %v2205 = vadd.f32 %v2036, %v2095
    %v2206 = vadd.f32 %v2037, %v2099
    %v2207 = vadd.f32 %v2038, %v2103
    %v2208 = vadd.f32 %v2039, %v2075
    %v2209 = vadd.f32 %v2040, %v2079
    %v2210 = vadd.f32 %v2041, %v2083
    %v2211 = vadd.f32 %v2042, %v2087
    %v2212 = vadd.f32 %v2043, %v2091
    %v2213 = vadd.f32 %v2044, %v2095
    %v2214 = vadd.f32 %v2045, %v2099
    %v2215 = vadd.f32 %v2046, %v2103
    %v2216 = vadd.f32 %v2047, %v2075
    %v2217 = vadd.f32 %v2048, %v2079
    %v2218 = vadd.f32 %v2049, %v2083
    %v2219 = vadd.f32 %v2050, %v2087
    %v2220 = vadd.f32 %v2051, %v2091
    %v2221 = vadd.f32 %v2052, %v2095
    %v2222 = vadd.f32 %v2053, %v2099
    %v2223 = vadd.f32 %v2054, %v2103
    %v2224 = vadd.f32 %v2055, %v2075
    %v2225 = vadd.f32 %v2056, %v2079
    %v2226 = vadd.f32 %v2057, %v2083
    %v2227 = vadd.f32 %v2058, %v2087
    %v2228 = vadd.f32 %v2059, %v2091
    %v2229 = vadd.f32 %v2060, %v2095
    %v2230 = vadd.f32 %v2061, %v2099
    %v2231 = vadd.f32 %v2062, %v2103
    %v2232 = vadd.f32 %v2063, %v2075
    %v2233 = vadd.f32 %v2064, %v2079
    %v2234 = vadd.f32 %v2065, %v2083
    %v2235 = vadd.f32 %v2066, %v2087
    %v2236 = vadd.f32 %v2067, %v2091
    %v2237 = vadd.f32 %v2068, %v2095
    %v2238 = vadd.f32 %v2069, %v2099
    %v2239 = vadd.f32 %v2070, %v2103
    %v2240 = vmax.f32 %v2112, 0.0
    %v2241 = vmax.f32 %v2113, 0.0
    %v2242 = vmax.f32 %v2114, 0.0
    %v2243 = vmax.f32 %v2115, 0.0
    %v2244 = vmax.f32 %v2116, 0.0
    %v2245 = vmax.f32 %v2117, 0.0
    %v2246 = vmax.f32 %v2118, 0.0
    %v2247 = vmax.f32 %v2119, 0.0
    %v2248 = vmax.f32 %v2120, 0.0
    %v2249 = vmax.f32 %v2121, 0.0
    %v2250 = vmax.f32 %v2122, 0.0
    %v2251 = vmax.f32 %v2123, 0.0
    %v2252 = vmax.f32 %v2124, 0.0
    %v2253 = vmax.f32 %v2125, 0.0
    %v2254 = vmax.f32 %v2126, 0.0
    %v2255 = vmax.f32 %v2127, 0.0
    %v2256 = vmax.f32 %v2128, 0.0
    %v2257 = vmax.f32 %v2129, 0.0
    %v2258 = vmax.f32 %v2130, 0.0
    %v2259 = vmax.f32 %v2131, 0.0
    %v2260 = vmax.f32 %v2132, 0.0
    %v2261 = vmax.f32 %v2133, 0.0
    %v2262 = vmax.f32 %v2134, 0.0
    %v2263 = vmax.f32 %v2135, 0.0
    %v2264 = vmax.f32 %v2136, 0.0
    %v2265 = vmax.f32 %v2137, 0.0
    %v2266 = vmax.f32 %v2138, 0.0
    %v2267 = vmax.f32 %v2139, 0.0
    %v2268 = vmax.f32 %v2140, 0.0
    %v2269 = vmax.f32 %v2141, 0.0
    %v2270 = vmax.f32 %v2142, 0.0
    %v2271 = vmax.f32 %v2143, 0.0
    %v2272 = vmax.f32 %v2144, 0.0
    %v2273 = vmax.f32 %v2145, 0.0
    %v2274 = vmax.f32 %v2146, 0.0
    %v2275 = vmax.f32 %v2147, 0.0
    %v2276 = vmax.f32 %v2148, 0.0
    %v2277 = vmax.f32 %v2149, 0.0
    %v2278 = vmax.f32 %v2150, 0.0
    %v2279 = vmax.f32 %v2151, 0.0
    %v2280 = vmax.f32 %v2152, 0.0
    %v2281 = vmax.f32 %v2153, 0.0
    %v2282 = vmax.f32 %v2154, 0.0
    %v2283 = vmax.f32 %v2155, 0.0
    %v2284 = vmax.f32 %v2156, 0.0
    %v2285 = vmax.f32 %v2157, 0.0
    %v2286 = vmax.f32 %v2158, 0.0
    %v2287 = vmax.f32 %v2159, 0.0
    %v2288 = vmax.f32 %v2160, 0.0
    %v2289 = vmax.f32 %v2161, 0.0
    %v2290 = vmax.f32 %v2162, 0.0
    %v2291 = vmax.f32 %v2163, 0.0
    %v2292 = vmax.f32 %v2164, 0.0
    %v2293 = vmax.f32 %v2165, 0.0
    %v2294 = vmax.f32 %v2166, 0.0
    %v2295 = vmax.f32 %v2167, 0.0
    %v2296 = vmax.f32 %v2168, 0.0
    %v2297 = vmax.f32 %v2169, 0.0
    %v2298 = vmax.f32 %v2170, 0.0
    %v2299 = vmax.f32 %v2171, 0.0
    %v2300 = vmax.f32 %v2172, 0.0
    %v2301 = vmax.f32 %v2173, 0.0
    %v2302 = vmax.f32 %v2174, 0.0
    %v2303 = vmax.f32 %v2175, 0.0
    %v2304 = vmax.f32 %v2176, 0.0
    %v2305 = vmax.f32 %v2177, 0.0
    %v2306 = vmax.f32 %v2178, 0.0
    %v2307 = vmax.f32 %v2179, 0.0
    %v2308 = vmax.f32 %v2180, 0.0
    %v2309 = vmax.f32 %v2181, 0.0
    %v2310 = vmax.f32 %v2182, 0.0
    %v2311 = vmax.f32 %v2183, 0.0
    %v2312 = vmax.f32 %v2184, 0.0
    %v2313 = vmax.f32 %v2185, 0.0
    %v2314 = vmax.f32 %v2186, 0.0
    %v2315 = vmax.f32 %v2187, 0.0
    %v2316 = vmax.f32 %v2188, 0.0
    %v2317 = vmax.f32 %v2189, 0.0
    %v2318 = vmax.f32 %v2190, 0.0
    %v2319 = vmax.f32 %v2191, 0.0
    %v2320 = vmax.f32 %v2192, 0.0
    %v2321 = vmax.f32 %v2193, 0.0
    %v2322 = vmax.f32 %v2194, 0.0
    %v2323 = vmax.f32 %v2195, 0.0
    %v2324 = vmax.f32 %v2196, 0.0
    %v2325 = vmax.f32 %v2197, 0.0
    %v2326 = vmax.f32 %v2198, 0.0
    %v2327 = vmax.f32 %v2199, 0.0
    %v2328 = vmax.f32 %v2200, 0.0
    %v2329 = vmax.f32 %v2201, 0.0
    %v2330 = vmax.f32 %v2202, 0.0
    %v2331 = vmax.f32 %v2203, 0.0
    %v2332 = vmax.f32 %v2204, 0.0
    %v2333 = vmax.f32 %v2205, 0.0
    %v2334 = vmax.f32 %v2206, 0.0
    %v2335 = vmax.f32 %v2207, 0.0
    %v2336 = vmax.f32 %v2208, 0.0
    %v2337 = vmax.f32 %v2209, 0.0
    %v2338 = vmax.f32 %v2210, 0.0
    %v2339 = vmax.f32 %v2211, 0.0
    %v2340 = vmax.f32 %v2212, 0.0
    %v2341 = vmax.f32 %v2213, 0.0
    %v2342 = vmax.f32 %v2214, 0.0
    %v2343 = vmax.f32 %v2215, 0.0
    %v2344 = vmax.f32 %v2216, 0.0
    %v2345 = vmax.f32 %v2217, 0.0
    %v2346 = vmax.f32 %v2218, 0.0
    %v2347 = vmax.f32 %v2219, 0.0
    %v2348 = vmax.f32 %v2220, 0.0
    %v2349 = vmax.f32 %v2221, 0.0
    %v2350 = vmax.f32 %v2222, 0.0
    %v2351 = vmax.f32 %v2223, 0.0
    %v2352 = vmax.f32 %v2224, 0.0
    %v2353 = vmax.f32 %v2225, 0.0
    %v2354 = vmax.f32 %v2226, 0.0
    %v2355 = vmax.f32 %v2227, 0.0
    %v2356 = vmax.f32 %v2228, 0.0
    %v2357 = vmax.f32 %v2229, 0.0
    %v2358 = vmax.f32 %v2230, 0.0
    %v2359 = vmax.f32 %v2231, 0.0
    %v2360 = vmax.f32 %v2232, 0.0
    %v2361 = vmax.f32 %v2233, 0.0
    %v2362 = vmax.f32 %v2234, 0.0
    %v2363 = vmax.f32 %v2235, 0.0
    %v2364 = vmax.f32 %v2236, 0.0
    %v2365 = vmax.f32 %v2237, 0.0
    %v2366 = vmax.f32 %v2238, 0.0
    %v2367 = vmax.f32 %v2239, 0.0
    %v2368 = vmax.f32 %v2240, %v2248
    %v2369 = vmax.f32 %v2368, %v2256
    %v2370 = vmax.f32 %v2369, %v2264
    %v2371 = vmax.f32 %v2370, %v2272
    %v2372 = vmax.f32 %v2371, %v2280
    %v2373 = vmax.f32 %v2372, %v2288
    %v2374 = vmax.f32 %v2373, %v2296
    %v2375 = vrot.slane %v2374, 4
    %v2376 = vmax.f32 %v2374, %v2375
    %v2377 = vrot.slane %v2376, 2
    %v2378 = vmax.f32 %v2376, %v2377
    %v2379 = vrot.slane %v2378, 1
    %v2380 = vmax.f32 %v2378, %v2379
    %v2381 = vmax.f32 %v2241, %v2249
    %v2382 = vmax.f32 %v2381, %v2257
    %v2383 = vmax.f32 %v2382, %v2265
    %v2384 = vmax.f32 %v2383, %v2273
    %v2385 = vmax.f32 %v2384, %v2281
    %v2386 = vmax.f32 %v2385, %v2289
    %v2387 = vmax.f32 %v2386, %v2297
    %v2388 = vrot.slane %v2387, 4
    %v2389 = vmax.f32 %v2387, %v2388
    %v2390 = vrot.slane %v2389, 2
    %v2391 = vmax.f32 %v2389, %v2390
    %v2392 = vrot.slane %v2391, 1
    %v2393 = vmax.f32 %v2391, %v2392
    %v2394 = vmax.f32 %v2242, %v2250
    %v2395 = vmax.f32 %v2394, %v2258
    %v2396 = vmax.f32 %v2395, %v2266
    %v2397 = vmax.f32 %v2396, %v2274
    %v2398 = vmax.f32 %v2397, %v2282
    %v2399 = vmax.f32 %v2398, %v2290
    %v2400 = vmax.f32 %v2399, %v2298
    %v2401 = vrot.slane %v2400, 4
    %v2402 = vmax.f32 %v2400, %v2401
    %v2403 = vrot.slane %v2402, 2
    %v2404 = vmax.f32 %v2402, %v2403
    %v2405 = vrot.slane %v2404, 1
    %v2406 = vmax.f32 %v2404, %v2405
    %v2407 = vmax.f32 %v2243, %v2251
    %v2408 = vmax.f32 %v2407, %v2259
    %v2409 = vmax.f32 %v2408, %v2267
    %v2410 = vmax.f32 %v2409, %v2275
    %v2411 = vmax.f32 %v2410, %v2283
    %v2412 = vmax.f32 %v2411, %v2291
    %v2413 = vmax.f32 %v2412, %v2299
    %v2414 = vrot.slane %v2413, 4
    %v2415 = vmax.f32 %v2413, %v2414
    %v2416 = vrot.slane %v2415, 2
    %v2417 = vmax.f32 %v2415, %v2416
    %v2418 = vrot.slane %v2417, 1
    %v2419 = vmax.f32 %v2417, %v2418
    %v2420 = vmax.f32 %v2244, %v2252
    %v2421 = vmax.f32 %v2420, %v2260
    %v2422 = vmax.f32 %v2421, %v2268
    %v2423 = vmax.f32 %v2422, %v2276
    %v2424 = vmax.f32 %v2423, %v2284
    %v2425 = vmax.f32 %v2424, %v2292
    %v2426 = vmax.f32 %v2425, %v2300
    %v2427 = vrot.slane %v2426, 4
    %v2428 = vmax.f32 %v2426, %v2427
    %v2429 = vrot.slane %v2428, 2
    %v2430 = vmax.f32 %v2428, %v2429
    %v2431 = vrot.slane %v2430, 1
    %v2432 = vmax.f32 %v2430, %v2431
    %v2433 = vmax.f32 %v2245, %v2253
    %v2434 = vmax.f32 %v2433, %v2261
    %v2435 = vmax.f32 %v2434, %v2269
    %v2436 = vmax.f32 %v2435, %v2277
    %v2437 = vmax.f32 %v2436, %v2285
    %v2438 = vmax.f32 %v2437, %v2293
    %v2439 = vmax.f32 %v2438, %v2301
    %v2440 = vrot.slane %v2439, 4
    %v2441 = vmax.f32 %v2439, %v2440
    %v2442 = vrot.slane %v2441, 2
    %v2443 = vmax.f32 %v2441, %v2442
    %v2444 = vrot.slane %v2443, 1
    %v2445 = vmax.f32 %v2443, %v2444
    %v2446 = vmax.f32 %v2246, %v2254
    %v2447 = vmax.f32 %v2446, %v2262
    %v2448 = vmax.f32 %v2447, %v2270
    %v2449 = vmax.f32 %v2448, %v2278
    %v2450 = vmax.f32 %v2449, %v2286
    %v2451 = vmax.f32 %v2450, %v2294
    %v2452 = vmax.f32 %v2451, %v2302
    %v2453 = vrot.slane %v2452, 4
    %v2454 = vmax.f32 %v2452, %v2453
    %v2455 = vrot.slane %v2454, 2
    %v2456 = vmax.f32 %v2454, %v2455
    %v2457 = vrot.slane %v2456, 1
    %v2458 = vmax.f32 %v2456, %v2457
    %v2459 = vmax.f32 %v2247, %v2255
    %v2460 = vmax.f32 %v2459, %v2263
    %v2461 = vmax.f32 %v2460, %v2271
    %v2462 = vmax.f32 %v2461, %v2279
    %v2463 = vmax.f32 %v2462, %v2287
    %v2464 = vmax.f32 %v2463, %v2295
    %v2465 = vmax.f32 %v2464, %v2303
    %v2466 = vrot.slane %v2465, 4
    %v2467 = vmax.f32 %v2465, %v2466
    %v2468 = vrot.slane %v2467, 2
    %v2469 = vmax.f32 %v2467, %v2468
    %v2470 = vrot.slane %v2469, 1
    %v2471 = vmax.f32 %v2469, %v2470
    %v2472 = vmax.f32 %v2304, %v2312
    %v2473 = vmax.f32 %v2472, %v2320
    %v2474 = vmax.f32 %v2473, %v2328
    %v2475 = vmax.f32 %v2474, %v2336
    %v2476 = vmax.f32 %v2475, %v2344
    %v2477 = vmax.f32 %v2476, %v2352
    %v2478 = vmax.f32 %v2477, %v2360
    %v2479 = vrot.slane %v2478, 4
    %v2480 = vmax.f32 %v2478, %v2479
    %v2481 = vrot.slane %v2480, 2
    %v2482 = vmax.f32 %v2480, %v2481
    %v2483 = vrot.slane %v2482, 1
    %v2484 = vmax.f32 %v2482, %v2483
    %v2485 = vmax.f32 %v2305, %v2313
    %v2486 = vmax.f32 %v2485, %v2321
    %v2487 = vmax.f32 %v2486, %v2329
    %v2488 = vmax.f32 %v2487, %v2337
    %v2489 = vmax.f32 %v2488, %v2345
    %v2490 = vmax.f32 %v2489, %v2353
    %v2491 = vmax.f32 %v2490, %v2361
    %v2492 = vrot.slane %v2491, 4
    %v2493 = vmax.f32 %v2491, %v2492
    %v2494 = vrot.slane %v2493, 2
    %v2495 = vmax.f32 %v2493, %v2494
    %v2496 = vrot.slane %v2495, 1
    %v2497 = vmax.f32 %v2495, %v2496
    %v2498 = vmax.f32 %v2306, %v2314
    %v2499 = vmax.f32 %v2498, %v2322
    %v2500 = vmax.f32 %v2499, %v2330
    %v2501 = vmax.f32 %v2500, %v2338
    %v2502 = vmax.f32 %v2501, %v2346
    %v2503 = vmax.f32 %v2502, %v2354
    %v2504 = vmax.f32 %v2503, %v2362
    %v2505 = vrot.slane %v2504, 4
    %v2506 = vmax.f32 %v2504, %v2505
    %v2507 = vrot.slane %v2506, 2
    %v2508 = vmax.f32 %v2506, %v2507
    %v2509 = vrot.slane %v2508, 1
    %v2510 = vmax.f32 %v2508, %v2509
    %v2511 = vmax.f32 %v2307, %v2315
    %v2512 = vmax.f32 %v2511, %v2323
    %v2513 = vmax.f32 %v2512, %v2331
    %v2514 = vmax.f32 %v2513, %v2339
    %v2515 = vmax.f32 %v2514, %v2347
    %v2516 = vmax.f32 %v2515, %v2355
    %v2517 = vmax.f32 %v2516, %v2363
    %v2518 = vrot.slane %v2517, 4
    %v2519 = vmax.f32 %v2517, %v2518
    %v2520 = vrot.slane %v2519, 2
    %v2521 = vmax.f32 %v2519, %v2520
    %v2522 = vrot.slane %v2521, 1
    %v2523 = vmax.f32 %v2521, %v2522
    %v2524 = vmax.f32 %v2308, %v2316
    %v2525 = vmax.f32 %v2524, %v2324
    %v2526 = vmax.f32 %v2525, %v2332
    %v2527 = vmax.f32 %v2526, %v2340
    %v2528 = vmax.f32 %v2527, %v2348
    %v2529 = vmax.f32 %v2528, %v2356
    %v2530 = vmax.f32 %v2529, %v2364
    %v2531 = vrot.slane %v2530, 4
    %v2532 = vmax.f32 %v2530, %v2531
    %v2533 = vrot.slane %v2532, 2
    %v2534 = vmax.f32 %v2532, %v2533
    %v2535 = vrot.slane %v2534, 1
    %v2536 = vmax.f32 %v2534, %v2535
    %v2537 = vmax.f32 %v2309, %v2317
    %v2538 = vmax.f32 %v2537, %v2325
    %v2539 = vmax.f32 %v2538, %v2333
    %v2540 = vmax.f32 %v2539, %v2341
    %v2541 = vmax.f32 %v2540, %v2349
    %v2542 = vmax.f32 %v2541, %v2357
    %v2543 = vmax.f32 %v2542, %v2365
    %v2544 = vrot.slane %v2543, 4
    %v2545 = vmax.f32 %v2543, %v2544
    %v2546 = vrot.slane %v2545, 2
    %v2547 = vmax.f32 %v2545, %v2546
    %v2548 = vrot.slane %v2547, 1
    %v2549 = vmax.f32 %v2547, %v2548
    %v2550 = vmax.f32 %v2310, %v2318
    %v2551 = vmax.f32 %v2550, %v2326
    %v2552 = vmax.f32 %v2551, %v2334
    %v2553 = vmax.f32 %v2552, %v2342
    %v2554 = vmax.f32 %v2553, %v2350
    %v2555 = vmax.f32 %v2554, %v2358
    %v2556 = vmax.f32 %v2555, %v2366
    %v2557 = vrot.slane %v2556, 4
    %v2558 = vmax.f32 %v2556, %v2557
    %v2559 = vrot.slane %v2558, 2
    %v2560 = vmax.f32 %v2558, %v2559
    %v2561 = vrot.slane %v2560, 1
    %v2562 = vmax.f32 %v2560, %v2561
    %v2563 = vmax.f32 %v2311, %v2319
    %v2564 = vmax.f32 %v2563, %v2327
    %v2565 = vmax.f32 %v2564, %v2335
    %v2566 = vmax.f32 %v2565, %v2343
    %v2567 = vmax.f32 %v2566, %v2351
    %v2568 = vmax.f32 %v2567, %v2359
    %v2569 = vmax.f32 %v2568, %v2367
    %v2570 = vrot.slane %v2569, 4
    %v2571 = vmax.f32 %v2569, %v2570
    %v2572 = vrot.slane %v2571, 2
    %v2573 = vmax.f32 %v2571, %v2572
    %v2574 = vrot.slane %v2573, 1
    %v2575 = vmax.f32 %v2573, %v2574
    %vm2576 = vcmask 1040384
    %v2577 = vsel %vm2576, %v2380, %v2484
    %v2578 = vsel %vm2576, %v2393, %v2497
    %v2579 = vsel %vm2576, %v2406, %v2510
    %v2580 = vsel %vm2576, %v2419, %v2523
    %v2581 = vsel %vm2576, %v2432, %v2536
    %v2582 = vsel %vm2576, %v2445, %v2549
    %v2583 = vsel %vm2576, %v2458, %v2562
    %v2584 = vsel %vm2576, %v2471, %v2575
    %v2585 = vpack.c.bf16 %v2577, %v2577
    %v2586 = vpack.c.bf16 %v2578, %v2578
    %v2587 = vpack.c.bf16 %v2579, %v2579
    %v2588 = vpack.c.bf16 %v2580, %v2580
    %v2589 = vpack.c.bf16 %v2581, %v2581
    %v2590 = vpack.c.bf16 %v2582, %v2582
    %v2591 = vpack.c.bf16 %v2583, %v2583
    %v2592 = vpack.c.bf16 %v2584, %v2584
    %v2849 = vunpack.c.l.b16 %v258
    %v2850 = vunpack.c.h.b16 %v258
    %v2851 = vunpack.c.l.b16 %v259
    %v2852 = vunpack.c.h.b16 %v259
    %v2853 = vunpack.c.l.b16 %v260
    %v2854 = vunpack.c.h.b16 %v260
    %v2855 = vunpack.c.l.b16 %v261
    %v2856 = vunpack.c.h.b16 %v261
    %v2857 = vunpack.c.l.b16 %v262
    %v2858 = vunpack.c.h.b16 %v262
    %v2859 = vunpack.c.l.b16 %v263
    %v2860 = vunpack.c.h.b16 %v263
    %v2861 = vunpack.c.l.b16 %v264
    %v2862 = vunpack.c.h.b16 %v264
    %v2863 = vunpack.c.l.b16 %v265
    %v2864 = vunpack.c.h.b16 %v265
    %v2865 = vunpack.c.l.b16 %v266
    %v2866 = vunpack.c.h.b16 %v266
    %v2867 = vunpack.c.l.b16 %v267
    %v2868 = vunpack.c.h.b16 %v267
    %v2869 = vunpack.c.l.b16 %v268
    %v2870 = vunpack.c.h.b16 %v268
    %v2871 = vunpack.c.l.b16 %v269
    %v2872 = vunpack.c.h.b16 %v269
    %v2873 = vunpack.c.l.b16 %v270
    %v2874 = vunpack.c.h.b16 %v270
    %v2875 = vunpack.c.l.b16 %v271
    %v2876 = vunpack.c.h.b16 %v271
    %v2877 = vunpack.c.l.b16 %v272
    %v2878 = vunpack.c.h.b16 %v272
    %v2879 = vunpack.c.l.b16 %v273
    %v2880 = vunpack.c.h.b16 %v273
    %v2881 = vunpack.c.l.b16 %v274
    %v2882 = vunpack.c.h.b16 %v274
    %v2883 = vunpack.c.l.b16 %v275
    %v2884 = vunpack.c.h.b16 %v275
    %v2885 = vunpack.c.l.b16 %v276
    %v2886 = vunpack.c.h.b16 %v276
    %v2887 = vunpack.c.l.b16 %v277
    %v2888 = vunpack.c.h.b16 %v277
    %v2889 = vunpack.c.l.b16 %v278
    %v2890 = vunpack.c.h.b16 %v278
    %v2891 = vunpack.c.l.b16 %v279
    %v2892 = vunpack.c.h.b16 %v279
    %v2893 = vunpack.c.l.b16 %v280
    %v2894 = vunpack.c.h.b16 %v280
    %v2895 = vunpack.c.l.b16 %v281
    %v2896 = vunpack.c.h.b16 %v281
    %v2897 = vunpack.c.l.b16 %v282
    %v2898 = vunpack.c.h.b16 %v282
    %v2899 = vunpack.c.l.b16 %v283
    %v2900 = vunpack.c.h.b16 %v283
    %v2901 = vunpack.c.l.b16 %v284
    %v2902 = vunpack.c.h.b16 %v284
    %v2903 = vunpack.c.l.b16 %v285
    %v2904 = vunpack.c.h.b16 %v285
    %v2905 = vunpack.c.l.b16 %v286
    %v2906 = vunpack.c.h.b16 %v286
    %v2907 = vunpack.c.l.b16 %v287
    %v2908 = vunpack.c.h.b16 %v287
    %v2909 = vunpack.c.l.b16 %v288
    %v2910 = vunpack.c.h.b16 %v288
    %v2911 = vunpack.c.l.b16 %v289
    %v2912 = vunpack.c.h.b16 %v289
    %v2913 = vunpack.c.l.b16 %v290
    %v2914 = vunpack.c.h.b16 %v290
    %v2915 = vunpack.c.l.b16 %v291
    %v2916 = vunpack.c.h.b16 %v291
    %v2917 = vunpack.c.l.b16 %v292
    %v2918 = vunpack.c.h.b16 %v292
    %v2919 = vunpack.c.l.b16 %v293
    %v2920 = vunpack.c.h.b16 %v293
    %v2921 = vunpack.c.l.b16 %v294
    %v2922 = vunpack.c.h.b16 %v294
    %v2923 = vunpack.c.l.b16 %v295
    %v2924 = vunpack.c.h.b16 %v295
    %v2925 = vunpack.c.l.b16 %v296
    %v2926 = vunpack.c.h.b16 %v296
    %v2927 = vunpack.c.l.b16 %v297
    %v2928 = vunpack.c.h.b16 %v297
    %v2929 = vunpack.c.l.b16 %v298
    %v2930 = vunpack.c.h.b16 %v298
    %v2931 = vunpack.c.l.b16 %v299
    %v2932 = vunpack.c.h.b16 %v299
    %v2933 = vunpack.c.l.b16 %v300
    %v2934 = vunpack.c.h.b16 %v300
    %v2935 = vunpack.c.l.b16 %v301
    %v2936 = vunpack.c.h.b16 %v301
    %v2937 = vunpack.c.l.b16 %v302
    %v2938 = vunpack.c.h.b16 %v302
    %v2939 = vunpack.c.l.b16 %v303
    %v2940 = vunpack.c.h.b16 %v303
    %v2941 = vunpack.c.l.b16 %v304
    %v2942 = vunpack.c.h.b16 %v304
    %v2943 = vunpack.c.l.b16 %v305
    %v2944 = vunpack.c.h.b16 %v305
    %v2945 = vunpack.c.l.b16 %v306
    %v2946 = vunpack.c.h.b16 %v306
    %v2947 = vunpack.c.l.b16 %v307
    %v2948 = vunpack.c.h.b16 %v307
    %v2949 = vunpack.c.l.b16 %v308
    %v2950 = vunpack.c.h.b16 %v308
    %v2951 = vunpack.c.l.b16 %v309
    %v2952 = vunpack.c.h.b16 %v309
    %v2953 = vunpack.c.l.b16 %v310
    %v2954 = vunpack.c.h.b16 %v310
    %v2955 = vunpack.c.l.b16 %v311
    %v2956 = vunpack.c.h.b16 %v311
    %v2957 = vunpack.c.l.b16 %v312
    %v2958 = vunpack.c.h.b16 %v312
    %v2959 = vunpack.c.l.b16 %v313
    %v2960 = vunpack.c.h.b16 %v313
    %v2961 = vunpack.c.l.b16 %v314
    %v2962 = vunpack.c.h.b16 %v314
    %v2963 = vunpack.c.l.b16 %v315
    %v2964 = vunpack.c.h.b16 %v315
    %v2965 = vunpack.c.l.b16 %v316
    %v2966 = vunpack.c.h.b16 %v316
    %v2967 = vunpack.c.l.b16 %v317
    %v2968 = vunpack.c.h.b16 %v317
    %v2969 = vunpack.c.l.b16 %v318
    %v2970 = vunpack.c.h.b16 %v318
    %v2971 = vunpack.c.l.b16 %v319
    %v2972 = vunpack.c.h.b16 %v319
    %v2973 = vunpack.c.l.b16 %v320
    %v2974 = vunpack.c.h.b16 %v320
    %v2975 = vunpack.c.l.b16 %v321
    %v2976 = vunpack.c.h.b16 %v321
    %v2977 = vunpack.c.l.b16 %v322
    %v2978 = vunpack.c.h.b16 %v322
    %v2979 = vunpack.c.l.b16 %v323
    %v2980 = vunpack.c.h.b16 %v323
    %v2981 = vunpack.c.l.b16 %v324
    %v2982 = vunpack.c.h.b16 %v324
    %v2983 = vunpack.c.l.b16 %v325
    %v2984 = vunpack.c.h.b16 %v325
    %v2985 = vunpack.c.l.b16 %v326
    %v2986 = vunpack.c.h.b16 %v326
    %v2987 = vunpack.c.l.b16 %v327
    %v2988 = vunpack.c.h.b16 %v327
    %v2989 = vunpack.c.l.b16 %v328
    %v2990 = vunpack.c.h.b16 %v328
    %v2991 = vunpack.c.l.b16 %v329
    %v2992 = vunpack.c.h.b16 %v329
    %v2993 = vunpack.c.l.b16 %v330
    %v2994 = vunpack.c.h.b16 %v330
    %v2995 = vunpack.c.l.b16 %v331
    %v2996 = vunpack.c.h.b16 %v331
    %v2997 = vunpack.c.l.b16 %v332
    %v2998 = vunpack.c.h.b16 %v332
    %v2999 = vunpack.c.l.b16 %v333
    %v3000 = vunpack.c.h.b16 %v333
    %v3001 = vunpack.c.l.b16 %v334
    %v3002 = vunpack.c.h.b16 %v334
    %v3003 = vunpack.c.l.b16 %v335
    %v3004 = vunpack.c.h.b16 %v335
    %v3005 = vunpack.c.l.b16 %v336
    %v3006 = vunpack.c.h.b16 %v336
    %v3007 = vunpack.c.l.b16 %v337
    %v3008 = vunpack.c.h.b16 %v337
    %v3009 = vunpack.c.l.b16 %v338
    %v3010 = vunpack.c.h.b16 %v338
    %v3011 = vunpack.c.l.b16 %v339
    %v3012 = vunpack.c.h.b16 %v339
    %v3013 = vunpack.c.l.b16 %v340
    %v3014 = vunpack.c.h.b16 %v340
    %v3015 = vunpack.c.l.b16 %v341
    %v3016 = vunpack.c.h.b16 %v341
    %v3017 = vunpack.c.l.b16 %v342
    %v3018 = vunpack.c.h.b16 %v342
    %v3019 = vunpack.c.l.b16 %v343
    %v3020 = vunpack.c.h.b16 %v343
    %v3021 = vunpack.c.l.b16 %v344
    %v3022 = vunpack.c.h.b16 %v344
    %v3023 = vunpack.c.l.b16 %v345
    %v3024 = vunpack.c.h.b16 %v345
    %v3025 = vunpack.c.l.b16 %v346
    %v3026 = vunpack.c.h.b16 %v346
    %v3027 = vunpack.c.l.b16 %v347
    %v3028 = vunpack.c.h.b16 %v347
    %v3029 = vunpack.c.l.b16 %v348
    %v3030 = vunpack.c.h.b16 %v348
    %v3031 = vunpack.c.l.b16 %v349
    %v3032 = vunpack.c.h.b16 %v349
    %v3033 = vunpack.c.l.b16 %v350
    %v3034 = vunpack.c.h.b16 %v350
    %v3035 = vunpack.c.l.b16 %v351
    %v3036 = vunpack.c.h.b16 %v351
    %v3037 = vunpack.c.l.b16 %v352
    %v3038 = vunpack.c.h.b16 %v352
    %v3039 = vunpack.c.l.b16 %v353
    %v3040 = vunpack.c.h.b16 %v353
    %v3041 = vunpack.c.l.b16 %v354
    %v3042 = vunpack.c.h.b16 %v354
    %v3043 = vunpack.c.l.b16 %v355
    %v3044 = vunpack.c.h.b16 %v355
    %v3045 = vunpack.c.l.b16 %v356
    %v3046 = vunpack.c.h.b16 %v356
    %v3047 = vunpack.c.l.b16 %v357
    %v3048 = vunpack.c.h.b16 %v357
    %v3049 = vunpack.c.l.b16 %v358
    %v3050 = vunpack.c.h.b16 %v358
    %v3051 = vunpack.c.l.b16 %v359
    %v3052 = vunpack.c.h.b16 %v359
    %v3053 = vunpack.c.l.b16 %v360
    %v3054 = vunpack.c.h.b16 %v360
    %v3055 = vunpack.c.l.b16 %v361
    %v3056 = vunpack.c.h.b16 %v361
    %v3057 = vunpack.c.l.b16 %v362
    %v3058 = vunpack.c.h.b16 %v362
    %v3059 = vunpack.c.l.b16 %v363
    %v3060 = vunpack.c.h.b16 %v363
    %v3061 = vunpack.c.l.b16 %v364
    %v3062 = vunpack.c.h.b16 %v364
    %v3063 = vunpack.c.l.b16 %v365
    %v3064 = vunpack.c.h.b16 %v365
    %v3065 = vunpack.c.l.b16 %v366
    %v3066 = vunpack.c.h.b16 %v366
    %v3067 = vunpack.c.l.b16 %v367
    %v3068 = vunpack.c.h.b16 %v367
    %v3069 = vunpack.c.l.b16 %v368
    %v3070 = vunpack.c.h.b16 %v368
    %v3071 = vunpack.c.l.b16 %v369
    %v3072 = vunpack.c.h.b16 %v369
    %v3073 = vunpack.c.l.b16 %v370
    %v3074 = vunpack.c.h.b16 %v370
    %v3075 = vunpack.c.l.b16 %v371
    %v3076 = vunpack.c.h.b16 %v371
    %v3077 = vunpack.c.l.b16 %v372
    %v3078 = vunpack.c.h.b16 %v372
    %v3079 = vunpack.c.l.b16 %v373
    %v3080 = vunpack.c.h.b16 %v373
    %v3081 = vunpack.c.l.b16 %v374
    %v3082 = vunpack.c.h.b16 %v374
    %v3083 = vunpack.c.l.b16 %v375
    %v3084 = vunpack.c.h.b16 %v375
    %v3085 = vunpack.c.l.b16 %v376
    %v3086 = vunpack.c.h.b16 %v376
    %v3087 = vunpack.c.l.b16 %v377
    %v3088 = vunpack.c.h.b16 %v377
    %v3089 = vunpack.c.l.b16 %v378
    %v3090 = vunpack.c.h.b16 %v378
    %v3091 = vunpack.c.l.b16 %v379
    %v3092 = vunpack.c.h.b16 %v379
    %v3093 = vunpack.c.l.b16 %v380
    %v3094 = vunpack.c.h.b16 %v380
    %v3095 = vunpack.c.l.b16 %v381
    %v3096 = vunpack.c.h.b16 %v381
    %v3097 = vunpack.c.l.b16 %v382
    %v3098 = vunpack.c.h.b16 %v382
    %v3099 = vunpack.c.l.b16 %v383
    %v3100 = vunpack.c.h.b16 %v383
    %v3101 = vunpack.c.l.b16 %v384
    %v3102 = vunpack.c.h.b16 %v384
    %v3103 = vunpack.c.l.b16 %v385
    %v3104 = vunpack.c.h.b16 %v385
    %v3105 = vunpack.c.l.b16 %v386
    %v3106 = vunpack.c.h.b16 %v386
    %v3107 = vunpack.c.l.b16 %v387
    %v3108 = vunpack.c.h.b16 %v387
    %v3109 = vunpack.c.l.b16 %v388
    %v3110 = vunpack.c.h.b16 %v388
    %v3111 = vunpack.c.l.b16 %v389
    %v3112 = vunpack.c.h.b16 %v389
    %v3113 = vunpack.c.l.b16 %v390
    %v3114 = vunpack.c.h.b16 %v390
    %v3115 = vunpack.c.l.b16 %v391
    %v3116 = vunpack.c.h.b16 %v391
    %v3117 = vunpack.c.l.b16 %v392
    %v3118 = vunpack.c.h.b16 %v392
    %v3119 = vunpack.c.l.b16 %v393
    %v3120 = vunpack.c.h.b16 %v393
    %v3121 = vunpack.c.l.b16 %v394
    %v3122 = vunpack.c.h.b16 %v394
    %v3123 = vunpack.c.l.b16 %v395
    %v3124 = vunpack.c.h.b16 %v395
    %v3125 = vunpack.c.l.b16 %v396
    %v3126 = vunpack.c.h.b16 %v396
    %v3127 = vunpack.c.l.b16 %v397
    %v3128 = vunpack.c.h.b16 %v397
    %v3129 = vunpack.c.l.b16 %v398
    %v3130 = vunpack.c.h.b16 %v398
    %v3131 = vunpack.c.l.b16 %v399
    %v3132 = vunpack.c.h.b16 %v399
    %v3133 = vunpack.c.l.b16 %v400
    %v3134 = vunpack.c.h.b16 %v400
    %v3135 = vunpack.c.l.b16 %v401
    %v3136 = vunpack.c.h.b16 %v401
    %v3137 = vunpack.c.l.b16 %v402
    %v3138 = vunpack.c.h.b16 %v402
    %v3139 = vunpack.c.l.b16 %v403
    %v3140 = vunpack.c.h.b16 %v403
    %v3141 = vunpack.c.l.b16 %v404
    %v3142 = vunpack.c.h.b16 %v404
    %v3143 = vunpack.c.l.b16 %v405
    %v3144 = vunpack.c.h.b16 %v405
    %v3145 = vunpack.c.l.b16 %v406
    %v3146 = vunpack.c.h.b16 %v406
    %v3147 = vunpack.c.l.b16 %v407
    %v3148 = vunpack.c.h.b16 %v407
    %v3149 = vunpack.c.l.b16 %v408
    %v3150 = vunpack.c.h.b16 %v408
    %v3151 = vunpack.c.l.b16 %v409
    %v3152 = vunpack.c.h.b16 %v409
    %v3153 = vunpack.c.l.b16 %v410
    %v3154 = vunpack.c.h.b16 %v410
    %v3155 = vunpack.c.l.b16 %v411
    %v3156 = vunpack.c.h.b16 %v411
    %v3157 = vunpack.c.l.b16 %v412
    %v3158 = vunpack.c.h.b16 %v412
    %v3159 = vunpack.c.l.b16 %v413
    %v3160 = vunpack.c.h.b16 %v413
    %v3161 = vunpack.c.l.b16 %v414
    %v3162 = vunpack.c.h.b16 %v414
    %v3163 = vunpack.c.l.b16 %v415
    %v3164 = vunpack.c.h.b16 %v415
    %v3165 = vunpack.c.l.b16 %v416
    %v3166 = vunpack.c.h.b16 %v416
    %v3167 = vunpack.c.l.b16 %v417
    %v3168 = vunpack.c.h.b16 %v417
    %v3169 = vunpack.c.l.b16 %v418
    %v3170 = vunpack.c.h.b16 %v418
    %v3171 = vunpack.c.l.b16 %v419
    %v3172 = vunpack.c.h.b16 %v419
    %v3173 = vunpack.c.l.b16 %v420
    %v3174 = vunpack.c.h.b16 %v420
    %v3175 = vunpack.c.l.b16 %v421
    %v3176 = vunpack.c.h.b16 %v421
    %v3177 = vunpack.c.l.b16 %v422
    %v3178 = vunpack.c.h.b16 %v422
    %v3179 = vunpack.c.l.b16 %v423
    %v3180 = vunpack.c.h.b16 %v423
    %v3181 = vunpack.c.l.b16 %v424
    %v3182 = vunpack.c.h.b16 %v424
    %v3183 = vunpack.c.l.b16 %v425
    %v3184 = vunpack.c.h.b16 %v425
    %v3185 = vunpack.c.l.b16 %v426
    %v3186 = vunpack.c.h.b16 %v426
    %v3187 = vunpack.c.l.b16 %v427
    %v3188 = vunpack.c.h.b16 %v427
    %v3189 = vunpack.c.l.b16 %v428
    %v3190 = vunpack.c.h.b16 %v428
    %v3191 = vunpack.c.l.b16 %v429
    %v3192 = vunpack.c.h.b16 %v429
    %v3193 = vunpack.c.l.b16 %v430
    %v3194 = vunpack.c.h.b16 %v430
    %v3195 = vunpack.c.l.b16 %v431
    %v3196 = vunpack.c.h.b16 %v431
    %v3197 = vunpack.c.l.b16 %v432
    %v3198 = vunpack.c.h.b16 %v432
    %v3199 = vunpack.c.l.b16 %v433
    %v3200 = vunpack.c.h.b16 %v433
    %v3201 = vunpack.c.l.b16 %v434
    %v3202 = vunpack.c.h.b16 %v434
    %v3203 = vunpack.c.l.b16 %v435
    %v3204 = vunpack.c.h.b16 %v435
    %v3205 = vunpack.c.l.b16 %v436
    %v3206 = vunpack.c.h.b16 %v436
    %v3207 = vunpack.c.l.b16 %v437
    %v3208 = vunpack.c.h.b16 %v437
    %v3209 = vunpack.c.l.b16 %v438
    %v3210 = vunpack.c.h.b16 %v438
    %v3211 = vunpack.c.l.b16 %v439
    %v3212 = vunpack.c.h.b16 %v439
    %v3213 = vunpack.c.l.b16 %v440
    %v3214 = vunpack.c.h.b16 %v440
    %v3215 = vunpack.c.l.b16 %v441
    %v3216 = vunpack.c.h.b16 %v441
    %v3217 = vunpack.c.l.b16 %v442
    %v3218 = vunpack.c.h.b16 %v442
    %v3219 = vunpack.c.l.b16 %v443
    %v3220 = vunpack.c.h.b16 %v443
    %v3221 = vunpack.c.l.b16 %v444
    %v3222 = vunpack.c.h.b16 %v444
    %v3223 = vunpack.c.l.b16 %v445
    %v3224 = vunpack.c.h.b16 %v445
    %v3225 = vunpack.c.l.b16 %v446
    %v3226 = vunpack.c.h.b16 %v446
    %v3227 = vunpack.c.l.b16 %v447
    %v3228 = vunpack.c.h.b16 %v447
    %v3229 = vunpack.c.l.b16 %v448
    %v3230 = vunpack.c.h.b16 %v448
    %v3231 = vunpack.c.l.b16 %v449
    %v3232 = vunpack.c.h.b16 %v449
    %v3233 = vunpack.c.l.b16 %v450
    %v3234 = vunpack.c.h.b16 %v450
    %v3235 = vunpack.c.l.b16 %v451
    %v3236 = vunpack.c.h.b16 %v451
    %v3237 = vunpack.c.l.b16 %v452
    %v3238 = vunpack.c.h.b16 %v452
    %v3239 = vunpack.c.l.b16 %v453
    %v3240 = vunpack.c.h.b16 %v453
    %v3241 = vunpack.c.l.b16 %v454
    %v3242 = vunpack.c.h.b16 %v454
    %v3243 = vunpack.c.l.b16 %v455
    %v3244 = vunpack.c.h.b16 %v455
    %v3245 = vunpack.c.l.b16 %v456
    %v3246 = vunpack.c.h.b16 %v456
    %v3247 = vunpack.c.l.b16 %v457
    %v3248 = vunpack.c.h.b16 %v457
    %v3249 = vunpack.c.l.b16 %v458
    %v3250 = vunpack.c.h.b16 %v458
    %v3251 = vunpack.c.l.b16 %v459
    %v3252 = vunpack.c.h.b16 %v459
    %v3253 = vunpack.c.l.b16 %v460
    %v3254 = vunpack.c.h.b16 %v460
    %v3255 = vunpack.c.l.b16 %v461
    %v3256 = vunpack.c.h.b16 %v461
    %v3257 = vunpack.c.l.b16 %v462
    %v3258 = vunpack.c.h.b16 %v462
    %v3259 = vunpack.c.l.b16 %v463
    %v3260 = vunpack.c.h.b16 %v463
    %v3261 = vunpack.c.l.b16 %v464
    %v3262 = vunpack.c.h.b16 %v464
    %v3263 = vunpack.c.l.b16 %v465
    %v3264 = vunpack.c.h.b16 %v465
    %v3265 = vunpack.c.l.b16 %v466
    %v3266 = vunpack.c.h.b16 %v466
    %v3267 = vunpack.c.l.b16 %v467
    %v3268 = vunpack.c.h.b16 %v467
    %v3269 = vunpack.c.l.b16 %v468
    %v3270 = vunpack.c.h.b16 %v468
    %v3271 = vunpack.c.l.b16 %v469
    %v3272 = vunpack.c.h.b16 %v469
    %v3273 = vunpack.c.l.b16 %v470
    %v3274 = vunpack.c.h.b16 %v470
    %v3275 = vunpack.c.l.b16 %v471
    %v3276 = vunpack.c.h.b16 %v471
    %v3277 = vunpack.c.l.b16 %v472
    %v3278 = vunpack.c.h.b16 %v472
    %v3279 = vunpack.c.l.b16 %v473
    %v3280 = vunpack.c.h.b16 %v473
    %v3281 = vunpack.c.l.b16 %v474
    %v3282 = vunpack.c.h.b16 %v474
    %v3283 = vunpack.c.l.b16 %v475
    %v3284 = vunpack.c.h.b16 %v475
    %v3285 = vunpack.c.l.b16 %v476
    %v3286 = vunpack.c.h.b16 %v476
    %v3287 = vunpack.c.l.b16 %v477
    %v3288 = vunpack.c.h.b16 %v477
    %v3289 = vunpack.c.l.b16 %v478
    %v3290 = vunpack.c.h.b16 %v478
    %v3291 = vunpack.c.l.b16 %v479
    %v3292 = vunpack.c.h.b16 %v479
    %v3293 = vunpack.c.l.b16 %v480
    %v3294 = vunpack.c.h.b16 %v480
    %v3295 = vunpack.c.l.b16 %v481
    %v3296 = vunpack.c.h.b16 %v481
    %v3297 = vunpack.c.l.b16 %v482
    %v3298 = vunpack.c.h.b16 %v482
    %v3299 = vunpack.c.l.b16 %v483
    %v3300 = vunpack.c.h.b16 %v483
    %v3301 = vunpack.c.l.b16 %v484
    %v3302 = vunpack.c.h.b16 %v484
    %v3303 = vunpack.c.l.b16 %v485
    %v3304 = vunpack.c.h.b16 %v485
    %v3305 = vunpack.c.l.b16 %v486
    %v3306 = vunpack.c.h.b16 %v486
    %v3307 = vunpack.c.l.b16 %v487
    %v3308 = vunpack.c.h.b16 %v487
    %v3309 = vunpack.c.l.b16 %v488
    %v3310 = vunpack.c.h.b16 %v488
    %v3311 = vunpack.c.l.b16 %v489
    %v3312 = vunpack.c.h.b16 %v489
    %v3313 = vunpack.c.l.b16 %v490
    %v3314 = vunpack.c.h.b16 %v490
    %v3315 = vunpack.c.l.b16 %v491
    %v3316 = vunpack.c.h.b16 %v491
    %v3317 = vunpack.c.l.b16 %v492
    %v3318 = vunpack.c.h.b16 %v492
    %v3319 = vunpack.c.l.b16 %v493
    %v3320 = vunpack.c.h.b16 %v493
    %v3321 = vunpack.c.l.b16 %v494
    %v3322 = vunpack.c.h.b16 %v494
    %v3323 = vunpack.c.l.b16 %v495
    %v3324 = vunpack.c.h.b16 %v495
    %v3325 = vunpack.c.l.b16 %v496
    %v3326 = vunpack.c.h.b16 %v496
    %v3327 = vunpack.c.l.b16 %v497
    %v3328 = vunpack.c.h.b16 %v497
    %v3329 = vunpack.c.l.b16 %v498
    %v3330 = vunpack.c.h.b16 %v498
    %v3331 = vunpack.c.l.b16 %v499
    %v3332 = vunpack.c.h.b16 %v499
    %v3333 = vunpack.c.l.b16 %v500
    %v3334 = vunpack.c.h.b16 %v500
    %v3335 = vunpack.c.l.b16 %v501
    %v3336 = vunpack.c.h.b16 %v501
    %v3337 = vunpack.c.l.b16 %v502
    %v3338 = vunpack.c.h.b16 %v502
    %v3339 = vunpack.c.l.b16 %v503
    %v3340 = vunpack.c.h.b16 %v503
    %v3341 = vunpack.c.l.b16 %v504
    %v3342 = vunpack.c.h.b16 %v504
    %v3343 = vunpack.c.l.b16 %v505
    %v3344 = vunpack.c.h.b16 %v505
    %v3345 = vunpack.c.l.b16 %v506
    %v3346 = vunpack.c.h.b16 %v506
    %v3347 = vunpack.c.l.b16 %v507
    %v3348 = vunpack.c.h.b16 %v507
    %v3349 = vunpack.c.l.b16 %v508
    %v3350 = vunpack.c.h.b16 %v508
    %v3351 = vunpack.c.l.b16 %v509
    %v3352 = vunpack.c.h.b16 %v509
    %v3353 = vunpack.c.l.b16 %v510
    %v3354 = vunpack.c.h.b16 %v510
    %v3355 = vunpack.c.l.b16 %v511
    %v3356 = vunpack.c.h.b16 %v511
    %v3357 = vunpack.c.l.b16 %v512
    %v3358 = vunpack.c.h.b16 %v512
    %v3359 = vunpack.c.l.b16 %v513
    %v3360 = vunpack.c.h.b16 %v513
    %v3361 = vpack.c.b16 %v2853, %v2849
    %v3362 = vpack.c.b16 %v2854, %v2850
    %v3363 = vpack.c.b16 %v2855, %v2851
    %v3364 = vpack.c.b16 %v2856, %v2852
    %v3365 = vpack.c.b16 %v2861, %v2857
    %v3366 = vpack.c.b16 %v2862, %v2858
    %v3367 = vpack.c.b16 %v2863, %v2859
    %v3368 = vpack.c.b16 %v2864, %v2860
    %v3369 = vpack.c.b16 %v2869, %v2865
    %v3370 = vpack.c.b16 %v2870, %v2866
    %v3371 = vpack.c.b16 %v2871, %v2867
    %v3372 = vpack.c.b16 %v2872, %v2868
    %v3373 = vpack.c.b16 %v2877, %v2873
    %v3374 = vpack.c.b16 %v2878, %v2874
    %v3375 = vpack.c.b16 %v2879, %v2875
    %v3376 = vpack.c.b16 %v2880, %v2876
    %v3377 = vpack.c.b16 %v2885, %v2881
    %v3378 = vpack.c.b16 %v2886, %v2882
    %v3379 = vpack.c.b16 %v2887, %v2883
    %v3380 = vpack.c.b16 %v2888, %v2884
    %v3381 = vpack.c.b16 %v2893, %v2889
    %v3382 = vpack.c.b16 %v2894, %v2890
    %v3383 = vpack.c.b16 %v2895, %v2891
    %v3384 = vpack.c.b16 %v2896, %v2892
    %v3385 = vpack.c.b16 %v2901, %v2897
    %v3386 = vpack.c.b16 %v2902, %v2898
    %v3387 = vpack.c.b16 %v2903, %v2899
    %v3388 = vpack.c.b16 %v2904, %v2900
    %v3389 = vpack.c.b16 %v2909, %v2905
    %v3390 = vpack.c.b16 %v2910, %v2906
    %v3391 = vpack.c.b16 %v2911, %v2907
    %v3392 = vpack.c.b16 %v2912, %v2908
    %v3393 = vpack.c.b16 %v2917, %v2913
    %v3394 = vpack.c.b16 %v2918, %v2914
    %v3395 = vpack.c.b16 %v2919, %v2915
    %v3396 = vpack.c.b16 %v2920, %v2916
    %v3397 = vpack.c.b16 %v2925, %v2921
    %v3398 = vpack.c.b16 %v2926, %v2922
    %v3399 = vpack.c.b16 %v2927, %v2923
    %v3400 = vpack.c.b16 %v2928, %v2924
    %v3401 = vpack.c.b16 %v2933, %v2929
    %v3402 = vpack.c.b16 %v2934, %v2930
    %v3403 = vpack.c.b16 %v2935, %v2931
    %v3404 = vpack.c.b16 %v2936, %v2932
    %v3405 = vpack.c.b16 %v2941, %v2937
    %v3406 = vpack.c.b16 %v2942, %v2938
    %v3407 = vpack.c.b16 %v2943, %v2939
    %v3408 = vpack.c.b16 %v2944, %v2940
    %v3409 = vpack.c.b16 %v2949, %v2945
    %v3410 = vpack.c.b16 %v2950, %v2946
    %v3411 = vpack.c.b16 %v2951, %v2947
    %v3412 = vpack.c.b16 %v2952, %v2948
    %v3413 = vpack.c.b16 %v2957, %v2953
    %v3414 = vpack.c.b16 %v2958, %v2954
    %v3415 = vpack.c.b16 %v2959, %v2955
    %v3416 = vpack.c.b16 %v2960, %v2956
    %v3417 = vpack.c.b16 %v2965, %v2961
    %v3418 = vpack.c.b16 %v2966, %v2962
    %v3419 = vpack.c.b16 %v2967, %v2963
    %v3420 = vpack.c.b16 %v2968, %v2964
    %v3421 = vpack.c.b16 %v2973, %v2969
    %v3422 = vpack.c.b16 %v2974, %v2970
    %v3423 = vpack.c.b16 %v2975, %v2971
    %v3424 = vpack.c.b16 %v2976, %v2972
    %v3425 = vpack.c.b16 %v2981, %v2977
    %v3426 = vpack.c.b16 %v2982, %v2978
    %v3427 = vpack.c.b16 %v2983, %v2979
    %v3428 = vpack.c.b16 %v2984, %v2980
    %v3429 = vpack.c.b16 %v2989, %v2985
    %v3430 = vpack.c.b16 %v2990, %v2986
    %v3431 = vpack.c.b16 %v2991, %v2987
    %v3432 = vpack.c.b16 %v2992, %v2988
    %v3433 = vpack.c.b16 %v2997, %v2993
    %v3434 = vpack.c.b16 %v2998, %v2994
    %v3435 = vpack.c.b16 %v2999, %v2995
    %v3436 = vpack.c.b16 %v3000, %v2996
    %v3437 = vpack.c.b16 %v3005, %v3001
    %v3438 = vpack.c.b16 %v3006, %v3002
    %v3439 = vpack.c.b16 %v3007, %v3003
    %v3440 = vpack.c.b16 %v3008, %v3004
    %v3441 = vpack.c.b16 %v3013, %v3009
    %v3442 = vpack.c.b16 %v3014, %v3010
    %v3443 = vpack.c.b16 %v3015, %v3011
    %v3444 = vpack.c.b16 %v3016, %v3012
    %v3445 = vpack.c.b16 %v3021, %v3017
    %v3446 = vpack.c.b16 %v3022, %v3018
    %v3447 = vpack.c.b16 %v3023, %v3019
    %v3448 = vpack.c.b16 %v3024, %v3020
    %v3449 = vpack.c.b16 %v3029, %v3025
    %v3450 = vpack.c.b16 %v3030, %v3026
    %v3451 = vpack.c.b16 %v3031, %v3027
    %v3452 = vpack.c.b16 %v3032, %v3028
    %v3453 = vpack.c.b16 %v3037, %v3033
    %v3454 = vpack.c.b16 %v3038, %v3034
    %v3455 = vpack.c.b16 %v3039, %v3035
    %v3456 = vpack.c.b16 %v3040, %v3036
    %v3457 = vpack.c.b16 %v3045, %v3041
    %v3458 = vpack.c.b16 %v3046, %v3042
    %v3459 = vpack.c.b16 %v3047, %v3043
    %v3460 = vpack.c.b16 %v3048, %v3044
    %v3461 = vpack.c.b16 %v3053, %v3049
    %v3462 = vpack.c.b16 %v3054, %v3050
    %v3463 = vpack.c.b16 %v3055, %v3051
    %v3464 = vpack.c.b16 %v3056, %v3052
    %v3465 = vpack.c.b16 %v3061, %v3057
    %v3466 = vpack.c.b16 %v3062, %v3058
    %v3467 = vpack.c.b16 %v3063, %v3059
    %v3468 = vpack.c.b16 %v3064, %v3060
    %v3469 = vpack.c.b16 %v3069, %v3065
    %v3470 = vpack.c.b16 %v3070, %v3066
    %v3471 = vpack.c.b16 %v3071, %v3067
    %v3472 = vpack.c.b16 %v3072, %v3068
    %v3473 = vpack.c.b16 %v3077, %v3073
    %v3474 = vpack.c.b16 %v3078, %v3074
    %v3475 = vpack.c.b16 %v3079, %v3075
    %v3476 = vpack.c.b16 %v3080, %v3076
    %v3477 = vpack.c.b16 %v3085, %v3081
    %v3478 = vpack.c.b16 %v3086, %v3082
    %v3479 = vpack.c.b16 %v3087, %v3083
    %v3480 = vpack.c.b16 %v3088, %v3084
    %v3481 = vpack.c.b16 %v3093, %v3089
    %v3482 = vpack.c.b16 %v3094, %v3090
    %v3483 = vpack.c.b16 %v3095, %v3091
    %v3484 = vpack.c.b16 %v3096, %v3092
    %v3485 = vpack.c.b16 %v3101, %v3097
    %v3486 = vpack.c.b16 %v3102, %v3098
    %v3487 = vpack.c.b16 %v3103, %v3099
    %v3488 = vpack.c.b16 %v3104, %v3100
    %v3489 = vpack.c.b16 %v3109, %v3105
    %v3490 = vpack.c.b16 %v3110, %v3106
    %v3491 = vpack.c.b16 %v3111, %v3107
    %v3492 = vpack.c.b16 %v3112, %v3108
    %v3493 = vpack.c.b16 %v3117, %v3113
    %v3494 = vpack.c.b16 %v3118, %v3114
    %v3495 = vpack.c.b16 %v3119, %v3115
    %v3496 = vpack.c.b16 %v3120, %v3116
    %v3497 = vpack.c.b16 %v3125, %v3121
    %v3498 = vpack.c.b16 %v3126, %v3122
    %v3499 = vpack.c.b16 %v3127, %v3123
    %v3500 = vpack.c.b16 %v3128, %v3124
    %v3501 = vpack.c.b16 %v3133, %v3129
    %v3502 = vpack.c.b16 %v3134, %v3130
    %v3503 = vpack.c.b16 %v3135, %v3131
    %v3504 = vpack.c.b16 %v3136, %v3132
    %v3505 = vpack.c.b16 %v3141, %v3137
    %v3506 = vpack.c.b16 %v3142, %v3138
    %v3507 = vpack.c.b16 %v3143, %v3139
    %v3508 = vpack.c.b16 %v3144, %v3140
    %v3509 = vpack.c.b16 %v3149, %v3145
    %v3510 = vpack.c.b16 %v3150, %v3146
    %v3511 = vpack.c.b16 %v3151, %v3147
    %v3512 = vpack.c.b16 %v3152, %v3148
    %v3513 = vpack.c.b16 %v3157, %v3153
    %v3514 = vpack.c.b16 %v3158, %v3154
    %v3515 = vpack.c.b16 %v3159, %v3155
    %v3516 = vpack.c.b16 %v3160, %v3156
    %v3517 = vpack.c.b16 %v3165, %v3161
    %v3518 = vpack.c.b16 %v3166, %v3162
    %v3519 = vpack.c.b16 %v3167, %v3163
    %v3520 = vpack.c.b16 %v3168, %v3164
    %v3521 = vpack.c.b16 %v3173, %v3169
    %v3522 = vpack.c.b16 %v3174, %v3170
    %v3523 = vpack.c.b16 %v3175, %v3171
    %v3524 = vpack.c.b16 %v3176, %v3172
    %v3525 = vpack.c.b16 %v3181, %v3177
    %v3526 = vpack.c.b16 %v3182, %v3178
    %v3527 = vpack.c.b16 %v3183, %v3179
    %v3528 = vpack.c.b16 %v3184, %v3180
    %v3529 = vpack.c.b16 %v3189, %v3185
    %v3530 = vpack.c.b16 %v3190, %v3186
    %v3531 = vpack.c.b16 %v3191, %v3187
    %v3532 = vpack.c.b16 %v3192, %v3188
    %v3533 = vpack.c.b16 %v3197, %v3193
    %v3534 = vpack.c.b16 %v3198, %v3194
    %v3535 = vpack.c.b16 %v3199, %v3195
    %v3536 = vpack.c.b16 %v3200, %v3196
    %v3537 = vpack.c.b16 %v3205, %v3201
    %v3538 = vpack.c.b16 %v3206, %v3202
    %v3539 = vpack.c.b16 %v3207, %v3203
    %v3540 = vpack.c.b16 %v3208, %v3204
    %v3541 = vpack.c.b16 %v3213, %v3209
    %v3542 = vpack.c.b16 %v3214, %v3210
    %v3543 = vpack.c.b16 %v3215, %v3211
    %v3544 = vpack.c.b16 %v3216, %v3212
    %v3545 = vpack.c.b16 %v3221, %v3217
    %v3546 = vpack.c.b16 %v3222, %v3218
    %v3547 = vpack.c.b16 %v3223, %v3219
    %v3548 = vpack.c.b16 %v3224, %v3220
    %v3549 = vpack.c.b16 %v3229, %v3225
    %v3550 = vpack.c.b16 %v3230, %v3226
    %v3551 = vpack.c.b16 %v3231, %v3227
    %v3552 = vpack.c.b16 %v3232, %v3228
    %v3553 = vpack.c.b16 %v3237, %v3233
    %v3554 = vpack.c.b16 %v3238, %v3234
    %v3555 = vpack.c.b16 %v3239, %v3235
    %v3556 = vpack.c.b16 %v3240, %v3236
    %v3557 = vpack.c.b16 %v3245, %v3241
    %v3558 = vpack.c.b16 %v3246, %v3242
    %v3559 = vpack.c.b16 %v3247, %v3243
    %v3560 = vpack.c.b16 %v3248, %v3244
    %v3561 = vpack.c.b16 %v3253, %v3249
    %v3562 = vpack.c.b16 %v3254, %v3250
    %v3563 = vpack.c.b16 %v3255, %v3251
    %v3564 = vpack.c.b16 %v3256, %v3252
    %v3565 = vpack.c.b16 %v3261, %v3257
    %v3566 = vpack.c.b16 %v3262, %v3258
    %v3567 = vpack.c.b16 %v3263, %v3259
    %v3568 = vpack.c.b16 %v3264, %v3260
    %v3569 = vpack.c.b16 %v3269, %v3265
    %v3570 = vpack.c.b16 %v3270, %v3266
    %v3571 = vpack.c.b16 %v3271, %v3267
    %v3572 = vpack.c.b16 %v3272, %v3268
    %v3573 = vpack.c.b16 %v3277, %v3273
    %v3574 = vpack.c.b16 %v3278, %v3274
    %v3575 = vpack.c.b16 %v3279, %v3275
    %v3576 = vpack.c.b16 %v3280, %v3276
    %v3577 = vpack.c.b16 %v3285, %v3281
    %v3578 = vpack.c.b16 %v3286, %v3282
    %v3579 = vpack.c.b16 %v3287, %v3283
    %v3580 = vpack.c.b16 %v3288, %v3284
    %v3581 = vpack.c.b16 %v3293, %v3289
    %v3582 = vpack.c.b16 %v3294, %v3290
    %v3583 = vpack.c.b16 %v3295, %v3291
    %v3584 = vpack.c.b16 %v3296, %v3292
    %v3585 = vpack.c.b16 %v3301, %v3297
    %v3586 = vpack.c.b16 %v3302, %v3298
    %v3587 = vpack.c.b16 %v3303, %v3299
    %v3588 = vpack.c.b16 %v3304, %v3300
    %v3589 = vpack.c.b16 %v3309, %v3305
    %v3590 = vpack.c.b16 %v3310, %v3306
    %v3591 = vpack.c.b16 %v3311, %v3307
    %v3592 = vpack.c.b16 %v3312, %v3308
    %v3593 = vpack.c.b16 %v3317, %v3313
    %v3594 = vpack.c.b16 %v3318, %v3314
    %v3595 = vpack.c.b16 %v3319, %v3315
    %v3596 = vpack.c.b16 %v3320, %v3316
    %v3597 = vpack.c.b16 %v3325, %v3321
    %v3598 = vpack.c.b16 %v3326, %v3322
    %v3599 = vpack.c.b16 %v3327, %v3323
    %v3600 = vpack.c.b16 %v3328, %v3324
    %v3601 = vpack.c.b16 %v3333, %v3329
    %v3602 = vpack.c.b16 %v3334, %v3330
    %v3603 = vpack.c.b16 %v3335, %v3331
    %v3604 = vpack.c.b16 %v3336, %v3332
    %v3605 = vpack.c.b16 %v3341, %v3337
    %v3606 = vpack.c.b16 %v3342, %v3338
    %v3607 = vpack.c.b16 %v3343, %v3339
    %v3608 = vpack.c.b16 %v3344, %v3340
    %v3609 = vpack.c.b16 %v3349, %v3345
    %v3610 = vpack.c.b16 %v3350, %v3346
    %v3611 = vpack.c.b16 %v3351, %v3347
    %v3612 = vpack.c.b16 %v3352, %v3348
    %v3613 = vpack.c.b16 %v3357, %v3353
    %v3614 = vpack.c.b16 %v3358, %v3354
    %v3615 = vpack.c.b16 %v3359, %v3355
    %v3616 = vpack.c.b16 %v3360, %v3356
    %3873 = vmatprep.subr.bf16.mxu0 %v3362
    %3874 = vmatpush1.bf16.msra.mxu0 %v3361
    %3875 = vmatprep.subr.bf16.mxu0 %v3366
    %3876 = vmatpush1.bf16.msra.mxu0 %v3365
    %3877 = vmatprep.subr.bf16.mxu0 %v3370
    %3878 = vmatpush1.bf16.msra.mxu0 %v3369
    %3879 = vmatprep.subr.bf16.mxu0 %v3374
    %3880 = vmatpush1.bf16.msra.mxu0 %v3373
    %3881 = vmatprep.subr.bf16.mxu0 %v3378
    %3882 = vmatpush1.bf16.msra.mxu0 %v3377
    %3883 = vmatprep.subr.bf16.mxu0 %v3382
    %3884 = vmatpush1.bf16.msra.mxu0 %v3381
    %3885 = vmatprep.subr.bf16.mxu0 %v3386
    %3886 = vmatpush1.bf16.msra.mxu0 %v3385
    %3887 = vmatprep.subr.bf16.mxu0 %v3390
    %3888 = vmatpush1.bf16.msra.mxu0 %v3389
    %3889 = vmatprep.subr.bf16.mxu0 %v3394
    %3890 = vmatpush1.bf16.msra.mxu0 %v3393
    %3891 = vmatprep.subr.bf16.mxu0 %v3398
    %3892 = vmatpush1.bf16.msra.mxu0 %v3397
    %3893 = vmatprep.subr.bf16.mxu0 %v3402
    %3894 = vmatpush1.bf16.msra.mxu0 %v3401
    %3895 = vmatprep.subr.bf16.mxu0 %v3406
    %3896 = vmatpush1.bf16.msra.mxu0 %v3405
    %3897 = vmatprep.subr.bf16.mxu0 %v3410
    %3898 = vmatpush1.bf16.msra.mxu0 %v3409
    %3899 = vmatprep.subr.bf16.mxu0 %v3414
    %3900 = vmatpush1.bf16.msra.mxu0 %v3413
    %3901 = vmatprep.subr.bf16.mxu0 %v3418
    %3902 = vmatpush1.bf16.msra.mxu0 %v3417
    %3903 = vmatprep.subr.bf16.mxu0 %v3422
    %3904 = vmatpush1.bf16.msra.mxu0 %v3421
    %3905 = vmatprep.mubr.bf16.mxu0 %v2586
    %3906 = vmatmul.mubr.bf16.gmra.mrb[0].mxu0 %v2585
    %v3907 = vpop.f32.mrb[0].mxu0
    %v3908 = vadd.f32 0.0, %v3907
    %v3909 = vpop.f32.mrb[0].mxu0
    %v3910 = vadd.f32 0.0, %v3909
    %v3911 = vpop.f32.mrb[0].mxu0
    %v3912 = vpop.f32.mrb[0].mxu0
    %3913 = vdwg.mxu0
    %3914 = vmatprep.subr.bf16.mxu0 %v3426
    %3915 = vmatpush1.bf16.msra.mxu0 %v3425
    %3916 = vmatprep.subr.bf16.mxu0 %v3430
    %3917 = vmatpush1.bf16.msra.mxu0 %v3429
    %3918 = vmatprep.subr.bf16.mxu0 %v3434
    %3919 = vmatpush1.bf16.msra.mxu0 %v3433
    %3920 = vmatprep.subr.bf16.mxu0 %v3438
    %3921 = vmatpush1.bf16.msra.mxu0 %v3437
    %3922 = vmatprep.subr.bf16.mxu0 %v3442
    %3923 = vmatpush1.bf16.msra.mxu0 %v3441
    %3924 = vmatprep.subr.bf16.mxu0 %v3446
    %3925 = vmatpush1.bf16.msra.mxu0 %v3445
    %3926 = vmatprep.subr.bf16.mxu0 %v3450
    %3927 = vmatpush1.bf16.msra.mxu0 %v3449
    %3928 = vmatprep.subr.bf16.mxu0 %v3454
    %3929 = vmatpush1.bf16.msra.mxu0 %v3453
    %3930 = vmatprep.subr.bf16.mxu0 %v3458
    %3931 = vmatpush1.bf16.msra.mxu0 %v3457
    %3932 = vmatprep.subr.bf16.mxu0 %v3462
    %3933 = vmatpush1.bf16.msra.mxu0 %v3461
    %3934 = vmatprep.subr.bf16.mxu0 %v3466
    %3935 = vmatpush1.bf16.msra.mxu0 %v3465
    %3936 = vmatprep.subr.bf16.mxu0 %v3470
    %3937 = vmatpush1.bf16.msra.mxu0 %v3469
    %3938 = vmatprep.subr.bf16.mxu0 %v3474
    %3939 = vmatpush1.bf16.msra.mxu0 %v3473
    %3940 = vmatprep.subr.bf16.mxu0 %v3478
    %3941 = vmatpush1.bf16.msra.mxu0 %v3477
    %3942 = vmatprep.subr.bf16.mxu0 %v3482
    %3943 = vmatpush1.bf16.msra.mxu0 %v3481
    %3944 = vmatprep.subr.bf16.mxu0 %v3486
    %3945 = vmatpush1.bf16.msra.mxu0 %v3485
    %3946 = vmatprep.mubr.bf16.mxu0 %v2588
    %3947 = vmatmul.mubr.bf16.gmra.mrb[0].mxu0 %v2587
    %v3948 = vpop.f32.mrb[0].mxu0
    %v3949 = vadd.f32 %v3908, %v3948
    %v3950 = vpop.f32.mrb[0].mxu0
    %v3951 = vadd.f32 %v3910, %v3950
    %v3952 = vpop.f32.mrb[0].mxu0
    %v3953 = vpop.f32.mrb[0].mxu0
    %3954 = vdwg.mxu0
    %3955 = vmatprep.subr.bf16.mxu0 %v3490
    %3956 = vmatpush1.bf16.msra.mxu0 %v3489
    %3957 = vmatprep.subr.bf16.mxu0 %v3494
    %3958 = vmatpush1.bf16.msra.mxu0 %v3493
    %3959 = vmatprep.subr.bf16.mxu0 %v3498
    %3960 = vmatpush1.bf16.msra.mxu0 %v3497
    %3961 = vmatprep.subr.bf16.mxu0 %v3502
    %3962 = vmatpush1.bf16.msra.mxu0 %v3501
    %3963 = vmatprep.subr.bf16.mxu0 %v3506
    %3964 = vmatpush1.bf16.msra.mxu0 %v3505
    %3965 = vmatprep.subr.bf16.mxu0 %v3510
    %3966 = vmatpush1.bf16.msra.mxu0 %v3509
    %3967 = vmatprep.subr.bf16.mxu0 %v3514
    %3968 = vmatpush1.bf16.msra.mxu0 %v3513
    %3969 = vmatprep.subr.bf16.mxu0 %v3518
    %3970 = vmatpush1.bf16.msra.mxu0 %v3517
    %3971 = vmatprep.subr.bf16.mxu0 %v3522
    %3972 = vmatpush1.bf16.msra.mxu0 %v3521
    %3973 = vmatprep.subr.bf16.mxu0 %v3526
    %3974 = vmatpush1.bf16.msra.mxu0 %v3525
    %3975 = vmatprep.subr.bf16.mxu0 %v3530
    %3976 = vmatpush1.bf16.msra.mxu0 %v3529
    %3977 = vmatprep.subr.bf16.mxu0 %v3534
    %3978 = vmatpush1.bf16.msra.mxu0 %v3533
    %3979 = vmatprep.subr.bf16.mxu0 %v3538
    %3980 = vmatpush1.bf16.msra.mxu0 %v3537
    %3981 = vmatprep.subr.bf16.mxu0 %v3542
    %3982 = vmatpush1.bf16.msra.mxu0 %v3541
    %3983 = vmatprep.subr.bf16.mxu0 %v3546
    %3984 = vmatpush1.bf16.msra.mxu0 %v3545
    %3985 = vmatprep.subr.bf16.mxu0 %v3550
    %3986 = vmatpush1.bf16.msra.mxu0 %v3549
    %3987 = vmatprep.mubr.bf16.mxu0 %v2590
    %3988 = vmatmul.mubr.bf16.gmra.mrb[0].mxu0 %v2589
    %v3989 = vpop.f32.mrb[0].mxu0
    %v3990 = vadd.f32 %v3949, %v3989
    %v3991 = vpop.f32.mrb[0].mxu0
    %v3992 = vadd.f32 %v3951, %v3991
    %v3993 = vpop.f32.mrb[0].mxu0
    %v3994 = vpop.f32.mrb[0].mxu0
    %3995 = vdwg.mxu0
    %3996 = vmatprep.subr.bf16.mxu0 %v3554
    %3997 = vmatpush1.bf16.msra.mxu0 %v3553
    %3998 = vmatprep.subr.bf16.mxu0 %v3558
    %3999 = vmatpush1.bf16.msra.mxu0 %v3557
    %4000 = vmatprep.subr.bf16.mxu0 %v3562
    %4001 = vmatpush1.bf16.msra.mxu0 %v3561
    %4002 = vmatprep.subr.bf16.mxu0 %v3566
    %4003 = vmatpush1.bf16.msra.mxu0 %v3565
    %4004 = vmatprep.subr.bf16.mxu0 %v3570
    %4005 = vmatpush1.bf16.msra.mxu0 %v3569
    %4006 = vmatprep.subr.bf16.mxu0 %v3574
    %4007 = vmatpush1.bf16.msra.mxu0 %v3573
    %4008 = vmatprep.subr.bf16.mxu0 %v3578
    %4009 = vmatpush1.bf16.msra.mxu0 %v3577
    %4010 = vmatprep.subr.bf16.mxu0 %v3582
    %4011 = vmatpush1.bf16.msra.mxu0 %v3581
    %4012 = vmatprep.subr.bf16.mxu0 %v3586
    %4013 = vmatpush1.bf16.msra.mxu0 %v3585
    %4014 = vmatprep.subr.bf16.mxu0 %v3590
    %4015 = vmatpush1.bf16.msra.mxu0 %v3589
    %4016 = vmatprep.subr.bf16.mxu0 %v3594
    %4017 = vmatpush1.bf16.msra.mxu0 %v3593
    %4018 = vmatprep.subr.bf16.mxu0 %v3598
    %4019 = vmatpush1.bf16.msra.mxu0 %v3597
    %4020 = vmatprep.subr.bf16.mxu0 %v3602
    %4021 = vmatpush1.bf16.msra.mxu0 %v3601
    %4022 = vmatprep.subr.bf16.mxu0 %v3606
    %4023 = vmatpush1.bf16.msra.mxu0 %v3605
    %4024 = vmatprep.subr.bf16.mxu0 %v3610
    %4025 = vmatpush1.bf16.msra.mxu0 %v3609
    %4026 = vmatprep.subr.bf16.mxu0 %v3614
    %4027 = vmatpush1.bf16.msra.mxu0 %v3613
    %4028 = vmatprep.mubr.bf16.mxu0 %v2592
    %4029 = vmatmul.mubr.bf16.gmra.mrb[0].mxu0 %v2591
    %v4030 = vpop.f32.mrb[0].mxu0
    %v4031 = vadd.f32 %v3990, %v4030
    %v4032 = vpop.f32.mrb[0].mxu0
    %v4033 = vadd.f32 %v3992, %v4032
    %v4034 = vpop.f32.mrb[0].mxu0
    %v4035 = vpop.f32.mrb[0].mxu0
    %4036 = vdwg.mxu0
    %4037 = vmatprep.subr.bf16.mxu0 %v3364
    %4038 = vmatpush1.bf16.msra.mxu0 %v3363
    %4039 = vmatprep.subr.bf16.mxu0 %v3368
    %4040 = vmatpush1.bf16.msra.mxu0 %v3367
    %4041 = vmatprep.subr.bf16.mxu0 %v3372
    %4042 = vmatpush1.bf16.msra.mxu0 %v3371
    %4043 = vmatprep.subr.bf16.mxu0 %v3376
    %4044 = vmatpush1.bf16.msra.mxu0 %v3375
    %4045 = vmatprep.subr.bf16.mxu0 %v3380
    %4046 = vmatpush1.bf16.msra.mxu0 %v3379
    %4047 = vmatprep.subr.bf16.mxu0 %v3384
    %4048 = vmatpush1.bf16.msra.mxu0 %v3383
    %4049 = vmatprep.subr.bf16.mxu0 %v3388
    %4050 = vmatpush1.bf16.msra.mxu0 %v3387
    %4051 = vmatprep.subr.bf16.mxu0 %v3392
    %4052 = vmatpush1.bf16.msra.mxu0 %v3391
    %4053 = vmatprep.subr.bf16.mxu0 %v3396
    %4054 = vmatpush1.bf16.msra.mxu0 %v3395
    %4055 = vmatprep.subr.bf16.mxu0 %v3400
    %4056 = vmatpush1.bf16.msra.mxu0 %v3399
    %4057 = vmatprep.subr.bf16.mxu0 %v3404
    %4058 = vmatpush1.bf16.msra.mxu0 %v3403
    %4059 = vmatprep.subr.bf16.mxu0 %v3408
    %4060 = vmatpush1.bf16.msra.mxu0 %v3407
    %4061 = vmatprep.subr.bf16.mxu0 %v3412
    %4062 = vmatpush1.bf16.msra.mxu0 %v3411
    %4063 = vmatprep.subr.bf16.mxu0 %v3416
    %4064 = vmatpush1.bf16.msra.mxu0 %v3415
    %4065 = vmatprep.subr.bf16.mxu0 %v3420
    %4066 = vmatpush1.bf16.msra.mxu0 %v3419
    %4067 = vmatprep.subr.bf16.mxu0 %v3424
    %4068 = vmatpush1.bf16.msra.mxu0 %v3423
    %4069 = vmatprep.mubr.bf16.mxu0 %v2586
    %4070 = vmatmul.mubr.bf16.gmra.mrb[0].mxu0 %v2585
    %v4071 = vpop.f32.mrb[0].mxu0
    %v4072 = vadd.f32 0.0, %v4071
    %v4073 = vpop.f32.mrb[0].mxu0
    %v4074 = vadd.f32 0.0, %v4073
    %v4075 = vpop.f32.mrb[0].mxu0
    %v4076 = vpop.f32.mrb[0].mxu0
    %4077 = vdwg.mxu0
    %4078 = vmatprep.subr.bf16.mxu0 %v3428
    %4079 = vmatpush1.bf16.msra.mxu0 %v3427
    %4080 = vmatprep.subr.bf16.mxu0 %v3432
    %4081 = vmatpush1.bf16.msra.mxu0 %v3431
    %4082 = vmatprep.subr.bf16.mxu0 %v3436
    %4083 = vmatpush1.bf16.msra.mxu0 %v3435
    %4084 = vmatprep.subr.bf16.mxu0 %v3440
    %4085 = vmatpush1.bf16.msra.mxu0 %v3439
    %4086 = vmatprep.subr.bf16.mxu0 %v3444
    %4087 = vmatpush1.bf16.msra.mxu0 %v3443
    %4088 = vmatprep.subr.bf16.mxu0 %v3448
    %4089 = vmatpush1.bf16.msra.mxu0 %v3447
    %4090 = vmatprep.subr.bf16.mxu0 %v3452
    %4091 = vmatpush1.bf16.msra.mxu0 %v3451
    %4092 = vmatprep.subr.bf16.mxu0 %v3456
    %4093 = vmatpush1.bf16.msra.mxu0 %v3455
    %4094 = vmatprep.subr.bf16.mxu0 %v3460
    %4095 = vmatpush1.bf16.msra.mxu0 %v3459
    %4096 = vmatprep.subr.bf16.mxu0 %v3464
    %4097 = vmatpush1.bf16.msra.mxu0 %v3463
    %4098 = vmatprep.subr.bf16.mxu0 %v3468
    %4099 = vmatpush1.bf16.msra.mxu0 %v3467
    %4100 = vmatprep.subr.bf16.mxu0 %v3472
    %4101 = vmatpush1.bf16.msra.mxu0 %v3471
    %4102 = vmatprep.subr.bf16.mxu0 %v3476
    %4103 = vmatpush1.bf16.msra.mxu0 %v3475
    %4104 = vmatprep.subr.bf16.mxu0 %v3480
    %4105 = vmatpush1.bf16.msra.mxu0 %v3479
    %4106 = vmatprep.subr.bf16.mxu0 %v3484
    %4107 = vmatpush1.bf16.msra.mxu0 %v3483
    %4108 = vmatprep.subr.bf16.mxu0 %v3488
    %4109 = vmatpush1.bf16.msra.mxu0 %v3487
    %4110 = vmatprep.mubr.bf16.mxu0 %v2588
    %4111 = vmatmul.mubr.bf16.gmra.mrb[0].mxu0 %v2587
    %v4112 = vpop.f32.mrb[0].mxu0
    %v4113 = vadd.f32 %v4072, %v4112
    %v4114 = vpop.f32.mrb[0].mxu0
    %v4115 = vadd.f32 %v4074, %v4114
    %v4116 = vpop.f32.mrb[0].mxu0
    %v4117 = vpop.f32.mrb[0].mxu0
    %4118 = vdwg.mxu0
    %4119 = vmatprep.subr.bf16.mxu0 %v3492
    %4120 = vmatpush1.bf16.msra.mxu0 %v3491
    %4121 = vmatprep.subr.bf16.mxu0 %v3496
    %4122 = vmatpush1.bf16.msra.mxu0 %v3495
    %4123 = vmatprep.subr.bf16.mxu0 %v3500
    %4124 = vmatpush1.bf16.msra.mxu0 %v3499
    %4125 = vmatprep.subr.bf16.mxu0 %v3504
    %4126 = vmatpush1.bf16.msra.mxu0 %v3503
    %4127 = vmatprep.subr.bf16.mxu0 %v3508
    %4128 = vmatpush1.bf16.msra.mxu0 %v3507
    %4129 = vmatprep.subr.bf16.mxu0 %v3512
    %4130 = vmatpush1.bf16.msra.mxu0 %v3511
    %4131 = vmatprep.subr.bf16.mxu0 %v3516
    %4132 = vmatpush1.bf16.msra.mxu0 %v3515
    %4133 = vmatprep.subr.bf16.mxu0 %v3520
    %4134 = vmatpush1.bf16.msra.mxu0 %v3519
    %4135 = vmatprep.subr.bf16.mxu0 %v3524
    %4136 = vmatpush1.bf16.msra.mxu0 %v3523
    %4137 = vmatprep.subr.bf16.mxu0 %v3528
    %4138 = vmatpush1.bf16.msra.mxu0 %v3527
    %4139 = vmatprep.subr.bf16.mxu0 %v3532
    %4140 = vmatpush1.bf16.msra.mxu0 %v3531
    %4141 = vmatprep.subr.bf16.mxu0 %v3536
    %4142 = vmatpush1.bf16.msra.mxu0 %v3535
    %4143 = vmatprep.subr.bf16.mxu0 %v3540
    %4144 = vmatpush1.bf16.msra.mxu0 %v3539
    %4145 = vmatprep.subr.bf16.mxu0 %v3544
    %4146 = vmatpush1.bf16.msra.mxu0 %v3543
    %4147 = vmatprep.subr.bf16.mxu0 %v3548
    %4148 = vmatpush1.bf16.msra.mxu0 %v3547
    %4149 = vmatprep.subr.bf16.mxu0 %v3552
    %4150 = vmatpush1.bf16.msra.mxu0 %v3551
    %4151 = vmatprep.mubr.bf16.mxu0 %v2590
    %4152 = vmatmul.mubr.bf16.gmra.mrb[0].mxu0 %v2589
    %v4153 = vpop.f32.mrb[0].mxu0
    %v4154 = vadd.f32 %v4113, %v4153
    %v4155 = vpop.f32.mrb[0].mxu0
    %v4156 = vadd.f32 %v4115, %v4155
    %v4157 = vpop.f32.mrb[0].mxu0
    %v4158 = vpop.f32.mrb[0].mxu0
    %4159 = vdwg.mxu0
    %4160 = vmatprep.subr.bf16.mxu0 %v3556
    %4161 = vmatpush1.bf16.msra.mxu0 %v3555
    %4162 = vmatprep.subr.bf16.mxu0 %v3560
    %4163 = vmatpush1.bf16.msra.mxu0 %v3559
    %4164 = vmatprep.subr.bf16.mxu0 %v3564
    %4165 = vmatpush1.bf16.msra.mxu0 %v3563
    %4166 = vmatprep.subr.bf16.mxu0 %v3568
    %4167 = vmatpush1.bf16.msra.mxu0 %v3567
    %4168 = vmatprep.subr.bf16.mxu0 %v3572
    %4169 = vmatpush1.bf16.msra.mxu0 %v3571
    %4170 = vmatprep.subr.bf16.mxu0 %v3576
    %4171 = vmatpush1.bf16.msra.mxu0 %v3575
    %4172 = vmatprep.subr.bf16.mxu0 %v3580
    %4173 = vmatpush1.bf16.msra.mxu0 %v3579
    %4174 = vmatprep.subr.bf16.mxu0 %v3584
    %4175 = vmatpush1.bf16.msra.mxu0 %v3583
    %4176 = vmatprep.subr.bf16.mxu0 %v3588
    %4177 = vmatpush1.bf16.msra.mxu0 %v3587
    %4178 = vmatprep.subr.bf16.mxu0 %v3592
    %4179 = vmatpush1.bf16.msra.mxu0 %v3591
    %4180 = vmatprep.subr.bf16.mxu0 %v3596
    %4181 = vmatpush1.bf16.msra.mxu0 %v3595
    %4182 = vmatprep.subr.bf16.mxu0 %v3600
    %4183 = vmatpush1.bf16.msra.mxu0 %v3599
    %4184 = vmatprep.subr.bf16.mxu0 %v3604
    %4185 = vmatpush1.bf16.msra.mxu0 %v3603
    %4186 = vmatprep.subr.bf16.mxu0 %v3608
    %4187 = vmatpush1.bf16.msra.mxu0 %v3607
    %4188 = vmatprep.subr.bf16.mxu0 %v3612
    %4189 = vmatpush1.bf16.msra.mxu0 %v3611
    %4190 = vmatprep.subr.bf16.mxu0 %v3616
    %4191 = vmatpush1.bf16.msra.mxu0 %v3615
    %4192 = vmatprep.mubr.bf16.mxu0 %v2592
    %4193 = vmatmul.mubr.bf16.gmra.mrb[0].mxu0 %v2591
    %v4194 = vpop.f32.mrb[0].mxu0
    %v4195 = vadd.f32 %v4154, %v4194
    %v4196 = vpop.f32.mrb[0].mxu0
    %v4197 = vadd.f32 %v4156, %v4196
    %v4198 = vpop.f32.mrb[0].mxu0
    %v4199 = vpop.f32.mrb[0].mxu0
    %4200 = vdwg.mxu0
    %v4202 = vlaneseq
    %v4203 = vshrl.u32 %v4202, 7
    %v4204 = vsub.s32 0, %v4203
    %v4205 = vrot.slane %v514, %v4204
    %v4206 = vlaneseq
    %v4207 = vshrl.u32 %v4206, 7
    %v4208 = vsub.s32 1, %v4207
    %v4209 = vrot.slane %v514, %v4208
    %v4210 = vlaneseq
    %v4211 = vshrl.u32 %v4210, 7
    %v4212 = vsub.s32 2, %v4211
    %v4213 = vrot.slane %v514, %v4212
    %v4214 = vlaneseq
    %v4215 = vshrl.u32 %v4214, 7
    %v4216 = vsub.s32 3, %v4215
    %v4217 = vrot.slane %v514, %v4216
    %v4222 = vmul.f32 %v4031, %v4205
    %v4223 = vmul.f32 %v4033, %v4209
    %v4224 = vmul.f32 %v4195, %v4213
    %v4225 = vmul.f32 %v4197, %v4217
    %v4227 = vlaneseq
    %v4228 = vshrl.u32 %v4227, 7
    %v4229 = vsub.s32 0, %v4228
    %v4230 = vrot.slane %v515, %v4229
    %v4231 = vlaneseq
    %v4232 = vshrl.u32 %v4231, 7
    %v4233 = vsub.s32 1, %v4232
    %v4234 = vrot.slane %v515, %v4233
    %v4235 = vlaneseq
    %v4236 = vshrl.u32 %v4235, 7
    %v4237 = vsub.s32 2, %v4236
    %v4238 = vrot.slane %v515, %v4237
    %v4239 = vlaneseq
    %v4240 = vshrl.u32 %v4239, 7
    %v4241 = vsub.s32 3, %v4240
    %v4242 = vrot.slane %v515, %v4241
    %v4247 = vadd.f32 %v4222, %v4230
    %v4248 = vadd.f32 %v4223, %v4234
    %v4249 = vadd.f32 %v4224, %v4238
    %v4250 = vadd.f32 %v4225, %v4242
    %v4251 = vmax.f32 %v4247, 0.0
    %v4252 = vmax.f32 %v4248, 0.0
    %v4253 = vmax.f32 %v4249, 0.0
    %v4254 = vmax.f32 %v4250, 0.0
    %v4255 = vpack.c.bf16 %v4251, %v4251
    %v4256 = vpack.c.bf16 %v4252, %v4252
    %v4257 = vpack.c.bf16 %v4253, %v4253
    %v4258 = vpack.c.bf16 %v4254, %v4254
    %v4323 = vunpack.c.l.b16 %v516
    %v4324 = vunpack.c.h.b16 %v516
    %v4325 = vunpack.c.l.b16 %v517
    %v4326 = vunpack.c.h.b16 %v517
    %v4327 = vunpack.c.l.b16 %v518
    %v4328 = vunpack.c.h.b16 %v518
    %v4329 = vunpack.c.l.b16 %v519
    %v4330 = vunpack.c.h.b16 %v519
    %v4331 = vunpack.c.l.b16 %v520
    %v4332 = vunpack.c.h.b16 %v520
    %v4333 = vunpack.c.l.b16 %v521
    %v4334 = vunpack.c.h.b16 %v521
    %v4335 = vunpack.c.l.b16 %v522
    %v4336 = vunpack.c.h.b16 %v522
    %v4337 = vunpack.c.l.b16 %v523
    %v4338 = vunpack.c.h.b16 %v523
    %v4339 = vunpack.c.l.b16 %v524
    %v4340 = vunpack.c.h.b16 %v524
    %v4341 = vunpack.c.l.b16 %v525
    %v4342 = vunpack.c.h.b16 %v525
    %v4343 = vunpack.c.l.b16 %v526
    %v4344 = vunpack.c.h.b16 %v526
    %v4345 = vunpack.c.l.b16 %v527
    %v4346 = vunpack.c.h.b16 %v527
    %v4347 = vunpack.c.l.b16 %v528
    %v4348 = vunpack.c.h.b16 %v528
    %v4349 = vunpack.c.l.b16 %v529
    %v4350 = vunpack.c.h.b16 %v529
    %v4351 = vunpack.c.l.b16 %v530
    %v4352 = vunpack.c.h.b16 %v530
    %v4353 = vunpack.c.l.b16 %v531
    %v4354 = vunpack.c.h.b16 %v531
    %v4355 = vunpack.c.l.b16 %v532
    %v4356 = vunpack.c.h.b16 %v532
    %v4357 = vunpack.c.l.b16 %v533
    %v4358 = vunpack.c.h.b16 %v533
    %v4359 = vunpack.c.l.b16 %v534
    %v4360 = vunpack.c.h.b16 %v534
    %v4361 = vunpack.c.l.b16 %v535
    %v4362 = vunpack.c.h.b16 %v535
    %v4363 = vunpack.c.l.b16 %v536
    %v4364 = vunpack.c.h.b16 %v536
    %v4365 = vunpack.c.l.b16 %v537
    %v4366 = vunpack.c.h.b16 %v537
    %v4367 = vunpack.c.l.b16 %v538
    %v4368 = vunpack.c.h.b16 %v538
    %v4369 = vunpack.c.l.b16 %v539
    %v4370 = vunpack.c.h.b16 %v539
    %v4371 = vunpack.c.l.b16 %v540
    %v4372 = vunpack.c.h.b16 %v540
    %v4373 = vunpack.c.l.b16 %v541
    %v4374 = vunpack.c.h.b16 %v541
    %v4375 = vunpack.c.l.b16 %v542
    %v4376 = vunpack.c.h.b16 %v542
    %v4377 = vunpack.c.l.b16 %v543
    %v4378 = vunpack.c.h.b16 %v543
    %v4379 = vunpack.c.l.b16 %v544
    %v4380 = vunpack.c.h.b16 %v544
    %v4381 = vunpack.c.l.b16 %v545
    %v4382 = vunpack.c.h.b16 %v545
    %v4383 = vunpack.c.l.b16 %v546
    %v4384 = vunpack.c.h.b16 %v546
    %v4385 = vunpack.c.l.b16 %v547
    %v4386 = vunpack.c.h.b16 %v547
    %v4387 = vunpack.c.l.b16 %v548
    %v4388 = vunpack.c.h.b16 %v548
    %v4389 = vunpack.c.l.b16 %v549
    %v4390 = vunpack.c.h.b16 %v549
    %v4391 = vunpack.c.l.b16 %v550
    %v4392 = vunpack.c.h.b16 %v550
    %v4393 = vunpack.c.l.b16 %v551
    %v4394 = vunpack.c.h.b16 %v551
    %v4395 = vunpack.c.l.b16 %v552
    %v4396 = vunpack.c.h.b16 %v552
    %v4397 = vunpack.c.l.b16 %v553
    %v4398 = vunpack.c.h.b16 %v553
    %v4399 = vunpack.c.l.b16 %v554
    %v4400 = vunpack.c.h.b16 %v554
    %v4401 = vunpack.c.l.b16 %v555
    %v4402 = vunpack.c.h.b16 %v555
    %v4403 = vunpack.c.l.b16 %v556
    %v4404 = vunpack.c.h.b16 %v556
    %v4405 = vunpack.c.l.b16 %v557
    %v4406 = vunpack.c.h.b16 %v557
    %v4407 = vunpack.c.l.b16 %v558
    %v4408 = vunpack.c.h.b16 %v558
    %v4409 = vunpack.c.l.b16 %v559
    %v4410 = vunpack.c.h.b16 %v559
    %v4411 = vunpack.c.l.b16 %v560
    %v4412 = vunpack.c.h.b16 %v560
    %v4413 = vunpack.c.l.b16 %v561
    %v4414 = vunpack.c.h.b16 %v561
    %v4415 = vunpack.c.l.b16 %v562
    %v4416 = vunpack.c.h.b16 %v562
    %v4417 = vunpack.c.l.b16 %v563
    %v4418 = vunpack.c.h.b16 %v563
    %v4419 = vunpack.c.l.b16 %v564
    %v4420 = vunpack.c.h.b16 %v564
    %v4421 = vunpack.c.l.b16 %v565
    %v4422 = vunpack.c.h.b16 %v565
    %v4423 = vunpack.c.l.b16 %v566
    %v4424 = vunpack.c.h.b16 %v566
    %v4425 = vunpack.c.l.b16 %v567
    %v4426 = vunpack.c.h.b16 %v567
    %v4427 = vunpack.c.l.b16 %v568
    %v4428 = vunpack.c.h.b16 %v568
    %v4429 = vunpack.c.l.b16 %v569
    %v4430 = vunpack.c.h.b16 %v569
    %v4431 = vunpack.c.l.b16 %v570
    %v4432 = vunpack.c.h.b16 %v570
    %v4433 = vunpack.c.l.b16 %v571
    %v4434 = vunpack.c.h.b16 %v571
    %v4435 = vunpack.c.l.b16 %v572
    %v4436 = vunpack.c.h.b16 %v572
    %v4437 = vunpack.c.l.b16 %v573
    %v4438 = vunpack.c.h.b16 %v573
    %v4439 = vunpack.c.l.b16 %v574
    %v4440 = vunpack.c.h.b16 %v574
    %v4441 = vunpack.c.l.b16 %v575
    %v4442 = vunpack.c.h.b16 %v575
    %v4443 = vunpack.c.l.b16 %v576
    %v4444 = vunpack.c.h.b16 %v576
    %v4445 = vunpack.c.l.b16 %v577
    %v4446 = vunpack.c.h.b16 %v577
    %v4447 = vunpack.c.l.b16 %v578
    %v4448 = vunpack.c.h.b16 %v578
    %v4449 = vunpack.c.l.b16 %v579
    %v4450 = vunpack.c.h.b16 %v579
    %v4451 = vpack.c.b16 %v4325, %v4323
    %v4452 = vpack.c.b16 %v4326, %v4324
    %v4453 = vpack.c.b16 %v4329, %v4327
    %v4454 = vpack.c.b16 %v4330, %v4328
    %v4455 = vpack.c.b16 %v4333, %v4331
    %v4456 = vpack.c.b16 %v4334, %v4332
    %v4457 = vpack.c.b16 %v4337, %v4335
    %v4458 = vpack.c.b16 %v4338, %v4336
    %v4459 = vpack.c.b16 %v4341, %v4339
    %v4460 = vpack.c.b16 %v4342, %v4340
    %v4461 = vpack.c.b16 %v4345, %v4343
    %v4462 = vpack.c.b16 %v4346, %v4344
    %v4463 = vpack.c.b16 %v4349, %v4347
    %v4464 = vpack.c.b16 %v4350, %v4348
    %v4465 = vpack.c.b16 %v4353, %v4351
    %v4466 = vpack.c.b16 %v4354, %v4352
    %v4467 = vpack.c.b16 %v4357, %v4355
    %v4468 = vpack.c.b16 %v4358, %v4356
    %v4469 = vpack.c.b16 %v4361, %v4359
    %v4470 = vpack.c.b16 %v4362, %v4360
    %v4471 = vpack.c.b16 %v4365, %v4363
    %v4472 = vpack.c.b16 %v4366, %v4364
    %v4473 = vpack.c.b16 %v4369, %v4367
    %v4474 = vpack.c.b16 %v4370, %v4368
    %v4475 = vpack.c.b16 %v4373, %v4371
    %v4476 = vpack.c.b16 %v4374, %v4372
    %v4477 = vpack.c.b16 %v4377, %v4375
    %v4478 = vpack.c.b16 %v4378, %v4376
    %v4479 = vpack.c.b16 %v4381, %v4379
    %v4480 = vpack.c.b16 %v4382, %v4380
    %v4481 = vpack.c.b16 %v4385, %v4383
    %v4482 = vpack.c.b16 %v4386, %v4384
    %v4483 = vpack.c.b16 %v4389, %v4387
    %v4484 = vpack.c.b16 %v4390, %v4388
    %v4485 = vpack.c.b16 %v4393, %v4391
    %v4486 = vpack.c.b16 %v4394, %v4392
    %v4487 = vpack.c.b16 %v4397, %v4395
    %v4488 = vpack.c.b16 %v4398, %v4396
    %v4489 = vpack.c.b16 %v4401, %v4399
    %v4490 = vpack.c.b16 %v4402, %v4400
    %v4491 = vpack.c.b16 %v4405, %v4403
    %v4492 = vpack.c.b16 %v4406, %v4404
    %v4493 = vpack.c.b16 %v4409, %v4407
    %v4494 = vpack.c.b16 %v4410, %v4408
    %v4495 = vpack.c.b16 %v4413, %v4411
    %v4496 = vpack.c.b16 %v4414, %v4412
    %v4497 = vpack.c.b16 %v4417, %v4415
    %v4498 = vpack.c.b16 %v4418, %v4416
    %v4499 = vpack.c.b16 %v4421, %v4419
    %v4500 = vpack.c.b16 %v4422, %v4420
    %v4501 = vpack.c.b16 %v4425, %v4423
    %v4502 = vpack.c.b16 %v4426, %v4424
    %v4503 = vpack.c.b16 %v4429, %v4427
    %v4504 = vpack.c.b16 %v4430, %v4428
    %v4505 = vpack.c.b16 %v4433, %v4431
    %v4506 = vpack.c.b16 %v4434, %v4432
    %v4507 = vpack.c.b16 %v4437, %v4435
    %v4508 = vpack.c.b16 %v4438, %v4436
    %v4509 = vpack.c.b16 %v4441, %v4439
    %v4510 = vpack.c.b16 %v4442, %v4440
    %v4511 = vpack.c.b16 %v4445, %v4443
    %v4512 = vpack.c.b16 %v4446, %v4444
    %v4513 = vpack.c.b16 %v4449, %v4447
    %v4514 = vpack.c.b16 %v4450, %v4448
    %4579 = vmatprep.subr.bf16.mxu0 %v4452
    %4580 = vmatpush1.bf16.msra.mxu0 %v4451
    %4581 = vmatprep.subr.bf16.mxu0 %v4454
    %4582 = vmatpush1.bf16.msra.mxu0 %v4453
    %4583 = vmatprep.subr.bf16.mxu0 %v4456
    %4584 = vmatpush1.bf16.msra.mxu0 %v4455
    %4585 = vmatprep.subr.bf16.mxu0 %v4458
    %4586 = vmatpush1.bf16.msra.mxu0 %v4457
    %4587 = vmatprep.subr.bf16.mxu0 %v4460
    %4588 = vmatpush1.bf16.msra.mxu0 %v4459
    %4589 = vmatprep.subr.bf16.mxu0 %v4462
    %4590 = vmatpush1.bf16.msra.mxu0 %v4461
    %4591 = vmatprep.subr.bf16.mxu0 %v4464
    %4592 = vmatpush1.bf16.msra.mxu0 %v4463
    %4593 = vmatprep.subr.bf16.mxu0 %v4466
    %4594 = vmatpush1.bf16.msra.mxu0 %v4465
    %4595 = vmatprep.subr.bf16.mxu0 %v4468
    %4596 = vmatpush1.bf16.msra.mxu0 %v4467
    %4597 = vmatprep.subr.bf16.mxu0 %v4470
    %4598 = vmatpush1.bf16.msra.mxu0 %v4469
    %4599 = vmatprep.subr.bf16.mxu0 %v4472
    %4600 = vmatpush1.bf16.msra.mxu0 %v4471
    %4601 = vmatprep.subr.bf16.mxu0 %v4474
    %4602 = vmatpush1.bf16.msra.mxu0 %v4473
    %4603 = vmatprep.subr.bf16.mxu0 %v4476
    %4604 = vmatpush1.bf16.msra.mxu0 %v4475
    %4605 = vmatprep.subr.bf16.mxu0 %v4478
    %4606 = vmatpush1.bf16.msra.mxu0 %v4477
    %4607 = vmatprep.subr.bf16.mxu0 %v4480
    %4608 = vmatpush1.bf16.msra.mxu0 %v4479
    %4609 = vmatprep.subr.bf16.mxu0 %v4482
    %4610 = vmatpush1.bf16.msra.mxu0 %v4481
    %4611 = vmatprep.mubr.bf16.mxu0 %v4256
    %4612 = vmatmul.mubr.bf16.gmra.mrb[0].mxu0 %v4255
    %v4613 = vpop.f32.mrb[0].mxu0
    %v4614 = vadd.f32 0.0, %v4613
    %v4615 = vpop.f32.mrb[0].mxu0
    %v4616 = vadd.f32 0.0, %v4615
    %v4617 = vpop.f32.mrb[0].mxu0
    %v4618 = vpop.f32.mrb[0].mxu0
    %4619 = vdwg.mxu0
    %4620 = vmatprep.subr.bf16.mxu0 %v4484
    %4621 = vmatpush1.bf16.msra.mxu0 %v4483
    %4622 = vmatprep.subr.bf16.mxu0 %v4486
    %4623 = vmatpush1.bf16.msra.mxu0 %v4485
    %4624 = vmatprep.subr.bf16.mxu0 %v4488
    %4625 = vmatpush1.bf16.msra.mxu0 %v4487
    %4626 = vmatprep.subr.bf16.mxu0 %v4490
    %4627 = vmatpush1.bf16.msra.mxu0 %v4489
    %4628 = vmatprep.subr.bf16.mxu0 %v4492
    %4629 = vmatpush1.bf16.msra.mxu0 %v4491
    %4630 = vmatprep.subr.bf16.mxu0 %v4494
    %4631 = vmatpush1.bf16.msra.mxu0 %v4493
    %4632 = vmatprep.subr.bf16.mxu0 %v4496
    %4633 = vmatpush1.bf16.msra.mxu0 %v4495
    %4634 = vmatprep.subr.bf16.mxu0 %v4498
    %4635 = vmatpush1.bf16.msra.mxu0 %v4497
    %4636 = vmatprep.subr.bf16.mxu0 %v4500
    %4637 = vmatpush1.bf16.msra.mxu0 %v4499
    %4638 = vmatprep.subr.bf16.mxu0 %v4502
    %4639 = vmatpush1.bf16.msra.mxu0 %v4501
    %4640 = vmatprep.subr.bf16.mxu0 %v4504
    %4641 = vmatpush1.bf16.msra.mxu0 %v4503
    %4642 = vmatprep.subr.bf16.mxu0 %v4506
    %4643 = vmatpush1.bf16.msra.mxu0 %v4505
    %4644 = vmatprep.subr.bf16.mxu0 %v4508
    %4645 = vmatpush1.bf16.msra.mxu0 %v4507
    %4646 = vmatprep.subr.bf16.mxu0 %v4510
    %4647 = vmatpush1.bf16.msra.mxu0 %v4509
    %4648 = vmatprep.subr.bf16.mxu0 %v4512
    %4649 = vmatpush1.bf16.msra.mxu0 %v4511
    %4650 = vmatprep.subr.bf16.mxu0 %v4514
    %4651 = vmatpush1.bf16.msra.mxu0 %v4513
    %4652 = vmatprep.mubr.bf16.mxu0 %v4258
    %4653 = vmatmul.mubr.bf16.gmra.mrb[0].mxu0 %v4257
    %v4654 = vpop.f32.mrb[0].mxu0
    %v4655 = vadd.f32 %v4614, %v4654
    %v4656 = vpop.f32.mrb[0].mxu0
    %v4657 = vadd.f32 %v4616, %v4656
    %v4658 = vpop.f32.mrb[0].mxu0
    %v4659 = vpop.f32.mrb[0].mxu0
    %4660 = vdwg.mxu0
    %v4662 = vlaneseq
    %v4663 = vshrl.u32 %v4662, 7
    %v4664 = vsub.s32 0, %v4663
    %v4665 = vrot.slane %v580, %v4664
    %v4666 = vlaneseq
    %v4667 = vshrl.u32 %v4666, 7
    %v4668 = vsub.s32 1, %v4667
    %v4669 = vrot.slane %v580, %v4668
    %v4672 = vmul.f32 %v4655, %v4665
    %v4673 = vmul.f32 %v4657, %v4669
    %v4675 = vlaneseq
    %v4676 = vshrl.u32 %v4675, 7
    %v4677 = vsub.s32 0, %v4676
    %v4678 = vrot.slane %v581, %v4677
    %v4679 = vlaneseq
    %v4680 = vshrl.u32 %v4679, 7
    %v4681 = vsub.s32 1, %v4680
    %v4682 = vrot.slane %v581, %v4681
    %v4685 = vadd.f32 %v4672, %v4678
    %v4686 = vadd.f32 %v4673, %v4682
    %v4687 = vmax.f32 %v4685, 0.0
    %v4688 = vmax.f32 %v4686, 0.0
    %v4689 = vpack.c.bf16 %v4687, %v4687
    %v4690 = vpack.c.bf16 %v4688, %v4688
    %v4692 = vlaneseq
    %v4693 = vshrl.u32 %v4692, 7
    %v4694 = vsub.s32 0, %v4693
    %v4695 = vrot.slane %v614, %v4694
    %v4729 = vunpack.c.l.b16 %v582
    %v4730 = vunpack.c.l.b16 %v583
    %v4731 = vunpack.c.l.b16 %v584
    %v4732 = vunpack.c.l.b16 %v585
    %v4733 = vunpack.c.l.b16 %v586
    %v4734 = vunpack.c.l.b16 %v587
    %v4735 = vunpack.c.l.b16 %v588
    %v4736 = vunpack.c.l.b16 %v589
    %v4737 = vunpack.c.l.b16 %v590
    %v4738 = vunpack.c.l.b16 %v591
    %v4739 = vunpack.c.l.b16 %v592
    %v4740 = vunpack.c.l.b16 %v593
    %v4741 = vunpack.c.l.b16 %v594
    %v4742 = vunpack.c.l.b16 %v595
    %v4743 = vunpack.c.l.b16 %v596
    %v4744 = vunpack.c.l.b16 %v597
    %v4745 = vunpack.c.l.b16 %v598
    %v4746 = vunpack.c.l.b16 %v599
    %v4747 = vunpack.c.l.b16 %v600
    %v4748 = vunpack.c.l.b16 %v601
    %v4749 = vunpack.c.l.b16 %v602
    %v4750 = vunpack.c.l.b16 %v603
    %v4751 = vunpack.c.l.b16 %v604
    %v4752 = vunpack.c.l.b16 %v605
    %v4753 = vunpack.c.l.b16 %v606
    %v4754 = vunpack.c.l.b16 %v607
    %v4755 = vunpack.c.l.b16 %v608
    %v4756 = vunpack.c.l.b16 %v609
    %v4757 = vunpack.c.l.b16 %v610
    %v4758 = vunpack.c.l.b16 %v611
    %v4759 = vunpack.c.l.b16 %v612
    %v4760 = vunpack.c.l.b16 %v613
    %v4761 = vpack.c.b16 %v4730, %v4729
    %v4762 = vpack.c.b16 %v4732, %v4731
    %v4763 = vpack.c.b16 %v4734, %v4733
    %v4764 = vpack.c.b16 %v4736, %v4735
    %v4765 = vpack.c.b16 %v4738, %v4737
    %v4766 = vpack.c.b16 %v4740, %v4739
    %v4767 = vpack.c.b16 %v4742, %v4741
    %v4768 = vpack.c.b16 %v4744, %v4743
    %v4769 = vpack.c.b16 %v4746, %v4745
    %v4770 = vpack.c.b16 %v4748, %v4747
    %v4771 = vpack.c.b16 %v4750, %v4749
    %v4772 = vpack.c.b16 %v4752, %v4751
    %v4773 = vpack.c.b16 %v4754, %v4753
    %v4774 = vpack.c.b16 %v4756, %v4755
    %v4775 = vpack.c.b16 %v4758, %v4757
    %v4776 = vpack.c.b16 %v4760, %v4759
    %4793 = vmatprep.subr.bf16.mxu0 0
    %4794 = vmatpush1.bf16.msra.mxu0 %v4761
    %4795 = vmatprep.subr.bf16.mxu0 0
    %4796 = vmatpush1.bf16.msra.mxu0 %v4762
    %4797 = vmatprep.subr.bf16.mxu0 0
    %4798 = vmatpush1.bf16.msra.mxu0 %v4763
    %4799 = vmatprep.subr.bf16.mxu0 0
    %4800 = vmatpush1.bf16.msra.mxu0 %v4764
    %4801 = vmatprep.subr.bf16.mxu0 0
    %4802 = vmatpush1.bf16.msra.mxu0 %v4765
    %4803 = vmatprep.subr.bf16.mxu0 0
    %4804 = vmatpush1.bf16.msra.mxu0 %v4766
    %4805 = vmatprep.subr.bf16.mxu0 0
    %4806 = vmatpush1.bf16.msra.mxu0 %v4767
    %4807 = vmatprep.subr.bf16.mxu0 0
    %4808 = vmatpush1.bf16.msra.mxu0 %v4768
    %4809 = vmatprep.subr.bf16.mxu0 0
    %4810 = vmatpush1.bf16.msra.mxu0 %v4769
    %4811 = vmatprep.subr.bf16.mxu0 0
    %4812 = vmatpush1.bf16.msra.mxu0 %v4770
    %4813 = vmatprep.subr.bf16.mxu0 0
    %4814 = vmatpush1.bf16.msra.mxu0 %v4771
    %4815 = vmatprep.subr.bf16.mxu0 0
    %4816 = vmatpush1.bf16.msra.mxu0 %v4772
    %4817 = vmatprep.subr.bf16.mxu0 0
    %4818 = vmatpush1.bf16.msra.mxu0 %v4773
    %4819 = vmatprep.subr.bf16.mxu0 0
    %4820 = vmatpush1.bf16.msra.mxu0 %v4774
    %4821 = vmatprep.subr.bf16.mxu0 0
    %4822 = vmatpush1.bf16.msra.mxu0 %v4775
    %4823 = vmatprep.subr.bf16.mxu0 0
    %4824 = vmatpush1.bf16.msra.mxu0 %v4776
    %4825 = vmatprep.mubr.bf16.mxu0 %v4690
    %4826 = vmatmul.mubr.bf16.gmra.mrb[0].mxu0 %v4689
    %v4827 = vpop.f32.mrb[0].mxu0
    %v4828 = vadd.f32 %v4695, %v4827
    %v4829 = vpop.f32.mrb[0].mxu0
    %v4830 = vpop.f32.mrb[0].mxu0
    %v4831 = vpop.f32.mrb[0].mxu0
    %4832 = vdwg.mxu0
    %v4834 = vlaneseq
    %v4835 = vshrl.u32 %v4834, 7
    %v4836 = vsub.s32 0, %v4835
    %v4837 = vrot.slane %v615, %v4836
    %v4839 = vadd.f32 %v4828, %v4837
    %4841 = vset.pattern.permute.xlu0 0
    %4842 = vperm.xlu0 %4841, %v695
    %v4843 = vpop.permute.xlu0 %4842
    %4846 = vset.pattern.permute.xlu0 0
    %4847 = vperm.xlu0 %4846, %v696
    %v4848 = vpop.permute.xlu0 %4847
    %4851 = vset.pattern.permute.xlu0 0
    %4852 = vperm.xlu0 %4851, %v697
    %v4853 = vpop.permute.xlu0 %4852
    %4856 = vset.pattern.permute.xlu0 0
    %4857 = vperm.xlu0 %4856, %v698
    %v4858 = vpop.permute.xlu0 %4857
    %4861 = vset.pattern.permute.xlu0 0
    %4862 = vperm.xlu0 %4861, %v699
    %v4863 = vpop.permute.xlu0 %4862
    %4866 = vset.pattern.permute.xlu0 0
    %4867 = vperm.xlu0 %4866, %v700
    %v4868 = vpop.permute.xlu0 %4867
    %4871 = vset.pattern.permute.xlu0 0
    %4872 = vperm.xlu0 %4871, %v701
    %v4873 = vpop.permute.xlu0 %4872
    %4876 = vset.pattern.permute.xlu0 0
    %4877 = vperm.xlu0 %4876, %v702
    %v4878 = vpop.permute.xlu0 %4877
    %v4880 = vlaneseq
    %v4881 = vshrl.u32 %v4880, 7
    %v4882 = vsub.s32 0, %v4881
    %v4883 = vrot.slane %v4839, %v4882
    %v4884 = vmul.f32 %v4843, %v4883
    %v4885 = vmul.f32 %v4848, %v4883
    %v4886 = vmul.f32 %v4853, %v4883
    %v4887 = vmul.f32 %v4858, %v4883
    %v4888 = vmul.f32 %v4863, %v4883
    %v4889 = vmul.f32 %v4868, %v4883
    %v4890 = vmul.f32 %v4873, %v4883
    %v4891 = vmul.f32 %v4878, %v4883
    %4892 = vset.pattern.permute.xlu0 1
    %4893 = vperm.xlu0 %4892, %v695
    %v4894 = vpop.permute.xlu0 %4893
    %4896 = vset.pattern.permute.xlu0 1
    %4897 = vperm.xlu0 %4896, %v696
    %v4898 = vpop.permute.xlu0 %4897
    %4900 = vset.pattern.permute.xlu0 1
    %4901 = vperm.xlu0 %4900, %v697
    %v4902 = vpop.permute.xlu0 %4901
    %4904 = vset.pattern.permute.xlu0 1
    %4905 = vperm.xlu0 %4904, %v698
    %v4906 = vpop.permute.xlu0 %4905
    %4908 = vset.pattern.permute.xlu0 1
    %4909 = vperm.xlu0 %4908, %v699
    %v4910 = vpop.permute.xlu0 %4909
    %4912 = vset.pattern.permute.xlu0 1
    %4913 = vperm.xlu0 %4912, %v700
    %v4914 = vpop.permute.xlu0 %4913
    %4916 = vset.pattern.permute.xlu0 1
    %4917 = vperm.xlu0 %4916, %v701
    %v4918 = vpop.permute.xlu0 %4917
    %4920 = vset.pattern.permute.xlu0 1
    %4921 = vperm.xlu0 %4920, %v702
    %v4922 = vpop.permute.xlu0 %4921
    %v4924 = vmul.f32 %v4894, %v4883
    %v4925 = vmul.f32 %v4898, %v4883
    %v4926 = vmul.f32 %v4902, %v4883
    %v4927 = vmul.f32 %v4906, %v4883
    %v4928 = vmul.f32 %v4910, %v4883
    %v4929 = vmul.f32 %v4914, %v4883
    %v4930 = vmul.f32 %v4918, %v4883
    %v4931 = vmul.f32 %v4922, %v4883
    %4940 = vrot.lane.b32.xlu0 %v4924, 123
    %v4941 = vpop.permute.xlu0 %4940
    %4942 = vrot.lane.b32.xlu0 %v4925, 123
    %v4943 = vpop.permute.xlu0 %4942
    %4944 = vrot.lane.b32.xlu0 %v4926, 123
    %v4945 = vpop.permute.xlu0 %4944
    %4946 = vrot.lane.b32.xlu0 %v4927, 123
    %v4947 = vpop.permute.xlu0 %4946
    %4948 = vrot.lane.b32.xlu0 %v4928, 123
    %v4949 = vpop.permute.xlu0 %4948
    %4950 = vrot.lane.b32.xlu0 %v4929, 123
    %v4951 = vpop.permute.xlu0 %4950
    %4952 = vrot.lane.b32.xlu0 %v4930, 123
    %v4953 = vpop.permute.xlu0 %4952
    %4954 = vrot.lane.b32.xlu0 %v4931, 123
    %v4955 = vpop.permute.xlu0 %4954
    %v4964 = vadd.f32 %v4884, %v4941
    %v4965 = vadd.f32 %v4885, %v4943
    %v4966 = vadd.f32 %v4886, %v4945
    %v4967 = vadd.f32 %v4887, %v4947
    %v4968 = vadd.f32 %v4888, %v4949
    %v4969 = vadd.f32 %v4889, %v4951
    %v4970 = vadd.f32 %v4890, %v4953
    %v4971 = vadd.f32 %v4891, %v4955
    %4972 = vset.pattern.permute.xlu0 2
    %4973 = vperm.xlu0 %4972, %v695
    %v4974 = vpop.permute.xlu0 %4973
    %4976 = vset.pattern.permute.xlu0 2
    %4977 = vperm.xlu0 %4976, %v696
    %v4978 = vpop.permute.xlu0 %4977
    %4980 = vset.pattern.permute.xlu0 2
    %4981 = vperm.xlu0 %4980, %v697
    %v4982 = vpop.permute.xlu0 %4981
    %4984 = vset.pattern.permute.xlu0 2
    %4985 = vperm.xlu0 %4984, %v698
    %v4986 = vpop.permute.xlu0 %4985
    %4988 = vset.pattern.permute.xlu0 2
    %4989 = vperm.xlu0 %4988, %v699
    %v4990 = vpop.permute.xlu0 %4989
    %4992 = vset.pattern.permute.xlu0 2
    %4993 = vperm.xlu0 %4992, %v700
    %v4994 = vpop.permute.xlu0 %4993
    %4996 = vset.pattern.permute.xlu0 2
    %4997 = vperm.xlu0 %4996, %v701
    %v4998 = vpop.permute.xlu0 %4997
    %5000 = vset.pattern.permute.xlu0 2
    %5001 = vperm.xlu0 %5000, %v702
    %v5002 = vpop.permute.xlu0 %5001
    %v5004 = vmul.f32 %v4974, %v4883
    %v5005 = vmul.f32 %v4978, %v4883
    %v5006 = vmul.f32 %v4982, %v4883
    %v5007 = vmul.f32 %v4986, %v4883
    %v5008 = vmul.f32 %v4990, %v4883
    %v5009 = vmul.f32 %v4994, %v4883
    %v5010 = vmul.f32 %v4998, %v4883
    %v5011 = vmul.f32 %v5002, %v4883
    %5020 = vrot.lane.b32.xlu0 %v5004, 118
    %v5021 = vpop.permute.xlu0 %5020
    %5022 = vrot.lane.b32.xlu0 %v5005, 118
    %v5023 = vpop.permute.xlu0 %5022
    %5024 = vrot.lane.b32.xlu0 %v5006, 118
    %v5025 = vpop.permute.xlu0 %5024
    %5026 = vrot.lane.b32.xlu0 %v5007, 118
    %v5027 = vpop.permute.xlu0 %5026
    %5028 = vrot.lane.b32.xlu0 %v5008, 118
    %v5029 = vpop.permute.xlu0 %5028
    %5030 = vrot.lane.b32.xlu0 %v5009, 118
    %v5031 = vpop.permute.xlu0 %5030
    %5032 = vrot.lane.b32.xlu0 %v5010, 118
    %v5033 = vpop.permute.xlu0 %5032
    %5034 = vrot.lane.b32.xlu0 %v5011, 118
    %v5035 = vpop.permute.xlu0 %5034
    %v5044 = vadd.f32 %v4964, %v5021
    %v5045 = vadd.f32 %v4965, %v5023
    %v5046 = vadd.f32 %v4966, %v5025
    %v5047 = vadd.f32 %v4967, %v5027
    %v5048 = vadd.f32 %v4968, %v5029
    %v5049 = vadd.f32 %v4969, %v5031
    %v5050 = vadd.f32 %v4970, %v5033
    %v5051 = vadd.f32 %v4971, %v5035
    %5052 = vset.pattern.permute.xlu0 3
    %5053 = vperm.xlu0 %5052, %v695
    %v5054 = vpop.permute.xlu0 %5053
    %5056 = vset.pattern.permute.xlu0 3
    %5057 = vperm.xlu0 %5056, %v696
    %v5058 = vpop.permute.xlu0 %5057
    %5060 = vset.pattern.permute.xlu0 3
    %5061 = vperm.xlu0 %5060, %v697
    %v5062 = vpop.permute.xlu0 %5061
    %5064 = vset.pattern.permute.xlu0 3
    %5065 = vperm.xlu0 %5064, %v698
    %v5066 = vpop.permute.xlu0 %5065
    %5068 = vset.pattern.permute.xlu0 3
    %5069 = vperm.xlu0 %5068, %v699
    %v5070 = vpop.permute.xlu0 %5069
    %5072 = vset.pattern.permute.xlu0 3
    %5073 = vperm.xlu0 %5072, %v700
    %v5074 = vpop.permute.xlu0 %5073
    %5076 = vset.pattern.permute.xlu0 3
    %5077 = vperm.xlu0 %5076, %v701
    %v5078 = vpop.permute.xlu0 %5077
    %5080 = vset.pattern.permute.xlu0 3
    %5081 = vperm.xlu0 %5080, %v702
    %v5082 = vpop.permute.xlu0 %5081
    %v5084 = vmul.f32 %v5054, %v4883
    %v5085 = vmul.f32 %v5058, %v4883
    %v5086 = vmul.f32 %v5062, %v4883
    %v5087 = vmul.f32 %v5066, %v4883
    %v5088 = vmul.f32 %v5070, %v4883
    %v5089 = vmul.f32 %v5074, %v4883
    %v5090 = vmul.f32 %v5078, %v4883
    %v5091 = vmul.f32 %v5082, %v4883
    %5100 = vrot.lane.b32.xlu0 %v5084, 113
    %v5101 = vpop.permute.xlu0 %5100
    %5102 = vrot.lane.b32.xlu0 %v5085, 113
    %v5103 = vpop.permute.xlu0 %5102
    %5104 = vrot.lane.b32.xlu0 %v5086, 113
    %v5105 = vpop.permute.xlu0 %5104
    %5106 = vrot.lane.b32.xlu0 %v5087, 113
    %v5107 = vpop.permute.xlu0 %5106
    %5108 = vrot.lane.b32.xlu0 %v5088, 113
    %v5109 = vpop.permute.xlu0 %5108
    %5110 = vrot.lane.b32.xlu0 %v5089, 113
    %v5111 = vpop.permute.xlu0 %5110
    %5112 = vrot.lane.b32.xlu0 %v5090, 113
    %v5113 = vpop.permute.xlu0 %5112
    %5114 = vrot.lane.b32.xlu0 %v5091, 113
    %v5115 = vpop.permute.xlu0 %5114
    %v5124 = vadd.f32 %v5044, %v5101
    %v5125 = vadd.f32 %v5045, %v5103
    %v5126 = vadd.f32 %v5046, %v5105
    %v5127 = vadd.f32 %v5047, %v5107
    %v5128 = vadd.f32 %v5048, %v5109
    %v5129 = vadd.f32 %v5049, %v5111
    %v5130 = vadd.f32 %v5050, %v5113
    %v5131 = vadd.f32 %v5051, %v5115
    %5132 = vset.pattern.permute.xlu0 4
    %5133 = vperm.xlu0 %5132, %v695
    %v5134 = vpop.permute.xlu0 %5133
    %5136 = vset.pattern.permute.xlu0 4
    %5137 = vperm.xlu0 %5136, %v696
    %v5138 = vpop.permute.xlu0 %5137
    %5140 = vset.pattern.permute.xlu0 4
    %5141 = vperm.xlu0 %5140, %v697
    %v5142 = vpop.permute.xlu0 %5141
    %5144 = vset.pattern.permute.xlu0 4
    %5145 = vperm.xlu0 %5144, %v698
    %v5146 = vpop.permute.xlu0 %5145
    %5148 = vset.pattern.permute.xlu0 4
    %5149 = vperm.xlu0 %5148, %v699
    %v5150 = vpop.permute.xlu0 %5149
    %5152 = vset.pattern.permute.xlu0 4
    %5153 = vperm.xlu0 %5152, %v700
    %v5154 = vpop.permute.xlu0 %5153
    %5156 = vset.pattern.permute.xlu0 4
    %5157 = vperm.xlu0 %5156, %v701
    %v5158 = vpop.permute.xlu0 %5157
    %5160 = vset.pattern.permute.xlu0 4
    %5161 = vperm.xlu0 %5160, %v702
    %v5162 = vpop.permute.xlu0 %5161
    %v5164 = vmul.f32 %v5134, %v4883
    %v5165 = vmul.f32 %v5138, %v4883
    %v5166 = vmul.f32 %v5142, %v4883
    %v5167 = vmul.f32 %v5146, %v4883
    %v5168 = vmul.f32 %v5150, %v4883
    %v5169 = vmul.f32 %v5154, %v4883
    %v5170 = vmul.f32 %v5158, %v4883
    %v5171 = vmul.f32 %v5162, %v4883
    %5180 = vrot.lane.b32.xlu0 %v5164, 108
    %v5181 = vpop.permute.xlu0 %5180
    %5182 = vrot.lane.b32.xlu0 %v5165, 108
    %v5183 = vpop.permute.xlu0 %5182
    %5184 = vrot.lane.b32.xlu0 %v5166, 108
    %v5185 = vpop.permute.xlu0 %5184
    %5186 = vrot.lane.b32.xlu0 %v5167, 108
    %v5187 = vpop.permute.xlu0 %5186
    %5188 = vrot.lane.b32.xlu0 %v5168, 108
    %v5189 = vpop.permute.xlu0 %5188
    %5190 = vrot.lane.b32.xlu0 %v5169, 108
    %v5191 = vpop.permute.xlu0 %5190
    %5192 = vrot.lane.b32.xlu0 %v5170, 108
    %v5193 = vpop.permute.xlu0 %5192
    %5194 = vrot.lane.b32.xlu0 %v5171, 108
    %v5195 = vpop.permute.xlu0 %5194
    %v5204 = vadd.f32 %v5124, %v5181
    %v5205 = vadd.f32 %v5125, %v5183
    %v5206 = vadd.f32 %v5126, %v5185
    %v5207 = vadd.f32 %v5127, %v5187
    %v5208 = vadd.f32 %v5128, %v5189
    %v5209 = vadd.f32 %v5129, %v5191
    %v5210 = vadd.f32 %v5130, %v5193
    %v5211 = vadd.f32 %v5131, %v5195
    %5213 = vset.pattern.permute.xlu0 0
    %5214 = vperm.xlu0 %5213, %v703
    %v5215 = vpop.permute.xlu0 %5214
    %5218 = vset.pattern.permute.xlu0 0
    %5219 = vperm.xlu0 %5218, %v704
    %v5220 = vpop.permute.xlu0 %5219
    %5223 = vset.pattern.permute.xlu0 0
    %5224 = vperm.xlu0 %5223, %v705
    %v5225 = vpop.permute.xlu0 %5224
    %5228 = vset.pattern.permute.xlu0 0
    %5229 = vperm.xlu0 %5228, %v706
    %v5230 = vpop.permute.xlu0 %5229
    %5233 = vset.pattern.permute.xlu0 0
    %5234 = vperm.xlu0 %5233, %v707
    %v5235 = vpop.permute.xlu0 %5234
    %5238 = vset.pattern.permute.xlu0 0
    %5239 = vperm.xlu0 %5238, %v708
    %v5240 = vpop.permute.xlu0 %5239
    %5243 = vset.pattern.permute.xlu0 0
    %5244 = vperm.xlu0 %5243, %v709
    %v5245 = vpop.permute.xlu0 %5244
    %5248 = vset.pattern.permute.xlu0 0
    %5249 = vperm.xlu0 %5248, %v710
    %v5250 = vpop.permute.xlu0 %5249
    %v5252 = vlaneseq
    %v5253 = vshrl.u32 %v5252, 7
    %v5254 = vsub.s32 1, %v5253
    %v5255 = vrot.slane %v4839, %v5254
    %v5256 = vmul.f32 %v5215, %v5255
    %v5257 = vmul.f32 %v5220, %v5255
    %v5258 = vmul.f32 %v5225, %v5255
    %v5259 = vmul.f32 %v5230, %v5255
    %v5260 = vmul.f32 %v5235, %v5255
    %v5261 = vmul.f32 %v5240, %v5255
    %v5262 = vmul.f32 %v5245, %v5255
    %v5263 = vmul.f32 %v5250, %v5255
    %5264 = vset.pattern.permute.xlu0 1
    %5265 = vperm.xlu0 %5264, %v703
    %v5266 = vpop.permute.xlu0 %5265
    %5268 = vset.pattern.permute.xlu0 1
    %5269 = vperm.xlu0 %5268, %v704
    %v5270 = vpop.permute.xlu0 %5269
    %5272 = vset.pattern.permute.xlu0 1
    %5273 = vperm.xlu0 %5272, %v705
    %v5274 = vpop.permute.xlu0 %5273
    %5276 = vset.pattern.permute.xlu0 1
    %5277 = vperm.xlu0 %5276, %v706
    %v5278 = vpop.permute.xlu0 %5277
    %5280 = vset.pattern.permute.xlu0 1
    %5281 = vperm.xlu0 %5280, %v707
    %v5282 = vpop.permute.xlu0 %5281
    %5284 = vset.pattern.permute.xlu0 1
    %5285 = vperm.xlu0 %5284, %v708
    %v5286 = vpop.permute.xlu0 %5285
    %5288 = vset.pattern.permute.xlu0 1
    %5289 = vperm.xlu0 %5288, %v709
    %v5290 = vpop.permute.xlu0 %5289
    %5292 = vset.pattern.permute.xlu0 1
    %5293 = vperm.xlu0 %5292, %v710
    %v5294 = vpop.permute.xlu0 %5293
    %v5296 = vmul.f32 %v5266, %v5255
    %v5297 = vmul.f32 %v5270, %v5255
    %v5298 = vmul.f32 %v5274, %v5255
    %v5299 = vmul.f32 %v5278, %v5255
    %v5300 = vmul.f32 %v5282, %v5255
    %v5301 = vmul.f32 %v5286, %v5255
    %v5302 = vmul.f32 %v5290, %v5255
    %v5303 = vmul.f32 %v5294, %v5255
    %5312 = vrot.lane.b32.xlu0 %v5296, 123
    %v5313 = vpop.permute.xlu0 %5312
    %5314 = vrot.lane.b32.xlu0 %v5297, 123
    %v5315 = vpop.permute.xlu0 %5314
    %5316 = vrot.lane.b32.xlu0 %v5298, 123
    %v5317 = vpop.permute.xlu0 %5316
    %5318 = vrot.lane.b32.xlu0 %v5299, 123
    %v5319 = vpop.permute.xlu0 %5318
    %5320 = vrot.lane.b32.xlu0 %v5300, 123
    %v5321 = vpop.permute.xlu0 %5320
    %5322 = vrot.lane.b32.xlu0 %v5301, 123
    %v5323 = vpop.permute.xlu0 %5322
    %5324 = vrot.lane.b32.xlu0 %v5302, 123
    %v5325 = vpop.permute.xlu0 %5324
    %5326 = vrot.lane.b32.xlu0 %v5303, 123
    %v5327 = vpop.permute.xlu0 %5326
    %v5336 = vadd.f32 %v5256, %v5313
    %v5337 = vadd.f32 %v5257, %v5315
    %v5338 = vadd.f32 %v5258, %v5317
    %v5339 = vadd.f32 %v5259, %v5319
    %v5340 = vadd.f32 %v5260, %v5321
    %v5341 = vadd.f32 %v5261, %v5323
    %v5342 = vadd.f32 %v5262, %v5325
    %v5343 = vadd.f32 %v5263, %v5327
    %5344 = vset.pattern.permute.xlu0 2
    %5345 = vperm.xlu0 %5344, %v703
    %v5346 = vpop.permute.xlu0 %5345
    %5348 = vset.pattern.permute.xlu0 2
    %5349 = vperm.xlu0 %5348, %v704
    %v5350 = vpop.permute.xlu0 %5349
    %5352 = vset.pattern.permute.xlu0 2
    %5353 = vperm.xlu0 %5352, %v705
    %v5354 = vpop.permute.xlu0 %5353
    %5356 = vset.pattern.permute.xlu0 2
    %5357 = vperm.xlu0 %5356, %v706
    %v5358 = vpop.permute.xlu0 %5357
    %5360 = vset.pattern.permute.xlu0 2
    %5361 = vperm.xlu0 %5360, %v707
    %v5362 = vpop.permute.xlu0 %5361
    %5364 = vset.pattern.permute.xlu0 2
    %5365 = vperm.xlu0 %5364, %v708
    %v5366 = vpop.permute.xlu0 %5365
    %5368 = vset.pattern.permute.xlu0 2
    %5369 = vperm.xlu0 %5368, %v709
    %v5370 = vpop.permute.xlu0 %5369
    %5372 = vset.pattern.permute.xlu0 2
    %5373 = vperm.xlu0 %5372, %v710
    %v5374 = vpop.permute.xlu0 %5373
    %v5376 = vmul.f32 %v5346, %v5255
    %v5377 = vmul.f32 %v5350, %v5255
    %v5378 = vmul.f32 %v5354, %v5255
    %v5379 = vmul.f32 %v5358, %v5255
    %v5380 = vmul.f32 %v5362, %v5255
    %v5381 = vmul.f32 %v5366, %v5255
    %v5382 = vmul.f32 %v5370, %v5255
    %v5383 = vmul.f32 %v5374, %v5255
    %5392 = vrot.lane.b32.xlu0 %v5376, 118
    %v5393 = vpop.permute.xlu0 %5392
    %5394 = vrot.lane.b32.xlu0 %v5377, 118
    %v5395 = vpop.permute.xlu0 %5394
    %5396 = vrot.lane.b32.xlu0 %v5378, 118
    %v5397 = vpop.permute.xlu0 %5396
    %5398 = vrot.lane.b32.xlu0 %v5379, 118
    %v5399 = vpop.permute.xlu0 %5398
    %5400 = vrot.lane.b32.xlu0 %v5380, 118
    %v5401 = vpop.permute.xlu0 %5400
    %5402 = vrot.lane.b32.xlu0 %v5381, 118
    %v5403 = vpop.permute.xlu0 %5402
    %5404 = vrot.lane.b32.xlu0 %v5382, 118
    %v5405 = vpop.permute.xlu0 %5404
    %5406 = vrot.lane.b32.xlu0 %v5383, 118
    %v5407 = vpop.permute.xlu0 %5406
    %v5416 = vadd.f32 %v5336, %v5393
    %v5417 = vadd.f32 %v5337, %v5395
    %v5418 = vadd.f32 %v5338, %v5397
    %v5419 = vadd.f32 %v5339, %v5399
    %v5420 = vadd.f32 %v5340, %v5401
    %v5421 = vadd.f32 %v5341, %v5403
    %v5422 = vadd.f32 %v5342, %v5405
    %v5423 = vadd.f32 %v5343, %v5407
    %5424 = vset.pattern.permute.xlu0 3
    %5425 = vperm.xlu0 %5424, %v703
    %v5426 = vpop.permute.xlu0 %5425
    %5428 = vset.pattern.permute.xlu0 3
    %5429 = vperm.xlu0 %5428, %v704
    %v5430 = vpop.permute.xlu0 %5429
    %5432 = vset.pattern.permute.xlu0 3
    %5433 = vperm.xlu0 %5432, %v705
    %v5434 = vpop.permute.xlu0 %5433
    %5436 = vset.pattern.permute.xlu0 3
    %5437 = vperm.xlu0 %5436, %v706
    %v5438 = vpop.permute.xlu0 %5437
    %5440 = vset.pattern.permute.xlu0 3
    %5441 = vperm.xlu0 %5440, %v707
    %v5442 = vpop.permute.xlu0 %5441
    %5444 = vset.pattern.permute.xlu0 3
    %5445 = vperm.xlu0 %5444, %v708
    %v5446 = vpop.permute.xlu0 %5445
    %5448 = vset.pattern.permute.xlu0 3
    %5449 = vperm.xlu0 %5448, %v709
    %v5450 = vpop.permute.xlu0 %5449
    %5452 = vset.pattern.permute.xlu0 3
    %5453 = vperm.xlu0 %5452, %v710
    %v5454 = vpop.permute.xlu0 %5453
    %v5456 = vmul.f32 %v5426, %v5255
    %v5457 = vmul.f32 %v5430, %v5255
    %v5458 = vmul.f32 %v5434, %v5255
    %v5459 = vmul.f32 %v5438, %v5255
    %v5460 = vmul.f32 %v5442, %v5255
    %v5461 = vmul.f32 %v5446, %v5255
    %v5462 = vmul.f32 %v5450, %v5255
    %v5463 = vmul.f32 %v5454, %v5255
    %5472 = vrot.lane.b32.xlu0 %v5456, 113
    %v5473 = vpop.permute.xlu0 %5472
    %5474 = vrot.lane.b32.xlu0 %v5457, 113
    %v5475 = vpop.permute.xlu0 %5474
    %5476 = vrot.lane.b32.xlu0 %v5458, 113
    %v5477 = vpop.permute.xlu0 %5476
    %5478 = vrot.lane.b32.xlu0 %v5459, 113
    %v5479 = vpop.permute.xlu0 %5478
    %5480 = vrot.lane.b32.xlu0 %v5460, 113
    %v5481 = vpop.permute.xlu0 %5480
    %5482 = vrot.lane.b32.xlu0 %v5461, 113
    %v5483 = vpop.permute.xlu0 %5482
    %5484 = vrot.lane.b32.xlu0 %v5462, 113
    %v5485 = vpop.permute.xlu0 %5484
    %5486 = vrot.lane.b32.xlu0 %v5463, 113
    %v5487 = vpop.permute.xlu0 %5486
    %v5496 = vadd.f32 %v5416, %v5473
    %v5497 = vadd.f32 %v5417, %v5475
    %v5498 = vadd.f32 %v5418, %v5477
    %v5499 = vadd.f32 %v5419, %v5479
    %v5500 = vadd.f32 %v5420, %v5481
    %v5501 = vadd.f32 %v5421, %v5483
    %v5502 = vadd.f32 %v5422, %v5485
    %v5503 = vadd.f32 %v5423, %v5487
    %5504 = vset.pattern.permute.xlu0 4
    %5505 = vperm.xlu0 %5504, %v703
    %v5506 = vpop.permute.xlu0 %5505
    %5508 = vset.pattern.permute.xlu0 4
    %5509 = vperm.xlu0 %5508, %v704
    %v5510 = vpop.permute.xlu0 %5509
    %5512 = vset.pattern.permute.xlu0 4
    %5513 = vperm.xlu0 %5512, %v705
    %v5514 = vpop.permute.xlu0 %5513
    %5516 = vset.pattern.permute.xlu0 4
    %5517 = vperm.xlu0 %5516, %v706
    %v5518 = vpop.permute.xlu0 %5517
    %5520 = vset.pattern.permute.xlu0 4
    %5521 = vperm.xlu0 %5520, %v707
    %v5522 = vpop.permute.xlu0 %5521
    %5524 = vset.pattern.permute.xlu0 4
    %5525 = vperm.xlu0 %5524, %v708
    %v5526 = vpop.permute.xlu0 %5525
    %5528 = vset.pattern.permute.xlu0 4
    %5529 = vperm.xlu0 %5528, %v709
    %v5530 = vpop.permute.xlu0 %5529
    %5532 = vset.pattern.permute.xlu0 4
    %5533 = vperm.xlu0 %5532, %v710
    %v5534 = vpop.permute.xlu0 %5533
    %v5536 = vmul.f32 %v5506, %v5255
    %v5537 = vmul.f32 %v5510, %v5255
    %v5538 = vmul.f32 %v5514, %v5255
    %v5539 = vmul.f32 %v5518, %v5255
    %v5540 = vmul.f32 %v5522, %v5255
    %v5541 = vmul.f32 %v5526, %v5255
    %v5542 = vmul.f32 %v5530, %v5255
    %v5543 = vmul.f32 %v5534, %v5255
    %5552 = vrot.lane.b32.xlu0 %v5536, 108
    %v5553 = vpop.permute.xlu0 %5552
    %5554 = vrot.lane.b32.xlu0 %v5537, 108
    %v5555 = vpop.permute.xlu0 %5554
    %5556 = vrot.lane.b32.xlu0 %v5538, 108
    %v5557 = vpop.permute.xlu0 %5556
    %5558 = vrot.lane.b32.xlu0 %v5539, 108
    %v5559 = vpop.permute.xlu0 %5558
    %5560 = vrot.lane.b32.xlu0 %v5540, 108
    %v5561 = vpop.permute.xlu0 %5560
    %5562 = vrot.lane.b32.xlu0 %v5541, 108
    %v5563 = vpop.permute.xlu0 %5562
    %5564 = vrot.lane.b32.xlu0 %v5542, 108
    %v5565 = vpop.permute.xlu0 %5564
    %5566 = vrot.lane.b32.xlu0 %v5543, 108
    %v5567 = vpop.permute.xlu0 %5566
    %v5576 = vadd.f32 %v5496, %v5553
    %v5577 = vadd.f32 %v5497, %v5555
    %v5578 = vadd.f32 %v5498, %v5557
    %v5579 = vadd.f32 %v5499, %v5559
    %v5580 = vadd.f32 %v5500, %v5561
    %v5581 = vadd.f32 %v5501, %v5563
    %v5582 = vadd.f32 %v5502, %v5565
    %v5583 = vadd.f32 %v5503, %v5567
    %v5584 = vpack.c.bf16 %v5205, %v5204
    %v5585 = vpack.c.bf16 %v5207, %v5206
    %v5586 = vpack.c.bf16 %v5209, %v5208
    %v5587 = vpack.c.bf16 %v5211, %v5210
    %v5588 = vpack.c.bf16 %v5577, %v5576
    %v5589 = vpack.c.bf16 %v5579, %v5578
    %v5590 = vpack.c.bf16 %v5581, %v5580
    %v5591 = vpack.c.bf16 %v5583, %v5582
    %v5593 = vsel %vm719, %v5584, 0
    %v5596 = vsel %vm719, %v5585, 0
    %v5599 = vsel %vm719, %v5586, 0
    %v5602 = vsel %vm719, %v5587, 0
    %v5605 = vsel %vm719, %v5588, 0
    %v5608 = vsel %vm719, %v5589, 0
    %v5611 = vsel %vm719, %v5590, 0
    %v5614 = vsel %vm719, %v5591, 0
    %v5617 = vand.u32 %v616, %v747
    %5619 = vmatprep.subr.bf16.mxu0 0
    %5620 = vmatpush1.bf16.msra.mxu0 %v5617
    %5621 = vmatprep.subr.bf16.mxu0 0
    %5622 = vmatpush1.bf16.msra.mxu0 0
    %5623 = vmatprep.subr.bf16.mxu0 0
    %5624 = vmatpush1.bf16.msra.mxu0 0
    %5625 = vmatprep.subr.bf16.mxu0 0
    %5626 = vmatpush1.bf16.msra.mxu0 0
    %5627 = vmatprep.subr.bf16.mxu0 0
    %5628 = vmatpush1.bf16.msra.mxu0 0
    %5629 = vmatprep.subr.bf16.mxu0 0
    %5630 = vmatpush1.bf16.msra.mxu0 0
    %5631 = vmatprep.subr.bf16.mxu0 0
    %5632 = vmatpush1.bf16.msra.mxu0 0
    %5633 = vmatprep.subr.bf16.mxu0 0
    %5634 = vmatpush1.bf16.msra.mxu0 0
    %5635 = vmatprep.subr.bf16.mxu0 0
    %5636 = vmatpush1.bf16.msra.mxu0 0
    %5637 = vmatprep.subr.bf16.mxu0 0
    %5638 = vmatpush1.bf16.msra.mxu0 0
    %5639 = vmatprep.subr.bf16.mxu0 0
    %5640 = vmatpush1.bf16.msra.mxu0 0
    %5641 = vmatprep.subr.bf16.mxu0 0
    %5642 = vmatpush1.bf16.msra.mxu0 0
    %5643 = vmatprep.subr.bf16.mxu0 0
    %5644 = vmatpush1.bf16.msra.mxu0 0
    %5645 = vmatprep.subr.bf16.mxu0 0
    %5646 = vmatpush1.bf16.msra.mxu0 0
    %5647 = vmatprep.subr.bf16.mxu0 0
    %5648 = vmatpush1.bf16.msra.mxu0 0
    %5649 = vmatprep.subr.bf16.mxu0 0
    %5650 = vmatpush1.bf16.msra.mxu0 0
    %5651 = vmatprep.mubr.bf16.mxu0 0
    %5652 = vmatmul.mubr.bf16.gmra.mrb[0].mxu0 %v5593
    %v5653 = vpop.f32.mrb[0].mxu0
    %v5654 = vadd.f32 0.0, %v5653
    %v5655 = vpop.f32.mrb[0].mxu0
    %v5656 = vpop.f32.mrb[0].mxu0
    %v5657 = vadd.f32 0.0, %v5656
    %v5658 = vpop.f32.mrb[0].mxu0
    %5659 = vmatprep.mubr.bf16.mxu0 0
    %5660 = vmatmul.mubr.bf16.gmra.mrb[0].mxu0 %v5596
    %v5661 = vpop.f32.mrb[0].mxu0
    %v5662 = vadd.f32 0.0, %v5661
    %v5663 = vpop.f32.mrb[0].mxu0
    %v5664 = vpop.f32.mrb[0].mxu0
    %v5665 = vadd.f32 0.0, %v5664
    %v5666 = vpop.f32.mrb[0].mxu0
    %5667 = vmatprep.mubr.bf16.mxu0 0
    %5668 = vmatmul.mubr.bf16.gmra.mrb[0].mxu0 %v5599
    %v5669 = vpop.f32.mrb[0].mxu0
    %v5670 = vadd.f32 0.0, %v5669
    %v5671 = vpop.f32.mrb[0].mxu0
    %v5672 = vpop.f32.mrb[0].mxu0
    %v5673 = vadd.f32 0.0, %v5672
    %v5674 = vpop.f32.mrb[0].mxu0
    %5675 = vmatprep.mubr.bf16.mxu0 0
    %5676 = vmatmul.mubr.bf16.gmra.mrb[0].mxu0 %v5602
    %v5677 = vpop.f32.mrb[0].mxu0
    %v5678 = vadd.f32 0.0, %v5677
    %v5679 = vpop.f32.mrb[0].mxu0
    %v5680 = vpop.f32.mrb[0].mxu0
    %v5681 = vadd.f32 0.0, %v5680
    %v5682 = vpop.f32.mrb[0].mxu0
    %5683 = vmatprep.mubr.bf16.mxu0 0
    %5684 = vmatmul.mubr.bf16.gmra.mrb[0].mxu0 %v5605
    %v5685 = vpop.f32.mrb[0].mxu0
    %v5686 = vadd.f32 0.0, %v5685
    %v5687 = vpop.f32.mrb[0].mxu0
    %v5688 = vpop.f32.mrb[0].mxu0
    %v5689 = vadd.f32 0.0, %v5688
    %v5690 = vpop.f32.mrb[0].mxu0
    %5691 = vmatprep.mubr.bf16.mxu0 0
    %5692 = vmatmul.mubr.bf16.gmra.mrb[0].mxu0 %v5608
    %v5693 = vpop.f32.mrb[0].mxu0
    %v5694 = vadd.f32 0.0, %v5693
    %v5695 = vpop.f32.mrb[0].mxu0
    %v5696 = vpop.f32.mrb[0].mxu0
    %v5697 = vadd.f32 0.0, %v5696
    %v5698 = vpop.f32.mrb[0].mxu0
    %5699 = vmatprep.mubr.bf16.mxu0 0
    %5700 = vmatmul.mubr.bf16.gmra.mrb[0].mxu0 %v5611
    %v5701 = vpop.f32.mrb[0].mxu0
    %v5702 = vadd.f32 0.0, %v5701
    %v5703 = vpop.f32.mrb[0].mxu0
    %v5704 = vpop.f32.mrb[0].mxu0
    %v5705 = vadd.f32 0.0, %v5704
    %v5706 = vpop.f32.mrb[0].mxu0
    %5707 = vmatprep.mubr.bf16.mxu0 0
    %5708 = vmatmul.mubr.bf16.gmra.mrb[0].mxu0 %v5614
    %v5709 = vpop.f32.mrb[0].mxu0
    %v5710 = vadd.f32 0.0, %v5709
    %v5711 = vpop.f32.mrb[0].mxu0
    %v5712 = vpop.f32.mrb[0].mxu0
    %v5713 = vadd.f32 0.0, %v5712
    %v5714 = vpop.f32.mrb[0].mxu0
    %5715 = vdwg.mxu0
    %v5717 = vlaneseq
    %v5718 = vshrl.u32 %v5717, 7
    %v5719 = vsub.s32 0, %v5718
    %v5720 = vrot.slane %v617, %v5719
    %v5722 = vmul.f32 %v5654, %v5720
    %v5723 = vmul.f32 %v5657, %v5720
    %v5724 = vmul.f32 %v5662, %v5720
    %v5725 = vmul.f32 %v5665, %v5720
    %v5726 = vmul.f32 %v5670, %v5720
    %v5727 = vmul.f32 %v5673, %v5720
    %v5728 = vmul.f32 %v5678, %v5720
    %v5729 = vmul.f32 %v5681, %v5720
    %v5730 = vmul.f32 %v5686, %v5720
    %v5731 = vmul.f32 %v5689, %v5720
    %v5732 = vmul.f32 %v5694, %v5720
    %v5733 = vmul.f32 %v5697, %v5720
    %v5734 = vmul.f32 %v5702, %v5720
    %v5735 = vmul.f32 %v5705, %v5720
    %v5736 = vmul.f32 %v5710, %v5720
    %v5737 = vmul.f32 %v5713, %v5720
    %v5739 = vlaneseq
    %v5740 = vshrl.u32 %v5739, 7
    %v5741 = vsub.s32 0, %v5740
    %v5742 = vrot.slane %v618, %v5741
    %v5744 = vadd.f32 %v5722, %v5742
    %v5745 = vadd.f32 %v5723, %v5742
    %v5746 = vadd.f32 %v5724, %v5742
    %v5747 = vadd.f32 %v5725, %v5742
    %v5748 = vadd.f32 %v5726, %v5742
    %v5749 = vadd.f32 %v5727, %v5742
    %v5750 = vadd.f32 %v5728, %v5742
    %v5751 = vadd.f32 %v5729, %v5742
    %v5752 = vadd.f32 %v5730, %v5742
    %v5753 = vadd.f32 %v5731, %v5742
    %v5754 = vadd.f32 %v5732, %v5742
    %v5755 = vadd.f32 %v5733, %v5742
    %v5756 = vadd.f32 %v5734, %v5742
    %v5757 = vadd.f32 %v5735, %v5742
    %v5758 = vadd.f32 %v5736, %v5742
    %v5759 = vadd.f32 %v5737, %v5742
    %v5760 = vmax.f32 %v5744, 0.0
    %v5761 = vmax.f32 %v5745, 0.0
    %v5762 = vmax.f32 %v5746, 0.0
    %v5763 = vmax.f32 %v5747, 0.0
    %v5764 = vmax.f32 %v5748, 0.0
    %v5765 = vmax.f32 %v5749, 0.0
    %v5766 = vmax.f32 %v5750, 0.0
    %v5767 = vmax.f32 %v5751, 0.0
    %v5768 = vmax.f32 %v5752, 0.0
    %v5769 = vmax.f32 %v5753, 0.0
    %v5770 = vmax.f32 %v5754, 0.0
    %v5771 = vmax.f32 %v5755, 0.0
    %v5772 = vmax.f32 %v5756, 0.0
    %v5773 = vmax.f32 %v5757, 0.0
    %v5774 = vmax.f32 %v5758, 0.0
    %v5775 = vmax.f32 %v5759, 0.0
    %v5776 = vpack.c.bf16 %v5761, %v5760
    %v5777 = vpack.c.bf16 %v5763, %v5762
    %v5778 = vpack.c.bf16 %v5765, %v5764
    %v5779 = vpack.c.bf16 %v5767, %v5766
    %v5780 = vpack.c.bf16 %v5769, %v5768
    %v5781 = vpack.c.bf16 %v5771, %v5770
    %v5782 = vpack.c.bf16 %v5773, %v5772
    %v5783 = vpack.c.bf16 %v5775, %v5774
    %v5792 = vunpack.c.l.b16 %v619
    %v5793 = vunpack.c.l.b16 %v620
    %v5794 = vunpack.c.l.b16 %v621
    %v5795 = vunpack.c.l.b16 %v622
    %v5796 = vunpack.c.l.b16 %v623
    %v5797 = vunpack.c.l.b16 %v624
    %v5798 = vunpack.c.l.b16 %v625
    %v5799 = vunpack.c.l.b16 %v626
    %v5800 = vpack.c.b16 %v5793, %v5792
    %v5801 = vpack.c.b16 %v5795, %v5794
    %v5802 = vpack.c.b16 %v5797, %v5796
    %v5803 = vpack.c.b16 %v5799, %v5798
    %v5809 = vsel %vm940, %v5776, 0
    %v5812 = vsel %vm940, %v5777, 0
    %v5815 = vsel %vm940, %v5778, 0
    %v5818 = vsel %vm940, %v5779, 0
    %v5821 = vsel %vm940, %v5780, 0
    %v5824 = vsel %vm940, %v5781, 0
    %v5827 = vsel %vm940, %v5782, 0
    %v5830 = vsel %vm940, %v5783, 0
    %5832 = vmatprep.subr.bf16.mxu0 0
    %5833 = vmatpush1.bf16.msra.mxu0 %v5800
    %5834 = vmatprep.subr.bf16.mxu0 0
    %5835 = vmatpush1.bf16.msra.mxu0 %v5801
    %5836 = vmatprep.subr.bf16.mxu0 0
    %5837 = vmatpush1.bf16.msra.mxu0 %v5802
    %5838 = vmatprep.subr.bf16.mxu0 0
    %5839 = vmatpush1.bf16.msra.mxu0 %v5803
    %5840 = vmatprep.subr.bf16.mxu0 0
    %5841 = vmatpush1.bf16.msra.mxu0 0
    %5842 = vmatprep.subr.bf16.mxu0 0
    %5843 = vmatpush1.bf16.msra.mxu0 0
    %5844 = vmatprep.subr.bf16.mxu0 0
    %5845 = vmatpush1.bf16.msra.mxu0 0
    %5846 = vmatprep.subr.bf16.mxu0 0
    %5847 = vmatpush1.bf16.msra.mxu0 0
    %5848 = vmatprep.subr.bf16.mxu0 0
    %5849 = vmatpush1.bf16.msra.mxu0 0
    %5850 = vmatprep.subr.bf16.mxu0 0
    %5851 = vmatpush1.bf16.msra.mxu0 0
    %5852 = vmatprep.subr.bf16.mxu0 0
    %5853 = vmatpush1.bf16.msra.mxu0 0
    %5854 = vmatprep.subr.bf16.mxu0 0
    %5855 = vmatpush1.bf16.msra.mxu0 0
    %5856 = vmatprep.subr.bf16.mxu0 0
    %5857 = vmatpush1.bf16.msra.mxu0 0
    %5858 = vmatprep.subr.bf16.mxu0 0
    %5859 = vmatpush1.bf16.msra.mxu0 0
    %5860 = vmatprep.subr.bf16.mxu0 0
    %5861 = vmatpush1.bf16.msra.mxu0 0
    %5862 = vmatprep.subr.bf16.mxu0 0
    %5863 = vmatpush1.bf16.msra.mxu0 0
    %5864 = vmatprep.mubr.bf16.mxu0 0
    %5865 = vmatmul.mubr.bf16.gmra.mrb[0].mxu0 %v5809
    %v5866 = vpop.f32.mrb[0].mxu0
    %v5867 = vadd.f32 0.0, %v5866
    %v5868 = vpop.f32.mrb[0].mxu0
    %v5869 = vpop.f32.mrb[0].mxu0
    %v5870 = vadd.f32 0.0, %v5869
    %v5871 = vpop.f32.mrb[0].mxu0
    %5872 = vmatprep.mubr.bf16.mxu0 0
    %5873 = vmatmul.mubr.bf16.gmra.mrb[0].mxu0 %v5812
    %v5874 = vpop.f32.mrb[0].mxu0
    %v5875 = vadd.f32 0.0, %v5874
    %v5876 = vpop.f32.mrb[0].mxu0
    %v5877 = vpop.f32.mrb[0].mxu0
    %v5878 = vadd.f32 0.0, %v5877
    %v5879 = vpop.f32.mrb[0].mxu0
    %5880 = vmatprep.mubr.bf16.mxu0 0
    %5881 = vmatmul.mubr.bf16.gmra.mrb[0].mxu0 %v5815
    %v5882 = vpop.f32.mrb[0].mxu0
    %v5883 = vadd.f32 0.0, %v5882
    %v5884 = vpop.f32.mrb[0].mxu0
    %v5885 = vpop.f32.mrb[0].mxu0
    %v5886 = vadd.f32 0.0, %v5885
    %v5887 = vpop.f32.mrb[0].mxu0
    %5888 = vmatprep.mubr.bf16.mxu0 0
    %5889 = vmatmul.mubr.bf16.gmra.mrb[0].mxu0 %v5818
    %v5890 = vpop.f32.mrb[0].mxu0
    %v5891 = vadd.f32 0.0, %v5890
    %v5892 = vpop.f32.mrb[0].mxu0
    %v5893 = vpop.f32.mrb[0].mxu0
    %v5894 = vadd.f32 0.0, %v5893
    %v5895 = vpop.f32.mrb[0].mxu0
    %5896 = vmatprep.mubr.bf16.mxu0 0
    %5897 = vmatmul.mubr.bf16.gmra.mrb[0].mxu0 %v5821
    %v5898 = vpop.f32.mrb[0].mxu0
    %v5899 = vadd.f32 0.0, %v5898
    %v5900 = vpop.f32.mrb[0].mxu0
    %v5901 = vpop.f32.mrb[0].mxu0
    %v5902 = vadd.f32 0.0, %v5901
    %v5903 = vpop.f32.mrb[0].mxu0
    %5904 = vmatprep.mubr.bf16.mxu0 0
    %5905 = vmatmul.mubr.bf16.gmra.mrb[0].mxu0 %v5824
    %v5906 = vpop.f32.mrb[0].mxu0
    %v5907 = vadd.f32 0.0, %v5906
    %v5908 = vpop.f32.mrb[0].mxu0
    %v5909 = vpop.f32.mrb[0].mxu0
    %v5910 = vadd.f32 0.0, %v5909
    %v5911 = vpop.f32.mrb[0].mxu0
    %5912 = vmatprep.mubr.bf16.mxu0 0
    %5913 = vmatmul.mubr.bf16.gmra.mrb[0].mxu0 %v5827
    %v5914 = vpop.f32.mrb[0].mxu0
    %v5915 = vadd.f32 0.0, %v5914
    %v5916 = vpop.f32.mrb[0].mxu0
    %v5917 = vpop.f32.mrb[0].mxu0
    %v5918 = vadd.f32 0.0, %v5917
    %v5919 = vpop.f32.mrb[0].mxu0
    %5920 = vmatprep.mubr.bf16.mxu0 0
    %5921 = vmatmul.mubr.bf16.gmra.mrb[0].mxu0 %v5830
    %v5922 = vpop.f32.mrb[0].mxu0
    %v5923 = vadd.f32 0.0, %v5922
    %v5924 = vpop.f32.mrb[0].mxu0
    %v5925 = vpop.f32.mrb[0].mxu0
    %v5926 = vadd.f32 0.0, %v5925
    %v5927 = vpop.f32.mrb[0].mxu0
    %5928 = vdwg.mxu0
    %v5930 = vlaneseq
    %v5931 = vshrl.u32 %v5930, 7
    %v5932 = vsub.s32 0, %v5931
    %v5933 = vrot.slane %v627, %v5932
    %v5935 = vmul.f32 %v5867, %v5933
    %v5936 = vmul.f32 %v5870, %v5933
    %v5937 = vmul.f32 %v5875, %v5933
    %v5938 = vmul.f32 %v5878, %v5933
    %v5939 = vmul.f32 %v5883, %v5933
    %v5940 = vmul.f32 %v5886, %v5933
    %v5941 = vmul.f32 %v5891, %v5933
    %v5942 = vmul.f32 %v5894, %v5933
    %v5943 = vmul.f32 %v5899, %v5933
    %v5944 = vmul.f32 %v5902, %v5933
    %v5945 = vmul.f32 %v5907, %v5933
    %v5946 = vmul.f32 %v5910, %v5933
    %v5947 = vmul.f32 %v5915, %v5933
    %v5948 = vmul.f32 %v5918, %v5933
    %v5949 = vmul.f32 %v5923, %v5933
    %v5950 = vmul.f32 %v5926, %v5933
    %v5952 = vlaneseq
    %v5953 = vshrl.u32 %v5952, 7
    %v5954 = vsub.s32 0, %v5953
    %v5955 = vrot.slane %v628, %v5954
    %v5957 = vadd.f32 %v5935, %v5955
    %v5958 = vadd.f32 %v5936, %v5955
    %v5959 = vadd.f32 %v5937, %v5955
    %v5960 = vadd.f32 %v5938, %v5955
    %v5961 = vadd.f32 %v5939, %v5955
    %v5962 = vadd.f32 %v5940, %v5955
    %v5963 = vadd.f32 %v5941, %v5955
    %v5964 = vadd.f32 %v5942, %v5955
    %v5965 = vadd.f32 %v5943, %v5955
    %v5966 = vadd.f32 %v5944, %v5955
    %v5967 = vadd.f32 %v5945, %v5955
    %v5968 = vadd.f32 %v5946, %v5955
    %v5969 = vadd.f32 %v5947, %v5955
    %v5970 = vadd.f32 %v5948, %v5955
    %v5971 = vadd.f32 %v5949, %v5955
    %v5972 = vadd.f32 %v5950, %v5955
    %v5973 = vmax.f32 %v5957, 0.0
    %v5974 = vmax.f32 %v5958, 0.0
    %v5975 = vmax.f32 %v5959, 0.0
    %v5976 = vmax.f32 %v5960, 0.0
    %v5977 = vmax.f32 %v5961, 0.0
    %v5978 = vmax.f32 %v5962, 0.0
    %v5979 = vmax.f32 %v5963, 0.0
    %v5980 = vmax.f32 %v5964, 0.0
    %v5981 = vmax.f32 %v5965, 0.0
    %v5982 = vmax.f32 %v5966, 0.0
    %v5983 = vmax.f32 %v5967, 0.0
    %v5984 = vmax.f32 %v5968, 0.0
    %v5985 = vmax.f32 %v5969, 0.0
    %v5986 = vmax.f32 %v5970, 0.0
    %v5987 = vmax.f32 %v5971, 0.0
    %v5988 = vmax.f32 %v5972, 0.0
    %v5989 = vpack.c.bf16 %v5974, %v5973
    %v5990 = vpack.c.bf16 %v5976, %v5975
    %v5991 = vpack.c.bf16 %v5978, %v5977
    %v5992 = vpack.c.bf16 %v5980, %v5979
    %v5993 = vpack.c.bf16 %v5982, %v5981
    %v5994 = vpack.c.bf16 %v5984, %v5983
    %v5995 = vpack.c.bf16 %v5986, %v5985
    %v5996 = vpack.c.bf16 %v5988, %v5987
    %v6061 = vunpack.c.l.b16 %v629
    %v6062 = vunpack.c.h.b16 %v629
    %v6063 = vunpack.c.l.b16 %v630
    %v6064 = vunpack.c.h.b16 %v630
    %v6065 = vunpack.c.l.b16 %v631
    %v6066 = vunpack.c.h.b16 %v631
    %v6067 = vunpack.c.l.b16 %v632
    %v6068 = vunpack.c.h.b16 %v632
    %v6069 = vunpack.c.l.b16 %v633
    %v6070 = vunpack.c.h.b16 %v633
    %v6071 = vunpack.c.l.b16 %v634
    %v6072 = vunpack.c.h.b16 %v634
    %v6073 = vunpack.c.l.b16 %v635
    %v6074 = vunpack.c.h.b16 %v635
    %v6075 = vunpack.c.l.b16 %v636
    %v6076 = vunpack.c.h.b16 %v636
    %v6077 = vunpack.c.l.b16 %v637
    %v6078 = vunpack.c.h.b16 %v637
    %v6079 = vunpack.c.l.b16 %v638
    %v6080 = vunpack.c.h.b16 %v638
    %v6081 = vunpack.c.l.b16 %v639
    %v6082 = vunpack.c.h.b16 %v639
    %v6083 = vunpack.c.l.b16 %v640
    %v6084 = vunpack.c.h.b16 %v640
    %v6085 = vunpack.c.l.b16 %v641
    %v6086 = vunpack.c.h.b16 %v641
    %v6087 = vunpack.c.l.b16 %v642
    %v6088 = vunpack.c.h.b16 %v642
    %v6089 = vunpack.c.l.b16 %v643
    %v6090 = vunpack.c.h.b16 %v643
    %v6091 = vunpack.c.l.b16 %v644
    %v6092 = vunpack.c.h.b16 %v644
    %v6093 = vunpack.c.l.b16 %v645
    %v6094 = vunpack.c.h.b16 %v645
    %v6095 = vunpack.c.l.b16 %v646
    %v6096 = vunpack.c.h.b16 %v646
    %v6097 = vunpack.c.l.b16 %v647
    %v6098 = vunpack.c.h.b16 %v647
    %v6099 = vunpack.c.l.b16 %v648
    %v6100 = vunpack.c.h.b16 %v648
    %v6101 = vunpack.c.l.b16 %v649
    %v6102 = vunpack.c.h.b16 %v649
    %v6103 = vunpack.c.l.b16 %v650
    %v6104 = vunpack.c.h.b16 %v650
    %v6105 = vunpack.c.l.b16 %v651
    %v6106 = vunpack.c.h.b16 %v651
    %v6107 = vunpack.c.l.b16 %v652
    %v6108 = vunpack.c.h.b16 %v652
    %v6109 = vunpack.c.l.b16 %v653
    %v6110 = vunpack.c.h.b16 %v653
    %v6111 = vunpack.c.l.b16 %v654
    %v6112 = vunpack.c.h.b16 %v654
    %v6113 = vunpack.c.l.b16 %v655
    %v6114 = vunpack.c.h.b16 %v655
    %v6115 = vunpack.c.l.b16 %v656
    %v6116 = vunpack.c.h.b16 %v656
    %v6117 = vunpack.c.l.b16 %v657
    %v6118 = vunpack.c.h.b16 %v657
    %v6119 = vunpack.c.l.b16 %v658
    %v6120 = vunpack.c.h.b16 %v658
    %v6121 = vunpack.c.l.b16 %v659
    %v6122 = vunpack.c.h.b16 %v659
    %v6123 = vunpack.c.l.b16 %v660
    %v6124 = vunpack.c.h.b16 %v660
    %v6125 = vunpack.c.l.b16 %v661
    %v6126 = vunpack.c.h.b16 %v661
    %v6127 = vunpack.c.l.b16 %v662
    %v6128 = vunpack.c.h.b16 %v662
    %v6129 = vunpack.c.l.b16 %v663
    %v6130 = vunpack.c.h.b16 %v663
    %v6131 = vunpack.c.l.b16 %v664
    %v6132 = vunpack.c.h.b16 %v664
    %v6133 = vunpack.c.l.b16 %v665
    %v6134 = vunpack.c.h.b16 %v665
    %v6135 = vunpack.c.l.b16 %v666
    %v6136 = vunpack.c.h.b16 %v666
    %v6137 = vunpack.c.l.b16 %v667
    %v6138 = vunpack.c.h.b16 %v667
    %v6139 = vunpack.c.l.b16 %v668
    %v6140 = vunpack.c.h.b16 %v668
    %v6141 = vunpack.c.l.b16 %v669
    %v6142 = vunpack.c.h.b16 %v669
    %v6143 = vunpack.c.l.b16 %v670
    %v6144 = vunpack.c.h.b16 %v670
    %v6145 = vunpack.c.l.b16 %v671
    %v6146 = vunpack.c.h.b16 %v671
    %v6147 = vunpack.c.l.b16 %v672
    %v6148 = vunpack.c.h.b16 %v672
    %v6149 = vunpack.c.l.b16 %v673
    %v6150 = vunpack.c.h.b16 %v673
    %v6151 = vunpack.c.l.b16 %v674
    %v6152 = vunpack.c.h.b16 %v674
    %v6153 = vunpack.c.l.b16 %v675
    %v6154 = vunpack.c.h.b16 %v675
    %v6155 = vunpack.c.l.b16 %v676
    %v6156 = vunpack.c.h.b16 %v676
    %v6157 = vunpack.c.l.b16 %v677
    %v6158 = vunpack.c.h.b16 %v677
    %v6159 = vunpack.c.l.b16 %v678
    %v6160 = vunpack.c.h.b16 %v678
    %v6161 = vunpack.c.l.b16 %v679
    %v6162 = vunpack.c.h.b16 %v679
    %v6163 = vunpack.c.l.b16 %v680
    %v6164 = vunpack.c.h.b16 %v680
    %v6165 = vunpack.c.l.b16 %v681
    %v6166 = vunpack.c.h.b16 %v681
    %v6167 = vunpack.c.l.b16 %v682
    %v6168 = vunpack.c.h.b16 %v682
    %v6169 = vunpack.c.l.b16 %v683
    %v6170 = vunpack.c.h.b16 %v683
    %v6171 = vunpack.c.l.b16 %v684
    %v6172 = vunpack.c.h.b16 %v684
    %v6173 = vunpack.c.l.b16 %v685
    %v6174 = vunpack.c.h.b16 %v685
    %v6175 = vunpack.c.l.b16 %v686
    %v6176 = vunpack.c.h.b16 %v686
    %v6177 = vunpack.c.l.b16 %v687
    %v6178 = vunpack.c.h.b16 %v687
    %v6179 = vunpack.c.l.b16 %v688
    %v6180 = vunpack.c.h.b16 %v688
    %v6181 = vunpack.c.l.b16 %v689
    %v6182 = vunpack.c.h.b16 %v689
    %v6183 = vunpack.c.l.b16 %v690
    %v6184 = vunpack.c.h.b16 %v690
    %v6185 = vunpack.c.l.b16 %v691
    %v6186 = vunpack.c.h.b16 %v691
    %v6187 = vunpack.c.l.b16 %v692
    %v6188 = vunpack.c.h.b16 %v692
    %v6189 = vpack.c.b16 %v6069, %v6061
    %v6190 = vpack.c.b16 %v6070, %v6062
    %v6191 = vpack.c.b16 %v6071, %v6063
    %v6192 = vpack.c.b16 %v6072, %v6064
    %v6193 = vpack.c.b16 %v6073, %v6065
    %v6194 = vpack.c.b16 %v6074, %v6066
    %v6195 = vpack.c.b16 %v6075, %v6067
    %v6196 = vpack.c.b16 %v6076, %v6068
    %v6197 = vpack.c.b16 %v6085, %v6077
    %v6198 = vpack.c.b16 %v6086, %v6078
    %v6199 = vpack.c.b16 %v6087, %v6079
    %v6200 = vpack.c.b16 %v6088, %v6080
    %v6201 = vpack.c.b16 %v6089, %v6081
    %v6202 = vpack.c.b16 %v6090, %v6082
    %v6203 = vpack.c.b16 %v6091, %v6083
    %v6204 = vpack.c.b16 %v6092, %v6084
    %v6205 = vpack.c.b16 %v6101, %v6093
    %v6206 = vpack.c.b16 %v6102, %v6094
    %v6207 = vpack.c.b16 %v6103, %v6095
    %v6208 = vpack.c.b16 %v6104, %v6096
    %v6209 = vpack.c.b16 %v6105, %v6097
    %v6210 = vpack.c.b16 %v6106, %v6098
    %v6211 = vpack.c.b16 %v6107, %v6099
    %v6212 = vpack.c.b16 %v6108, %v6100
    %v6213 = vpack.c.b16 %v6117, %v6109
    %v6214 = vpack.c.b16 %v6118, %v6110
    %v6215 = vpack.c.b16 %v6119, %v6111
    %v6216 = vpack.c.b16 %v6120, %v6112
    %v6217 = vpack.c.b16 %v6121, %v6113
    %v6218 = vpack.c.b16 %v6122, %v6114
    %v6219 = vpack.c.b16 %v6123, %v6115
    %v6220 = vpack.c.b16 %v6124, %v6116
    %v6221 = vpack.c.b16 %v6133, %v6125
    %v6222 = vpack.c.b16 %v6134, %v6126
    %v6223 = vpack.c.b16 %v6135, %v6127
    %v6224 = vpack.c.b16 %v6136, %v6128
    %v6225 = vpack.c.b16 %v6137, %v6129
    %v6226 = vpack.c.b16 %v6138, %v6130
    %v6227 = vpack.c.b16 %v6139, %v6131
    %v6228 = vpack.c.b16 %v6140, %v6132
    %v6229 = vpack.c.b16 %v6149, %v6141
    %v6230 = vpack.c.b16 %v6150, %v6142
    %v6231 = vpack.c.b16 %v6151, %v6143
    %v6232 = vpack.c.b16 %v6152, %v6144
    %v6233 = vpack.c.b16 %v6153, %v6145
    %v6234 = vpack.c.b16 %v6154, %v6146
    %v6235 = vpack.c.b16 %v6155, %v6147
    %v6236 = vpack.c.b16 %v6156, %v6148
    %v6237 = vpack.c.b16 %v6165, %v6157
    %v6238 = vpack.c.b16 %v6166, %v6158
    %v6239 = vpack.c.b16 %v6167, %v6159
    %v6240 = vpack.c.b16 %v6168, %v6160
    %v6241 = vpack.c.b16 %v6169, %v6161
    %v6242 = vpack.c.b16 %v6170, %v6162
    %v6243 = vpack.c.b16 %v6171, %v6163
    %v6244 = vpack.c.b16 %v6172, %v6164
    %v6245 = vpack.c.b16 %v6181, %v6173
    %v6246 = vpack.c.b16 %v6182, %v6174
    %v6247 = vpack.c.b16 %v6183, %v6175
    %v6248 = vpack.c.b16 %v6184, %v6176
    %v6249 = vpack.c.b16 %v6185, %v6177
    %v6250 = vpack.c.b16 %v6186, %v6178
    %v6251 = vpack.c.b16 %v6187, %v6179
    %v6252 = vpack.c.b16 %v6188, %v6180
    %6317 = vmatprep.subr.bf16.mxu0 %v6190
    %6318 = vmatpush1.bf16.msra.mxu0 %v6189
    %6319 = vmatprep.subr.bf16.mxu0 %v6198
    %6320 = vmatpush1.bf16.msra.mxu0 %v6197
    %6321 = vmatprep.subr.bf16.mxu0 %v6206
    %6322 = vmatpush1.bf16.msra.mxu0 %v6205
    %6323 = vmatprep.subr.bf16.mxu0 %v6214
    %6324 = vmatpush1.bf16.msra.mxu0 %v6213
    %6325 = vmatprep.subr.bf16.mxu0 %v6222
    %6326 = vmatpush1.bf16.msra.mxu0 %v6221
    %6327 = vmatprep.subr.bf16.mxu0 %v6230
    %6328 = vmatpush1.bf16.msra.mxu0 %v6229
    %6329 = vmatprep.subr.bf16.mxu0 %v6238
    %6330 = vmatpush1.bf16.msra.mxu0 %v6237
    %6331 = vmatprep.subr.bf16.mxu0 %v6246
    %6332 = vmatpush1.bf16.msra.mxu0 %v6245
    %6333 = vmatprep.subr.bf16.mxu0 0
    %6334 = vmatpush1.bf16.msra.mxu0 0
    %6335 = vmatprep.subr.bf16.mxu0 0
    %6336 = vmatpush1.bf16.msra.mxu0 0
    %6337 = vmatprep.subr.bf16.mxu0 0
    %6338 = vmatpush1.bf16.msra.mxu0 0
    %6339 = vmatprep.subr.bf16.mxu0 0
    %6340 = vmatpush1.bf16.msra.mxu0 0
    %6341 = vmatprep.subr.bf16.mxu0 0
    %6342 = vmatpush1.bf16.msra.mxu0 0
    %6343 = vmatprep.subr.bf16.mxu0 0
    %6344 = vmatpush1.bf16.msra.mxu0 0
    %6345 = vmatprep.subr.bf16.mxu0 0
    %6346 = vmatpush1.bf16.msra.mxu0 0
    %6347 = vmatprep.subr.bf16.mxu0 0
    %6348 = vmatpush1.bf16.msra.mxu0 0
    %6349 = vmatprep.mubr.bf16.mxu0 0
    %6350 = vmatmul.mubr.bf16.gmra.mrb[0].mxu0 %v5989
    %v6351 = vpop.f32.mrb[0].mxu0
    %v6352 = vadd.f32 0.0, %v6351
    %v6353 = vpop.f32.mrb[0].mxu0
    %v6354 = vadd.f32 0.0, %v6353
    %v6355 = vpop.f32.mrb[0].mxu0
    %v6356 = vadd.f32 0.0, %v6355
    %v6357 = vpop.f32.mrb[0].mxu0
    %v6358 = vadd.f32 0.0, %v6357
    %6359 = vmatprep.mubr.bf16.mxu0 0
    %6360 = vmatmul.mubr.bf16.gmra.mrb[0].mxu0 %v5990
    %v6361 = vpop.f32.mrb[0].mxu0
    %v6362 = vadd.f32 0.0, %v6361
    %v6363 = vpop.f32.mrb[0].mxu0
    %v6364 = vadd.f32 0.0, %v6363
    %v6365 = vpop.f32.mrb[0].mxu0
    %v6366 = vadd.f32 0.0, %v6365
    %v6367 = vpop.f32.mrb[0].mxu0
    %v6368 = vadd.f32 0.0, %v6367
    %6369 = vmatprep.mubr.bf16.mxu0 0
    %6370 = vmatmul.mubr.bf16.gmra.mrb[0].mxu0 %v5991
    %v6371 = vpop.f32.mrb[0].mxu0
    %v6372 = vadd.f32 0.0, %v6371
    %v6373 = vpop.f32.mrb[0].mxu0
    %v6374 = vadd.f32 0.0, %v6373
    %v6375 = vpop.f32.mrb[0].mxu0
    %v6376 = vadd.f32 0.0, %v6375
    %v6377 = vpop.f32.mrb[0].mxu0
    %v6378 = vadd.f32 0.0, %v6377
    %6379 = vmatprep.mubr.bf16.mxu0 0
    %6380 = vmatmul.mubr.bf16.gmra.mrb[0].mxu0 %v5992
    %v6381 = vpop.f32.mrb[0].mxu0
    %v6382 = vadd.f32 0.0, %v6381
    %v6383 = vpop.f32.mrb[0].mxu0
    %v6384 = vadd.f32 0.0, %v6383
    %v6385 = vpop.f32.mrb[0].mxu0
    %v6386 = vadd.f32 0.0, %v6385
    %v6387 = vpop.f32.mrb[0].mxu0
    %v6388 = vadd.f32 0.0, %v6387
    %6389 = vmatprep.mubr.bf16.mxu0 0
    %6390 = vmatmul.mubr.bf16.gmra.mrb[0].mxu0 %v5993
    %v6391 = vpop.f32.mrb[0].mxu0
    %v6392 = vadd.f32 0.0, %v6391
    %v6393 = vpop.f32.mrb[0].mxu0
    %v6394 = vadd.f32 0.0, %v6393
    %v6395 = vpop.f32.mrb[0].mxu0
    %v6396 = vadd.f32 0.0, %v6395
    %v6397 = vpop.f32.mrb[0].mxu0
    %v6398 = vadd.f32 0.0, %v6397
    %6399 = vmatprep.mubr.bf16.mxu0 0
    %6400 = vmatmul.mubr.bf16.gmra.mrb[0].mxu0 %v5994
    %v6401 = vpop.f32.mrb[0].mxu0
    %v6402 = vadd.f32 0.0, %v6401
    %v6403 = vpop.f32.mrb[0].mxu0
    %v6404 = vadd.f32 0.0, %v6403
    %v6405 = vpop.f32.mrb[0].mxu0
    %v6406 = vadd.f32 0.0, %v6405
    %v6407 = vpop.f32.mrb[0].mxu0
    %v6408 = vadd.f32 0.0, %v6407
    %6409 = vmatprep.mubr.bf16.mxu0 0
    %6410 = vmatmul.mubr.bf16.gmra.mrb[0].mxu0 %v5995
    %v6411 = vpop.f32.mrb[0].mxu0
    %v6412 = vadd.f32 0.0, %v6411
    %v6413 = vpop.f32.mrb[0].mxu0
    %v6414 = vadd.f32 0.0, %v6413
    %v6415 = vpop.f32.mrb[0].mxu0
    %v6416 = vadd.f32 0.0, %v6415
    %v6417 = vpop.f32.mrb[0].mxu0
    %v6418 = vadd.f32 0.0, %v6417
    %6419 = vmatprep.mubr.bf16.mxu0 0
    %6420 = vmatmul.mubr.bf16.gmra.mrb[0].mxu0 %v5996
    %v6421 = vpop.f32.mrb[0].mxu0
    %v6422 = vadd.f32 0.0, %v6421
    %v6423 = vpop.f32.mrb[0].mxu0
    %v6424 = vadd.f32 0.0, %v6423
    %v6425 = vpop.f32.mrb[0].mxu0
    %v6426 = vadd.f32 0.0, %v6425
    %v6427 = vpop.f32.mrb[0].mxu0
    %v6428 = vadd.f32 0.0, %v6427
    %6429 = vdwg.mxu0
    %6430 = vmatprep.subr.bf16.mxu0 %v6192
    %6431 = vmatpush1.bf16.msra.mxu0 %v6191
    %6432 = vmatprep.subr.bf16.mxu0 %v6200
    %6433 = vmatpush1.bf16.msra.mxu0 %v6199
    %6434 = vmatprep.subr.bf16.mxu0 %v6208
    %6435 = vmatpush1.bf16.msra.mxu0 %v6207
    %6436 = vmatprep.subr.bf16.mxu0 %v6216
    %6437 = vmatpush1.bf16.msra.mxu0 %v6215
    %6438 = vmatprep.subr.bf16.mxu0 %v6224
    %6439 = vmatpush1.bf16.msra.mxu0 %v6223
    %6440 = vmatprep.subr.bf16.mxu0 %v6232
    %6441 = vmatpush1.bf16.msra.mxu0 %v6231
    %6442 = vmatprep.subr.bf16.mxu0 %v6240
    %6443 = vmatpush1.bf16.msra.mxu0 %v6239
    %6444 = vmatprep.subr.bf16.mxu0 %v6248
    %6445 = vmatpush1.bf16.msra.mxu0 %v6247
    %6446 = vmatprep.subr.bf16.mxu0 0
    %6447 = vmatpush1.bf16.msra.mxu0 0
    %6448 = vmatprep.subr.bf16.mxu0 0
    %6449 = vmatpush1.bf16.msra.mxu0 0
    %6450 = vmatprep.subr.bf16.mxu0 0
    %6451 = vmatpush1.bf16.msra.mxu0 0
    %6452 = vmatprep.subr.bf16.mxu0 0
    %6453 = vmatpush1.bf16.msra.mxu0 0
    %6454 = vmatprep.subr.bf16.mxu0 0
    %6455 = vmatpush1.bf16.msra.mxu0 0
    %6456 = vmatprep.subr.bf16.mxu0 0
    %6457 = vmatpush1.bf16.msra.mxu0 0
    %6458 = vmatprep.subr.bf16.mxu0 0
    %6459 = vmatpush1.bf16.msra.mxu0 0
    %6460 = vmatprep.subr.bf16.mxu0 0
    %6461 = vmatpush1.bf16.msra.mxu0 0
    %6462 = vmatprep.mubr.bf16.mxu0 0
    %6463 = vmatmul.mubr.bf16.gmra.mrb[0].mxu0 %v5989
    %v6464 = vpop.f32.mrb[0].mxu0
    %v6465 = vadd.f32 0.0, %v6464
    %v6466 = vpop.f32.mrb[0].mxu0
    %v6467 = vadd.f32 0.0, %v6466
    %v6468 = vpop.f32.mrb[0].mxu0
    %v6469 = vadd.f32 0.0, %v6468
    %v6470 = vpop.f32.mrb[0].mxu0
    %v6471 = vadd.f32 0.0, %v6470
    %6472 = vmatprep.mubr.bf16.mxu0 0
    %6473 = vmatmul.mubr.bf16.gmra.mrb[0].mxu0 %v5990
    %v6474 = vpop.f32.mrb[0].mxu0
    %v6475 = vadd.f32 0.0, %v6474
    %v6476 = vpop.f32.mrb[0].mxu0
    %v6477 = vadd.f32 0.0, %v6476
    %v6478 = vpop.f32.mrb[0].mxu0
    %v6479 = vadd.f32 0.0, %v6478
    %v6480 = vpop.f32.mrb[0].mxu0
    %v6481 = vadd.f32 0.0, %v6480
    %6482 = vmatprep.mubr.bf16.mxu0 0
    %6483 = vmatmul.mubr.bf16.gmra.mrb[0].mxu0 %v5991
    %v6484 = vpop.f32.mrb[0].mxu0
    %v6485 = vadd.f32 0.0, %v6484
    %v6486 = vpop.f32.mrb[0].mxu0
    %v6487 = vadd.f32 0.0, %v6486
    %v6488 = vpop.f32.mrb[0].mxu0
    %v6489 = vadd.f32 0.0, %v6488
    %v6490 = vpop.f32.mrb[0].mxu0
    %v6491 = vadd.f32 0.0, %v6490
    %6492 = vmatprep.mubr.bf16.mxu0 0
    %6493 = vmatmul.mubr.bf16.gmra.mrb[0].mxu0 %v5992
    %v6494 = vpop.f32.mrb[0].mxu0
    %v6495 = vadd.f32 0.0, %v6494
    %v6496 = vpop.f32.mrb[0].mxu0
    %v6497 = vadd.f32 0.0, %v6496
    %v6498 = vpop.f32.mrb[0].mxu0
    %v6499 = vadd.f32 0.0, %v6498
    %v6500 = vpop.f32.mrb[0].mxu0
    %v6501 = vadd.f32 0.0, %v6500
    %6502 = vmatprep.mubr.bf16.mxu0 0
    %6503 = vmatmul.mubr.bf16.gmra.mrb[0].mxu0 %v5993
    %v6504 = vpop.f32.mrb[0].mxu0
    %v6505 = vadd.f32 0.0, %v6504
    %v6506 = vpop.f32.mrb[0].mxu0
    %v6507 = vadd.f32 0.0, %v6506
    %v6508 = vpop.f32.mrb[0].mxu0
    %v6509 = vadd.f32 0.0, %v6508
    %v6510 = vpop.f32.mrb[0].mxu0
    %v6511 = vadd.f32 0.0, %v6510
    %6512 = vmatprep.mubr.bf16.mxu0 0
    %6513 = vmatmul.mubr.bf16.gmra.mrb[0].mxu0 %v5994
    %v6514 = vpop.f32.mrb[0].mxu0
    %v6515 = vadd.f32 0.0, %v6514
    %v6516 = vpop.f32.mrb[0].mxu0
    %v6517 = vadd.f32 0.0, %v6516
    %v6518 = vpop.f32.mrb[0].mxu0
    %v6519 = vadd.f32 0.0, %v6518
    %v6520 = vpop.f32.mrb[0].mxu0
    %v6521 = vadd.f32 0.0, %v6520
    %6522 = vmatprep.mubr.bf16.mxu0 0
    %6523 = vmatmul.mubr.bf16.gmra.mrb[0].mxu0 %v5995
    %v6524 = vpop.f32.mrb[0].mxu0
    %v6525 = vadd.f32 0.0, %v6524
    %v6526 = vpop.f32.mrb[0].mxu0
    %v6527 = vadd.f32 0.0, %v6526
    %v6528 = vpop.f32.mrb[0].mxu0
    %v6529 = vadd.f32 0.0, %v6528
    %v6530 = vpop.f32.mrb[0].mxu0
    %v6531 = vadd.f32 0.0, %v6530
    %6532 = vmatprep.mubr.bf16.mxu0 0
    %6533 = vmatmul.mubr.bf16.gmra.mrb[0].mxu0 %v5996
    %v6534 = vpop.f32.mrb[0].mxu0
    %v6535 = vadd.f32 0.0, %v6534
    %v6536 = vpop.f32.mrb[0].mxu0
    %v6537 = vadd.f32 0.0, %v6536
    %v6538 = vpop.f32.mrb[0].mxu0
    %v6539 = vadd.f32 0.0, %v6538
    %v6540 = vpop.f32.mrb[0].mxu0
    %v6541 = vadd.f32 0.0, %v6540
    %6542 = vdwg.mxu0
    %6543 = vmatprep.subr.bf16.mxu0 %v6194
    %6544 = vmatpush1.bf16.msra.mxu0 %v6193
    %6545 = vmatprep.subr.bf16.mxu0 %v6202
    %6546 = vmatpush1.bf16.msra.mxu0 %v6201
    %6547 = vmatprep.subr.bf16.mxu0 %v6210
    %6548 = vmatpush1.bf16.msra.mxu0 %v6209
    %6549 = vmatprep.subr.bf16.mxu0 %v6218
    %6550 = vmatpush1.bf16.msra.mxu0 %v6217
    %6551 = vmatprep.subr.bf16.mxu0 %v6226
    %6552 = vmatpush1.bf16.msra.mxu0 %v6225
    %6553 = vmatprep.subr.bf16.mxu0 %v6234
    %6554 = vmatpush1.bf16.msra.mxu0 %v6233
    %6555 = vmatprep.subr.bf16.mxu0 %v6242
    %6556 = vmatpush1.bf16.msra.mxu0 %v6241
    %6557 = vmatprep.subr.bf16.mxu0 %v6250
    %6558 = vmatpush1.bf16.msra.mxu0 %v6249
    %6559 = vmatprep.subr.bf16.mxu0 0
    %6560 = vmatpush1.bf16.msra.mxu0 0
    %6561 = vmatprep.subr.bf16.mxu0 0
    %6562 = vmatpush1.bf16.msra.mxu0 0
    %6563 = vmatprep.subr.bf16.mxu0 0
    %6564 = vmatpush1.bf16.msra.mxu0 0
    %6565 = vmatprep.subr.bf16.mxu0 0
    %6566 = vmatpush1.bf16.msra.mxu0 0
    %6567 = vmatprep.subr.bf16.mxu0 0
    %6568 = vmatpush1.bf16.msra.mxu0 0
    %6569 = vmatprep.subr.bf16.mxu0 0
    %6570 = vmatpush1.bf16.msra.mxu0 0
    %6571 = vmatprep.subr.bf16.mxu0 0
    %6572 = vmatpush1.bf16.msra.mxu0 0
    %6573 = vmatprep.subr.bf16.mxu0 0
    %6574 = vmatpush1.bf16.msra.mxu0 0
    %6575 = vmatprep.mubr.bf16.mxu0 0
    %6576 = vmatmul.mubr.bf16.gmra.mrb[0].mxu0 %v5989
    %v6577 = vpop.f32.mrb[0].mxu0
    %v6578 = vadd.f32 0.0, %v6577
    %v6579 = vpop.f32.mrb[0].mxu0
    %v6580 = vadd.f32 0.0, %v6579
    %v6581 = vpop.f32.mrb[0].mxu0
    %v6582 = vadd.f32 0.0, %v6581
    %v6583 = vpop.f32.mrb[0].mxu0
    %v6584 = vadd.f32 0.0, %v6583
    %6585 = vmatprep.mubr.bf16.mxu0 0
    %6586 = vmatmul.mubr.bf16.gmra.mrb[0].mxu0 %v5990
    %v6587 = vpop.f32.mrb[0].mxu0
    %v6588 = vadd.f32 0.0, %v6587
    %v6589 = vpop.f32.mrb[0].mxu0
    %v6590 = vadd.f32 0.0, %v6589
    %v6591 = vpop.f32.mrb[0].mxu0
    %v6592 = vadd.f32 0.0, %v6591
    %v6593 = vpop.f32.mrb[0].mxu0
    %v6594 = vadd.f32 0.0, %v6593
    %6595 = vmatprep.mubr.bf16.mxu0 0
    %6596 = vmatmul.mubr.bf16.gmra.mrb[0].mxu0 %v5991
    %v6597 = vpop.f32.mrb[0].mxu0
    %v6598 = vadd.f32 0.0, %v6597
    %v6599 = vpop.f32.mrb[0].mxu0
    %v6600 = vadd.f32 0.0, %v6599
    %v6601 = vpop.f32.mrb[0].mxu0
    %v6602 = vadd.f32 0.0, %v6601
    %v6603 = vpop.f32.mrb[0].mxu0
    %v6604 = vadd.f32 0.0, %v6603
    %6605 = vmatprep.mubr.bf16.mxu0 0
    %6606 = vmatmul.mubr.bf16.gmra.mrb[0].mxu0 %v5992
    %v6607 = vpop.f32.mrb[0].mxu0
    %v6608 = vadd.f32 0.0, %v6607
    %v6609 = vpop.f32.mrb[0].mxu0
    %v6610 = vadd.f32 0.0, %v6609
    %v6611 = vpop.f32.mrb[0].mxu0
    %v6612 = vadd.f32 0.0, %v6611
    %v6613 = vpop.f32.mrb[0].mxu0
    %v6614 = vadd.f32 0.0, %v6613
    %6615 = vmatprep.mubr.bf16.mxu0 0
    %6616 = vmatmul.mubr.bf16.gmra.mrb[0].mxu0 %v5993
    %v6617 = vpop.f32.mrb[0].mxu0
    %v6618 = vadd.f32 0.0, %v6617
    %v6619 = vpop.f32.mrb[0].mxu0
    %v6620 = vadd.f32 0.0, %v6619
    %v6621 = vpop.f32.mrb[0].mxu0
    %v6622 = vadd.f32 0.0, %v6621
    %v6623 = vpop.f32.mrb[0].mxu0
    %v6624 = vadd.f32 0.0, %v6623
    %6625 = vmatprep.mubr.bf16.mxu0 0
    %6626 = vmatmul.mubr.bf16.gmra.mrb[0].mxu0 %v5994
    %v6627 = vpop.f32.mrb[0].mxu0
    %v6628 = vadd.f32 0.0, %v6627
    %v6629 = vpop.f32.mrb[0].mxu0
    %v6630 = vadd.f32 0.0, %v6629
    %v6631 = vpop.f32.mrb[0].mxu0
    %v6632 = vadd.f32 0.0, %v6631
    %v6633 = vpop.f32.mrb[0].mxu0
    %v6634 = vadd.f32 0.0, %v6633
    %6635 = vmatprep.mubr.bf16.mxu0 0
    %6636 = vmatmul.mubr.bf16.gmra.mrb[0].mxu0 %v5995
    %v6637 = vpop.f32.mrb[0].mxu0
    %v6638 = vadd.f32 0.0, %v6637
    %v6639 = vpop.f32.mrb[0].mxu0
    %v6640 = vadd.f32 0.0, %v6639
    %v6641 = vpop.f32.mrb[0].mxu0
    %v6642 = vadd.f32 0.0, %v6641
    %v6643 = vpop.f32.mrb[0].mxu0
    %v6644 = vadd.f32 0.0, %v6643
    %6645 = vmatprep.mubr.bf16.mxu0 0
    %6646 = vmatmul.mubr.bf16.gmra.mrb[0].mxu0 %v5996
    %v6647 = vpop.f32.mrb[0].mxu0
    %v6648 = vadd.f32 0.0, %v6647
    %v6649 = vpop.f32.mrb[0].mxu0
    %v6650 = vadd.f32 0.0, %v6649
    %v6651 = vpop.f32.mrb[0].mxu0
    %v6652 = vadd.f32 0.0, %v6651
    %v6653 = vpop.f32.mrb[0].mxu0
    %v6654 = vadd.f32 0.0, %v6653
    %6655 = vdwg.mxu0
    %6656 = vmatprep.subr.bf16.mxu0 %v6196
    %6657 = vmatpush1.bf16.msra.mxu0 %v6195
    %6658 = vmatprep.subr.bf16.mxu0 %v6204
    %6659 = vmatpush1.bf16.msra.mxu0 %v6203
    %6660 = vmatprep.subr.bf16.mxu0 %v6212
    %6661 = vmatpush1.bf16.msra.mxu0 %v6211
    %6662 = vmatprep.subr.bf16.mxu0 %v6220
    %6663 = vmatpush1.bf16.msra.mxu0 %v6219
    %6664 = vmatprep.subr.bf16.mxu0 %v6228
    %6665 = vmatpush1.bf16.msra.mxu0 %v6227
    %6666 = vmatprep.subr.bf16.mxu0 %v6236
    %6667 = vmatpush1.bf16.msra.mxu0 %v6235
    %6668 = vmatprep.subr.bf16.mxu0 %v6244
    %6669 = vmatpush1.bf16.msra.mxu0 %v6243
    %6670 = vmatprep.subr.bf16.mxu0 %v6252
    %6671 = vmatpush1.bf16.msra.mxu0 %v6251
    %6672 = vmatprep.subr.bf16.mxu0 0
    %6673 = vmatpush1.bf16.msra.mxu0 0
    %6674 = vmatprep.subr.bf16.mxu0 0
    %6675 = vmatpush1.bf16.msra.mxu0 0
    %6676 = vmatprep.subr.bf16.mxu0 0
    %6677 = vmatpush1.bf16.msra.mxu0 0
    %6678 = vmatprep.subr.bf16.mxu0 0
    %6679 = vmatpush1.bf16.msra.mxu0 0
    %6680 = vmatprep.subr.bf16.mxu0 0
    %6681 = vmatpush1.bf16.msra.mxu0 0
    %6682 = vmatprep.subr.bf16.mxu0 0
    %6683 = vmatpush1.bf16.msra.mxu0 0
    %6684 = vmatprep.subr.bf16.mxu0 0
    %6685 = vmatpush1.bf16.msra.mxu0 0
    %6686 = vmatprep.subr.bf16.mxu0 0
    %6687 = vmatpush1.bf16.msra.mxu0 0
    %6688 = vmatprep.mubr.bf16.mxu0 0
    %6689 = vmatmul.mubr.bf16.gmra.mrb[0].mxu0 %v5989
    %v6690 = vpop.f32.mrb[0].mxu0
    %v6691 = vadd.f32 0.0, %v6690
    %v6692 = vpop.f32.mrb[0].mxu0
    %v6693 = vadd.f32 0.0, %v6692
    %v6694 = vpop.f32.mrb[0].mxu0
    %v6695 = vadd.f32 0.0, %v6694
    %v6696 = vpop.f32.mrb[0].mxu0
    %v6697 = vadd.f32 0.0, %v6696
    %6698 = vmatprep.mubr.bf16.mxu0 0
    %6699 = vmatmul.mubr.bf16.gmra.mrb[0].mxu0 %v5990
    %v6700 = vpop.f32.mrb[0].mxu0
    %v6701 = vadd.f32 0.0, %v6700
    %v6702 = vpop.f32.mrb[0].mxu0
    %v6703 = vadd.f32 0.0, %v6702
    %v6704 = vpop.f32.mrb[0].mxu0
    %v6705 = vadd.f32 0.0, %v6704
    %v6706 = vpop.f32.mrb[0].mxu0
    %v6707 = vadd.f32 0.0, %v6706
    %6708 = vmatprep.mubr.bf16.mxu0 0
    %6709 = vmatmul.mubr.bf16.gmra.mrb[0].mxu0 %v5991
    %v6710 = vpop.f32.mrb[0].mxu0
    %v6711 = vadd.f32 0.0, %v6710
    %v6712 = vpop.f32.mrb[0].mxu0
    %v6713 = vadd.f32 0.0, %v6712
    %v6714 = vpop.f32.mrb[0].mxu0
    %v6715 = vadd.f32 0.0, %v6714
    %v6716 = vpop.f32.mrb[0].mxu0
    %v6717 = vadd.f32 0.0, %v6716
    %6718 = vmatprep.mubr.bf16.mxu0 0
    %6719 = vmatmul.mubr.bf16.gmra.mrb[0].mxu0 %v5992
    %v6720 = vpop.f32.mrb[0].mxu0
    %v6721 = vadd.f32 0.0, %v6720
    %v6722 = vpop.f32.mrb[0].mxu0
    %v6723 = vadd.f32 0.0, %v6722
    %v6724 = vpop.f32.mrb[0].mxu0
    %v6725 = vadd.f32 0.0, %v6724
    %v6726 = vpop.f32.mrb[0].mxu0
    %v6727 = vadd.f32 0.0, %v6726
    %6728 = vmatprep.mubr.bf16.mxu0 0
    %6729 = vmatmul.mubr.bf16.gmra.mrb[0].mxu0 %v5993
    %v6730 = vpop.f32.mrb[0].mxu0
    %v6731 = vadd.f32 0.0, %v6730
    %v6732 = vpop.f32.mrb[0].mxu0
    %v6733 = vadd.f32 0.0, %v6732
    %v6734 = vpop.f32.mrb[0].mxu0
    %v6735 = vadd.f32 0.0, %v6734
    %v6736 = vpop.f32.mrb[0].mxu0
    %v6737 = vadd.f32 0.0, %v6736
    %6738 = vmatprep.mubr.bf16.mxu0 0
    %6739 = vmatmul.mubr.bf16.gmra.mrb[0].mxu0 %v5994
    %v6740 = vpop.f32.mrb[0].mxu0
    %v6741 = vadd.f32 0.0, %v6740
    %v6742 = vpop.f32.mrb[0].mxu0
    %v6743 = vadd.f32 0.0, %v6742
    %v6744 = vpop.f32.mrb[0].mxu0
    %v6745 = vadd.f32 0.0, %v6744
    %v6746 = vpop.f32.mrb[0].mxu0
    %v6747 = vadd.f32 0.0, %v6746
    %6748 = vmatprep.mubr.bf16.mxu0 0
    %6749 = vmatmul.mubr.bf16.gmra.mrb[0].mxu0 %v5995
    %v6750 = vpop.f32.mrb[0].mxu0
    %v6751 = vadd.f32 0.0, %v6750
    %v6752 = vpop.f32.mrb[0].mxu0
    %v6753 = vadd.f32 0.0, %v6752
    %v6754 = vpop.f32.mrb[0].mxu0
    %v6755 = vadd.f32 0.0, %v6754
    %v6756 = vpop.f32.mrb[0].mxu0
    %v6757 = vadd.f32 0.0, %v6756
    %6758 = vmatprep.mubr.bf16.mxu0 0
    %6759 = vmatmul.mubr.bf16.gmra.mrb[0].mxu0 %v5996
    %v6760 = vpop.f32.mrb[0].mxu0
    %v6761 = vadd.f32 0.0, %v6760
    %v6762 = vpop.f32.mrb[0].mxu0
    %v6763 = vadd.f32 0.0, %v6762
    %v6764 = vpop.f32.mrb[0].mxu0
    %v6765 = vadd.f32 0.0, %v6764
    %v6766 = vpop.f32.mrb[0].mxu0
    %v6767 = vadd.f32 0.0, %v6766
    %6768 = vdwg.mxu0
    %v6770 = vlaneseq
    %v6771 = vshrl.u32 %v6770, 7
    %v6772 = vsub.s32 0, %v6771
    %v6773 = vrot.slane %v693, %v6772
    %v6774 = vlaneseq
    %v6775 = vshrl.u32 %v6774, 7
    %v6776 = vsub.s32 1, %v6775
    %v6777 = vrot.slane %v693, %v6776
    %v6778 = vlaneseq
    %v6779 = vshrl.u32 %v6778, 7
    %v6780 = vsub.s32 2, %v6779
    %v6781 = vrot.slane %v693, %v6780
    %v6782 = vlaneseq
    %v6783 = vshrl.u32 %v6782, 7
    %v6784 = vsub.s32 3, %v6783
    %v6785 = vrot.slane %v693, %v6784
    %v6786 = vlaneseq
    %v6787 = vshrl.u32 %v6786, 7
    %v6788 = vsub.s32 4, %v6787
    %v6789 = vrot.slane %v693, %v6788
    %v6790 = vlaneseq
    %v6791 = vshrl.u32 %v6790, 7
    %v6792 = vsub.s32 5, %v6791
    %v6793 = vrot.slane %v693, %v6792
    %v6794 = vlaneseq
    %v6795 = vshrl.u32 %v6794, 7
    %v6796 = vsub.s32 6, %v6795
    %v6797 = vrot.slane %v693, %v6796
    %v6798 = vlaneseq
    %v6799 = vshrl.u32 %v6798, 7
    %v6800 = vsub.s32 7, %v6799
    %v6801 = vrot.slane %v693, %v6800
    %v6810 = vmul.f32 %v6352, %v6773
    %v6811 = vmul.f32 %v6354, %v6777
    %v6812 = vmul.f32 %v6465, %v6781
    %v6813 = vmul.f32 %v6467, %v6785
    %v6814 = vmul.f32 %v6578, %v6789
    %v6815 = vmul.f32 %v6580, %v6793
    %v6816 = vmul.f32 %v6691, %v6797
    %v6817 = vmul.f32 %v6693, %v6801
    %v6818 = vmul.f32 %v6356, %v6773
    %v6819 = vmul.f32 %v6358, %v6777
    %v6820 = vmul.f32 %v6469, %v6781
    %v6821 = vmul.f32 %v6471, %v6785
    %v6822 = vmul.f32 %v6582, %v6789
    %v6823 = vmul.f32 %v6584, %v6793
    %v6824 = vmul.f32 %v6695, %v6797
    %v6825 = vmul.f32 %v6697, %v6801
    %v6826 = vmul.f32 %v6362, %v6773
    %v6827 = vmul.f32 %v6364, %v6777
    %v6828 = vmul.f32 %v6475, %v6781
    %v6829 = vmul.f32 %v6477, %v6785
    %v6830 = vmul.f32 %v6588, %v6789
    %v6831 = vmul.f32 %v6590, %v6793
    %v6832 = vmul.f32 %v6701, %v6797
    %v6833 = vmul.f32 %v6703, %v6801
    %v6834 = vmul.f32 %v6366, %v6773
    %v6835 = vmul.f32 %v6368, %v6777
    %v6836 = vmul.f32 %v6479, %v6781
    %v6837 = vmul.f32 %v6481, %v6785
    %v6838 = vmul.f32 %v6592, %v6789
    %v6839 = vmul.f32 %v6594, %v6793
    %v6840 = vmul.f32 %v6705, %v6797
    %v6841 = vmul.f32 %v6707, %v6801
    %v6842 = vmul.f32 %v6372, %v6773
    %v6843 = vmul.f32 %v6374, %v6777
    %v6844 = vmul.f32 %v6485, %v6781
    %v6845 = vmul.f32 %v6487, %v6785
    %v6846 = vmul.f32 %v6598, %v6789
    %v6847 = vmul.f32 %v6600, %v6793
    %v6848 = vmul.f32 %v6711, %v6797
    %v6849 = vmul.f32 %v6713, %v6801
    %v6850 = vmul.f32 %v6376, %v6773
    %v6851 = vmul.f32 %v6378, %v6777
    %v6852 = vmul.f32 %v6489, %v6781
    %v6853 = vmul.f32 %v6491, %v6785
    %v6854 = vmul.f32 %v6602, %v6789
    %v6855 = vmul.f32 %v6604, %v6793
    %v6856 = vmul.f32 %v6715, %v6797
    %v6857 = vmul.f32 %v6717, %v6801
    %v6858 = vmul.f32 %v6382, %v6773
    %v6859 = vmul.f32 %v6384, %v6777
    %v6860 = vmul.f32 %v6495, %v6781
    %v6861 = vmul.f32 %v6497, %v6785
    %v6862 = vmul.f32 %v6608, %v6789
    %v6863 = vmul.f32 %v6610, %v6793
    %v6864 = vmul.f32 %v6721, %v6797
    %v6865 = vmul.f32 %v6723, %v6801
    %v6866 = vmul.f32 %v6386, %v6773
    %v6867 = vmul.f32 %v6388, %v6777
    %v6868 = vmul.f32 %v6499, %v6781
    %v6869 = vmul.f32 %v6501, %v6785
    %v6870 = vmul.f32 %v6612, %v6789
    %v6871 = vmul.f32 %v6614, %v6793
    %v6872 = vmul.f32 %v6725, %v6797
    %v6873 = vmul.f32 %v6727, %v6801
    %v6874 = vmul.f32 %v6392, %v6773
    %v6875 = vmul.f32 %v6394, %v6777
    %v6876 = vmul.f32 %v6505, %v6781
    %v6877 = vmul.f32 %v6507, %v6785
    %v6878 = vmul.f32 %v6618, %v6789
    %v6879 = vmul.f32 %v6620, %v6793
    %v6880 = vmul.f32 %v6731, %v6797
    %v6881 = vmul.f32 %v6733, %v6801
    %v6882 = vmul.f32 %v6396, %v6773
    %v6883 = vmul.f32 %v6398, %v6777
    %v6884 = vmul.f32 %v6509, %v6781
    %v6885 = vmul.f32 %v6511, %v6785
    %v6886 = vmul.f32 %v6622, %v6789
    %v6887 = vmul.f32 %v6624, %v6793
    %v6888 = vmul.f32 %v6735, %v6797
    %v6889 = vmul.f32 %v6737, %v6801
    %v6890 = vmul.f32 %v6402, %v6773
    %v6891 = vmul.f32 %v6404, %v6777
    %v6892 = vmul.f32 %v6515, %v6781
    %v6893 = vmul.f32 %v6517, %v6785
    %v6894 = vmul.f32 %v6628, %v6789
    %v6895 = vmul.f32 %v6630, %v6793
    %v6896 = vmul.f32 %v6741, %v6797
    %v6897 = vmul.f32 %v6743, %v6801
    %v6898 = vmul.f32 %v6406, %v6773
    %v6899 = vmul.f32 %v6408, %v6777
    %v6900 = vmul.f32 %v6519, %v6781
    %v6901 = vmul.f32 %v6521, %v6785
    %v6902 = vmul.f32 %v6632, %v6789
    %v6903 = vmul.f32 %v6634, %v6793
    %v6904 = vmul.f32 %v6745, %v6797
    %v6905 = vmul.f32 %v6747, %v6801
    %v6906 = vmul.f32 %v6412, %v6773
    %v6907 = vmul.f32 %v6414, %v6777
    %v6908 = vmul.f32 %v6525, %v6781
    %v6909 = vmul.f32 %v6527, %v6785
    %v6910 = vmul.f32 %v6638, %v6789
    %v6911 = vmul.f32 %v6640, %v6793
    %v6912 = vmul.f32 %v6751, %v6797
    %v6913 = vmul.f32 %v6753, %v6801
    %v6914 = vmul.f32 %v6416, %v6773
    %v6915 = vmul.f32 %v6418, %v6777
    %v6916 = vmul.f32 %v6529, %v6781
    %v6917 = vmul.f32 %v6531, %v6785
    %v6918 = vmul.f32 %v6642, %v6789
    %v6919 = vmul.f32 %v6644, %v6793
    %v6920 = vmul.f32 %v6755, %v6797
    %v6921 = vmul.f32 %v6757, %v6801
    %v6922 = vmul.f32 %v6422, %v6773
    %v6923 = vmul.f32 %v6424, %v6777
    %v6924 = vmul.f32 %v6535, %v6781
    %v6925 = vmul.f32 %v6537, %v6785
    %v6926 = vmul.f32 %v6648, %v6789
    %v6927 = vmul.f32 %v6650, %v6793
    %v6928 = vmul.f32 %v6761, %v6797
    %v6929 = vmul.f32 %v6763, %v6801
    %v6930 = vmul.f32 %v6426, %v6773
    %v6931 = vmul.f32 %v6428, %v6777
    %v6932 = vmul.f32 %v6539, %v6781
    %v6933 = vmul.f32 %v6541, %v6785
    %v6934 = vmul.f32 %v6652, %v6789
    %v6935 = vmul.f32 %v6654, %v6793
    %v6936 = vmul.f32 %v6765, %v6797
    %v6937 = vmul.f32 %v6767, %v6801
    %v6939 = vlaneseq
    %v6940 = vshrl.u32 %v6939, 7
    %v6941 = vsub.s32 0, %v6940
    %v6942 = vrot.slane %v694, %v6941
    %v6943 = vlaneseq
    %v6944 = vshrl.u32 %v6943, 7
    %v6945 = vsub.s32 1, %v6944
    %v6946 = vrot.slane %v694, %v6945
    %v6947 = vlaneseq
    %v6948 = vshrl.u32 %v6947, 7
    %v6949 = vsub.s32 2, %v6948
    %v6950 = vrot.slane %v694, %v6949
    %v6951 = vlaneseq
    %v6952 = vshrl.u32 %v6951, 7
    %v6953 = vsub.s32 3, %v6952
    %v6954 = vrot.slane %v694, %v6953
    %v6955 = vlaneseq
    %v6956 = vshrl.u32 %v6955, 7
    %v6957 = vsub.s32 4, %v6956
    %v6958 = vrot.slane %v694, %v6957
    %v6959 = vlaneseq
    %v6960 = vshrl.u32 %v6959, 7
    %v6961 = vsub.s32 5, %v6960
    %v6962 = vrot.slane %v694, %v6961
    %v6963 = vlaneseq
    %v6964 = vshrl.u32 %v6963, 7
    %v6965 = vsub.s32 6, %v6964
    %v6966 = vrot.slane %v694, %v6965
    %v6967 = vlaneseq
    %v6968 = vshrl.u32 %v6967, 7
    %v6969 = vsub.s32 7, %v6968
    %v6970 = vrot.slane %v694, %v6969
    %v6979 = vadd.f32 %v6810, %v6942
    %v6980 = vadd.f32 %v6811, %v6946
    %v6981 = vadd.f32 %v6812, %v6950
    %v6982 = vadd.f32 %v6813, %v6954
    %v6983 = vadd.f32 %v6814, %v6958
    %v6984 = vadd.f32 %v6815, %v6962
    %v6985 = vadd.f32 %v6816, %v6966
    %v6986 = vadd.f32 %v6817, %v6970
    %v6987 = vadd.f32 %v6818, %v6942
    %v6988 = vadd.f32 %v6819, %v6946
    %v6989 = vadd.f32 %v6820, %v6950
    %v6990 = vadd.f32 %v6821, %v6954
    %v6991 = vadd.f32 %v6822, %v6958
    %v6992 = vadd.f32 %v6823, %v6962
    %v6993 = vadd.f32 %v6824, %v6966
    %v6994 = vadd.f32 %v6825, %v6970
    %v6995 = vadd.f32 %v6826, %v6942
    %v6996 = vadd.f32 %v6827, %v6946
    %v6997 = vadd.f32 %v6828, %v6950
    %v6998 = vadd.f32 %v6829, %v6954
    %v6999 = vadd.f32 %v6830, %v6958
    %v7000 = vadd.f32 %v6831, %v6962
    %v7001 = vadd.f32 %v6832, %v6966
    %v7002 = vadd.f32 %v6833, %v6970
    %v7003 = vadd.f32 %v6834, %v6942
    %v7004 = vadd.f32 %v6835, %v6946
    %v7005 = vadd.f32 %v6836, %v6950
    %v7006 = vadd.f32 %v6837, %v6954
    %v7007 = vadd.f32 %v6838, %v6958
    %v7008 = vadd.f32 %v6839, %v6962
    %v7009 = vadd.f32 %v6840, %v6966
    %v7010 = vadd.f32 %v6841, %v6970
    %v7011 = vadd.f32 %v6842, %v6942
    %v7012 = vadd.f32 %v6843, %v6946
    %v7013 = vadd.f32 %v6844, %v6950
    %v7014 = vadd.f32 %v6845, %v6954
    %v7015 = vadd.f32 %v6846, %v6958
    %v7016 = vadd.f32 %v6847, %v6962
    %v7017 = vadd.f32 %v6848, %v6966
    %v7018 = vadd.f32 %v6849, %v6970
    %v7019 = vadd.f32 %v6850, %v6942
    %v7020 = vadd.f32 %v6851, %v6946
    %v7021 = vadd.f32 %v6852, %v6950
    %v7022 = vadd.f32 %v6853, %v6954
    %v7023 = vadd.f32 %v6854, %v6958
    %v7024 = vadd.f32 %v6855, %v6962
    %v7025 = vadd.f32 %v6856, %v6966
    %v7026 = vadd.f32 %v6857, %v6970
    %v7027 = vadd.f32 %v6858, %v6942
    %v7028 = vadd.f32 %v6859, %v6946
    %v7029 = vadd.f32 %v6860, %v6950
    %v7030 = vadd.f32 %v6861, %v6954
    %v7031 = vadd.f32 %v6862, %v6958
    %v7032 = vadd.f32 %v6863, %v6962
    %v7033 = vadd.f32 %v6864, %v6966
    %v7034 = vadd.f32 %v6865, %v6970
    %v7035 = vadd.f32 %v6866, %v6942
    %v7036 = vadd.f32 %v6867, %v6946
    %v7037 = vadd.f32 %v6868, %v6950
    %v7038 = vadd.f32 %v6869, %v6954
    %v7039 = vadd.f32 %v6870, %v6958
    %v7040 = vadd.f32 %v6871, %v6962
    %v7041 = vadd.f32 %v6872, %v6966
    %v7042 = vadd.f32 %v6873, %v6970
    %v7043 = vadd.f32 %v6874, %v6942
    %v7044 = vadd.f32 %v6875, %v6946
    %v7045 = vadd.f32 %v6876, %v6950
    %v7046 = vadd.f32 %v6877, %v6954
    %v7047 = vadd.f32 %v6878, %v6958
    %v7048 = vadd.f32 %v6879, %v6962
    %v7049 = vadd.f32 %v6880, %v6966
    %v7050 = vadd.f32 %v6881, %v6970
    %v7051 = vadd.f32 %v6882, %v6942
    %v7052 = vadd.f32 %v6883, %v6946
    %v7053 = vadd.f32 %v6884, %v6950
    %v7054 = vadd.f32 %v6885, %v6954
    %v7055 = vadd.f32 %v6886, %v6958
    %v7056 = vadd.f32 %v6887, %v6962
    %v7057 = vadd.f32 %v6888, %v6966
    %v7058 = vadd.f32 %v6889, %v6970
    %v7059 = vadd.f32 %v6890, %v6942
    %v7060 = vadd.f32 %v6891, %v6946
    %v7061 = vadd.f32 %v6892, %v6950
    %v7062 = vadd.f32 %v6893, %v6954
    %v7063 = vadd.f32 %v6894, %v6958
    %v7064 = vadd.f32 %v6895, %v6962
    %v7065 = vadd.f32 %v6896, %v6966
    %v7066 = vadd.f32 %v6897, %v6970
    %v7067 = vadd.f32 %v6898, %v6942
    %v7068 = vadd.f32 %v6899, %v6946
    %v7069 = vadd.f32 %v6900, %v6950
    %v7070 = vadd.f32 %v6901, %v6954
    %v7071 = vadd.f32 %v6902, %v6958
    %v7072 = vadd.f32 %v6903, %v6962
    %v7073 = vadd.f32 %v6904, %v6966
    %v7074 = vadd.f32 %v6905, %v6970
    %v7075 = vadd.f32 %v6906, %v6942
    %v7076 = vadd.f32 %v6907, %v6946
    %v7077 = vadd.f32 %v6908, %v6950
    %v7078 = vadd.f32 %v6909, %v6954
    %v7079 = vadd.f32 %v6910, %v6958
    %v7080 = vadd.f32 %v6911, %v6962
    %v7081 = vadd.f32 %v6912, %v6966
    %v7082 = vadd.f32 %v6913, %v6970
    %v7083 = vadd.f32 %v6914, %v6942
    %v7084 = vadd.f32 %v6915, %v6946
    %v7085 = vadd.f32 %v6916, %v6950
    %v7086 = vadd.f32 %v6917, %v6954
    %v7087 = vadd.f32 %v6918, %v6958
    %v7088 = vadd.f32 %v6919, %v6962
    %v7089 = vadd.f32 %v6920, %v6966
    %v7090 = vadd.f32 %v6921, %v6970
    %v7091 = vadd.f32 %v6922, %v6942
    %v7092 = vadd.f32 %v6923, %v6946
    %v7093 = vadd.f32 %v6924, %v6950
    %v7094 = vadd.f32 %v6925, %v6954
    %v7095 = vadd.f32 %v6926, %v6958
    %v7096 = vadd.f32 %v6927, %v6962
    %v7097 = vadd.f32 %v6928, %v6966
    %v7098 = vadd.f32 %v6929, %v6970
    %v7099 = vadd.f32 %v6930, %v6942
    %v7100 = vadd.f32 %v6931, %v6946
    %v7101 = vadd.f32 %v6932, %v6950
    %v7102 = vadd.f32 %v6933, %v6954
    %v7103 = vadd.f32 %v6934, %v6958
    %v7104 = vadd.f32 %v6935, %v6962
    %v7105 = vadd.f32 %v6936, %v6966
    %v7106 = vadd.f32 %v6937, %v6970
    %v7107 = vmax.f32 %v6979, %v6987
    %v7108 = vmax.f32 %v7107, %v6995
    %v7109 = vmax.f32 %v7108, %v7003
    %v7110 = vmax.f32 %v7109, %v7011
    %v7111 = vmax.f32 %v7110, %v7019
    %v7112 = vmax.f32 %v7111, %v7027
    %v7113 = vmax.f32 %v7112, %v7035
    %v7114 = vrot.slane %v7113, 4
    %v7115 = vmax.f32 %v7113, %v7114
    %v7116 = vrot.slane %v7115, 2
    %v7117 = vmax.f32 %v7115, %v7116
    %v7118 = vrot.slane %v7117, 1
    %v7119 = vmax.f32 %v7117, %v7118
    %v7120 = vmax.f32 %v6980, %v6988
    %v7121 = vmax.f32 %v7120, %v6996
    %v7122 = vmax.f32 %v7121, %v7004
    %v7123 = vmax.f32 %v7122, %v7012
    %v7124 = vmax.f32 %v7123, %v7020
    %v7125 = vmax.f32 %v7124, %v7028
    %v7126 = vmax.f32 %v7125, %v7036
    %v7127 = vrot.slane %v7126, 4
    %v7128 = vmax.f32 %v7126, %v7127
    %v7129 = vrot.slane %v7128, 2
    %v7130 = vmax.f32 %v7128, %v7129
    %v7131 = vrot.slane %v7130, 1
    %v7132 = vmax.f32 %v7130, %v7131
    %v7133 = vmax.f32 %v6981, %v6989
    %v7134 = vmax.f32 %v7133, %v6997
    %v7135 = vmax.f32 %v7134, %v7005
    %v7136 = vmax.f32 %v7135, %v7013
    %v7137 = vmax.f32 %v7136, %v7021
    %v7138 = vmax.f32 %v7137, %v7029
    %v7139 = vmax.f32 %v7138, %v7037
    %v7140 = vrot.slane %v7139, 4
    %v7141 = vmax.f32 %v7139, %v7140
    %v7142 = vrot.slane %v7141, 2
    %v7143 = vmax.f32 %v7141, %v7142
    %v7144 = vrot.slane %v7143, 1
    %v7145 = vmax.f32 %v7143, %v7144
    %v7146 = vmax.f32 %v6982, %v6990
    %v7147 = vmax.f32 %v7146, %v6998
    %v7148 = vmax.f32 %v7147, %v7006
    %v7149 = vmax.f32 %v7148, %v7014
    %v7150 = vmax.f32 %v7149, %v7022
    %v7151 = vmax.f32 %v7150, %v7030
    %v7152 = vmax.f32 %v7151, %v7038
    %v7153 = vrot.slane %v7152, 4
    %v7154 = vmax.f32 %v7152, %v7153
    %v7155 = vrot.slane %v7154, 2
    %v7156 = vmax.f32 %v7154, %v7155
    %v7157 = vrot.slane %v7156, 1
    %v7158 = vmax.f32 %v7156, %v7157
    %v7159 = vmax.f32 %v6983, %v6991
    %v7160 = vmax.f32 %v7159, %v6999
    %v7161 = vmax.f32 %v7160, %v7007
    %v7162 = vmax.f32 %v7161, %v7015
    %v7163 = vmax.f32 %v7162, %v7023
    %v7164 = vmax.f32 %v7163, %v7031
    %v7165 = vmax.f32 %v7164, %v7039
    %v7166 = vrot.slane %v7165, 4
    %v7167 = vmax.f32 %v7165, %v7166
    %v7168 = vrot.slane %v7167, 2
    %v7169 = vmax.f32 %v7167, %v7168
    %v7170 = vrot.slane %v7169, 1
    %v7171 = vmax.f32 %v7169, %v7170
    %v7172 = vmax.f32 %v6984, %v6992
    %v7173 = vmax.f32 %v7172, %v7000
    %v7174 = vmax.f32 %v7173, %v7008
    %v7175 = vmax.f32 %v7174, %v7016
    %v7176 = vmax.f32 %v7175, %v7024
    %v7177 = vmax.f32 %v7176, %v7032
    %v7178 = vmax.f32 %v7177, %v7040
    %v7179 = vrot.slane %v7178, 4
    %v7180 = vmax.f32 %v7178, %v7179
    %v7181 = vrot.slane %v7180, 2
    %v7182 = vmax.f32 %v7180, %v7181
    %v7183 = vrot.slane %v7182, 1
    %v7184 = vmax.f32 %v7182, %v7183
    %v7185 = vmax.f32 %v6985, %v6993
    %v7186 = vmax.f32 %v7185, %v7001
    %v7187 = vmax.f32 %v7186, %v7009
    %v7188 = vmax.f32 %v7187, %v7017
    %v7189 = vmax.f32 %v7188, %v7025
    %v7190 = vmax.f32 %v7189, %v7033
    %v7191 = vmax.f32 %v7190, %v7041
    %v7192 = vrot.slane %v7191, 4
    %v7193 = vmax.f32 %v7191, %v7192
    %v7194 = vrot.slane %v7193, 2
    %v7195 = vmax.f32 %v7193, %v7194
    %v7196 = vrot.slane %v7195, 1
    %v7197 = vmax.f32 %v7195, %v7196
    %v7198 = vmax.f32 %v6986, %v6994
    %v7199 = vmax.f32 %v7198, %v7002
    %v7200 = vmax.f32 %v7199, %v7010
    %v7201 = vmax.f32 %v7200, %v7018
    %v7202 = vmax.f32 %v7201, %v7026
    %v7203 = vmax.f32 %v7202, %v7034
    %v7204 = vmax.f32 %v7203, %v7042
    %v7205 = vrot.slane %v7204, 4
    %v7206 = vmax.f32 %v7204, %v7205
    %v7207 = vrot.slane %v7206, 2
    %v7208 = vmax.f32 %v7206, %v7207
    %v7209 = vrot.slane %v7208, 1
    %v7210 = vmax.f32 %v7208, %v7209
    %v7211 = vmax.f32 %v7043, %v7051
    %v7212 = vmax.f32 %v7211, %v7059
    %v7213 = vmax.f32 %v7212, %v7067
    %v7214 = vmax.f32 %v7213, %v7075
    %v7215 = vmax.f32 %v7214, %v7083
    %v7216 = vmax.f32 %v7215, %v7091
    %v7217 = vmax.f32 %v7216, %v7099
    %v7218 = vrot.slane %v7217, 4
    %v7219 = vmax.f32 %v7217, %v7218
    %v7220 = vrot.slane %v7219, 2
    %v7221 = vmax.f32 %v7219, %v7220
    %v7222 = vrot.slane %v7221, 1
    %v7223 = vmax.f32 %v7221, %v7222
    %v7224 = vmax.f32 %v7044, %v7052
    %v7225 = vmax.f32 %v7224, %v7060
    %v7226 = vmax.f32 %v7225, %v7068
    %v7227 = vmax.f32 %v7226, %v7076
    %v7228 = vmax.f32 %v7227, %v7084
    %v7229 = vmax.f32 %v7228, %v7092
    %v7230 = vmax.f32 %v7229, %v7100
    %v7231 = vrot.slane %v7230, 4
    %v7232 = vmax.f32 %v7230, %v7231
    %v7233 = vrot.slane %v7232, 2
    %v7234 = vmax.f32 %v7232, %v7233
    %v7235 = vrot.slane %v7234, 1
    %v7236 = vmax.f32 %v7234, %v7235
    %v7237 = vmax.f32 %v7045, %v7053
    %v7238 = vmax.f32 %v7237, %v7061
    %v7239 = vmax.f32 %v7238, %v7069
    %v7240 = vmax.f32 %v7239, %v7077
    %v7241 = vmax.f32 %v7240, %v7085
    %v7242 = vmax.f32 %v7241, %v7093
    %v7243 = vmax.f32 %v7242, %v7101
    %v7244 = vrot.slane %v7243, 4
    %v7245 = vmax.f32 %v7243, %v7244
    %v7246 = vrot.slane %v7245, 2
    %v7247 = vmax.f32 %v7245, %v7246
    %v7248 = vrot.slane %v7247, 1
    %v7249 = vmax.f32 %v7247, %v7248
    %v7250 = vmax.f32 %v7046, %v7054
    %v7251 = vmax.f32 %v7250, %v7062
    %v7252 = vmax.f32 %v7251, %v7070
    %v7253 = vmax.f32 %v7252, %v7078
    %v7254 = vmax.f32 %v7253, %v7086
    %v7255 = vmax.f32 %v7254, %v7094
    %v7256 = vmax.f32 %v7255, %v7102
    %v7257 = vrot.slane %v7256, 4
    %v7258 = vmax.f32 %v7256, %v7257
    %v7259 = vrot.slane %v7258, 2
    %v7260 = vmax.f32 %v7258, %v7259
    %v7261 = vrot.slane %v7260, 1
    %v7262 = vmax.f32 %v7260, %v7261
    %v7263 = vmax.f32 %v7047, %v7055
    %v7264 = vmax.f32 %v7263, %v7063
    %v7265 = vmax.f32 %v7264, %v7071
    %v7266 = vmax.f32 %v7265, %v7079
    %v7267 = vmax.f32 %v7266, %v7087
    %v7268 = vmax.f32 %v7267, %v7095
    %v7269 = vmax.f32 %v7268, %v7103
    %v7270 = vrot.slane %v7269, 4
    %v7271 = vmax.f32 %v7269, %v7270
    %v7272 = vrot.slane %v7271, 2
    %v7273 = vmax.f32 %v7271, %v7272
    %v7274 = vrot.slane %v7273, 1
    %v7275 = vmax.f32 %v7273, %v7274
    %v7276 = vmax.f32 %v7048, %v7056
    %v7277 = vmax.f32 %v7276, %v7064
    %v7278 = vmax.f32 %v7277, %v7072
    %v7279 = vmax.f32 %v7278, %v7080
    %v7280 = vmax.f32 %v7279, %v7088
    %v7281 = vmax.f32 %v7280, %v7096
    %v7282 = vmax.f32 %v7281, %v7104
    %v7283 = vrot.slane %v7282, 4
    %v7284 = vmax.f32 %v7282, %v7283
    %v7285 = vrot.slane %v7284, 2
    %v7286 = vmax.f32 %v7284, %v7285
    %v7287 = vrot.slane %v7286, 1
    %v7288 = vmax.f32 %v7286, %v7287
    %v7289 = vmax.f32 %v7049, %v7057
    %v7290 = vmax.f32 %v7289, %v7065
    %v7291 = vmax.f32 %v7290, %v7073
    %v7292 = vmax.f32 %v7291, %v7081
    %v7293 = vmax.f32 %v7292, %v7089
    %v7294 = vmax.f32 %v7293, %v7097
    %v7295 = vmax.f32 %v7294, %v7105
    %v7296 = vrot.slane %v7295, 4
    %v7297 = vmax.f32 %v7295, %v7296
    %v7298 = vrot.slane %v7297, 2
    %v7299 = vmax.f32 %v7297, %v7298
    %v7300 = vrot.slane %v7299, 1
    %v7301 = vmax.f32 %v7299, %v7300
    %v7302 = vmax.f32 %v7050, %v7058
    %v7303 = vmax.f32 %v7302, %v7066
    %v7304 = vmax.f32 %v7303, %v7074
    %v7305 = vmax.f32 %v7304, %v7082
    %v7306 = vmax.f32 %v7305, %v7090
    %v7307 = vmax.f32 %v7306, %v7098
    %v7308 = vmax.f32 %v7307, %v7106
    %v7309 = vrot.slane %v7308, 4
    %v7310 = vmax.f32 %v7308, %v7309
    %v7311 = vrot.slane %v7310, 2
    %v7312 = vmax.f32 %v7310, %v7311
    %v7313 = vrot.slane %v7312, 1
    %v7314 = vmax.f32 %v7312, %v7313
    %v7315 = vsel %vm2576, %v7119, %v7223
    %v7316 = vsel %vm2576, %v7132, %v7236
    %v7317 = vsel %vm2576, %v7145, %v7249
    %v7318 = vsel %vm2576, %v7158, %v7262
    %v7319 = vsel %vm2576, %v7171, %v7275
    %v7320 = vsel %vm2576, %v7184, %v7288
    %v7321 = vsel %vm2576, %v7197, %v7301
    %v7322 = vsel %vm2576, %v7210, %v7314
    %v7331 = vcombine.low %v7315, %v7316
    %v7332 = vcombine.low %v7317, %v7318
    %v7334 = vunpack.c.l.s4 1983009808
    %v7335 = vunpack.c.0.s8 %v7334
    %v7336 = vlaneseq
    %v7337 = vshrl.u32 %v7336, 7
    %v7338 = vsub.s32 %v7335, %v7337
    %v7339 = vrot.slane %v7331, %v7338
    %v7341 = vunpack.c.l.s4 1983009808
    %v7342 = vunpack.c.0.s8 %v7341
    %v7343 = vlaneseq
    %v7344 = vshrl.u32 %v7343, 7
    %v7345 = vsub.s32 %v7342, %v7344
    %v7346 = vrot.slane %v7332, %v7345
    %v7347 = vcombine.low %v7339, %v7346
    %v7348 = vcombine.low %v7319, %v7320
    %v7349 = vcombine.low %v7321, %v7322
    %v7351 = vunpack.c.l.s4 1983009808
    %v7352 = vunpack.c.0.s8 %v7351
    %v7353 = vlaneseq
    %v7354 = vshrl.u32 %v7353, 7
    %v7355 = vsub.s32 %v7352, %v7354
    %v7356 = vrot.slane %v7348, %v7355
    %v7358 = vunpack.c.l.s4 1983009808
    %v7359 = vunpack.c.0.s8 %v7358
    %v7360 = vlaneseq
    %v7361 = vshrl.u32 %v7360, 7
    %v7362 = vsub.s32 %v7359, %v7361
    %v7363 = vrot.slane %v7349, %v7362
    %v7364 = vcombine.low %v7356, %v7363
    %7367 = vst [vmem:[#allocation10] sm:$0xff] %v7347
    %7368 = vst [vmem:[#allocation10 + $0x8] sm:$0xff] %v7364
    %vm7369 = vcmask 197632
    %7370 = vst.msk [vmem:[#allocation11] sm:$0x3] %vm7369, %v4839
    // Predicated region
    $region130: #{tpu_custom_call.1} parent=1 // pred_check
      _
    $region131: #{tpu_custom_call.1} parent=1 // pred_check_branch
      %7372 = sbr.rel (0) target = $region133
    $region132: #{tpu_custom_call.1} parent=1 // pred_region
      %s7374 = ssub.s32 256, 256
      %7375 = vsyncadd [#allocation4], %s7374
      %s7377 = sshll.u32 [#allocation10], 4
      %s7378 = int_to_ptr.vmem [resolvable:$true] %s7377
      %7380 = dma.vmem_to_hbm [thread:$0]  %s7378, 256, %s57, [#allocation4]
    $region133: #{tpu_custom_call.1} parent=1 // pred_fallthru
      _
    // Predicated region
    $region134: #{tpu_custom_call.1} parent=1 // pred_check
      _
    $region135: #{tpu_custom_call.1} parent=1 // pred_check_branch
      %7382 = sbr.rel (0) target = $region137
    $region136: #{tpu_custom_call.1} parent=1 // pred_region
      %s7384 = ssub.s32 32, 32
      %7385 = vsyncadd [#allocation12], %s7384
      %s7387 = sshll.u32 [#allocation11], 4
      %s7388 = int_to_ptr.vmem [resolvable:$true] %s7387
      %7390 = dma.vmem_to_hbm [thread:$0]  %s7388, 32, %s59, [#allocation12]
    $region137: #{tpu_custom_call.1} parent=1 // pred_fallthru
      _
    // Predicated region
    $region138: #{tpu_custom_call.1} parent=1 // pred_check
      _
    $region139: #{tpu_custom_call.1} parent=1 // pred_check_branch
      %7392 = sbr.rel (0) target = $region141
    $region140: #{tpu_custom_call.1} parent=1 // pred_region
      %7393 = dma.done [#allocation4], 256
    $region141: #{tpu_custom_call.1} parent=1 // pred_fallthru
      _
    // Predicated region
    $region142: #{tpu_custom_call.1} parent=1 // pred_check
      _
    $region143: #{tpu_custom_call.1} parent=1 // pred_check_branch
      %7395 = sbr.rel (0) target = $region145
    $region144: #{tpu_custom_call.1} parent=1 // pred_region
      %7396 = dma.done [#allocation12], 32
    $region145: #{tpu_custom_call.1} parent=1 // pred_fallthru
      _
    %7397 = vsyncpa [#allocation3], 1
    %7398 = vsyncpa [#allocation6], 1
    %7399 = vsyncpa [#allocation9], 1
    %7400 = vsyncpa [#allocation4], 1
    %7401 = vsyncpa [#allocation12], 1

</llo_original>
